<compile_context>
chip_gen: v7x
topology: tpu7x:2x2x1
jax: 0.10.0
libtpu: 0.0.40
codegen_flags: <defaults>
</compile_context>

<pallas_src>
import functools

import numpy as np
import jax
import jax.numpy as jnp
from jax.experimental import pallas as pl
from jax.experimental.pallas import tpu as pltpu


_PC = 8  # interior column offset inside the padded halo buffers (sublane aligned)


# ---------------------------------------------------------------------------
# In-kernel helpers
# ---------------------------------------------------------------------------
def _conv3x3_relu(src_ref, w_ref, b_ref, h, w):
    """'same' 3x3 conv + bias + ReLU read from a padded VMEM halo buffer.

    src_ref: (h+2, w+_PC+1, cin) with the image at [1:1+h, _PC:_PC+w, :] and
    zeros elsewhere.  w_ref: (3, 3, cin, cout).  Returns (h*w, cout) f32.
    """
    cin = src_ref.shape[-1]
    acc = None
    for dy in range(3):
        for dx in range(3):
            tap = src_ref[dy:dy + h, _PC - 1 + dx:_PC - 1 + dx + w, :]
            y = jnp.dot(tap.reshape(h * w, cin), w_ref[dy, dx],
                        preferred_element_type=jnp.float32)
            acc = y if acc is None else acc + y
    return jnp.maximum(acc + b_ref[...], 0.0)


def _unet_kernel(x_ref, w1_ref, b1_ref, w2_ref, b2_ref, w3_ref, b3_ref,
                 w4_ref, b4_ref, pool_ref, up_ref,
                 o_ref,
                 xpad_ref, p1pad_ref, catpad_ref,
                 *, H, W, C_IN, C1, C2, C_OUT):
    H2, W2 = H // 2, W // 2
    HW = H * W

    # ---- stage 0: input image -> zero-padded halo buffer ------------------
    xpad_ref[...] = jnp.zeros(xpad_ref.shape, jnp.float32)
    xpad_ref[1:1 + H, _PC:_PC + W, :] = x_ref[0]

    # ---- encoder 3x3 conv + bias + ReLU (fused im2col: 9 tap matmuls) -----
    e1 = _conv3x3_relu(xpad_ref, w1_ref, b1_ref, H, W)              # (HW, C1)

    # ---- maxpool 2x2 == max over four 0/1 selection matmuls ---------------
    p00 = jnp.dot(pool_ref[0], e1, preferred_element_type=jnp.float32)
    p01 = jnp.dot(pool_ref[1], e1, preferred_element_type=jnp.float32)
    p10 = jnp.dot(pool_ref[2], e1, preferred_element_type=jnp.float32)
    p11 = jnp.dot(pool_ref[3], e1, preferred_element_type=jnp.float32)
    pooled = jnp.maximum(jnp.maximum(p00, p01), jnp.maximum(p10, p11))

    # ---- bottleneck 3x3 conv + ReLU at half resolution ---------------------
    p1pad_ref[...] = jnp.zeros(p1pad_ref.shape, jnp.float32)
    p1pad_ref[1:1 + H2, _PC:_PC + W2, :] = pooled.reshape(H2, W2, C1)
    bo = _conv3x3_relu(p1pad_ref, w2_ref, b2_ref, H2, W2)           # (H2*W2, C2)

    # ---- nearest-neighbour 2x upsample == one duplication matmul ----------
    up = jnp.dot(up_ref[...], bo, preferred_element_type=jnp.float32)  # (HW, C2)

    # ---- skip concat: write [up | e1] into one padded buffer --------------
    catpad_ref[...] = jnp.zeros(catpad_ref.shape, jnp.float32)
    catpad_ref[1:1 + H, _PC:_PC + W, 0:C2] = up.reshape(H, W, C2)
    catpad_ref[1:1 + H, _PC:_PC + W, C2:C2 + C1] = e1.reshape(H, W, C1)

    # ---- decoder 3x3 conv + ReLU -------------------------------------------
    d1 = _conv3x3_relu(catpad_ref, w3_ref, b3_ref, H, W)            # (HW, C1)

    # ---- final 1x1 conv fused with nn.Sigmoid (the UNet_Segmenter op),
    #      computed transposed so the single HBM store is lane-dense --------
    logits = jax.lax.dot_general(
        w4_ref[...], d1,
        dimension_numbers=(((1,), (1,)), ((), ())),
        preferred_element_type=jnp.float32) + b4_ref[...]            # (C_OUT, HW)
    probs = 1.0 / (1.0 + jnp.exp(-logits))                           # sigmoid
    o_ref[...] = probs.reshape(1, C_OUT, HW).astype(o_ref.dtype)


# ---------------------------------------------------------------------------
# Trace-time constant matrices (tile-sized: fine for small spatial tiles)
# ---------------------------------------------------------------------------
def _maxpool_select_matrices(H, W):
    H2, W2 = H // 2, W // 2
    m = np.zeros((4, H2 * W2, H * W), np.float32)
    for qi in range(2):
        for qj in range(2):
            q = 2 * qi + qj
            for i2 in range(H2):
                for j2 in range(W2):
                    m[q, i2 * W2 + j2, (2 * i2 + qi) * W + (2 * j2 + qj)] = 1.0
    return m


def _upsample_matrix(H, W):
    H2, W2 = H // 2, W // 2
    u = np.zeros((H * W, H2 * W2), np.float32)
    for i in range(H):
        for j in range(W):
            u[i * W + j, (i // 2) * W2 + (j // 2)] = 1.0
    return u


# ---------------------------------------------------------------------------
# Params + forward wrapper
# ---------------------------------------------------------------------------
def init_unet_params(key, in_ch=4, base=8, out_ch=1):
    ks = jax.random.split(key, 8)

    def conv_w(k, kh, kw, cin, cout):
        fan_in = kh * kw * cin
        return jax.random.normal(k, (kh, kw, cin, cout), jnp.float32) * (2.0 / fan_in) ** 0.5

    def bias(k, c):
        return 0.1 * jax.random.normal(k, (c,), jnp.float32)

    return {
        "enc_w": conv_w(ks[0], 3, 3, in_ch, base),
        "enc_b": bias(ks[1], base),
        "bot_w": conv_w(ks[2], 3, 3, base, 2 * base),
        "bot_b": bias(ks[3], 2 * base),
        "dec_w": conv_w(ks[4], 3, 3, 3 * base, base),
        "dec_b": bias(ks[5], base),
        "out_w": conv_w(ks[6], 1, 1, base, out_ch),
        "out_b": bias(ks[7], out_ch),
    }


def unet_segmenter_forward(params, x_nchw):
    """UNet_Segmenter.forward: sigmoid(unet(x)).  x_nchw: (N, Cin, H, W)."""
    N, C_IN, H, W = x_nchw.shape
    C1 = params["enc_b"].shape[0]
    C2 = params["bot_b"].shape[0]
    C_OUT = params["out_w"].shape[-1]
    H2, W2 = H // 2, W // 2
    HW = H * W
    assert H % 2 == 0 and W % 16 == 0, "kernel assumes even H and W % 16 == 0"
    # TODO(synk): large images would need a spatially tiled grid with halo
    # exchange; here each batch element's full feature maps fit in VMEM.

    # NCHW -> NHWC (tiny tensor; channel-last is what the tap matmuls consume).
    x_nhwc = jnp.transpose(x_nchw, (0, 2, 3, 1))

    pool_m = jnp.asarray(_maxpool_select_matrices(H, W))   # (4, HW/4, HW)
    up_m = jnp.asarray(_upsample_matrix(H, W))             # (HW, HW/4)

    b1 = params["enc_b"].reshape(1, C1)
    b2 = params["bot_b"].reshape(1, C2)
    b3 = params["dec_b"].reshape(1, C1)
    w4 = jnp.transpose(params["out_w"].reshape(C1, C_OUT))  # (C_OUT, C1)
    b4 = params["out_b"].reshape(C_OUT, 1)

    kernel = functools.partial(
        _unet_kernel, H=H, W=W, C_IN=C_IN, C1=C1, C2=C2, C_OUT=C_OUT)

    out = pl.pallas_call(
        kernel,
        out_shape=jax.ShapeDtypeStruct((N, C_OUT, HW), jnp.float32),
        grid=(N,),
        in_specs=[
            pl.BlockSpec((1, H, W, C_IN), lambda b: (b, 0, 0, 0)),      # x (NHWC)
            pl.BlockSpec((3, 3, C_IN, C1), lambda b: (0, 0, 0, 0)),     # enc_w
            pl.BlockSpec((1, C1), lambda b: (0, 0)),                    # enc_b
            pl.BlockSpec((3, 3, C1, C2), lambda b: (0, 0, 0, 0)),       # bot_w
            pl.BlockSpec((1, C2), lambda b: (0, 0)),                    # bot_b
            pl.BlockSpec((3, 3, C1 + C2, C1), lambda b: (0, 0, 0, 0)),  # dec_w
            pl.BlockSpec((1, C1), lambda b: (0, 0)),                    # dec_b
            pl.BlockSpec((C_OUT, C1), lambda b: (0, 0)),                # out_w^T
            pl.BlockSpec((C_OUT, 1), lambda b: (0, 0)),                 # out_b
            pl.BlockSpec((4, H2 * W2, HW), lambda b: (0, 0, 0)),        # pool sel
            pl.BlockSpec((HW, H2 * W2), lambda b: (0, 0)),              # upsample
        ],
        out_specs=pl.BlockSpec((1, C_OUT, HW), lambda b: (b, 0, 0)),
        scratch_shapes=[
            pltpu.VMEM((H + 2, W + _PC + 1, C_IN), jnp.float32),        # xpad
            pltpu.VMEM((H2 + 2, W2 + _PC + 1, C1), jnp.float32),        # p1pad
            pltpu.VMEM((H + 2, W + _PC + 1, C1 + C2), jnp.float32),     # catpad
        ],
        compiler_params=pltpu.CompilerParams(
            dimension_semantics=("parallel",),
            vmem_limit_bytes=32 * 1024 * 1024),
    )(x_nhwc, params["enc_w"], b1, params["bot_w"], b2,
      params["dec_w"], b3, w4, b4, pool_m, up_m)

    # Output already (N, C_OUT, H*W) in NCHW pixel order: pure reshape, no transpose.
    return out.reshape(N, C_OUT, H, W)


# ---------------------------------------------------------------------------
# Pure-JAX (XLA) reference, used only as an in-script self-check
# ---------------------------------------------------------------------------
def _reference_forward(params, x_nchw):
    x = jnp.transpose(x_nchw, (0, 2, 3, 1))

    def conv3x3_relu(t, w, b):
        N, H, W, Cin = t.shape
        tp = jnp.pad(t, ((0, 0), (1, 1), (1, 1), (0, 0)))
        cols = jnp.concatenate(
            [tp[:, dy:dy + H, dx:dx + W, :] for dy in range(3) for dx in range(3)],
            axis=-1).reshape(N * H * W, 9 * Cin)
        y = cols @ w.reshape(9 * Cin, -1) + b
        return jnp.maximum(y, 0.0).reshape(N, H, W, -1)

    e1 = conv3x3_relu(x, params["enc_w"], params["enc_b"])
    N, H, W, C1 = e1.shape
    p1 = jnp.max(e1.reshape(N, H // 2, 2, W // 2, 2, C1), axis=(2, 4))
    bo = conv3x3_relu(p1, params["bot_w"], params["bot_b"])
    up = jnp.repeat(jnp.repeat(bo, 2, axis=1), 2, axis=2)
    cat = jnp.concatenate([up, e1], axis=-1)
    d1 = conv3x3_relu(cat, params["dec_w"], params["dec_b"])
    C_OUT = params["out_w"].shape[-1]
    logits = d1.reshape(-1, C1) @ params["out_w"].reshape(C1, C_OUT) + params["out_b"]
    probs = 1.0 / (1.0 + jnp.exp(-logits))
    return jnp.transpose(probs.reshape(N, H, W, C_OUT), (0, 3, 1, 2))


# ---------------------------------------------------------------------------
if __name__ == "__main__":
    key = jax.random.PRNGKey(0)
    pkey, xkey = jax.random.split(key)
    params = init_unet_params(pkey, in_ch=4, base=8, out_ch=1)
    x = jax.random.normal(xkey, (2, 4, 16, 16), jnp.float32)     # NCHW input

    fwd = jax.jit(functools.partial(unet_segmenter_forward, params))
    out = jax.block_until_ready(fwd(x))

    assert out.shape == (2, 1, 16, 16), out.shape
    assert bool(jnp.all(jnp.isfinite(out)))
    assert bool(jnp.all((out >= 0.0) & (out <= 1.0)))            # sigmoid range

    ref = jax.block_until_ready(_reference_forward(params, x))
    max_err = float(jnp.max(jnp.abs(out - ref)))
    assert max_err < 3e-2, max_err                               # MXU vs XLA precision slack

    print("KERNEL_OK")
</pallas_src>

<mosaic_0001>
module attributes {stable_mosaic.version = 11 : i64} {
  func.func @_unet_kernel(%arg0: i32, %arg1: memref<1x16x16x4xf32, #tpu.memory_space<vmem>>, %arg2: memref<3x3x4x8xf32, #tpu.memory_space<vmem>>, %arg3: memref<1x8xf32, #tpu.memory_space<vmem>>, %arg4: memref<3x3x8x16xf32, #tpu.memory_space<vmem>>, %arg5: memref<1x16xf32, #tpu.memory_space<vmem>>, %arg6: memref<3x3x24x8xf32, #tpu.memory_space<vmem>>, %arg7: memref<1x8xf32, #tpu.memory_space<vmem>>, %arg8: memref<1x8xf32, #tpu.memory_space<vmem>>, %arg9: memref<1x1xf32, #tpu.memory_space<vmem>>, %arg10: memref<4x64x256xf32, #tpu.memory_space<vmem>>, %arg11: memref<256x64xf32, #tpu.memory_space<vmem>>, %arg12: memref<1x1x256xf32, #tpu.memory_space<vmem>>, %arg13: memref<18x25x4xf32, #tpu.memory_space<vmem>>, %arg14: memref<10x17x8xf32, #tpu.memory_space<vmem>>, %arg15: memref<18x25x24xf32, #tpu.memory_space<vmem>>) attributes {dimension_semantics = [#tpu.dimension_semantics<parallel>], iteration_bounds = array<i64: 2>, scalar_prefetch = 0 : i64, scratch_operands = 3 : i64, tpu.core_type = #tpu.core_type<tc>, window_params = [{transform_indices = @transform_0, window_bounds = array<i64: 1, 16, 16, 4>}, {pipeline_mode = #tpu.pipeline_mode<synchronous>, transform_indices = @transform_1, window_bounds = array<i64: 3, 3, 4, 8>}, {pipeline_mode = #tpu.pipeline_mode<synchronous>, transform_indices = @transform_2, window_bounds = array<i64: 1, 8>}, {pipeline_mode = #tpu.pipeline_mode<synchronous>, transform_indices = @transform_3, window_bounds = array<i64: 3, 3, 8, 16>}, {pipeline_mode = #tpu.pipeline_mode<synchronous>, transform_indices = @transform_4, window_bounds = array<i64: 1, 16>}, {pipeline_mode = #tpu.pipeline_mode<synchronous>, transform_indices = @transform_5, window_bounds = array<i64: 3, 3, 24, 8>}, {pipeline_mode = #tpu.pipeline_mode<synchronous>, transform_indices = @transform_6, window_bounds = array<i64: 1, 8>}, {pipeline_mode = #tpu.pipeline_mode<synchronous>, transform_indices = @transform_7, window_bounds = array<i64: 1, 8>}, {pipeline_mode = #tpu.pipeline_mode<synchronous>, transform_indices = @transform_8, window_bounds = array<i64: 1, 1>}, {pipeline_mode = #tpu.pipeline_mode<synchronous>, transform_indices = @transform_9, window_bounds = array<i64: 4, 64, 256>}, {pipeline_mode = #tpu.pipeline_mode<synchronous>, transform_indices = @transform_10, window_bounds = array<i64: 256, 64>}, {transform_indices = @transform_11, window_bounds = array<i64: 1, 1, 256>}]} {
    %cst = arith.constant 0.000000e+00 : f32
    %0 = vector.broadcast %cst : f32 to vector<18x25x4xf32>
    %c0 = arith.constant 0 : index
    %c0_0 = arith.constant 0 : index
    %c0_1 = arith.constant 0 : index
    %1 = vector.load %arg13[%c0, %c0_0, %c0_1] : memref<18x25x4xf32, #tpu.memory_space<vmem>>, vector<18x25x4xf32>
    tpu.vector_store %arg13[%c0, %c0_0, %c0_1], %0 {strides = array<i32>} : memref<18x25x4xf32, #tpu.memory_space<vmem>>, vector<18x25x4xf32>,
    %c0_2 = arith.constant 0 : index
    %c0_3 = arith.constant 0 : index
    %c0_4 = arith.constant 0 : index
    %c0_5 = arith.constant 0 : index
    %2 = vector.load %arg1[%c0_2, %c0_3, %c0_4, %c0_5] : memref<1x16x16x4xf32, #tpu.memory_space<vmem>>, vector<1x16x16x4xf32>
    %3 = vector.shape_cast %2 : vector<1x16x16x4xf32> to vector<16x16x4xf32>
    %c1 = arith.constant 1 : index
    %c8 = arith.constant 8 : index
    %c0_6 = arith.constant 0 : index
    %4 = vector.load %arg13[%c1, %c8, %c0_6] : memref<18x25x4xf32, #tpu.memory_space<vmem>>, vector<16x16x4xf32>
    tpu.vector_store %arg13[%c1, %c8, %c0_6], %3 {strides = array<i32>} : memref<18x25x4xf32, #tpu.memory_space<vmem>>, vector<16x16x4xf32>,
    %c0_7 = arith.constant 0 : index
    %c7 = arith.constant 7 : index
    %c0_8 = arith.constant 0 : index
    %5 = vector.load %arg13[%c0_7, %c7, %c0_8] : memref<18x25x4xf32, #tpu.memory_space<vmem>>, vector<16x16x4xf32>
    %6 = vector.shape_cast %5 : vector<16x16x4xf32> to vector<256x4xf32>
    %c0_9 = arith.constant 0 : index
    %c0_10 = arith.constant 0 : index
    %c0_11 = arith.constant 0 : index
    %c0_12 = arith.constant 0 : index
    %7 = vector.load %arg2[%c0_9, %c0_10, %c0_11, %c0_12] : memref<3x3x4x8xf32, #tpu.memory_space<vmem>>, vector<1x1x4x8xf32>
    %8 = vector.shape_cast %7 : vector<1x1x4x8xf32> to vector<4x8xf32>
    %cst_13 = arith.constant dense<0.000000e+00> : vector<256x8xf32>
    %9 = tpu.matmul %6, %8, %cst_13 {dimension_numbers = #tpu.dot_dimension_numbers<[1], [0], [0], [1], [0, 0, 1, 1], [], []>} : vector<256x4xf32>, vector<4x8xf32>, vector<256x8xf32> -> vector<256x8xf32>
    %c0_14 = arith.constant 0 : index
    %c8_15 = arith.constant 8 : index
    %c0_16 = arith.constant 0 : index
    %10 = vector.load %arg13[%c0_14, %c8_15, %c0_16] : memref<18x25x4xf32, #tpu.memory_space<vmem>>, vector<16x16x4xf32>
    %11 = vector.shape_cast %10 : vector<16x16x4xf32> to vector<256x4xf32>
    %c0_17 = arith.constant 0 : index
    %c1_18 = arith.constant 1 : index
    %c0_19 = arith.constant 0 : index
    %c0_20 = arith.constant 0 : index
    %12 = vector.load %arg2[%c0_17, %c1_18, %c0_19, %c0_20] : memref<3x3x4x8xf32, #tpu.memory_space<vmem>>, vector<1x1x4x8xf32>
    %13 = vector.shape_cast %12 : vector<1x1x4x8xf32> to vector<4x8xf32>
    %cst_21 = arith.constant dense<0.000000e+00> : vector<256x8xf32>
    %14 = tpu.matmul %11, %13, %cst_21 {dimension_numbers = #tpu.dot_dimension_numbers<[1], [0], [0], [1], [0, 0, 1, 1], [], []>} : vector<256x4xf32>, vector<4x8xf32>, vector<256x8xf32> -> vector<256x8xf32>
    %15 = arith.addf %9, %14 : vector<256x8xf32>
    %c0_22 = arith.constant 0 : index
    %c9 = arith.constant 9 : index
    %c0_23 = arith.constant 0 : index
    %16 = vector.load %arg13[%c0_22, %c9, %c0_23] : memref<18x25x4xf32, #tpu.memory_space<vmem>>, vector<16x16x4xf32>
    %17 = vector.shape_cast %16 : vector<16x16x4xf32> to vector<256x4xf32>
    %c0_24 = arith.constant 0 : index
    %c2 = arith.constant 2 : index
    %c0_25 = arith.constant 0 : index
    %c0_26 = arith.constant 0 : index
    %18 = vector.load %arg2[%c0_24, %c2, %c0_25, %c0_26] : memref<3x3x4x8xf32, #tpu.memory_space<vmem>>, vector<1x1x4x8xf32>
    %19 = vector.shape_cast %18 : vector<1x1x4x8xf32> to vector<4x8xf32>
    %cst_27 = arith.constant dense<0.000000e+00> : vector<256x8xf32>
    %20 = tpu.matmul %17, %19, %cst_27 {dimension_numbers = #tpu.dot_dimension_numbers<[1], [0], [0], [1], [0, 0, 1, 1], [], []>} : vector<256x4xf32>, vector<4x8xf32>, vector<256x8xf32> -> vector<256x8xf32>
    %21 = arith.addf %15, %20 : vector<256x8xf32>
    %c1_28 = arith.constant 1 : index
    %c7_29 = arith.constant 7 : index
    %c0_30 = arith.constant 0 : index
    %22 = vector.load %arg13[%c1_28, %c7_29, %c0_30] : memref<18x25x4xf32, #tpu.memory_space<vmem>>, vector<16x16x4xf32>
    %23 = vector.shape_cast %22 : vector<16x16x4xf32> to vector<256x4xf32>
    %c1_31 = arith.constant 1 : index
    %c0_32 = arith.constant 0 : index
    %c0_33 = arith.constant 0 : index
    %c0_34 = arith.constant 0 : index
    %24 = vector.load %arg2[%c1_31, %c0_32, %c0_33, %c0_34] : memref<3x3x4x8xf32, #tpu.memory_space<vmem>>, vector<1x1x4x8xf32>
    %25 = vector.shape_cast %24 : vector<1x1x4x8xf32> to vector<4x8xf32>
    %cst_35 = arith.constant dense<0.000000e+00> : vector<256x8xf32>
    %26 = tpu.matmul %23, %25, %cst_35 {dimension_numbers = #tpu.dot_dimension_numbers<[1], [0], [0], [1], [0, 0, 1, 1], [], []>} : vector<256x4xf32>, vector<4x8xf32>, vector<256x8xf32> -> vector<256x8xf32>
    %27 = arith.addf %21, %26 : vector<256x8xf32>
    %c1_36 = arith.constant 1 : index
    %c8_37 = arith.constant 8 : index
    %c0_38 = arith.constant 0 : index
    %28 = vector.load %arg13[%c1_36, %c8_37, %c0_38] : memref<18x25x4xf32, #tpu.memory_space<vmem>>, vector<16x16x4xf32>
    %29 = vector.shape_cast %28 : vector<16x16x4xf32> to vector<256x4xf32>
    %c1_39 = arith.constant 1 : index
    %c1_40 = arith.constant 1 : index
    %c0_41 = arith.constant 0 : index
    %c0_42 = arith.constant 0 : index
    %30 = vector.load %arg2[%c1_39, %c1_40, %c0_41, %c0_42] : memref<3x3x4x8xf32, #tpu.memory_space<vmem>>, vector<1x1x4x8xf32>
    %31 = vector.shape_cast %30 : vector<1x1x4x8xf32> to vector<4x8xf32>
    %cst_43 = arith.constant dense<0.000000e+00> : vector<256x8xf32>
    %32 = tpu.matmul %29, %31, %cst_43 {dimension_numbers = #tpu.dot_dimension_numbers<[1], [0], [0], [1], [0, 0, 1, 1], [], []>} : vector<256x4xf32>, vector<4x8xf32>, vector<256x8xf32> -> vector<256x8xf32>
    %33 = arith.addf %27, %32 : vector<256x8xf32>
    %c1_44 = arith.constant 1 : index
    %c9_45 = arith.constant 9 : index
    %c0_46 = arith.constant 0 : index
    %34 = vector.load %arg13[%c1_44, %c9_45, %c0_46] : memref<18x25x4xf32, #tpu.memory_space<vmem>>, vector<16x16x4xf32>
    %35 = vector.shape_cast %34 : vector<16x16x4xf32> to vector<256x4xf32>
    %c1_47 = arith.constant 1 : index
    %c2_48 = arith.constant 2 : index
    %c0_49 = arith.constant 0 : index
    %c0_50 = arith.constant 0 : index
    %36 = vector.load %arg2[%c1_47, %c2_48, %c0_49, %c0_50] : memref<3x3x4x8xf32, #tpu.memory_space<vmem>>, vector<1x1x4x8xf32>
    %37 = vector.shape_cast %36 : vector<1x1x4x8xf32> to vector<4x8xf32>
    %cst_51 = arith.constant dense<0.000000e+00> : vector<256x8xf32>
    %38 = tpu.matmul %35, %37, %cst_51 {dimension_numbers = #tpu.dot_dimension_numbers<[1], [0], [0], [1], [0, 0, 1, 1], [], []>} : vector<256x4xf32>, vector<4x8xf32>, vector<256x8xf32> -> vector<256x8xf32>
    %39 = arith.addf %33, %38 : vector<256x8xf32>
    %c2_52 = arith.constant 2 : index
    %c7_53 = arith.constant 7 : index
    %c0_54 = arith.constant 0 : index
    %40 = vector.load %arg13[%c2_52, %c7_53, %c0_54] : memref<18x25x4xf32, #tpu.memory_space<vmem>>, vector<16x16x4xf32>
    %41 = vector.shape_cast %40 : vector<16x16x4xf32> to vector<256x4xf32>
    %c2_55 = arith.constant 2 : index
    %c0_56 = arith.constant 0 : index
    %c0_57 = arith.constant 0 : index
    %c0_58 = arith.constant 0 : index
    %42 = vector.load %arg2[%c2_55, %c0_56, %c0_57, %c0_58] : memref<3x3x4x8xf32, #tpu.memory_space<vmem>>, vector<1x1x4x8xf32>
    %43 = vector.shape_cast %42 : vector<1x1x4x8xf32> to vector<4x8xf32>
    %cst_59 = arith.constant dense<0.000000e+00> : vector<256x8xf32>
    %44 = tpu.matmul %41, %43, %cst_59 {dimension_numbers = #tpu.dot_dimension_numbers<[1], [0], [0], [1], [0, 0, 1, 1], [], []>} : vector<256x4xf32>, vector<4x8xf32>, vector<256x8xf32> -> vector<256x8xf32>
    %45 = arith.addf %39, %44 : vector<256x8xf32>
    %c2_60 = arith.constant 2 : index
    %c8_61 = arith.constant 8 : index
    %c0_62 = arith.constant 0 : index
    %46 = vector.load %arg13[%c2_60, %c8_61, %c0_62] : memref<18x25x4xf32, #tpu.memory_space<vmem>>, vector<16x16x4xf32>
    %47 = vector.shape_cast %46 : vector<16x16x4xf32> to vector<256x4xf32>
    %c2_63 = arith.constant 2 : index
    %c1_64 = arith.constant 1 : index
    %c0_65 = arith.constant 0 : index
    %c0_66 = arith.constant 0 : index
    %48 = vector.load %arg2[%c2_63, %c1_64, %c0_65, %c0_66] : memref<3x3x4x8xf32, #tpu.memory_space<vmem>>, vector<1x1x4x8xf32>
    %49 = vector.shape_cast %48 : vector<1x1x4x8xf32> to vector<4x8xf32>
    %cst_67 = arith.constant dense<0.000000e+00> : vector<256x8xf32>
    %50 = tpu.matmul %47, %49, %cst_67 {dimension_numbers = #tpu.dot_dimension_numbers<[1], [0], [0], [1], [0, 0, 1, 1], [], []>} : vector<256x4xf32>, vector<4x8xf32>, vector<256x8xf32> -> vector<256x8xf32>
    %51 = arith.addf %45, %50 : vector<256x8xf32>
    %c2_68 = arith.constant 2 : index
    %c9_69 = arith.constant 9 : index
    %c0_70 = arith.constant 0 : index
    %52 = vector.load %arg13[%c2_68, %c9_69, %c0_70] : memref<18x25x4xf32, #tpu.memory_space<vmem>>, vector<16x16x4xf32>
    %53 = vector.shape_cast %52 : vector<16x16x4xf32> to vector<256x4xf32>
    %c2_71 = arith.constant 2 : index
    %c2_72 = arith.constant 2 : index
    %c0_73 = arith.constant 0 : index
    %c0_74 = arith.constant 0 : index
    %54 = vector.load %arg2[%c2_71, %c2_72, %c0_73, %c0_74] : memref<3x3x4x8xf32, #tpu.memory_space<vmem>>, vector<1x1x4x8xf32>
    %55 = vector.shape_cast %54 : vector<1x1x4x8xf32> to vector<4x8xf32>
    %cst_75 = arith.constant dense<0.000000e+00> : vector<256x8xf32>
    %56 = tpu.matmul %53, %55, %cst_75 {dimension_numbers = #tpu.dot_dimension_numbers<[1], [0], [0], [1], [0, 0, 1, 1], [], []>} : vector<256x4xf32>, vector<4x8xf32>, vector<256x8xf32> -> vector<256x8xf32>
    %57 = arith.addf %51, %56 : vector<256x8xf32>
    %c0_76 = arith.constant 0 : index
    %c0_77 = arith.constant 0 : index
    %58 = vector.load %arg3[%c0_76, %c0_77] : memref<1x8xf32, #tpu.memory_space<vmem>>, vector<1x8xf32>
    %59 = vector.broadcast %58 : vector<1x8xf32> to vector<256x8xf32>
    %60 = arith.addf %57, %59 : vector<256x8xf32>
    %cst_78 = arith.constant 0.000000e+00 : f32
    %61 = vector.broadcast %cst_78 : f32 to vector<256x8xf32>
    %62 = arith.maximumf %60, %61 : vector<256x8xf32>
    %c0_79 = arith.constant 0 : index
    %c0_80 = arith.constant 0 : index
    %c0_81 = arith.constant 0 : index
    %63 = vector.load %arg10[%c0_79, %c0_80, %c0_81] : memref<4x64x256xf32, #tpu.memory_space<vmem>>, vector<1x64x256xf32>
    %64 = vector.shape_cast %63 : vector<1x64x256xf32> to vector<64x256xf32>
    %cst_82 = arith.constant dense<0.000000e+00> : vector<64x8xf32>
    %65 = tpu.matmul %64, %62, %cst_82 {dimension_numbers = #tpu.dot_dimension_numbers<[1], [0], [0], [1], [0, 0, 1, 1], [], []>} : vector<64x256xf32>, vector<256x8xf32>, vector<64x8xf32> -> vector<64x8xf32>
    %c1_83 = arith.constant 1 : index
    %c0_84 = arith.constant 0 : index
    %c0_85 = arith.constant 0 : index
    %66 = vector.load %arg10[%c1_83, %c0_84, %c0_85] : memref<4x64x256xf32, #tpu.memory_space<vmem>>, vector<1x64x256xf32>
    %67 = vector.shape_cast %66 : vector<1x64x256xf32> to vector<64x256xf32>
    %cst_86 = arith.constant dense<0.000000e+00> : vector<64x8xf32>
    %68 = tpu.matmul %67, %62, %cst_86 {dimension_numbers = #tpu.dot_dimension_numbers<[1], [0], [0], [1], [0, 0, 1, 1], [], []>} : vector<64x256xf32>, vector<256x8xf32>, vector<64x8xf32> -> vector<64x8xf32>
    %c2_87 = arith.constant 2 : index
    %c0_88 = arith.constant 0 : index
    %c0_89 = arith.constant 0 : index
    %69 = vector.load %arg10[%c2_87, %c0_88, %c0_89] : memref<4x64x256xf32, #tpu.memory_space<vmem>>, vector<1x64x256xf32>
    %70 = vector.shape_cast %69 : vector<1x64x256xf32> to vector<64x256xf32>
    %cst_90 = arith.constant dense<0.000000e+00> : vector<64x8xf32>
    %71 = tpu.matmul %70, %62, %cst_90 {dimension_numbers = #tpu.dot_dimension_numbers<[1], [0], [0], [1], [0, 0, 1, 1], [], []>} : vector<64x256xf32>, vector<256x8xf32>, vector<64x8xf32> -> vector<64x8xf32>
    %c3 = arith.constant 3 : index
    %c0_91 = arith.constant 0 : index
    %c0_92 = arith.constant 0 : index
    %72 = vector.load %arg10[%c3, %c0_91, %c0_92] : memref<4x64x256xf32, #tpu.memory_space<vmem>>, vector<1x64x256xf32>
    %73 = vector.shape_cast %72 : vector<1x64x256xf32> to vector<64x256xf32>
    %cst_93 = arith.constant dense<0.000000e+00> : vector<64x8xf32>
    %74 = tpu.matmul %73, %62, %cst_93 {dimension_numbers = #tpu.dot_dimension_numbers<[1], [0], [0], [1], [0, 0, 1, 1], [], []>} : vector<64x256xf32>, vector<256x8xf32>, vector<64x8xf32> -> vector<64x8xf32>
    %75 = arith.maximumf %65, %68 : vector<64x8xf32>
    %76 = arith.maximumf %71, %74 : vector<64x8xf32>
    %77 = arith.maximumf %75, %76 : vector<64x8xf32>
    %cst_94 = arith.constant 0.000000e+00 : f32
    %78 = vector.broadcast %cst_94 : f32 to vector<10x17x8xf32>
    %c0_95 = arith.constant 0 : index
    %c0_96 = arith.constant 0 : index
    %c0_97 = arith.constant 0 : index
    %79 = vector.load %arg14[%c0_95, %c0_96, %c0_97] : memref<10x17x8xf32, #tpu.memory_space<vmem>>, vector<10x17x8xf32>
    tpu.vector_store %arg14[%c0_95, %c0_96, %c0_97], %78 {strides = array<i32>} : memref<10x17x8xf32, #tpu.memory_space<vmem>>, vector<10x17x8xf32>,
    %80 = vector.shape_cast %77 : vector<64x8xf32> to vector<8x8x8xf32>
    %c1_98 = arith.constant 1 : index
    %c8_99 = arith.constant 8 : index
    %c0_100 = arith.constant 0 : index
    %81 = vector.load %arg14[%c1_98, %c8_99, %c0_100] : memref<10x17x8xf32, #tpu.memory_space<vmem>>, vector<8x8x8xf32>
    tpu.vector_store %arg14[%c1_98, %c8_99, %c0_100], %80 {strides = array<i32>} : memref<10x17x8xf32, #tpu.memory_space<vmem>>, vector<8x8x8xf32>,
    %c0_101 = arith.constant 0 : index
    %c7_102 = arith.constant 7 : index
    %c0_103 = arith.constant 0 : index
    %82 = vector.load %arg14[%c0_101, %c7_102, %c0_103] : memref<10x17x8xf32, #tpu.memory_space<vmem>>, vector<8x8x8xf32>
    %83 = vector.shape_cast %82 : vector<8x8x8xf32> to vector<64x8xf32>
    %c0_104 = arith.constant 0 : index
    %c0_105 = arith.constant 0 : index
    %c0_106 = arith.constant 0 : index
    %c0_107 = arith.constant 0 : index
    %84 = vector.load %arg4[%c0_104, %c0_105, %c0_106, %c0_107] : memref<3x3x8x16xf32, #tpu.memory_space<vmem>>, vector<1x1x8x16xf32>
    %85 = vector.shape_cast %84 : vector<1x1x8x16xf32> to vector<8x16xf32>
    %cst_108 = arith.constant dense<0.000000e+00> : vector<64x16xf32>
    %86 = tpu.matmul %83, %85, %cst_108 {dimension_numbers = #tpu.dot_dimension_numbers<[1], [0], [0], [1], [0, 0, 1, 1], [], []>} : vector<64x8xf32>, vector<8x16xf32>, vector<64x16xf32> -> vector<64x16xf32>
    %c0_109 = arith.constant 0 : index
    %c8_110 = arith.constant 8 : index
    %c0_111 = arith.constant 0 : index
    %87 = vector.load %arg14[%c0_109, %c8_110, %c0_111] : memref<10x17x8xf32, #tpu.memory_space<vmem>>, vector<8x8x8xf32>
    %88 = vector.shape_cast %87 : vector<8x8x8xf32> to vector<64x8xf32>
    %c0_112 = arith.constant 0 : index
    %c1_113 = arith.constant 1 : index
    %c0_114 = arith.constant 0 : index
    %c0_115 = arith.constant 0 : index
    %89 = vector.load %arg4[%c0_112, %c1_113, %c0_114, %c0_115] : memref<3x3x8x16xf32, #tpu.memory_space<vmem>>, vector<1x1x8x16xf32>
    %90 = vector.shape_cast %89 : vector<1x1x8x16xf32> to vector<8x16xf32>
    %cst_116 = arith.constant dense<0.000000e+00> : vector<64x16xf32>
    %91 = tpu.matmul %88, %90, %cst_116 {dimension_numbers = #tpu.dot_dimension_numbers<[1], [0], [0], [1], [0, 0, 1, 1], [], []>} : vector<64x8xf32>, vector<8x16xf32>, vector<64x16xf32> -> vector<64x16xf32>
    %92 = arith.addf %86, %91 : vector<64x16xf32>
    %c0_117 = arith.constant 0 : index
    %c9_118 = arith.constant 9 : index
    %c0_119 = arith.constant 0 : index
    %93 = vector.load %arg14[%c0_117, %c9_118, %c0_119] : memref<10x17x8xf32, #tpu.memory_space<vmem>>, vector<8x8x8xf32>
    %94 = vector.shape_cast %93 : vector<8x8x8xf32> to vector<64x8xf32>
    %c0_120 = arith.constant 0 : index
    %c2_121 = arith.constant 2 : index
    %c0_122 = arith.constant 0 : index
    %c0_123 = arith.constant 0 : index
    %95 = vector.load %arg4[%c0_120, %c2_121, %c0_122, %c0_123] : memref<3x3x8x16xf32, #tpu.memory_space<vmem>>, vector<1x1x8x16xf32>
    %96 = vector.shape_cast %95 : vector<1x1x8x16xf32> to vector<8x16xf32>
    %cst_124 = arith.constant dense<0.000000e+00> : vector<64x16xf32>
    %97 = tpu.matmul %94, %96, %cst_124 {dimension_numbers = #tpu.dot_dimension_numbers<[1], [0], [0], [1], [0, 0, 1, 1], [], []>} : vector<64x8xf32>, vector<8x16xf32>, vector<64x16xf32> -> vector<64x16xf32>
    %98 = arith.addf %92, %97 : vector<64x16xf32>
    %c1_125 = arith.constant 1 : index
    %c7_126 = arith.constant 7 : index
    %c0_127 = arith.constant 0 : index
    %99 = vector.load %arg14[%c1_125, %c7_126, %c0_127] : memref<10x17x8xf32, #tpu.memory_space<vmem>>, vector<8x8x8xf32>
    %100 = vector.shape_cast %99 : vector<8x8x8xf32> to vector<64x8xf32>
    %c1_128 = arith.constant 1 : index
    %c0_129 = arith.constant 0 : index
    %c0_130 = arith.constant 0 : index
    %c0_131 = arith.constant 0 : index
    %101 = vector.load %arg4[%c1_128, %c0_129, %c0_130, %c0_131] : memref<3x3x8x16xf32, #tpu.memory_space<vmem>>, vector<1x1x8x16xf32>
    %102 = vector.shape_cast %101 : vector<1x1x8x16xf32> to vector<8x16xf32>
    %cst_132 = arith.constant dense<0.000000e+00> : vector<64x16xf32>
    %103 = tpu.matmul %100, %102, %cst_132 {dimension_numbers = #tpu.dot_dimension_numbers<[1], [0], [0], [1], [0, 0, 1, 1], [], []>} : vector<64x8xf32>, vector<8x16xf32>, vector<64x16xf32> -> vector<64x16xf32>
    %104 = arith.addf %98, %103 : vector<64x16xf32>
    %c1_133 = arith.constant 1 : index
    %c8_134 = arith.constant 8 : index
    %c0_135 = arith.constant 0 : index
    %105 = vector.load %arg14[%c1_133, %c8_134, %c0_135] : memref<10x17x8xf32, #tpu.memory_space<vmem>>, vector<8x8x8xf32>
    %106 = vector.shape_cast %105 : vector<8x8x8xf32> to vector<64x8xf32>
    %c1_136 = arith.constant 1 : index
    %c1_137 = arith.constant 1 : index
    %c0_138 = arith.constant 0 : index
    %c0_139 = arith.constant 0 : index
    %107 = vector.load %arg4[%c1_136, %c1_137, %c0_138, %c0_139] : memref<3x3x8x16xf32, #tpu.memory_space<vmem>>, vector<1x1x8x16xf32>
    %108 = vector.shape_cast %107 : vector<1x1x8x16xf32> to vector<8x16xf32>
    %cst_140 = arith.constant dense<0.000000e+00> : vector<64x16xf32>
    %109 = tpu.matmul %106, %108, %cst_140 {dimension_numbers = #tpu.dot_dimension_numbers<[1], [0], [0], [1], [0, 0, 1, 1], [], []>} : vector<64x8xf32>, vector<8x16xf32>, vector<64x16xf32> -> vector<64x16xf32>
    %110 = arith.addf %104, %109 : vector<64x16xf32>
    %c1_141 = arith.constant 1 : index
    %c9_142 = arith.constant 9 : index
    %c0_143 = arith.constant 0 : index
    %111 = vector.load %arg14[%c1_141, %c9_142, %c0_143] : memref<10x17x8xf32, #tpu.memory_space<vmem>>, vector<8x8x8xf32>
    %112 = vector.shape_cast %111 : vector<8x8x8xf32> to vector<64x8xf32>
    %c1_144 = arith.constant 1 : index
    %c2_145 = arith.constant 2 : index
    %c0_146 = arith.constant 0 : index
    %c0_147 = arith.constant 0 : index
    %113 = vector.load %arg4[%c1_144, %c2_145, %c0_146, %c0_147] : memref<3x3x8x16xf32, #tpu.memory_space<vmem>>, vector<1x1x8x16xf32>
    %114 = vector.shape_cast %113 : vector<1x1x8x16xf32> to vector<8x16xf32>
    %cst_148 = arith.constant dense<0.000000e+00> : vector<64x16xf32>
    %115 = tpu.matmul %112, %114, %cst_148 {dimension_numbers = #tpu.dot_dimension_numbers<[1], [0], [0], [1], [0, 0, 1, 1], [], []>} : vector<64x8xf32>, vector<8x16xf32>, vector<64x16xf32> -> vector<64x16xf32>
    %116 = arith.addf %110, %115 : vector<64x16xf32>
    %c2_149 = arith.constant 2 : index
    %c7_150 = arith.constant 7 : index
    %c0_151 = arith.constant 0 : index
    %117 = vector.load %arg14[%c2_149, %c7_150, %c0_151] : memref<10x17x8xf32, #tpu.memory_space<vmem>>, vector<8x8x8xf32>
    %118 = vector.shape_cast %117 : vector<8x8x8xf32> to vector<64x8xf32>
    %c2_152 = arith.constant 2 : index
    %c0_153 = arith.constant 0 : index
    %c0_154 = arith.constant 0 : index
    %c0_155 = arith.constant 0 : index
    %119 = vector.load %arg4[%c2_152, %c0_153, %c0_154, %c0_155] : memref<3x3x8x16xf32, #tpu.memory_space<vmem>>, vector<1x1x8x16xf32>
    %120 = vector.shape_cast %119 : vector<1x1x8x16xf32> to vector<8x16xf32>
    %cst_156 = arith.constant dense<0.000000e+00> : vector<64x16xf32>
    %121 = tpu.matmul %118, %120, %cst_156 {dimension_numbers = #tpu.dot_dimension_numbers<[1], [0], [0], [1], [0, 0, 1, 1], [], []>} : vector<64x8xf32>, vector<8x16xf32>, vector<64x16xf32> -> vector<64x16xf32>
    %122 = arith.addf %116, %121 : vector<64x16xf32>
    %c2_157 = arith.constant 2 : index
    %c8_158 = arith.constant 8 : index
    %c0_159 = arith.constant 0 : index
    %123 = vector.load %arg14[%c2_157, %c8_158, %c0_159] : memref<10x17x8xf32, #tpu.memory_space<vmem>>, vector<8x8x8xf32>
    %124 = vector.shape_cast %123 : vector<8x8x8xf32> to vector<64x8xf32>
    %c2_160 = arith.constant 2 : index
    %c1_161 = arith.constant 1 : index
    %c0_162 = arith.constant 0 : index
    %c0_163 = arith.constant 0 : index
    %125 = vector.load %arg4[%c2_160, %c1_161, %c0_162, %c0_163] : memref<3x3x8x16xf32, #tpu.memory_space<vmem>>, vector<1x1x8x16xf32>
    %126 = vector.shape_cast %125 : vector<1x1x8x16xf32> to vector<8x16xf32>
    %cst_164 = arith.constant dense<0.000000e+00> : vector<64x16xf32>
    %127 = tpu.matmul %124, %126, %cst_164 {dimension_numbers = #tpu.dot_dimension_numbers<[1], [0], [0], [1], [0, 0, 1, 1], [], []>} : vector<64x8xf32>, vector<8x16xf32>, vector<64x16xf32> -> vector<64x16xf32>
    %128 = arith.addf %122, %127 : vector<64x16xf32>
    %c2_165 = arith.constant 2 : index
    %c9_166 = arith.constant 9 : index
    %c0_167 = arith.constant 0 : index
    %129 = vector.load %arg14[%c2_165, %c9_166, %c0_167] : memref<10x17x8xf32, #tpu.memory_space<vmem>>, vector<8x8x8xf32>
    %130 = vector.shape_cast %129 : vector<8x8x8xf32> to vector<64x8xf32>
    %c2_168 = arith.constant 2 : index
    %c2_169 = arith.constant 2 : index
    %c0_170 = arith.constant 0 : index
    %c0_171 = arith.constant 0 : index
    %131 = vector.load %arg4[%c2_168, %c2_169, %c0_170, %c0_171] : memref<3x3x8x16xf32, #tpu.memory_space<vmem>>, vector<1x1x8x16xf32>
    %132 = vector.shape_cast %131 : vector<1x1x8x16xf32> to vector<8x16xf32>
    %cst_172 = arith.constant dense<0.000000e+00> : vector<64x16xf32>
    %133 = tpu.matmul %130, %132, %cst_172 {dimension_numbers = #tpu.dot_dimension_numbers<[1], [0], [0], [1], [0, 0, 1, 1], [], []>} : vector<64x8xf32>, vector<8x16xf32>, vector<64x16xf32> -> vector<64x16xf32>
    %134 = arith.addf %128, %133 : vector<64x16xf32>
    %c0_173 = arith.constant 0 : index
    %c0_174 = arith.constant 0 : index
    %135 = vector.load %arg5[%c0_173, %c0_174] : memref<1x16xf32, #tpu.memory_space<vmem>>, vector<1x16xf32>
    %136 = vector.broadcast %135 : vector<1x16xf32> to vector<64x16xf32>
    %137 = arith.addf %134, %136 : vector<64x16xf32>
    %cst_175 = arith.constant 0.000000e+00 : f32
    %138 = vector.broadcast %cst_175 : f32 to vector<64x16xf32>
    %139 = arith.maximumf %137, %138 : vector<64x16xf32>
    %c0_176 = arith.constant 0 : index
    %c0_177 = arith.constant 0 : index
    %140 = vector.load %arg11[%c0_176, %c0_177] : memref<256x64xf32, #tpu.memory_space<vmem>>, vector<256x64xf32>
    %cst_178 = arith.constant dense<0.000000e+00> : vector<256x16xf32>
    %141 = tpu.matmul %140, %139, %cst_178 {dimension_numbers = #tpu.dot_dimension_numbers<[1], [0], [0], [1], [0, 0, 1, 1], [], []>} : vector<256x64xf32>, vector<64x16xf32>, vector<256x16xf32> -> vector<256x16xf32>
    %cst_179 = arith.constant 0.000000e+00 : f32
    %142 = vector.broadcast %cst_179 : f32 to vector<18x25x24xf32>
    %c0_180 = arith.constant 0 : index
    %c0_181 = arith.constant 0 : index
    %c0_182 = arith.constant 0 : index
    %143 = vector.load %arg15[%c0_180, %c0_181, %c0_182] : memref<18x25x24xf32, #tpu.memory_space<vmem>>, vector<18x25x24xf32>
    tpu.vector_store %arg15[%c0_180, %c0_181, %c0_182], %142 {strides = array<i32>} : memref<18x25x24xf32, #tpu.memory_space<vmem>>, vector<18x25x24xf32>,
    %144 = vector.shape_cast %141 : vector<256x16xf32> to vector<16x16x16xf32>
    %c1_183 = arith.constant 1 : index
    %c8_184 = arith.constant 8 : index
    %c0_185 = arith.constant 0 : index
    %145 = vector.load %arg15[%c1_183, %c8_184, %c0_185] : memref<18x25x24xf32, #tpu.memory_space<vmem>>, vector<16x16x16xf32>
    tpu.vector_store %arg15[%c1_183, %c8_184, %c0_185], %144 {strides = array<i32>} : memref<18x25x24xf32, #tpu.memory_space<vmem>>, vector<16x16x16xf32>,
    %146 = vector.shape_cast %62 : vector<256x8xf32> to vector<16x16x8xf32>
    %c1_186 = arith.constant 1 : index
    %c8_187 = arith.constant 8 : index
    %c16 = arith.constant 16 : index
    %147 = vector.load %arg15[%c1_186, %c8_187, %c16] : memref<18x25x24xf32, #tpu.memory_space<vmem>>, vector<16x16x8xf32>
    tpu.vector_store %arg15[%c1_186, %c8_187, %c16], %146 {strides = array<i32>} : memref<18x25x24xf32, #tpu.memory_space<vmem>>, vector<16x16x8xf32>,
    %c0_188 = arith.constant 0 : index
    %c7_189 = arith.constant 7 : index
    %c0_190 = arith.constant 0 : index
    %148 = vector.load %arg15[%c0_188, %c7_189, %c0_190] : memref<18x25x24xf32, #tpu.memory_space<vmem>>, vector<16x16x24xf32>
    %149 = vector.shape_cast %148 : vector<16x16x24xf32> to vector<256x24xf32>
    %c0_191 = arith.constant 0 : index
    %c0_192 = arith.constant 0 : index
    %c0_193 = arith.constant 0 : index
    %c0_194 = arith.constant 0 : index
    %150 = vector.load %arg6[%c0_191, %c0_192, %c0_193, %c0_194] : memref<3x3x24x8xf32, #tpu.memory_space<vmem>>, vector<1x1x24x8xf32>
    %151 = vector.shape_cast %150 : vector<1x1x24x8xf32> to vector<24x8xf32>
    %cst_195 = arith.constant dense<0.000000e+00> : vector<256x8xf32>
    %152 = tpu.matmul %149, %151, %cst_195 {dimension_numbers = #tpu.dot_dimension_numbers<[1], [0], [0], [1], [0, 0, 1, 1], [], []>} : vector<256x24xf32>, vector<24x8xf32>, vector<256x8xf32> -> vector<256x8xf32>
    %c0_196 = arith.constant 0 : index
    %c8_197 = arith.constant 8 : index
    %c0_198 = arith.constant 0 : index
    %153 = vector.load %arg15[%c0_196, %c8_197, %c0_198] : memref<18x25x24xf32, #tpu.memory_space<vmem>>, vector<16x16x24xf32>
    %154 = vector.shape_cast %153 : vector<16x16x24xf32> to vector<256x24xf32>
    %c0_199 = arith.constant 0 : index
    %c1_200 = arith.constant 1 : index
    %c0_201 = arith.constant 0 : index
    %c0_202 = arith.constant 0 : index
    %155 = vector.load %arg6[%c0_199, %c1_200, %c0_201, %c0_202] : memref<3x3x24x8xf32, #tpu.memory_space<vmem>>, vector<1x1x24x8xf32>
    %156 = vector.shape_cast %155 : vector<1x1x24x8xf32> to vector<24x8xf32>
    %cst_203 = arith.constant dense<0.000000e+00> : vector<256x8xf32>
    %157 = tpu.matmul %154, %156, %cst_203 {dimension_numbers = #tpu.dot_dimension_numbers<[1], [0], [0], [1], [0, 0, 1, 1], [], []>} : vector<256x24xf32>, vector<24x8xf32>, vector<256x8xf32> -> vector<256x8xf32>
    %158 = arith.addf %152, %157 : vector<256x8xf32>
    %c0_204 = arith.constant 0 : index
    %c9_205 = arith.constant 9 : index
    %c0_206 = arith.constant 0 : index
    %159 = vector.load %arg15[%c0_204, %c9_205, %c0_206] : memref<18x25x24xf32, #tpu.memory_space<vmem>>, vector<16x16x24xf32>
    %160 = vector.shape_cast %159 : vector<16x16x24xf32> to vector<256x24xf32>
    %c0_207 = arith.constant 0 : index
    %c2_208 = arith.constant 2 : index
    %c0_209 = arith.constant 0 : index
    %c0_210 = arith.constant 0 : index
    %161 = vector.load %arg6[%c0_207, %c2_208, %c0_209, %c0_210] : memref<3x3x24x8xf32, #tpu.memory_space<vmem>>, vector<1x1x24x8xf32>
    %162 = vector.shape_cast %161 : vector<1x1x24x8xf32> to vector<24x8xf32>
    %cst_211 = arith.constant dense<0.000000e+00> : vector<256x8xf32>
    %163 = tpu.matmul %160, %162, %cst_211 {dimension_numbers = #tpu.dot_dimension_numbers<[1], [0], [0], [1], [0, 0, 1, 1], [], []>} : vector<256x24xf32>, vector<24x8xf32>, vector<256x8xf32> -> vector<256x8xf32>
    %164 = arith.addf %158, %163 : vector<256x8xf32>
    %c1_212 = arith.constant 1 : index
    %c7_213 = arith.constant 7 : index
    %c0_214 = arith.constant 0 : index
    %165 = vector.load %arg15[%c1_212, %c7_213, %c0_214] : memref<18x25x24xf32, #tpu.memory_space<vmem>>, vector<16x16x24xf32>
    %166 = vector.shape_cast %165 : vector<16x16x24xf32> to vector<256x24xf32>
    %c1_215 = arith.constant 1 : index
    %c0_216 = arith.constant 0 : index
    %c0_217 = arith.constant 0 : index
    %c0_218 = arith.constant 0 : index
    %167 = vector.load %arg6[%c1_215, %c0_216, %c0_217, %c0_218] : memref<3x3x24x8xf32, #tpu.memory_space<vmem>>, vector<1x1x24x8xf32>
    %168 = vector.shape_cast %167 : vector<1x1x24x8xf32> to vector<24x8xf32>
    %cst_219 = arith.constant dense<0.000000e+00> : vector<256x8xf32>
    %169 = tpu.matmul %166, %168, %cst_219 {dimension_numbers = #tpu.dot_dimension_numbers<[1], [0], [0], [1], [0, 0, 1, 1], [], []>} : vector<256x24xf32>, vector<24x8xf32>, vector<256x8xf32> -> vector<256x8xf32>
    %170 = arith.addf %164, %169 : vector<256x8xf32>
    %c1_220 = arith.constant 1 : index
    %c8_221 = arith.constant 8 : index
    %c0_222 = arith.constant 0 : index
    %171 = vector.load %arg15[%c1_220, %c8_221, %c0_222] : memref<18x25x24xf32, #tpu.memory_space<vmem>>, vector<16x16x24xf32>
    %172 = vector.shape_cast %171 : vector<16x16x24xf32> to vector<256x24xf32>
    %c1_223 = arith.constant 1 : index
    %c1_224 = arith.constant 1 : index
    %c0_225 = arith.constant 0 : index
    %c0_226 = arith.constant 0 : index
    %173 = vector.load %arg6[%c1_223, %c1_224, %c0_225, %c0_226] : memref<3x3x24x8xf32, #tpu.memory_space<vmem>>, vector<1x1x24x8xf32>
    %174 = vector.shape_cast %173 : vector<1x1x24x8xf32> to vector<24x8xf32>
    %cst_227 = arith.constant dense<0.000000e+00> : vector<256x8xf32>
    %175 = tpu.matmul %172, %174, %cst_227 {dimension_numbers = #tpu.dot_dimension_numbers<[1], [0], [0], [1], [0, 0, 1, 1], [], []>} : vector<256x24xf32>, vector<24x8xf32>, vector<256x8xf32> -> vector<256x8xf32>
    %176 = arith.addf %170, %175 : vector<256x8xf32>
    %c1_228 = arith.constant 1 : index
    %c9_229 = arith.constant 9 : index
    %c0_230 = arith.constant 0 : index
    %177 = vector.load %arg15[%c1_228, %c9_229, %c0_230] : memref<18x25x24xf32, #tpu.memory_space<vmem>>, vector<16x16x24xf32>
    %178 = vector.shape_cast %177 : vector<16x16x24xf32> to vector<256x24xf32>
    %c1_231 = arith.constant 1 : index
    %c2_232 = arith.constant 2 : index
    %c0_233 = arith.constant 0 : index
    %c0_234 = arith.constant 0 : index
    %179 = vector.load %arg6[%c1_231, %c2_232, %c0_233, %c0_234] : memref<3x3x24x8xf32, #tpu.memory_space<vmem>>, vector<1x1x24x8xf32>
    %180 = vector.shape_cast %179 : vector<1x1x24x8xf32> to vector<24x8xf32>
    %cst_235 = arith.constant dense<0.000000e+00> : vector<256x8xf32>
    %181 = tpu.matmul %178, %180, %cst_235 {dimension_numbers = #tpu.dot_dimension_numbers<[1], [0], [0], [1], [0, 0, 1, 1], [], []>} : vector<256x24xf32>, vector<24x8xf32>, vector<256x8xf32> -> vector<256x8xf32>
    %182 = arith.addf %176, %181 : vector<256x8xf32>
    %c2_236 = arith.constant 2 : index
    %c7_237 = arith.constant 7 : index
    %c0_238 = arith.constant 0 : index
    %183 = vector.load %arg15[%c2_236, %c7_237, %c0_238] : memref<18x25x24xf32, #tpu.memory_space<vmem>>, vector<16x16x24xf32>
    %184 = vector.shape_cast %183 : vector<16x16x24xf32> to vector<256x24xf32>
    %c2_239 = arith.constant 2 : index
    %c0_240 = arith.constant 0 : index
    %c0_241 = arith.constant 0 : index
    %c0_242 = arith.constant 0 : index
    %185 = vector.load %arg6[%c2_239, %c0_240, %c0_241, %c0_242] : memref<3x3x24x8xf32, #tpu.memory_space<vmem>>, vector<1x1x24x8xf32>
    %186 = vector.shape_cast %185 : vector<1x1x24x8xf32> to vector<24x8xf32>
    %cst_243 = arith.constant dense<0.000000e+00> : vector<256x8xf32>
    %187 = tpu.matmul %184, %186, %cst_243 {dimension_numbers = #tpu.dot_dimension_numbers<[1], [0], [0], [1], [0, 0, 1, 1], [], []>} : vector<256x24xf32>, vector<24x8xf32>, vector<256x8xf32> -> vector<256x8xf32>
    %188 = arith.addf %182, %187 : vector<256x8xf32>
    %c2_244 = arith.constant 2 : index
    %c8_245 = arith.constant 8 : index
    %c0_246 = arith.constant 0 : index
    %189 = vector.load %arg15[%c2_244, %c8_245, %c0_246] : memref<18x25x24xf32, #tpu.memory_space<vmem>>, vector<16x16x24xf32>
    %190 = vector.shape_cast %189 : vector<16x16x24xf32> to vector<256x24xf32>
    %c2_247 = arith.constant 2 : index
    %c1_248 = arith.constant 1 : index
    %c0_249 = arith.constant 0 : index
    %c0_250 = arith.constant 0 : index
    %191 = vector.load %arg6[%c2_247, %c1_248, %c0_249, %c0_250] : memref<3x3x24x8xf32, #tpu.memory_space<vmem>>, vector<1x1x24x8xf32>
    %192 = vector.shape_cast %191 : vector<1x1x24x8xf32> to vector<24x8xf32>
    %cst_251 = arith.constant dense<0.000000e+00> : vector<256x8xf32>
    %193 = tpu.matmul %190, %192, %cst_251 {dimension_numbers = #tpu.dot_dimension_numbers<[1], [0], [0], [1], [0, 0, 1, 1], [], []>} : vector<256x24xf32>, vector<24x8xf32>, vector<256x8xf32> -> vector<256x8xf32>
    %194 = arith.addf %188, %193 : vector<256x8xf32>
    %c2_252 = arith.constant 2 : index
    %c9_253 = arith.constant 9 : index
    %c0_254 = arith.constant 0 : index
    %195 = vector.load %arg15[%c2_252, %c9_253, %c0_254] : memref<18x25x24xf32, #tpu.memory_space<vmem>>, vector<16x16x24xf32>
    %196 = vector.shape_cast %195 : vector<16x16x24xf32> to vector<256x24xf32>
    %c2_255 = arith.constant 2 : index
    %c2_256 = arith.constant 2 : index
    %c0_257 = arith.constant 0 : index
    %c0_258 = arith.constant 0 : index
    %197 = vector.load %arg6[%c2_255, %c2_256, %c0_257, %c0_258] : memref<3x3x24x8xf32, #tpu.memory_space<vmem>>, vector<1x1x24x8xf32>
    %198 = vector.shape_cast %197 : vector<1x1x24x8xf32> to vector<24x8xf32>
    %cst_259 = arith.constant dense<0.000000e+00> : vector<256x8xf32>
    %199 = tpu.matmul %196, %198, %cst_259 {dimension_numbers = #tpu.dot_dimension_numbers<[1], [0], [0], [1], [0, 0, 1, 1], [], []>} : vector<256x24xf32>, vector<24x8xf32>, vector<256x8xf32> -> vector<256x8xf32>
    %200 = arith.addf %194, %199 : vector<256x8xf32>
    %c0_260 = arith.constant 0 : index
    %c0_261 = arith.constant 0 : index
    %201 = vector.load %arg7[%c0_260, %c0_261] : memref<1x8xf32, #tpu.memory_space<vmem>>, vector<1x8xf32>
    %202 = vector.broadcast %201 : vector<1x8xf32> to vector<256x8xf32>
    %203 = arith.addf %200, %202 : vector<256x8xf32>
    %cst_262 = arith.constant 0.000000e+00 : f32
    %204 = vector.broadcast %cst_262 : f32 to vector<256x8xf32>
    %205 = arith.maximumf %203, %204 : vector<256x8xf32>
    %c0_263 = arith.constant 0 : index
    %c0_264 = arith.constant 0 : index
    %206 = vector.load %arg8[%c0_263, %c0_264] : memref<1x8xf32, #tpu.memory_space<vmem>>, vector<1x8xf32>
    %cst_265 = arith.constant dense<0.000000e+00> : vector<1x256xf32>
    %207 = tpu.matmul %206, %205, %cst_265 {dimension_numbers = #tpu.dot_dimension_numbers<[1], [1], [0], [0], [0, 0, 1, 0], [], []>} : vector<1x8xf32>, vector<256x8xf32>, vector<1x256xf32> -> vector<1x256xf32>
    %c0_266 = arith.constant 0 : index
    %c0_267 = arith.constant 0 : index
    %208 = vector.load %arg9[%c0_266, %c0_267] : memref<1x1xf32, #tpu.memory_space<vmem>>, vector<1x1xf32>
    %209 = vector.broadcast %208 : vector<1x1xf32> to vector<1x256xf32>
    %210 = arith.addf %207, %209 : vector<1x256xf32>
    %cst_268 = arith.constant 0.000000e+00 : f32
    %211 = vector.broadcast %cst_268 : f32 to vector<1x256xf32>
    %212 = arith.subf %211, %210 : vector<1x256xf32>
    %213 = math.exp %212 : vector<1x256xf32>
    %cst_269 = arith.constant 1.000000e+00 : f32
    %214 = vector.broadcast %cst_269 : f32 to vector<1x256xf32>
    %215 = arith.addf %214, %213 : vector<1x256xf32>
    %cst_270 = arith.constant 1.000000e+00 : f32
    %216 = vector.broadcast %cst_270 : f32 to vector<1x256xf32>
    %217 = arith.divf %216, %215 : vector<1x256xf32>
    %218 = vector.shape_cast %217 : vector<1x256xf32> to vector<1x1x256xf32>
    %c0_271 = arith.constant 0 : index
    %c0_272 = arith.constant 0 : index
    %c0_273 = arith.constant 0 : index
    %219 = vector.load %arg12[%c0_271, %c0_272, %c0_273] : memref<1x1x256xf32, #tpu.memory_space<vmem>>, vector<1x1x256xf32>
    tpu.vector_store %arg12[%c0_271, %c0_272, %c0_273], %218 {strides = array<i32>} : memref<1x1x256xf32, #tpu.memory_space<vmem>>, vector<1x1x256xf32>,
    return
  }
  func.func @transform_0(%arg0: i32) -> (i32, i32, i32, i32) {
    %c0_i32 = arith.constant 0 : i32
    %c0_i32_0 = arith.constant 0 : i32
    %c0_i32_1 = arith.constant 0 : i32
    %c0_i32_2 = arith.constant 0 : i32
    return %arg0, %c0_i32, %c0_i32_0, %c0_i32_1 : i32, i32, i32, i32
  }
  func.func @transform_1(%arg0: i32) -> (i32, i32, i32, i32) {
    %c0_i32 = arith.constant 0 : i32
    %c0_i32_0 = arith.constant 0 : i32
    %c0_i32_1 = arith.constant 0 : i32
    %c0_i32_2 = arith.constant 0 : i32
    %c0_i32_3 = arith.constant 0 : i32
    return %c0_i32, %c0_i32_0, %c0_i32_1, %c0_i32_2 : i32, i32, i32, i32
  }
  func.func @transform_2(%arg0: i32) -> (i32, i32) {
    %c0_i32 = arith.constant 0 : i32
    %c0_i32_0 = arith.constant 0 : i32
    %c0_i32_1 = arith.constant 0 : i32
    return %c0_i32, %c0_i32_0 : i32, i32
  }
  func.func @transform_3(%arg0: i32) -> (i32, i32, i32, i32) {
    %c0_i32 = arith.constant 0 : i32
    %c0_i32_0 = arith.constant 0 : i32
    %c0_i32_1 = arith.constant 0 : i32
    %c0_i32_2 = arith.constant 0 : i32
    %c0_i32_3 = arith.constant 0 : i32
    return %c0_i32, %c0_i32_0, %c0_i32_1, %c0_i32_2 : i32, i32, i32, i32
  }
  func.func @transform_4(%arg0: i32) -> (i32, i32) {
    %c0_i32 = arith.constant 0 : i32
    %c0_i32_0 = arith.constant 0 : i32
    %c0_i32_1 = arith.constant 0 : i32
    return %c0_i32, %c0_i32_0 : i32, i32
  }
  func.func @transform_5(%arg0: i32) -> (i32, i32, i32, i32) {
    %c0_i32 = arith.constant 0 : i32
    %c0_i32_0 = arith.constant 0 : i32
    %c0_i32_1 = arith.constant 0 : i32
    %c0_i32_2 = arith.constant 0 : i32
    %c0_i32_3 = arith.constant 0 : i32
    return %c0_i32, %c0_i32_0, %c0_i32_1, %c0_i32_2 : i32, i32, i32, i32
  }
  func.func @transform_6(%arg0: i32) -> (i32, i32) {
    %c0_i32 = arith.constant 0 : i32
    %c0_i32_0 = arith.constant 0 : i32
    %c0_i32_1 = arith.constant 0 : i32
    return %c0_i32, %c0_i32_0 : i32, i32
  }
  func.func @transform_7(%arg0: i32) -> (i32, i32) {
    %c0_i32 = arith.constant 0 : i32
    %c0_i32_0 = arith.constant 0 : i32
    %c0_i32_1 = arith.constant 0 : i32
    return %c0_i32, %c0_i32_0 : i32, i32
  }
  func.func @transform_8(%arg0: i32) -> (i32, i32) {
    %c0_i32 = arith.constant 0 : i32
    %c0_i32_0 = arith.constant 0 : i32
    %c0_i32_1 = arith.constant 0 : i32
    return %c0_i32, %c0_i32_0 : i32, i32
  }
  func.func @transform_9(%arg0: i32) -> (i32, i32, i32) {
    %c0_i32 = arith.constant 0 : i32
    %c0_i32_0 = arith.constant 0 : i32
    %c0_i32_1 = arith.constant 0 : i32
    %c0_i32_2 = arith.constant 0 : i32
    return %c0_i32, %c0_i32_0, %c0_i32_1 : i32, i32, i32
  }
  func.func @transform_10(%arg0: i32) -> (i32, i32) {
    %c0_i32 = arith.constant 0 : i32
    %c0_i32_0 = arith.constant 0 : i32
    %c0_i32_1 = arith.constant 0 : i32
    return %c0_i32, %c0_i32_0 : i32, i32
  }
  func.func @transform_11(%arg0: i32) -> (i32, i32, i32) {
    %c0_i32 = arith.constant 0 : i32
    %c0_i32_0 = arith.constant 0 : i32
    %c0_i32_1 = arith.constant 0 : i32
    return %arg0, %c0_i32, %c0_i32_0 : i32, i32, i32
  }
}

</mosaic_0001>

<llo_original>
// kernel: unet_segmenter_forward.1
$region0: #{unet_segmenter_forward.1}
  #allocation0 [shape = 'u32[]', space=smem, size = 0x4, offset = 0x4, fixed_abs, tag = 'smem constant byte address 0x4 - core index']
  #allocation1 [shape = 'u32[144,128]{1,0:T(1,128)}', space=vmem, size = 0x12000, scoped, tag = 'internal scratch']
  #allocation2 [shape = 'f32[18,25,4]{2,1,0:T(8,128)}', space=vmem, size = 0x48000, scoped, tag = 'scratch operand']
  #allocation3 [shape = 'f32[10,17,8]{2,1,0:T(8,128)}', space=vmem, size = 0x1e000, scoped, tag = 'scratch operand']
  #allocation4 [shape = 'f32[18,25,24]{2,1,0:T(8,128)}', space=vmem, size = 0x48000, scoped, tag = 'scratch operand']
  #allocation5 [shape = 'f32[1,1]{1,0:T(1,128)S(1)}', space=vmem, size = 0x200, scoped, tag = 'scoped memory for unet_segmenter_forward.1']
  %s0 = inlined_call_operand.vmem [shape: f32[2,16,16,4], index: 0, kind: input, shape index: {}]
  %s1 = inlined_call_operand.vmem [shape: f32[3,3,4,8], index: 1, kind: input, shape index: {}]
  %s2 = inlined_call_operand.vmem [shape: f32[1,8], index: 2, kind: input, shape index: {}]
  %s3 = inlined_call_operand.vmem [shape: f32[3,3,8,16], index: 3, kind: input, shape index: {}]
  %s4 = inlined_call_operand.vmem [shape: f32[1,16], index: 4, kind: input, shape index: {}]
  %s5 = inlined_call_operand.hbm [shape: f32[3,3,24,8], index: 5, kind: input, shape index: {}]
  %s6 = inlined_call_operand.vmem [shape: f32[1,8], index: 6, kind: input, shape index: {}]
  %s7 = inlined_call_operand.vmem [shape: f32[1,8], index: 7, kind: input, shape index: {}]
  %s8 = inlined_call_operand.<no memory space> [shape: f32[1,1], index: 8, kind: input, shape index: {}]
  %s9 = inlined_call_operand.vmem [shape: f32[4,64,256], index: 9, kind: input, shape index: {}]
  %s10 = inlined_call_operand.hbm [shape: f32[256,64], index: 10, kind: input, shape index: {}]
  %s11 = inlined_call_operand.vmem [shape: f32[2,1,256], index: 11, kind: output, shape index: {}]
  %s12 = sld [smem:[#allocation0]]
  $region85: #{unet_segmenter_forward.1} parent=0
    _
  %s14 = ssub.s32 1, %s12
  %s15 = scalar_select 0, %s14, %s12
  %v16 = vstv %s8
  %17 = vst [vmem:[#allocation5] sm:$0x1] %v16
  $region1: #{unet_segmenter_forward.1} parent=0
    #allocation6 [shape = 'u8[110592]{0}', space=vmem, size = 0x1b000, scoped, tag = 'input window, operand 5, single buffered']
    #allocation7 [shape = 's32[2]{0}', space=sflag, size = 0x8, scoped, tag = 'scoped memory for unet_segmenter_forward.1']
    #allocation8 [shape = 'u8[131072]{0}', space=vmem, size = 0x20000, scoped, tag = 'input window, operand 10, single buffered']
    #allocation9 [shape = 's32[1]{0}', space=sflag, size = 0x4, scoped, tag = 'scoped memory for unet_segmenter_forward.1']
    %18 = vsyncpa [#allocation7], 0
    %19 = vsyncpa [#allocation9], 0
    loop: start=0, step=1, limit=4
    $region2: #{unet_segmenter_forward.1} parent=1 // loop_pre_header
      _
    $region3: #{unet_segmenter_forward.1} parent=1 // loop_header
      %s21 = sphi 0, %s25
      %p22 = scmp.ge.s32.totalorder %s21, 4
      %s31 = sphi 0, %s33
      %s34 = sphi 0, %s31
      %s35 = sphi 0, %s34
      %s51 = sphi 0, %s35
      %s55 = sphi 0, %s55
      %s57 = sphi 0, %s55
      %s58 = sphi 0, %s57
      %s72 = sphi 0, %s58
      %s76 = sphi 0, %s76
      %s78 = sphi 0, %s76
      %s79 = sphi 0, %s78
      %s93 = sphi 0, %s79
      %s97 = sphi 0, %s97
      %s99 = sphi 0, %s97
      %s100 = sphi 0, %s99
      %s114 = sphi 0, %s100
      %s118 = sphi 0, %s118
      %s120 = sphi 0, %s118
      %s121 = sphi 0, %s120
      %s135 = sphi 0, %s121
      %s139 = sphi 0, %s139
      %s141 = sphi 0, %s139
      %s142 = sphi 0, %s141
      %s156 = sphi 0, %s142
      %s160 = sphi 0, %s160
      %s162 = sphi 0, %s160
      %s163 = sphi 0, %s162
      %s177 = sphi 0, %s163
      %s181 = sphi 0, %s181
      %s183 = sphi 0, %s181
      %s184 = sphi 0, %s183
      %s198 = sphi 0, %s184
      %s202 = sphi 0, %s202
      %s204 = sphi 0, %s202
      %s205 = sphi 0, %s204
      %s219 = sphi 0, %s205
      %s223 = sphi 0, %s223
      %s225 = sphi 0, %s223
      %s226 = sphi 0, %s225
      %s240 = sphi 0, %s226
      %s244 = sphi 0, %s244
      %s246 = sphi 0, %s244
      %s247 = sphi 0, %s246
      %s261 = sphi 0, %s247
      %s267 = sphi 0, %s269
      %s270 = sphi 0, %s267
      %s271 = sphi 0, %s270
      %s287 = sphi 0, %s271
    $region4: #{unet_segmenter_forward.1} parent=1 // loop_header_branch
      %24 = sbr.rel (%p22) target = $region8
    $region5: #{unet_segmenter_forward.1} parent=1 // loop_body
      %s26 = ssub.s32 %s21, 1
      %s27 = ssub.s32 %s21, 2
      %s28 = sadd.s32 %s21, 1
      %s29 = ssub.s32 %s21, %s28
      %p30 = scmp.eq.s32.totalorder %s29, 0
      %s32 = sadd.s32 %s31, 1
      %s33 = scalar_select %p30, %s31, %s32
      %p36 = pneg %p30
      %p37 = scmp.eq.s32.totalorder %s21, 1
      %p38 = por %p36, %p37
      %p39 = scmp.ne.s32.totalorder %s31, %s34
      %p40 = scmp.eq.s32.totalorder %s21, 0
      %p41 = por %p39, %p40
      %p42 = scmp.ne.s32.totalorder %s31, %s34
      %p43 = scmp.eq.s32.totalorder %s26, 1
      %p44 = por %p42, %p43
      %p45 = scmp.ne.s32.totalorder %s34, %s35
      %p46 = scmp.eq.s32.totalorder %s26, 0
      %p47 = por %p45, %p46
      %p48 = scmp.ne.s32.totalorder %s34, %s35
      %p49 = scmp.eq.s32.totalorder %s27, 1
      %p50 = por %p48, %p49
      %p52 = scmp.ne.s32.totalorder %s35, %s51
      %p53 = scmp.eq.s32.totalorder %s27, 0
      %p54 = por %p52, %p53
      %s56 = sadd.s32 %s55, 1
      %p59 = scmp.eq.s32.totalorder %s21, 1
      %p60 = scmp.ne.s32.totalorder %s55, %s57
      %p61 = scmp.eq.s32.totalorder %s21, 0
      %p62 = por %p60, %p61
      %p63 = scmp.ne.s32.totalorder %s55, %s57
      %p64 = scmp.eq.s32.totalorder %s26, 1
      %p65 = por %p63, %p64
      %p66 = scmp.ne.s32.totalorder %s57, %s58
      %p67 = scmp.eq.s32.totalorder %s26, 0
      %p68 = por %p66, %p67
      %p69 = scmp.ne.s32.totalorder %s57, %s58
      %p70 = scmp.eq.s32.totalorder %s27, 1
      %p71 = por %p69, %p70
      %p73 = scmp.ne.s32.totalorder %s58, %s72
      %p74 = scmp.eq.s32.totalorder %s27, 0
      %p75 = por %p73, %p74
      %s77 = sadd.s32 %s76, 1
      %p80 = scmp.eq.s32.totalorder %s21, 1
      %p81 = scmp.ne.s32.totalorder %s76, %s78
      %p82 = scmp.eq.s32.totalorder %s21, 0
      %p83 = por %p81, %p82
      %p84 = scmp.ne.s32.totalorder %s76, %s78
      %p85 = scmp.eq.s32.totalorder %s26, 1
      %p86 = por %p84, %p85
      %p87 = scmp.ne.s32.totalorder %s78, %s79
      %p88 = scmp.eq.s32.totalorder %s26, 0
      %p89 = por %p87, %p88
      %p90 = scmp.ne.s32.totalorder %s78, %s79
      %p91 = scmp.eq.s32.totalorder %s27, 1
      %p92 = por %p90, %p91
      %p94 = scmp.ne.s32.totalorder %s79, %s93
      %p95 = scmp.eq.s32.totalorder %s27, 0
      %p96 = por %p94, %p95
      %s98 = sadd.s32 %s97, 1
      %p101 = scmp.eq.s32.totalorder %s21, 1
      %p102 = scmp.ne.s32.totalorder %s97, %s99
      %p103 = scmp.eq.s32.totalorder %s21, 0
      %p104 = por %p102, %p103
      %p105 = scmp.ne.s32.totalorder %s97, %s99
      %p106 = scmp.eq.s32.totalorder %s26, 1
      %p107 = por %p105, %p106
      %p108 = scmp.ne.s32.totalorder %s99, %s100
      %p109 = scmp.eq.s32.totalorder %s26, 0
      %p110 = por %p108, %p109
      %p111 = scmp.ne.s32.totalorder %s99, %s100
      %p112 = scmp.eq.s32.totalorder %s27, 1
      %p113 = por %p111, %p112
      %p115 = scmp.ne.s32.totalorder %s100, %s114
      %p116 = scmp.eq.s32.totalorder %s27, 0
      %p117 = por %p115, %p116
      %s119 = sadd.s32 %s118, 1
      %p122 = scmp.eq.s32.totalorder %s21, 1
      %p123 = scmp.ne.s32.totalorder %s118, %s120
      %p124 = scmp.eq.s32.totalorder %s21, 0
      %p125 = por %p123, %p124
      %p126 = scmp.ne.s32.totalorder %s118, %s120
      %p127 = scmp.eq.s32.totalorder %s26, 1
      %p128 = por %p126, %p127
      %p129 = scmp.ne.s32.totalorder %s120, %s121
      %p130 = scmp.eq.s32.totalorder %s26, 0
      %p131 = por %p129, %p130
      %p132 = scmp.ne.s32.totalorder %s120, %s121
      %p133 = scmp.eq.s32.totalorder %s27, 1
      %p134 = por %p132, %p133
      %p136 = scmp.ne.s32.totalorder %s121, %s135
      %p137 = scmp.eq.s32.totalorder %s27, 0
      %p138 = por %p136, %p137
      %s140 = sadd.s32 %s139, 1
      %p143 = scmp.eq.s32.totalorder %s21, 1
      %p144 = scmp.ne.s32.totalorder %s139, %s141
      %p145 = scmp.eq.s32.totalorder %s21, 0
      %p146 = por %p144, %p145
      %p147 = scmp.ne.s32.totalorder %s139, %s141
      %p148 = scmp.eq.s32.totalorder %s26, 1
      %p149 = por %p147, %p148
      %p150 = scmp.ne.s32.totalorder %s141, %s142
      %p151 = scmp.eq.s32.totalorder %s26, 0
      %p152 = por %p150, %p151
      %p153 = scmp.ne.s32.totalorder %s141, %s142
      %p154 = scmp.eq.s32.totalorder %s27, 1
      %p155 = por %p153, %p154
      %p157 = scmp.ne.s32.totalorder %s142, %s156
      %p158 = scmp.eq.s32.totalorder %s27, 0
      %p159 = por %p157, %p158
      %s161 = sadd.s32 %s160, 1
      %p164 = scmp.eq.s32.totalorder %s21, 1
      %p165 = scmp.ne.s32.totalorder %s160, %s162
      %p166 = scmp.eq.s32.totalorder %s21, 0
      %p167 = por %p165, %p166
      %p168 = scmp.ne.s32.totalorder %s160, %s162
      %p169 = scmp.eq.s32.totalorder %s26, 1
      %p170 = por %p168, %p169
      %p171 = scmp.ne.s32.totalorder %s162, %s163
      %p172 = scmp.eq.s32.totalorder %s26, 0
      %p173 = por %p171, %p172
      %p174 = scmp.ne.s32.totalorder %s162, %s163
      %p175 = scmp.eq.s32.totalorder %s27, 1
      %p176 = por %p174, %p175
      %p178 = scmp.ne.s32.totalorder %s163, %s177
      %p179 = scmp.eq.s32.totalorder %s27, 0
      %p180 = por %p178, %p179
      %s182 = sadd.s32 %s181, 1
      %p185 = scmp.eq.s32.totalorder %s21, 1
      %p186 = scmp.ne.s32.totalorder %s181, %s183
      %p187 = scmp.eq.s32.totalorder %s21, 0
      %p188 = por %p186, %p187
      %p189 = scmp.ne.s32.totalorder %s181, %s183
      %p190 = scmp.eq.s32.totalorder %s26, 1
      %p191 = por %p189, %p190
      %p192 = scmp.ne.s32.totalorder %s183, %s184
      %p193 = scmp.eq.s32.totalorder %s26, 0
      %p194 = por %p192, %p193
      %p195 = scmp.ne.s32.totalorder %s183, %s184
      %p196 = scmp.eq.s32.totalorder %s27, 1
      %p197 = por %p195, %p196
      %p199 = scmp.ne.s32.totalorder %s184, %s198
      %p200 = scmp.eq.s32.totalorder %s27, 0
      %p201 = por %p199, %p200
      %s203 = sadd.s32 %s202, 1
      %p206 = scmp.eq.s32.totalorder %s21, 1
      %p207 = scmp.ne.s32.totalorder %s202, %s204
      %p208 = scmp.eq.s32.totalorder %s21, 0
      %p209 = por %p207, %p208
      %p210 = scmp.ne.s32.totalorder %s202, %s204
      %p211 = scmp.eq.s32.totalorder %s26, 1
      %p212 = por %p210, %p211
      %p213 = scmp.ne.s32.totalorder %s204, %s205
      %p214 = scmp.eq.s32.totalorder %s26, 0
      %p215 = por %p213, %p214
      %p216 = scmp.ne.s32.totalorder %s204, %s205
      %p217 = scmp.eq.s32.totalorder %s27, 1
      %p218 = por %p216, %p217
      %p220 = scmp.ne.s32.totalorder %s205, %s219
      %p221 = scmp.eq.s32.totalorder %s27, 0
      %p222 = por %p220, %p221
      %s224 = sadd.s32 %s223, 1
      %p227 = scmp.eq.s32.totalorder %s21, 1
      %p228 = scmp.ne.s32.totalorder %s223, %s225
      %p229 = scmp.eq.s32.totalorder %s21, 0
      %p230 = por %p228, %p229
      %p231 = scmp.ne.s32.totalorder %s223, %s225
      %p232 = scmp.eq.s32.totalorder %s26, 1
      %p233 = por %p231, %p232
      %p234 = scmp.ne.s32.totalorder %s225, %s226
      %p235 = scmp.eq.s32.totalorder %s26, 0
      %p236 = por %p234, %p235
      %p237 = scmp.ne.s32.totalorder %s225, %s226
      %p238 = scmp.eq.s32.totalorder %s27, 1
      %p239 = por %p237, %p238
      %p241 = scmp.ne.s32.totalorder %s226, %s240
      %p242 = scmp.eq.s32.totalorder %s27, 0
      %p243 = por %p241, %p242
      %s245 = sadd.s32 %s244, 1
      %p248 = scmp.eq.s32.totalorder %s21, 1
      %p249 = scmp.ne.s32.totalorder %s244, %s246
      %p250 = scmp.eq.s32.totalorder %s21, 0
      %p251 = por %p249, %p250
      %p252 = scmp.ne.s32.totalorder %s244, %s246
      %p253 = scmp.eq.s32.totalorder %s26, 1
      %p254 = por %p252, %p253
      %p255 = scmp.ne.s32.totalorder %s246, %s247
      %p256 = scmp.eq.s32.totalorder %s26, 0
      %p257 = por %p255, %p256
      %p258 = scmp.ne.s32.totalorder %s246, %s247
      %p259 = scmp.eq.s32.totalorder %s27, 1
      %p260 = por %p258, %p259
      %p262 = scmp.ne.s32.totalorder %s247, %s261
      %p263 = scmp.eq.s32.totalorder %s27, 0
      %p264 = por %p262, %p263
      %s265 = ssub.s32 %s21, %s28
      %p266 = scmp.eq.s32.totalorder %s265, 0
      %s268 = sadd.s32 %s267, 1
      %s269 = scalar_select %p266, %s267, %s268
      %p272 = pneg %p266
      %p273 = scmp.eq.s32.totalorder %s21, 1
      %p274 = por %p272, %p273
      %p275 = scmp.ne.s32.totalorder %s267, %s270
      %p276 = scmp.eq.s32.totalorder %s21, 0
      %p277 = por %p275, %p276
      %p278 = scmp.ne.s32.totalorder %s267, %s270
      %p279 = scmp.eq.s32.totalorder %s26, 1
      %p280 = por %p278, %p279
      %p281 = scmp.ne.s32.totalorder %s270, %s271
      %p282 = scmp.eq.s32.totalorder %s26, 0
      %p283 = por %p281, %p282
      %p284 = scmp.ne.s32.totalorder %s270, %s271
      %p285 = scmp.eq.s32.totalorder %s27, 1
      %p286 = por %p284, %p285
      %p288 = scmp.ne.s32.totalorder %s271, %s287
      %p289 = scmp.eq.s32.totalorder %s27, 0
      %p290 = por %p288, %p289
      %p291 = scmp.le.s32.totalorder 1, %s21
      %p292 = scmp.lt.s32.totalorder %s21, 3
      %p293 = pnand %p291, %p292
      %p294 = pneg %p293
      // Predicated region
      $region9: #{unet_segmenter_forward.1} parent=5 // pred_check
        _
      $region10: #{unet_segmenter_forward.1} parent=5 // pred_check_branch
        %296 = sbr.rel (%p293) target = $region12
      $region11: #{unet_segmenter_forward.1} parent=5 // pred_region
        %s297 = ssub.s32 %s21, 1
        // Predicated region
        $region13: #{unet_segmenter_forward.1} parent=11 // pred_check
          %p298 = pneg %p68
        $region14: #{unet_segmenter_forward.1} parent=11 // pred_check_branch
          %300 = sbr.rel (%p298) target = $region16
        $region15: #{unet_segmenter_forward.1} parent=11 // pred_region
          _
        $region16: #{unet_segmenter_forward.1} parent=11 // pred_fallthru
          _
        // Predicated region
        $region17: #{unet_segmenter_forward.1} parent=11 // pred_check
          %p301 = pneg %p89
        $region18: #{unet_segmenter_forward.1} parent=11 // pred_check_branch
          %303 = sbr.rel (%p301) target = $region20
        $region19: #{unet_segmenter_forward.1} parent=11 // pred_region
          _
        $region20: #{unet_segmenter_forward.1} parent=11 // pred_fallthru
          _
        // Predicated region
        $region21: #{unet_segmenter_forward.1} parent=11 // pred_check
          %p304 = pneg %p110
        $region22: #{unet_segmenter_forward.1} parent=11 // pred_check_branch
          %306 = sbr.rel (%p304) target = $region24
        $region23: #{unet_segmenter_forward.1} parent=11 // pred_region
          _
        $region24: #{unet_segmenter_forward.1} parent=11 // pred_fallthru
          _
        // Predicated region
        $region25: #{unet_segmenter_forward.1} parent=11 // pred_check
          %p307 = pneg %p131
        $region26: #{unet_segmenter_forward.1} parent=11 // pred_check_branch
          %309 = sbr.rel (%p307) target = $region28
        $region27: #{unet_segmenter_forward.1} parent=11 // pred_region
          _
        $region28: #{unet_segmenter_forward.1} parent=11 // pred_fallthru
          _
        // Predicated region
        $region29: #{unet_segmenter_forward.1} parent=11 // pred_check
          %p310 = pneg %p152
        $region30: #{unet_segmenter_forward.1} parent=11 // pred_check_branch
          %312 = sbr.rel (%p310) target = $region32
        $region31: #{unet_segmenter_forward.1} parent=11 // pred_region
          %s314 = ssub.s32 3456, 3456
          %315 = vsyncadd [#allocation7], %s314
          %s316 = sshll.u32 [#allocation6], 4
          %s317 = int_to_ptr.vmem [resolvable:$true] %s316
          %322 = dma.hbm_to_vmem [thread:$0]  %s5, 3456, %s317, [#allocation7], 128, 128, 8
        $region32: #{unet_segmenter_forward.1} parent=11 // pred_fallthru
          _
        // Predicated region
        $region33: #{unet_segmenter_forward.1} parent=11 // pred_check
          %p323 = pneg %p173
        $region34: #{unet_segmenter_forward.1} parent=11 // pred_check_branch
          %325 = sbr.rel (%p323) target = $region36
        $region35: #{unet_segmenter_forward.1} parent=11 // pred_region
          _
        $region36: #{unet_segmenter_forward.1} parent=11 // pred_fallthru
          _
        // Predicated region
        $region37: #{unet_segmenter_forward.1} parent=11 // pred_check
          %p326 = pneg %p194
        $region38: #{unet_segmenter_forward.1} parent=11 // pred_check_branch
          %328 = sbr.rel (%p326) target = $region40
        $region39: #{unet_segmenter_forward.1} parent=11 // pred_region
          _
        $region40: #{unet_segmenter_forward.1} parent=11 // pred_fallthru
          _
        // Predicated region
        $region41: #{unet_segmenter_forward.1} parent=11 // pred_check
          %p329 = pneg %p215
        $region42: #{unet_segmenter_forward.1} parent=11 // pred_check_branch
          %331 = sbr.rel (%p329) target = $region44
        $region43: #{unet_segmenter_forward.1} parent=11 // pred_region
          _
        $region44: #{unet_segmenter_forward.1} parent=11 // pred_fallthru
          _
        // Predicated region
        $region45: #{unet_segmenter_forward.1} parent=11 // pred_check
          %p332 = pneg %p236
        $region46: #{unet_segmenter_forward.1} parent=11 // pred_check_branch
          %334 = sbr.rel (%p332) target = $region48
        $region47: #{unet_segmenter_forward.1} parent=11 // pred_region
          _
        $region48: #{unet_segmenter_forward.1} parent=11 // pred_fallthru
          _
        // Predicated region
        $region49: #{unet_segmenter_forward.1} parent=11 // pred_check
          %p335 = pneg %p257
        $region50: #{unet_segmenter_forward.1} parent=11 // pred_check_branch
          %337 = sbr.rel (%p335) target = $region52
        $region51: #{unet_segmenter_forward.1} parent=11 // pred_region
          %s339 = ssub.s32 4096, 4096
          %340 = vsyncadd [#allocation9], %s339
          %s341 = sshll.u32 [#allocation8], 4
          %s342 = int_to_ptr.vmem [resolvable:$true] %s341
          %347 = dma.hbm_to_vmem [thread:$0]  %s10, 4096, %s342, [#allocation9], 128, 128, 8
        $region52: #{unet_segmenter_forward.1} parent=11 // pred_fallthru
          _
      $region12: #{unet_segmenter_forward.1} parent=5 // pred_fallthru
        _
      %p348 = scmp.lt.s32.totalorder %s21, 2
      // Predicated region
      $region53: #{unet_segmenter_forward.1} parent=5 // pred_check
        %p349 = pneg %p348
      $region54: #{unet_segmenter_forward.1} parent=5 // pred_check_branch
        %351 = sbr.rel (%p349) target = $region56
      $region55: #{unet_segmenter_forward.1} parent=5 // pred_region
        // Predicated region
        $region57: #{unet_segmenter_forward.1} parent=55 // pred_check
          %p352 = pneg %p41
        $region58: #{unet_segmenter_forward.1} parent=55 // pred_check_branch
          %354 = sbr.rel (%p352) target = $region60
        $region59: #{unet_segmenter_forward.1} parent=55 // pred_region
          %p355 = scmp.lt.s32.totalorder %s21, 1
          %s356 = scalar_select %p355, %s21, 1
          %s357 = smul.addr %s356, 32
          %s358 = smul.addr %s357, 8
          %s359 = scalar_lea.vmem %s0, %s358
        $region60: #{unet_segmenter_forward.1} parent=55 // pred_fallthru
          _
      $region56: #{unet_segmenter_forward.1} parent=5 // pred_fallthru
        _
      %p360 = scmp.le.s32.totalorder 1, %s21
      %p361 = scmp.lt.s32.totalorder %s21, 3
      %p362 = pnand %p360, %p361
      %p363 = pneg %p362
      // Predicated region
      $region61: #{unet_segmenter_forward.1} parent=5 // pred_check
        _
      $region62: #{unet_segmenter_forward.1} parent=5 // pred_check_branch
        %365 = sbr.rel (%p362) target = $region64
      $region63: #{unet_segmenter_forward.1} parent=5 // pred_region
        %s366 = ssub.s32 %s21, 1
        // Predicated region
        $region65: #{unet_segmenter_forward.1} parent=63 // pred_check
          %p367 = pneg %p152
        $region66: #{unet_segmenter_forward.1} parent=63 // pred_check_branch
          %369 = sbr.rel (%p367) target = $region68
        $region67: #{unet_segmenter_forward.1} parent=63 // pred_region
          %370 = dma.done [#allocation7], 3456
        $region68: #{unet_segmenter_forward.1} parent=63 // pred_fallthru
          _
        // Predicated region
        $region69: #{unet_segmenter_forward.1} parent=63 // pred_check
          %p371 = pneg %p257
        $region70: #{unet_segmenter_forward.1} parent=63 // pred_check_branch
          %373 = sbr.rel (%p371) target = $region72
        $region71: #{unet_segmenter_forward.1} parent=63 // pred_region
          %374 = dma.done [#allocation9], 4096
        $region72: #{unet_segmenter_forward.1} parent=63 // pred_fallthru
          _
        %p375 = scmp.lt.s32.totalorder %s26, 1
        %s376 = scalar_select %p375, %s26, 1
        %s377 = smul.addr %s376, 32
        %s378 = smul.addr %s377, 8
        %s379 = scalar_lea.vmem %s0, %s378
        %p380 = pneg %p47
        %p381 = pneg %p44
        %p382 = pneg %p68
        %p383 = pneg %p65
        %p384 = pneg %p89
        %p385 = pneg %p86
        %p386 = pneg %p110
        %p387 = pneg %p107
        %p388 = pneg %p131
        %p389 = pneg %p128
        %p390 = pneg %p152
        %p391 = pneg %p149
        %p392 = pneg %p173
        %p393 = pneg %p170
        %p394 = pneg %p194
        %p395 = pneg %p191
        %p396 = pneg %p215
        %p397 = pneg %p212
        %p398 = pneg %p236
        %p399 = pneg %p233
        %p400 = pneg %p257
        %p401 = pneg %p254
        %p402 = pneg %p283
        %p403 = pneg %p280
        %p404 = scmp.lt.s32.totalorder %s26, 1
        %s405 = scalar_select %p404, %s26, 1
        %s406 = smul.addr %s405, 2
        %s407 = scalar_lea.vmem %s11, %s406
        %p408 = scmp.lt.s32.totalorder %s26, 1
        %s409 = scalar_select %p408, %s26, 1
        %s410 = smul.addr %s409, 32
        %s411 = smul.addr %s410, 8
        %s412 = scalar_lea.vmem %s0, %s411
        %p413 = scmp.lt.s32.totalorder %s26, 1
        %s414 = scalar_select %p413, %s26, 1
        %s415 = smul.addr %s414, 2
        %s416 = scalar_lea.vmem %s11, %s415
        %vm417 = vcmask 31744
        %418 = vst.msk [vmem:[#allocation2] sm:$0xff] %vm417, 0.0
        %419 = vst.msk [vmem:[#allocation2 + $0x8] sm:$0xff] %vm417, 0.0
        %420 = vst.msk [vmem:[#allocation2 + $0x10] sm:$0xff] %vm417, 0.0
        %vm421 = vcmask 24576
        %422 = vst.msk [vmem:[#allocation2 + $0x18] sm:$0x1] %vm421, 0.0
        %423 = vst.msk [vmem:[#allocation2 + $0x20] sm:$0xff] %vm417, 0.0
        %424 = vst.msk [vmem:[#allocation2 + $0x28] sm:$0xff] %vm417, 0.0
        %425 = vst.msk [vmem:[#allocation2 + $0x30] sm:$0xff] %vm417, 0.0
        %426 = vst.msk [vmem:[#allocation2 + $0x38] sm:$0x1] %vm421, 0.0
        %427 = vst.msk [vmem:[#allocation2 + $0x40] sm:$0xff] %vm417, 0.0
        %428 = vst.msk [vmem:[#allocation2 + $0x48] sm:$0xff] %vm417, 0.0
        %429 = vst.msk [vmem:[#allocation2 + $0x50] sm:$0xff] %vm417, 0.0
        %430 = vst.msk [vmem:[#allocation2 + $0x58] sm:$0x1] %vm421, 0.0
        %431 = vst.msk [vmem:[#allocation2 + $0x60] sm:$0xff] %vm417, 0.0
        %432 = vst.msk [vmem:[#allocation2 + $0x68] sm:$0xff] %vm417, 0.0
        %433 = vst.msk [vmem:[#allocation2 + $0x70] sm:$0xff] %vm417, 0.0
        %434 = vst.msk [vmem:[#allocation2 + $0x78] sm:$0x1] %vm421, 0.0
        %435 = vst.msk [vmem:[#allocation2 + $0x80] sm:$0xff] %vm417, 0.0
        %436 = vst.msk [vmem:[#allocation2 + $0x88] sm:$0xff] %vm417, 0.0
        %437 = vst.msk [vmem:[#allocation2 + $0x90] sm:$0xff] %vm417, 0.0
        %438 = vst.msk [vmem:[#allocation2 + $0x98] sm:$0x1] %vm421, 0.0
        %439 = vst.msk [vmem:[#allocation2 + $0xa0] sm:$0xff] %vm417, 0.0
        %440 = vst.msk [vmem:[#allocation2 + $0xa8] sm:$0xff] %vm417, 0.0
        %441 = vst.msk [vmem:[#allocation2 + $0xb0] sm:$0xff] %vm417, 0.0
        %442 = vst.msk [vmem:[#allocation2 + $0xb8] sm:$0x1] %vm421, 0.0
        %443 = vst.msk [vmem:[#allocation2 + $0xc0] sm:$0xff] %vm417, 0.0
        %444 = vst.msk [vmem:[#allocation2 + $0xc8] sm:$0xff] %vm417, 0.0
        %445 = vst.msk [vmem:[#allocation2 + $0xd0] sm:$0xff] %vm417, 0.0
        %446 = vst.msk [vmem:[#allocation2 + $0xd8] sm:$0x1] %vm421, 0.0
        %447 = vst.msk [vmem:[#allocation2 + $0xe0] sm:$0xff] %vm417, 0.0
        %448 = vst.msk [vmem:[#allocation2 + $0xe8] sm:$0xff] %vm417, 0.0
        %449 = vst.msk [vmem:[#allocation2 + $0xf0] sm:$0xff] %vm417, 0.0
        %450 = vst.msk [vmem:[#allocation2 + $0xf8] sm:$0x1] %vm421, 0.0
        %451 = vst.msk [vmem:[#allocation2 + $0x100] sm:$0xff] %vm417, 0.0
        %452 = vst.msk [vmem:[#allocation2 + $0x108] sm:$0xff] %vm417, 0.0
        %453 = vst.msk [vmem:[#allocation2 + $0x110] sm:$0xff] %vm417, 0.0
        %454 = vst.msk [vmem:[#allocation2 + $0x118] sm:$0x1] %vm421, 0.0
        %455 = vst.msk [vmem:[#allocation2 + $0x120] sm:$0xff] %vm417, 0.0
        %456 = vst.msk [vmem:[#allocation2 + $0x128] sm:$0xff] %vm417, 0.0
        %457 = vst.msk [vmem:[#allocation2 + $0x130] sm:$0xff] %vm417, 0.0
        %458 = vst.msk [vmem:[#allocation2 + $0x138] sm:$0x1] %vm421, 0.0
        %459 = vst.msk [vmem:[#allocation2 + $0x140] sm:$0xff] %vm417, 0.0
        %460 = vst.msk [vmem:[#allocation2 + $0x148] sm:$0xff] %vm417, 0.0
        %461 = vst.msk [vmem:[#allocation2 + $0x150] sm:$0xff] %vm417, 0.0
        %462 = vst.msk [vmem:[#allocation2 + $0x158] sm:$0x1] %vm421, 0.0
        %463 = vst.msk [vmem:[#allocation2 + $0x160] sm:$0xff] %vm417, 0.0
        %464 = vst.msk [vmem:[#allocation2 + $0x168] sm:$0xff] %vm417, 0.0
        %465 = vst.msk [vmem:[#allocation2 + $0x170] sm:$0xff] %vm417, 0.0
        %466 = vst.msk [vmem:[#allocation2 + $0x178] sm:$0x1] %vm421, 0.0
        %467 = vst.msk [vmem:[#allocation2 + $0x180] sm:$0xff] %vm417, 0.0
        %468 = vst.msk [vmem:[#allocation2 + $0x188] sm:$0xff] %vm417, 0.0
        %469 = vst.msk [vmem:[#allocation2 + $0x190] sm:$0xff] %vm417, 0.0
        %470 = vst.msk [vmem:[#allocation2 + $0x198] sm:$0x1] %vm421, 0.0
        %471 = vst.msk [vmem:[#allocation2 + $0x1a0] sm:$0xff] %vm417, 0.0
        %472 = vst.msk [vmem:[#allocation2 + $0x1a8] sm:$0xff] %vm417, 0.0
        %473 = vst.msk [vmem:[#allocation2 + $0x1b0] sm:$0xff] %vm417, 0.0
        %474 = vst.msk [vmem:[#allocation2 + $0x1b8] sm:$0x1] %vm421, 0.0
        %475 = vst.msk [vmem:[#allocation2 + $0x1c0] sm:$0xff] %vm417, 0.0
        %476 = vst.msk [vmem:[#allocation2 + $0x1c8] sm:$0xff] %vm417, 0.0
        %477 = vst.msk [vmem:[#allocation2 + $0x1d0] sm:$0xff] %vm417, 0.0
        %478 = vst.msk [vmem:[#allocation2 + $0x1d8] sm:$0x1] %vm421, 0.0
        %479 = vst.msk [vmem:[#allocation2 + $0x1e0] sm:$0xff] %vm417, 0.0
        %480 = vst.msk [vmem:[#allocation2 + $0x1e8] sm:$0xff] %vm417, 0.0
        %481 = vst.msk [vmem:[#allocation2 + $0x1f0] sm:$0xff] %vm417, 0.0
        %482 = vst.msk [vmem:[#allocation2 + $0x1f8] sm:$0x1] %vm421, 0.0
        %483 = vst.msk [vmem:[#allocation2 + $0x200] sm:$0xff] %vm417, 0.0
        %484 = vst.msk [vmem:[#allocation2 + $0x208] sm:$0xff] %vm417, 0.0
        %485 = vst.msk [vmem:[#allocation2 + $0x210] sm:$0xff] %vm417, 0.0
        %486 = vst.msk [vmem:[#allocation2 + $0x218] sm:$0x1] %vm421, 0.0
        %487 = vst.msk [vmem:[#allocation2 + $0x220] sm:$0xff] %vm417, 0.0
        %488 = vst.msk [vmem:[#allocation2 + $0x228] sm:$0xff] %vm417, 0.0
        %489 = vst.msk [vmem:[#allocation2 + $0x230] sm:$0xff] %vm417, 0.0
        %490 = vst.msk [vmem:[#allocation2 + $0x238] sm:$0x1] %vm421, 0.0
        %v491 = vld [vmem:[%s412] sm:$0xff]
        %v492 = vld [vmem:[%s412 + $0x8] sm:$0xff]
        %v493 = vld [vmem:[%s412 + $0x10] sm:$0xff]
        %v494 = vld [vmem:[%s412 + $0x18] sm:$0xff]
        %v495 = vld [vmem:[%s412 + $0x20] sm:$0xff]
        %v496 = vld [vmem:[%s412 + $0x28] sm:$0xff]
        %v497 = vld [vmem:[%s412 + $0x30] sm:$0xff]
        %v498 = vld [vmem:[%s412 + $0x38] sm:$0xff]
        %v499 = vld [vmem:[%s412 + $0x40] sm:$0xff]
        %v500 = vld [vmem:[%s412 + $0x48] sm:$0xff]
        %v501 = vld [vmem:[%s412 + $0x50] sm:$0xff]
        %v502 = vld [vmem:[%s412 + $0x58] sm:$0xff]
        %v503 = vld [vmem:[%s412 + $0x60] sm:$0xff]
        %v504 = vld [vmem:[%s412 + $0x68] sm:$0xff]
        %v505 = vld [vmem:[%s412 + $0x70] sm:$0xff]
        %v506 = vld [vmem:[%s412 + $0x78] sm:$0xff]
        %v507 = vld [vmem:[%s412 + $0x80] sm:$0xff]
        %v508 = vld [vmem:[%s412 + $0x88] sm:$0xff]
        %v509 = vld [vmem:[%s412 + $0x90] sm:$0xff]
        %v510 = vld [vmem:[%s412 + $0x98] sm:$0xff]
        %v511 = vld [vmem:[%s412 + $0xa0] sm:$0xff]
        %v512 = vld [vmem:[%s412 + $0xa8] sm:$0xff]
        %v513 = vld [vmem:[%s412 + $0xb0] sm:$0xff]
        %v514 = vld [vmem:[%s412 + $0xb8] sm:$0xff]
        %v515 = vld [vmem:[%s412 + $0xc0] sm:$0xff]
        %v516 = vld [vmem:[%s412 + $0xc8] sm:$0xff]
        %v517 = vld [vmem:[%s412 + $0xd0] sm:$0xff]
        %v518 = vld [vmem:[%s412 + $0xd8] sm:$0xff]
        %v519 = vld [vmem:[%s412 + $0xe0] sm:$0xff]
        %v520 = vld [vmem:[%s412 + $0xe8] sm:$0xff]
        %v521 = vld [vmem:[%s412 + $0xf0] sm:$0xff]
        %v522 = vld [vmem:[%s412 + $0xf8] sm:$0xff]
        %s523 = scalar_lea.vmem [#allocation2], 32
        %524 = vst.msk [vmem:[%s523 + $0x8] sm:$0xff] %vm417, %v491
        %525 = vst.msk [vmem:[%s523 + $0x10] sm:$0xff] %vm417, %v492
        %526 = vst.msk [vmem:[%s523 + $0x28] sm:$0xff] %vm417, %v493
        %527 = vst.msk [vmem:[%s523 + $0x30] sm:$0xff] %vm417, %v494
        %528 = vst.msk [vmem:[%s523 + $0x48] sm:$0xff] %vm417, %v495
        %529 = vst.msk [vmem:[%s523 + $0x50] sm:$0xff] %vm417, %v496
        %530 = vst.msk [vmem:[%s523 + $0x68] sm:$0xff] %vm417, %v497
        %531 = vst.msk [vmem:[%s523 + $0x70] sm:$0xff] %vm417, %v498
        %532 = vst.msk [vmem:[%s523 + $0x88] sm:$0xff] %vm417, %v499
        %533 = vst.msk [vmem:[%s523 + $0x90] sm:$0xff] %vm417, %v500
        %534 = vst.msk [vmem:[%s523 + $0xa8] sm:$0xff] %vm417, %v501
        %535 = vst.msk [vmem:[%s523 + $0xb0] sm:$0xff] %vm417, %v502
        %536 = vst.msk [vmem:[%s523 + $0xc8] sm:$0xff] %vm417, %v503
        %537 = vst.msk [vmem:[%s523 + $0xd0] sm:$0xff] %vm417, %v504
        %538 = vst.msk [vmem:[%s523 + $0xe8] sm:$0xff] %vm417, %v505
        %539 = vst.msk [vmem:[%s523 + $0xf0] sm:$0xff] %vm417, %v506
        %540 = vst.msk [vmem:[%s523 + $0x108] sm:$0xff] %vm417, %v507
        %541 = vst.msk [vmem:[%s523 + $0x110] sm:$0xff] %vm417, %v508
        %542 = vst.msk [vmem:[%s523 + $0x128] sm:$0xff] %vm417, %v509
        %543 = vst.msk [vmem:[%s523 + $0x130] sm:$0xff] %vm417, %v510
        %544 = vst.msk [vmem:[%s523 + $0x148] sm:$0xff] %vm417, %v511
        %545 = vst.msk [vmem:[%s523 + $0x150] sm:$0xff] %vm417, %v512
        %546 = vst.msk [vmem:[%s523 + $0x168] sm:$0xff] %vm417, %v513
        %547 = vst.msk [vmem:[%s523 + $0x170] sm:$0xff] %vm417, %v514
        %548 = vst.msk [vmem:[%s523 + $0x188] sm:$0xff] %vm417, %v515
        %549 = vst.msk [vmem:[%s523 + $0x190] sm:$0xff] %vm417, %v516
        %550 = vst.msk [vmem:[%s523 + $0x1a8] sm:$0xff] %vm417, %v517
        %551 = vst.msk [vmem:[%s523 + $0x1b0] sm:$0xff] %vm417, %v518
        %552 = vst.msk [vmem:[%s523 + $0x1c8] sm:$0xff] %vm417, %v519
        %553 = vst.msk [vmem:[%s523 + $0x1d0] sm:$0xff] %vm417, %v520
        %554 = vst.msk [vmem:[%s523 + $0x1e8] sm:$0xff] %vm417, %v521
        %555 = vst.msk [vmem:[%s523 + $0x1f0] sm:$0xff] %vm417, %v522
        %v556 = vld [vmem:[#allocation2 + $0x7] sm:$0xff]
        %v557 = vld [vmem:[#allocation2 + $0xf] sm:$0xff]
        %v558 = vld [vmem:[#allocation2 + $0x27] sm:$0xff]
        %v559 = vld [vmem:[#allocation2 + $0x2f] sm:$0xff]
        %v560 = vld [vmem:[#allocation2 + $0x47] sm:$0xff]
        %v561 = vld [vmem:[#allocation2 + $0x4f] sm:$0xff]
        %v562 = vld [vmem:[#allocation2 + $0x67] sm:$0xff]
        %v563 = vld [vmem:[#allocation2 + $0x6f] sm:$0xff]
        %v564 = vld [vmem:[#allocation2 + $0x87] sm:$0xff]
        %v565 = vld [vmem:[#allocation2 + $0x8f] sm:$0xff]
        %v566 = vld [vmem:[#allocation2 + $0xa7] sm:$0xff]
        %v567 = vld [vmem:[#allocation2 + $0xaf] sm:$0xff]
        %v568 = vld [vmem:[#allocation2 + $0xc7] sm:$0xff]
        %v569 = vld [vmem:[#allocation2 + $0xcf] sm:$0xff]
        %v570 = vld [vmem:[#allocation2 + $0xe7] sm:$0xff]
        %v571 = vld [vmem:[#allocation2 + $0xef] sm:$0xff]
        %v572 = vld [vmem:[#allocation2 + $0x107] sm:$0xff]
        %v573 = vld [vmem:[#allocation2 + $0x10f] sm:$0xff]
        %v574 = vld [vmem:[#allocation2 + $0x127] sm:$0xff]
        %v575 = vld [vmem:[#allocation2 + $0x12f] sm:$0xff]
        %v576 = vld [vmem:[#allocation2 + $0x147] sm:$0xff]
        %v577 = vld [vmem:[#allocation2 + $0x14f] sm:$0xff]
        %v578 = vld [vmem:[#allocation2 + $0x167] sm:$0xff]
        %v579 = vld [vmem:[#allocation2 + $0x16f] sm:$0xff]
        %v580 = vld [vmem:[#allocation2 + $0x187] sm:$0xff]
        %v581 = vld [vmem:[#allocation2 + $0x18f] sm:$0xff]
        %v582 = vld [vmem:[#allocation2 + $0x1a7] sm:$0xff]
        %v583 = vld [vmem:[#allocation2 + $0x1af] sm:$0xff]
        %v584 = vld [vmem:[#allocation2 + $0x1c7] sm:$0xff]
        %v585 = vld [vmem:[#allocation2 + $0x1cf] sm:$0xff]
        %v586 = vld [vmem:[#allocation2 + $0x1e7] sm:$0xff]
        %v587 = vld [vmem:[#allocation2 + $0x1ef] sm:$0xff]
        %v588 = vld [vmem:[%s1] sm:$0xf]
        %v589 = vld [vmem:[#allocation2 + $0x8] sm:$0xff]
        %v590 = vld [vmem:[#allocation2 + $0x10] sm:$0xff]
        %v591 = vld [vmem:[#allocation2 + $0x28] sm:$0xff]
        %v592 = vld [vmem:[#allocation2 + $0x30] sm:$0xff]
        %v593 = vld [vmem:[#allocation2 + $0x48] sm:$0xff]
        %v594 = vld [vmem:[#allocation2 + $0x50] sm:$0xff]
        %v595 = vld [vmem:[#allocation2 + $0x68] sm:$0xff]
        %v596 = vld [vmem:[#allocation2 + $0x70] sm:$0xff]
        %v597 = vld [vmem:[#allocation2 + $0x88] sm:$0xff]
        %v598 = vld [vmem:[#allocation2 + $0x90] sm:$0xff]
        %v599 = vld [vmem:[#allocation2 + $0xa8] sm:$0xff]
        %v600 = vld [vmem:[#allocation2 + $0xb0] sm:$0xff]
        %v601 = vld [vmem:[#allocation2 + $0xc8] sm:$0xff]
        %v602 = vld [vmem:[#allocation2 + $0xd0] sm:$0xff]
        %v603 = vld [vmem:[#allocation2 + $0xe8] sm:$0xff]
        %v604 = vld [vmem:[#allocation2 + $0xf0] sm:$0xff]
        %v605 = vld [vmem:[#allocation2 + $0x108] sm:$0xff]
        %v606 = vld [vmem:[#allocation2 + $0x110] sm:$0xff]
        %v607 = vld [vmem:[#allocation2 + $0x128] sm:$0xff]
        %v608 = vld [vmem:[#allocation2 + $0x130] sm:$0xff]
        %v609 = vld [vmem:[#allocation2 + $0x148] sm:$0xff]
        %v610 = vld [vmem:[#allocation2 + $0x150] sm:$0xff]
        %v611 = vld [vmem:[#allocation2 + $0x168] sm:$0xff]
        %v612 = vld [vmem:[#allocation2 + $0x170] sm:$0xff]
        %v613 = vld [vmem:[#allocation2 + $0x188] sm:$0xff]
        %v614 = vld [vmem:[#allocation2 + $0x190] sm:$0xff]
        %v615 = vld [vmem:[#allocation2 + $0x1a8] sm:$0xff]
        %v616 = vld [vmem:[#allocation2 + $0x1b0] sm:$0xff]
        %v617 = vld [vmem:[#allocation2 + $0x1c8] sm:$0xff]
        %v618 = vld [vmem:[#allocation2 + $0x1d0] sm:$0xff]
        %v619 = vld [vmem:[#allocation2 + $0x1e8] sm:$0xff]
        %v620 = vld [vmem:[#allocation2 + $0x1f0] sm:$0xff]
        %s621 = scalar_lea.vmem %s1, 4
        %v622 = vld [vmem:[%s621] sm:$0xf]
        %v624 = vsel %vm417, %v589, 0
        %v627 = vsel %vm417, %v590, 0
        %v630 = vsel %vm417, %v591, 0
        %v633 = vsel %vm417, %v592, 0
        %v636 = vsel %vm417, %v593, 0
        %v639 = vsel %vm417, %v594, 0
        %v642 = vsel %vm417, %v595, 0
        %v645 = vsel %vm417, %v596, 0
        %v648 = vsel %vm417, %v597, 0
        %v651 = vsel %vm417, %v598, 0
        %v654 = vsel %vm417, %v599, 0
        %v657 = vsel %vm417, %v600, 0
        %v660 = vsel %vm417, %v601, 0
        %v663 = vsel %vm417, %v602, 0
        %v666 = vsel %vm417, %v603, 0
        %v669 = vsel %vm417, %v604, 0
        %v672 = vsel %vm417, %v605, 0
        %v675 = vsel %vm417, %v606, 0
        %v678 = vsel %vm417, %v607, 0
        %v681 = vsel %vm417, %v608, 0
        %v684 = vsel %vm417, %v609, 0
        %v687 = vsel %vm417, %v610, 0
        %v690 = vsel %vm417, %v611, 0
        %v693 = vsel %vm417, %v612, 0
        %v696 = vsel %vm417, %v613, 0
        %v699 = vsel %vm417, %v614, 0
        %v702 = vsel %vm417, %v615, 0
        %v705 = vsel %vm417, %v616, 0
        %v708 = vsel %vm417, %v617, 0
        %v711 = vsel %vm417, %v618, 0
        %v714 = vsel %vm417, %v619, 0
        %v717 = vsel %vm417, %v620, 0
        %vm719 = vcmask 1043456
        %v721 = vsel %vm719, %v622, 0
        %723 = vmatprep.subr.mxu0 0.0
        %724 = vmatpush1.msra.mxu0 %v721
        %725 = vmatprep.subr.mxu0 0.0
        %726 = vmatpush1.msra.mxu0 0.0
        %727 = vmatprep.subr.mxu0 0.0
        %728 = vmatpush1.msra.mxu0 0.0
        %729 = vmatprep.subr.mxu0 0.0
        %730 = vmatpush1.msra.mxu0 0.0
        %731 = vmatprep.subr.mxu0 0.0
        %732 = vmatpush1.msra.mxu0 0.0
        %733 = vmatprep.subr.mxu0 0.0
        %734 = vmatpush1.msra.mxu0 0.0
        %735 = vmatprep.subr.mxu0 0.0
        %736 = vmatpush1.msra.mxu0 0.0
        %737 = vmatprep.subr.mxu0 0.0
        %738 = vmatpush1.msra.mxu0 0.0
        %739 = vmatprep.subr.mxu0 0.0
        %740 = vmatpush1.msra.mxu0 0.0
        %741 = vmatprep.subr.mxu0 0.0
        %742 = vmatpush1.msra.mxu0 0.0
        %743 = vmatprep.subr.mxu0 0.0
        %744 = vmatpush1.msra.mxu0 0.0
        %745 = vmatprep.subr.mxu0 0.0
        %746 = vmatpush1.msra.mxu0 0.0
        %747 = vmatprep.subr.mxu0 0.0
        %748 = vmatpush1.msra.mxu0 0.0
        %749 = vmatprep.subr.mxu0 0.0
        %750 = vmatpush1.msra.mxu0 0.0
        %751 = vmatprep.subr.mxu0 0.0
        %752 = vmatpush1.msra.mxu0 0.0
        %753 = vmatprep.subr.mxu0 0.0
        %754 = vmatpush1.msra.mxu0 0.0
        %755 = vmatprep.subr.mxu0 0.0
        %756 = vmatpush1.msra.mxu0 0.0
        %757 = vmatprep.subr.mxu0 0.0
        %758 = vmatpush1.msra.mxu0 0.0
        %759 = vmatprep.subr.mxu0 0.0
        %760 = vmatpush1.msra.mxu0 0.0
        %761 = vmatprep.subr.mxu0 0.0
        %762 = vmatpush1.msra.mxu0 0.0
        %763 = vmatprep.subr.mxu0 0.0
        %764 = vmatpush1.msra.mxu0 0.0
        %765 = vmatprep.subr.mxu0 0.0
        %766 = vmatpush1.msra.mxu0 0.0
        %767 = vmatprep.subr.mxu0 0.0
        %768 = vmatpush1.msra.mxu0 0.0
        %769 = vmatprep.subr.mxu0 0.0
        %770 = vmatpush1.msra.mxu0 0.0
        %771 = vmatprep.subr.mxu0 0.0
        %772 = vmatpush1.msra.mxu0 0.0
        %773 = vmatprep.subr.mxu0 0.0
        %774 = vmatpush1.msra.mxu0 0.0
        %775 = vmatprep.subr.mxu0 0.0
        %776 = vmatpush1.msra.mxu0 0.0
        %777 = vmatprep.subr.mxu0 0.0
        %778 = vmatpush1.msra.mxu0 0.0
        %779 = vmatprep.subr.mxu0 0.0
        %780 = vmatpush1.msra.mxu0 0.0
        %781 = vmatprep.subr.mxu0 0.0
        %782 = vmatpush1.msra.mxu0 0.0
        %783 = vmatprep.subr.mxu0 0.0
        %784 = vmatpush1.msra.mxu0 0.0
        %785 = vmatprep.subr.mxu0 0.0
        %786 = vmatpush1.msra.mxu0 0.0
        %787 = vmatprep.mubr.f32.mxu0 0.0
        %788 = vmatmul.mubr.f32.gmra.mrb[0].mxu0 %v624
        %v789 = vpop.f32.mrb[0].mxu0
        %v790 = vadd.f32 0.0, %v789
        %v791 = vpop.f32.mrb[0].mxu0
        %792 = vmatprep.mubr.f32.mxu0 0.0
        %793 = vmatmul.mubr.f32.gmra.mrb[0].mxu0 %v627
        %v794 = vpop.f32.mrb[0].mxu0
        %v795 = vadd.f32 0.0, %v794
        %v796 = vpop.f32.mrb[0].mxu0
        %797 = vmatprep.mubr.f32.mxu0 0.0
        %798 = vmatmul.mubr.f32.gmra.mrb[0].mxu0 %v630
        %v799 = vpop.f32.mrb[0].mxu0
        %v800 = vadd.f32 0.0, %v799
        %v801 = vpop.f32.mrb[0].mxu0
        %802 = vmatprep.mubr.f32.mxu0 0.0
        %803 = vmatmul.mubr.f32.gmra.mrb[0].mxu0 %v633
        %v804 = vpop.f32.mrb[0].mxu0
        %v805 = vadd.f32 0.0, %v804
        %v806 = vpop.f32.mrb[0].mxu0
        %807 = vmatprep.mubr.f32.mxu0 0.0
        %808 = vmatmul.mubr.f32.gmra.mrb[0].mxu0 %v636
        %v809 = vpop.f32.mrb[0].mxu0
        %v810 = vadd.f32 0.0, %v809
        %v811 = vpop.f32.mrb[0].mxu0
        %812 = vmatprep.mubr.f32.mxu0 0.0
        %813 = vmatmul.mubr.f32.gmra.mrb[0].mxu0 %v639
        %v814 = vpop.f32.mrb[0].mxu0
        %v815 = vadd.f32 0.0, %v814
        %v816 = vpop.f32.mrb[0].mxu0
        %817 = vmatprep.mubr.f32.mxu0 0.0
        %818 = vmatmul.mubr.f32.gmra.mrb[0].mxu0 %v642
        %v819 = vpop.f32.mrb[0].mxu0
        %v820 = vadd.f32 0.0, %v819
        %v821 = vpop.f32.mrb[0].mxu0
        %822 = vmatprep.mubr.f32.mxu0 0.0
        %823 = vmatmul.mubr.f32.gmra.mrb[0].mxu0 %v645
        %v824 = vpop.f32.mrb[0].mxu0
        %v825 = vadd.f32 0.0, %v824
        %v826 = vpop.f32.mrb[0].mxu0
        %827 = vmatprep.mubr.f32.mxu0 0.0
        %828 = vmatmul.mubr.f32.gmra.mrb[0].mxu0 %v648
        %v829 = vpop.f32.mrb[0].mxu0
        %v830 = vadd.f32 0.0, %v829
        %v831 = vpop.f32.mrb[0].mxu0
        %832 = vmatprep.mubr.f32.mxu0 0.0
        %833 = vmatmul.mubr.f32.gmra.mrb[0].mxu0 %v651
        %v834 = vpop.f32.mrb[0].mxu0
        %v835 = vadd.f32 0.0, %v834
        %v836 = vpop.f32.mrb[0].mxu0
        %837 = vmatprep.mubr.f32.mxu0 0.0
        %838 = vmatmul.mubr.f32.gmra.mrb[0].mxu0 %v654
        %v839 = vpop.f32.mrb[0].mxu0
        %v840 = vadd.f32 0.0, %v839
        %v841 = vpop.f32.mrb[0].mxu0
        %842 = vmatprep.mubr.f32.mxu0 0.0
        %843 = vmatmul.mubr.f32.gmra.mrb[0].mxu0 %v657
        %v844 = vpop.f32.mrb[0].mxu0
        %v845 = vadd.f32 0.0, %v844
        %v846 = vpop.f32.mrb[0].mxu0
        %847 = vmatprep.mubr.f32.mxu0 0.0
        %848 = vmatmul.mubr.f32.gmra.mrb[0].mxu0 %v660
        %v849 = vpop.f32.mrb[0].mxu0
        %v850 = vadd.f32 0.0, %v849
        %v851 = vpop.f32.mrb[0].mxu0
        %852 = vmatprep.mubr.f32.mxu0 0.0
        %853 = vmatmul.mubr.f32.gmra.mrb[0].mxu0 %v663
        %v854 = vpop.f32.mrb[0].mxu0
        %v855 = vadd.f32 0.0, %v854
        %v856 = vpop.f32.mrb[0].mxu0
        %857 = vmatprep.mubr.f32.mxu0 0.0
        %858 = vmatmul.mubr.f32.gmra.mrb[0].mxu0 %v666
        %v859 = vpop.f32.mrb[0].mxu0
        %v860 = vadd.f32 0.0, %v859
        %v861 = vpop.f32.mrb[0].mxu0
        %862 = vmatprep.mubr.f32.mxu0 0.0
        %863 = vmatmul.mubr.f32.gmra.mrb[0].mxu0 %v669
        %v864 = vpop.f32.mrb[0].mxu0
        %v865 = vadd.f32 0.0, %v864
        %v866 = vpop.f32.mrb[0].mxu0
        %867 = vmatprep.mubr.f32.mxu0 0.0
        %868 = vmatmul.mubr.f32.gmra.mrb[0].mxu0 %v672
        %v869 = vpop.f32.mrb[0].mxu0
        %v870 = vadd.f32 0.0, %v869
        %v871 = vpop.f32.mrb[0].mxu0
        %872 = vmatprep.mubr.f32.mxu0 0.0
        %873 = vmatmul.mubr.f32.gmra.mrb[0].mxu0 %v675
        %v874 = vpop.f32.mrb[0].mxu0
        %v875 = vadd.f32 0.0, %v874
        %v876 = vpop.f32.mrb[0].mxu0
        %877 = vmatprep.mubr.f32.mxu0 0.0
        %878 = vmatmul.mubr.f32.gmra.mrb[0].mxu0 %v678
        %v879 = vpop.f32.mrb[0].mxu0
        %v880 = vadd.f32 0.0, %v879
        %v881 = vpop.f32.mrb[0].mxu0
        %882 = vmatprep.mubr.f32.mxu0 0.0
        %883 = vmatmul.mubr.f32.gmra.mrb[0].mxu0 %v681
        %v884 = vpop.f32.mrb[0].mxu0
        %v885 = vadd.f32 0.0, %v884
        %v886 = vpop.f32.mrb[0].mxu0
        %887 = vmatprep.mubr.f32.mxu0 0.0
        %888 = vmatmul.mubr.f32.gmra.mrb[0].mxu0 %v684
        %v889 = vpop.f32.mrb[0].mxu0
        %v890 = vadd.f32 0.0, %v889
        %v891 = vpop.f32.mrb[0].mxu0
        %892 = vmatprep.mubr.f32.mxu0 0.0
        %893 = vmatmul.mubr.f32.gmra.mrb[0].mxu0 %v687
        %v894 = vpop.f32.mrb[0].mxu0
        %v895 = vadd.f32 0.0, %v894
        %v896 = vpop.f32.mrb[0].mxu0
        %897 = vmatprep.mubr.f32.mxu0 0.0
        %898 = vmatmul.mubr.f32.gmra.mrb[0].mxu0 %v690
        %v899 = vpop.f32.mrb[0].mxu0
        %v900 = vadd.f32 0.0, %v899
        %v901 = vpop.f32.mrb[0].mxu0
        %902 = vmatprep.mubr.f32.mxu0 0.0
        %903 = vmatmul.mubr.f32.gmra.mrb[0].mxu0 %v693
        %v904 = vpop.f32.mrb[0].mxu0
        %v905 = vadd.f32 0.0, %v904
        %v906 = vpop.f32.mrb[0].mxu0
        %907 = vmatprep.mubr.f32.mxu0 0.0
        %908 = vmatmul.mubr.f32.gmra.mrb[0].mxu0 %v696
        %v909 = vpop.f32.mrb[0].mxu0
        %v910 = vadd.f32 0.0, %v909
        %v911 = vpop.f32.mrb[0].mxu0
        %912 = vmatprep.mubr.f32.mxu0 0.0
        %913 = vmatmul.mubr.f32.gmra.mrb[0].mxu0 %v699
        %v914 = vpop.f32.mrb[0].mxu0
        %v915 = vadd.f32 0.0, %v914
        %v916 = vpop.f32.mrb[0].mxu0
        %917 = vmatprep.mubr.f32.mxu0 0.0
        %918 = vmatmul.mubr.f32.gmra.mrb[0].mxu0 %v702
        %v919 = vpop.f32.mrb[0].mxu0
        %v920 = vadd.f32 0.0, %v919
        %v921 = vpop.f32.mrb[0].mxu0
        %922 = vmatprep.mubr.f32.mxu0 0.0
        %923 = vmatmul.mubr.f32.gmra.mrb[0].mxu0 %v705
        %v924 = vpop.f32.mrb[0].mxu0
        %v925 = vadd.f32 0.0, %v924
        %v926 = vpop.f32.mrb[0].mxu0
        %927 = vmatprep.mubr.f32.mxu0 0.0
        %928 = vmatmul.mubr.f32.gmra.mrb[0].mxu0 %v708
        %v929 = vpop.f32.mrb[0].mxu0
        %v930 = vadd.f32 0.0, %v929
        %v931 = vpop.f32.mrb[0].mxu0
        %932 = vmatprep.mubr.f32.mxu0 0.0
        %933 = vmatmul.mubr.f32.gmra.mrb[0].mxu0 %v711
        %v934 = vpop.f32.mrb[0].mxu0
        %v935 = vadd.f32 0.0, %v934
        %v936 = vpop.f32.mrb[0].mxu0
        %937 = vmatprep.mubr.f32.mxu0 0.0
        %938 = vmatmul.mubr.f32.gmra.mrb[0].mxu0 %v714
        %v939 = vpop.f32.mrb[0].mxu0
        %v940 = vadd.f32 0.0, %v939
        %v941 = vpop.f32.mrb[0].mxu0
        %942 = vmatprep.mubr.f32.mxu0 0.0
        %943 = vmatmul.mubr.f32.gmra.mrb[0].mxu0 %v717
        %v944 = vpop.f32.mrb[0].mxu0
        %v945 = vadd.f32 0.0, %v944
        %v946 = vpop.f32.mrb[0].mxu0
        %947 = vdwg.mxu0
        %v949 = vsel %vm417, %v556, 0
        %v952 = vsel %vm417, %v557, 0
        %v955 = vsel %vm417, %v558, 0
        %v958 = vsel %vm417, %v559, 0
        %v961 = vsel %vm417, %v560, 0
        %v964 = vsel %vm417, %v561, 0
        %v967 = vsel %vm417, %v562, 0
        %v970 = vsel %vm417, %v563, 0
        %v973 = vsel %vm417, %v564, 0
        %v976 = vsel %vm417, %v565, 0
        %v979 = vsel %vm417, %v566, 0
        %v982 = vsel %vm417, %v567, 0
        %v985 = vsel %vm417, %v568, 0
        %v988 = vsel %vm417, %v569, 0
        %v991 = vsel %vm417, %v570, 0
        %v994 = vsel %vm417, %v571, 0
        %v997 = vsel %vm417, %v572, 0
        %v1000 = vsel %vm417, %v573, 0
        %v1003 = vsel %vm417, %v574, 0
        %v1006 = vsel %vm417, %v575, 0
        %v1009 = vsel %vm417, %v576, 0
        %v1012 = vsel %vm417, %v577, 0
        %v1015 = vsel %vm417, %v578, 0
        %v1018 = vsel %vm417, %v579, 0
        %v1021 = vsel %vm417, %v580, 0
        %v1024 = vsel %vm417, %v581, 0
        %v1027 = vsel %vm417, %v582, 0
        %v1030 = vsel %vm417, %v583, 0
        %v1033 = vsel %vm417, %v584, 0
        %v1036 = vsel %vm417, %v585, 0
        %v1039 = vsel %vm417, %v586, 0
        %v1042 = vsel %vm417, %v587, 0
        %v1045 = vsel %vm719, %v588, 0
        %1047 = vmatprep.subr.mxu0 0.0
        %1048 = vmatpush1.msra.mxu0 %v1045
        %1049 = vmatprep.subr.mxu0 0.0
        %1050 = vmatpush1.msra.mxu0 0.0
        %1051 = vmatprep.subr.mxu0 0.0
        %1052 = vmatpush1.msra.mxu0 0.0
        %1053 = vmatprep.subr.mxu0 0.0
        %1054 = vmatpush1.msra.mxu0 0.0
        %1055 = vmatprep.subr.mxu0 0.0
        %1056 = vmatpush1.msra.mxu0 0.0
        %1057 = vmatprep.subr.mxu0 0.0
        %1058 = vmatpush1.msra.mxu0 0.0
        %1059 = vmatprep.subr.mxu0 0.0
        %1060 = vmatpush1.msra.mxu0 0.0
        %1061 = vmatprep.subr.mxu0 0.0
        %1062 = vmatpush1.msra.mxu0 0.0
        %1063 = vmatprep.subr.mxu0 0.0
        %1064 = vmatpush1.msra.mxu0 0.0
        %1065 = vmatprep.subr.mxu0 0.0
        %1066 = vmatpush1.msra.mxu0 0.0
        %1067 = vmatprep.subr.mxu0 0.0
        %1068 = vmatpush1.msra.mxu0 0.0
        %1069 = vmatprep.subr.mxu0 0.0
        %1070 = vmatpush1.msra.mxu0 0.0
        %1071 = vmatprep.subr.mxu0 0.0
        %1072 = vmatpush1.msra.mxu0 0.0
        %1073 = vmatprep.subr.mxu0 0.0
        %1074 = vmatpush1.msra.mxu0 0.0
        %1075 = vmatprep.subr.mxu0 0.0
        %1076 = vmatpush1.msra.mxu0 0.0
        %1077 = vmatprep.subr.mxu0 0.0
        %1078 = vmatpush1.msra.mxu0 0.0
        %1079 = vmatprep.subr.mxu0 0.0
        %1080 = vmatpush1.msra.mxu0 0.0
        %1081 = vmatprep.subr.mxu0 0.0
        %1082 = vmatpush1.msra.mxu0 0.0
        %1083 = vmatprep.subr.mxu0 0.0
        %1084 = vmatpush1.msra.mxu0 0.0
        %1085 = vmatprep.subr.mxu0 0.0
        %1086 = vmatpush1.msra.mxu0 0.0
        %1087 = vmatprep.subr.mxu0 0.0
        %1088 = vmatpush1.msra.mxu0 0.0
        %1089 = vmatprep.subr.mxu0 0.0
        %1090 = vmatpush1.msra.mxu0 0.0
        %1091 = vmatprep.subr.mxu0 0.0
        %1092 = vmatpush1.msra.mxu0 0.0
        %1093 = vmatprep.subr.mxu0 0.0
        %1094 = vmatpush1.msra.mxu0 0.0
        %1095 = vmatprep.subr.mxu0 0.0
        %1096 = vmatpush1.msra.mxu0 0.0
        %1097 = vmatprep.subr.mxu0 0.0
        %1098 = vmatpush1.msra.mxu0 0.0
        %1099 = vmatprep.subr.mxu0 0.0
        %1100 = vmatpush1.msra.mxu0 0.0
        %1101 = vmatprep.subr.mxu0 0.0
        %1102 = vmatpush1.msra.mxu0 0.0
        %1103 = vmatprep.subr.mxu0 0.0
        %1104 = vmatpush1.msra.mxu0 0.0
        %1105 = vmatprep.subr.mxu0 0.0
        %1106 = vmatpush1.msra.mxu0 0.0
        %1107 = vmatprep.subr.mxu0 0.0
        %1108 = vmatpush1.msra.mxu0 0.0
        %1109 = vmatprep.subr.mxu0 0.0
        %1110 = vmatpush1.msra.mxu0 0.0
        %1111 = vmatprep.mubr.f32.mxu0 0.0
        %1112 = vmatmul.mubr.f32.gmra.mrb[0].mxu0 %v949
        %v1113 = vpop.f32.mrb[0].mxu0
        %v1114 = vadd.f32 %v790, %v1113
        %v1115 = vpop.f32.mrb[0].mxu0
        %1116 = vmatprep.mubr.f32.mxu0 0.0
        %1117 = vmatmul.mubr.f32.gmra.mrb[0].mxu0 %v952
        %v1118 = vpop.f32.mrb[0].mxu0
        %v1119 = vadd.f32 %v795, %v1118
        %v1120 = vpop.f32.mrb[0].mxu0
        %1121 = vmatprep.mubr.f32.mxu0 0.0
        %1122 = vmatmul.mubr.f32.gmra.mrb[0].mxu0 %v955
        %v1123 = vpop.f32.mrb[0].mxu0
        %v1124 = vadd.f32 %v800, %v1123
        %v1125 = vpop.f32.mrb[0].mxu0
        %1126 = vmatprep.mubr.f32.mxu0 0.0
        %1127 = vmatmul.mubr.f32.gmra.mrb[0].mxu0 %v958
        %v1128 = vpop.f32.mrb[0].mxu0
        %v1129 = vadd.f32 %v805, %v1128
        %v1130 = vpop.f32.mrb[0].mxu0
        %1131 = vmatprep.mubr.f32.mxu0 0.0
        %1132 = vmatmul.mubr.f32.gmra.mrb[0].mxu0 %v961
        %v1133 = vpop.f32.mrb[0].mxu0
        %v1134 = vadd.f32 %v810, %v1133
        %v1135 = vpop.f32.mrb[0].mxu0
        %1136 = vmatprep.mubr.f32.mxu0 0.0
        %1137 = vmatmul.mubr.f32.gmra.mrb[0].mxu0 %v964
        %v1138 = vpop.f32.mrb[0].mxu0
        %v1139 = vadd.f32 %v815, %v1138
        %v1140 = vpop.f32.mrb[0].mxu0
        %1141 = vmatprep.mubr.f32.mxu0 0.0
        %1142 = vmatmul.mubr.f32.gmra.mrb[0].mxu0 %v967
        %v1143 = vpop.f32.mrb[0].mxu0
        %v1144 = vadd.f32 %v820, %v1143
        %v1145 = vpop.f32.mrb[0].mxu0
        %1146 = vmatprep.mubr.f32.mxu0 0.0
        %1147 = vmatmul.mubr.f32.gmra.mrb[0].mxu0 %v970
        %v1148 = vpop.f32.mrb[0].mxu0
        %v1149 = vadd.f32 %v825, %v1148
        %v1150 = vpop.f32.mrb[0].mxu0
        %1151 = vmatprep.mubr.f32.mxu0 0.0
        %1152 = vmatmul.mubr.f32.gmra.mrb[0].mxu0 %v973
        %v1153 = vpop.f32.mrb[0].mxu0
        %v1154 = vadd.f32 %v830, %v1153
        %v1155 = vpop.f32.mrb[0].mxu0
        %1156 = vmatprep.mubr.f32.mxu0 0.0
        %1157 = vmatmul.mubr.f32.gmra.mrb[0].mxu0 %v976
        %v1158 = vpop.f32.mrb[0].mxu0
        %v1159 = vadd.f32 %v835, %v1158
        %v1160 = vpop.f32.mrb[0].mxu0
        %1161 = vmatprep.mubr.f32.mxu0 0.0
        %1162 = vmatmul.mubr.f32.gmra.mrb[0].mxu0 %v979
        %v1163 = vpop.f32.mrb[0].mxu0
        %v1164 = vadd.f32 %v840, %v1163
        %v1165 = vpop.f32.mrb[0].mxu0
        %1166 = vmatprep.mubr.f32.mxu0 0.0
        %1167 = vmatmul.mubr.f32.gmra.mrb[0].mxu0 %v982
        %v1168 = vpop.f32.mrb[0].mxu0
        %v1169 = vadd.f32 %v845, %v1168
        %v1170 = vpop.f32.mrb[0].mxu0
        %1171 = vmatprep.mubr.f32.mxu0 0.0
        %1172 = vmatmul.mubr.f32.gmra.mrb[0].mxu0 %v985
        %v1173 = vpop.f32.mrb[0].mxu0
        %v1174 = vadd.f32 %v850, %v1173
        %v1175 = vpop.f32.mrb[0].mxu0
        %1176 = vmatprep.mubr.f32.mxu0 0.0
        %1177 = vmatmul.mubr.f32.gmra.mrb[0].mxu0 %v988
        %v1178 = vpop.f32.mrb[0].mxu0
        %v1179 = vadd.f32 %v855, %v1178
        %v1180 = vpop.f32.mrb[0].mxu0
        %1181 = vmatprep.mubr.f32.mxu0 0.0
        %1182 = vmatmul.mubr.f32.gmra.mrb[0].mxu0 %v991
        %v1183 = vpop.f32.mrb[0].mxu0
        %v1184 = vadd.f32 %v860, %v1183
        %v1185 = vpop.f32.mrb[0].mxu0
        %1186 = vmatprep.mubr.f32.mxu0 0.0
        %1187 = vmatmul.mubr.f32.gmra.mrb[0].mxu0 %v994
        %v1188 = vpop.f32.mrb[0].mxu0
        %v1189 = vadd.f32 %v865, %v1188
        %v1190 = vpop.f32.mrb[0].mxu0
        %1191 = vmatprep.mubr.f32.mxu0 0.0
        %1192 = vmatmul.mubr.f32.gmra.mrb[0].mxu0 %v997
        %v1193 = vpop.f32.mrb[0].mxu0
        %v1194 = vadd.f32 %v870, %v1193
        %v1195 = vpop.f32.mrb[0].mxu0
        %1196 = vmatprep.mubr.f32.mxu0 0.0
        %1197 = vmatmul.mubr.f32.gmra.mrb[0].mxu0 %v1000
        %v1198 = vpop.f32.mrb[0].mxu0
        %v1199 = vadd.f32 %v875, %v1198
        %v1200 = vpop.f32.mrb[0].mxu0
        %1201 = vmatprep.mubr.f32.mxu0 0.0
        %1202 = vmatmul.mubr.f32.gmra.mrb[0].mxu0 %v1003
        %v1203 = vpop.f32.mrb[0].mxu0
        %v1204 = vadd.f32 %v880, %v1203
        %v1205 = vpop.f32.mrb[0].mxu0
        %1206 = vmatprep.mubr.f32.mxu0 0.0
        %1207 = vmatmul.mubr.f32.gmra.mrb[0].mxu0 %v1006
        %v1208 = vpop.f32.mrb[0].mxu0
        %v1209 = vadd.f32 %v885, %v1208
        %v1210 = vpop.f32.mrb[0].mxu0
        %1211 = vmatprep.mubr.f32.mxu0 0.0
        %1212 = vmatmul.mubr.f32.gmra.mrb[0].mxu0 %v1009
        %v1213 = vpop.f32.mrb[0].mxu0
        %v1214 = vadd.f32 %v890, %v1213
        %v1215 = vpop.f32.mrb[0].mxu0
        %1216 = vmatprep.mubr.f32.mxu0 0.0
        %1217 = vmatmul.mubr.f32.gmra.mrb[0].mxu0 %v1012
        %v1218 = vpop.f32.mrb[0].mxu0
        %v1219 = vadd.f32 %v895, %v1218
        %v1220 = vpop.f32.mrb[0].mxu0
        %1221 = vmatprep.mubr.f32.mxu0 0.0
        %1222 = vmatmul.mubr.f32.gmra.mrb[0].mxu0 %v1015
        %v1223 = vpop.f32.mrb[0].mxu0
        %v1224 = vadd.f32 %v900, %v1223
        %v1225 = vpop.f32.mrb[0].mxu0
        %1226 = vmatprep.mubr.f32.mxu0 0.0
        %1227 = vmatmul.mubr.f32.gmra.mrb[0].mxu0 %v1018
        %v1228 = vpop.f32.mrb[0].mxu0
        %v1229 = vadd.f32 %v905, %v1228
        %v1230 = vpop.f32.mrb[0].mxu0
        %1231 = vmatprep.mubr.f32.mxu0 0.0
        %1232 = vmatmul.mubr.f32.gmra.mrb[0].mxu0 %v1021
        %v1233 = vpop.f32.mrb[0].mxu0
        %v1234 = vadd.f32 %v910, %v1233
        %v1235 = vpop.f32.mrb[0].mxu0
        %1236 = vmatprep.mubr.f32.mxu0 0.0
        %1237 = vmatmul.mubr.f32.gmra.mrb[0].mxu0 %v1024
        %v1238 = vpop.f32.mrb[0].mxu0
        %v1239 = vadd.f32 %v915, %v1238
        %v1240 = vpop.f32.mrb[0].mxu0
        %1241 = vmatprep.mubr.f32.mxu0 0.0
        %1242 = vmatmul.mubr.f32.gmra.mrb[0].mxu0 %v1027
        %v1243 = vpop.f32.mrb[0].mxu0
        %v1244 = vadd.f32 %v920, %v1243
        %v1245 = vpop.f32.mrb[0].mxu0
        %1246 = vmatprep.mubr.f32.mxu0 0.0
        %1247 = vmatmul.mubr.f32.gmra.mrb[0].mxu0 %v1030
        %v1248 = vpop.f32.mrb[0].mxu0
        %v1249 = vadd.f32 %v925, %v1248
        %v1250 = vpop.f32.mrb[0].mxu0
        %1251 = vmatprep.mubr.f32.mxu0 0.0
        %1252 = vmatmul.mubr.f32.gmra.mrb[0].mxu0 %v1033
        %v1253 = vpop.f32.mrb[0].mxu0
        %v1254 = vadd.f32 %v930, %v1253
        %v1255 = vpop.f32.mrb[0].mxu0
        %1256 = vmatprep.mubr.f32.mxu0 0.0
        %1257 = vmatmul.mubr.f32.gmra.mrb[0].mxu0 %v1036
        %v1258 = vpop.f32.mrb[0].mxu0
        %v1259 = vadd.f32 %v935, %v1258
        %v1260 = vpop.f32.mrb[0].mxu0
        %1261 = vmatprep.mubr.f32.mxu0 0.0
        %1262 = vmatmul.mubr.f32.gmra.mrb[0].mxu0 %v1039
        %v1263 = vpop.f32.mrb[0].mxu0
        %v1264 = vadd.f32 %v940, %v1263
        %v1265 = vpop.f32.mrb[0].mxu0
        %1266 = vmatprep.mubr.f32.mxu0 0.0
        %1267 = vmatmul.mubr.f32.gmra.mrb[0].mxu0 %v1042
        %v1268 = vpop.f32.mrb[0].mxu0
        %v1269 = vadd.f32 %v945, %v1268
        %v1270 = vpop.f32.mrb[0].mxu0
        %1271 = vdwg.mxu0
        %v1272 = vld [vmem:[#allocation2 + $0x9] sm:$0xff]
        %v1273 = vld [vmem:[#allocation2 + $0x11] sm:$0xff]
        %v1274 = vld [vmem:[#allocation2 + $0x29] sm:$0xff]
        %v1275 = vld [vmem:[#allocation2 + $0x31] sm:$0xff]
        %v1276 = vld [vmem:[#allocation2 + $0x49] sm:$0xff]
        %v1277 = vld [vmem:[#allocation2 + $0x51] sm:$0xff]
        %v1278 = vld [vmem:[#allocation2 + $0x69] sm:$0xff]
        %v1279 = vld [vmem:[#allocation2 + $0x71] sm:$0xff]
        %v1280 = vld [vmem:[#allocation2 + $0x89] sm:$0xff]
        %v1281 = vld [vmem:[#allocation2 + $0x91] sm:$0xff]
        %v1282 = vld [vmem:[#allocation2 + $0xa9] sm:$0xff]
        %v1283 = vld [vmem:[#allocation2 + $0xb1] sm:$0xff]
        %v1284 = vld [vmem:[#allocation2 + $0xc9] sm:$0xff]
        %v1285 = vld [vmem:[#allocation2 + $0xd1] sm:$0xff]
        %v1286 = vld [vmem:[#allocation2 + $0xe9] sm:$0xff]
        %v1287 = vld [vmem:[#allocation2 + $0xf1] sm:$0xff]
        %v1288 = vld [vmem:[#allocation2 + $0x109] sm:$0xff]
        %v1289 = vld [vmem:[#allocation2 + $0x111] sm:$0xff]
        %v1290 = vld [vmem:[#allocation2 + $0x129] sm:$0xff]
        %v1291 = vld [vmem:[#allocation2 + $0x131] sm:$0xff]
        %v1292 = vld [vmem:[#allocation2 + $0x149] sm:$0xff]
        %v1293 = vld [vmem:[#allocation2 + $0x151] sm:$0xff]
        %v1294 = vld [vmem:[#allocation2 + $0x169] sm:$0xff]
        %v1295 = vld [vmem:[#allocation2 + $0x171] sm:$0xff]
        %v1296 = vld [vmem:[#allocation2 + $0x189] sm:$0xff]
        %v1297 = vld [vmem:[#allocation2 + $0x191] sm:$0xff]
        %v1298 = vld [vmem:[#allocation2 + $0x1a9] sm:$0xff]
        %v1299 = vld [vmem:[#allocation2 + $0x1b1] sm:$0xff]
        %v1300 = vld [vmem:[#allocation2 + $0x1c9] sm:$0xff]
        %v1301 = vld [vmem:[#allocation2 + $0x1d1] sm:$0xff]
        %v1302 = vld [vmem:[#allocation2 + $0x1e9] sm:$0xff]
        %v1303 = vld [vmem:[#allocation2 + $0x1f1] sm:$0xff]
        %s1304 = scalar_lea.vmem %s1, 8
        %v1305 = vld [vmem:[%s1304] sm:$0xf]
        %v1307 = vsel %vm417, %v1272, 0
        %v1310 = vsel %vm417, %v1273, 0
        %v1313 = vsel %vm417, %v1274, 0
        %v1316 = vsel %vm417, %v1275, 0
        %v1319 = vsel %vm417, %v1276, 0
        %v1322 = vsel %vm417, %v1277, 0
        %v1325 = vsel %vm417, %v1278, 0
        %v1328 = vsel %vm417, %v1279, 0
        %v1331 = vsel %vm417, %v1280, 0
        %v1334 = vsel %vm417, %v1281, 0
        %v1337 = vsel %vm417, %v1282, 0
        %v1340 = vsel %vm417, %v1283, 0
        %v1343 = vsel %vm417, %v1284, 0
        %v1346 = vsel %vm417, %v1285, 0
        %v1349 = vsel %vm417, %v1286, 0
        %v1352 = vsel %vm417, %v1287, 0
        %v1355 = vsel %vm417, %v1288, 0
        %v1358 = vsel %vm417, %v1289, 0
        %v1361 = vsel %vm417, %v1290, 0
        %v1364 = vsel %vm417, %v1291, 0
        %v1367 = vsel %vm417, %v1292, 0
        %v1370 = vsel %vm417, %v1293, 0
        %v1373 = vsel %vm417, %v1294, 0
        %v1376 = vsel %vm417, %v1295, 0
        %v1379 = vsel %vm417, %v1296, 0
        %v1382 = vsel %vm417, %v1297, 0
        %v1385 = vsel %vm417, %v1298, 0
        %v1388 = vsel %vm417, %v1299, 0
        %v1391 = vsel %vm417, %v1300, 0
        %v1394 = vsel %vm417, %v1301, 0
        %v1397 = vsel %vm417, %v1302, 0
        %v1400 = vsel %vm417, %v1303, 0
        %v1403 = vsel %vm719, %v1305, 0
        %1405 = vmatprep.subr.mxu0 0.0
        %1406 = vmatpush1.msra.mxu0 %v1403
        %1407 = vmatprep.subr.mxu0 0.0
        %1408 = vmatpush1.msra.mxu0 0.0
        %1409 = vmatprep.subr.mxu0 0.0
        %1410 = vmatpush1.msra.mxu0 0.0
        %1411 = vmatprep.subr.mxu0 0.0
        %1412 = vmatpush1.msra.mxu0 0.0
        %1413 = vmatprep.subr.mxu0 0.0
        %1414 = vmatpush1.msra.mxu0 0.0
        %1415 = vmatprep.subr.mxu0 0.0
        %1416 = vmatpush1.msra.mxu0 0.0
        %1417 = vmatprep.subr.mxu0 0.0
        %1418 = vmatpush1.msra.mxu0 0.0
        %1419 = vmatprep.subr.mxu0 0.0
        %1420 = vmatpush1.msra.mxu0 0.0
        %1421 = vmatprep.subr.mxu0 0.0
        %1422 = vmatpush1.msra.mxu0 0.0
        %1423 = vmatprep.subr.mxu0 0.0
        %1424 = vmatpush1.msra.mxu0 0.0
        %1425 = vmatprep.subr.mxu0 0.0
        %1426 = vmatpush1.msra.mxu0 0.0
        %1427 = vmatprep.subr.mxu0 0.0
        %1428 = vmatpush1.msra.mxu0 0.0
        %1429 = vmatprep.subr.mxu0 0.0
        %1430 = vmatpush1.msra.mxu0 0.0
        %1431 = vmatprep.subr.mxu0 0.0
        %1432 = vmatpush1.msra.mxu0 0.0
        %1433 = vmatprep.subr.mxu0 0.0
        %1434 = vmatpush1.msra.mxu0 0.0
        %1435 = vmatprep.subr.mxu0 0.0
        %1436 = vmatpush1.msra.mxu0 0.0
        %1437 = vmatprep.subr.mxu0 0.0
        %1438 = vmatpush1.msra.mxu0 0.0
        %1439 = vmatprep.subr.mxu0 0.0
        %1440 = vmatpush1.msra.mxu0 0.0
        %1441 = vmatprep.subr.mxu0 0.0
        %1442 = vmatpush1.msra.mxu0 0.0
        %1443 = vmatprep.subr.mxu0 0.0
        %1444 = vmatpush1.msra.mxu0 0.0
        %1445 = vmatprep.subr.mxu0 0.0
        %1446 = vmatpush1.msra.mxu0 0.0
        %1447 = vmatprep.subr.mxu0 0.0
        %1448 = vmatpush1.msra.mxu0 0.0
        %1449 = vmatprep.subr.mxu0 0.0
        %1450 = vmatpush1.msra.mxu0 0.0
        %1451 = vmatprep.subr.mxu0 0.0
        %1452 = vmatpush1.msra.mxu0 0.0
        %1453 = vmatprep.subr.mxu0 0.0
        %1454 = vmatpush1.msra.mxu0 0.0
        %1455 = vmatprep.subr.mxu0 0.0
        %1456 = vmatpush1.msra.mxu0 0.0
        %1457 = vmatprep.subr.mxu0 0.0
        %1458 = vmatpush1.msra.mxu0 0.0
        %1459 = vmatprep.subr.mxu0 0.0
        %1460 = vmatpush1.msra.mxu0 0.0
        %1461 = vmatprep.subr.mxu0 0.0
        %1462 = vmatpush1.msra.mxu0 0.0
        %1463 = vmatprep.subr.mxu0 0.0
        %1464 = vmatpush1.msra.mxu0 0.0
        %1465 = vmatprep.subr.mxu0 0.0
        %1466 = vmatpush1.msra.mxu0 0.0
        %1467 = vmatprep.subr.mxu0 0.0
        %1468 = vmatpush1.msra.mxu0 0.0
        %1469 = vmatprep.mubr.f32.mxu0 0.0
        %1470 = vmatmul.mubr.f32.gmra.mrb[0].mxu0 %v1307
        %v1471 = vpop.f32.mrb[0].mxu0
        %v1472 = vadd.f32 0.0, %v1471
        %v1473 = vpop.f32.mrb[0].mxu0
        %1474 = vmatprep.mubr.f32.mxu0 0.0
        %1475 = vmatmul.mubr.f32.gmra.mrb[0].mxu0 %v1310
        %v1476 = vpop.f32.mrb[0].mxu0
        %v1477 = vadd.f32 0.0, %v1476
        %v1478 = vpop.f32.mrb[0].mxu0
        %1479 = vmatprep.mubr.f32.mxu0 0.0
        %1480 = vmatmul.mubr.f32.gmra.mrb[0].mxu0 %v1313
        %v1481 = vpop.f32.mrb[0].mxu0
        %v1482 = vadd.f32 0.0, %v1481
        %v1483 = vpop.f32.mrb[0].mxu0
        %1484 = vmatprep.mubr.f32.mxu0 0.0
        %1485 = vmatmul.mubr.f32.gmra.mrb[0].mxu0 %v1316
        %v1486 = vpop.f32.mrb[0].mxu0
        %v1487 = vadd.f32 0.0, %v1486
        %v1488 = vpop.f32.mrb[0].mxu0
        %1489 = vmatprep.mubr.f32.mxu0 0.0
        %1490 = vmatmul.mubr.f32.gmra.mrb[0].mxu0 %v1319
        %v1491 = vpop.f32.mrb[0].mxu0
        %v1492 = vadd.f32 0.0, %v1491
        %v1493 = vpop.f32.mrb[0].mxu0
        %1494 = vmatprep.mubr.f32.mxu0 0.0
        %1495 = vmatmul.mubr.f32.gmra.mrb[0].mxu0 %v1322
        %v1496 = vpop.f32.mrb[0].mxu0
        %v1497 = vadd.f32 0.0, %v1496
        %v1498 = vpop.f32.mrb[0].mxu0
        %1499 = vmatprep.mubr.f32.mxu0 0.0
        %1500 = vmatmul.mubr.f32.gmra.mrb[0].mxu0 %v1325
        %v1501 = vpop.f32.mrb[0].mxu0
        %v1502 = vadd.f32 0.0, %v1501
        %v1503 = vpop.f32.mrb[0].mxu0
        %1504 = vmatprep.mubr.f32.mxu0 0.0
        %1505 = vmatmul.mubr.f32.gmra.mrb[0].mxu0 %v1328
        %v1506 = vpop.f32.mrb[0].mxu0
        %v1507 = vadd.f32 0.0, %v1506
        %v1508 = vpop.f32.mrb[0].mxu0
        %1509 = vmatprep.mubr.f32.mxu0 0.0
        %1510 = vmatmul.mubr.f32.gmra.mrb[0].mxu0 %v1331
        %v1511 = vpop.f32.mrb[0].mxu0
        %v1512 = vadd.f32 0.0, %v1511
        %v1513 = vpop.f32.mrb[0].mxu0
        %1514 = vmatprep.mubr.f32.mxu0 0.0
        %1515 = vmatmul.mubr.f32.gmra.mrb[0].mxu0 %v1334
        %v1516 = vpop.f32.mrb[0].mxu0
        %v1517 = vadd.f32 0.0, %v1516
        %v1518 = vpop.f32.mrb[0].mxu0
        %1519 = vmatprep.mubr.f32.mxu0 0.0
        %1520 = vmatmul.mubr.f32.gmra.mrb[0].mxu0 %v1337
        %v1521 = vpop.f32.mrb[0].mxu0
        %v1522 = vadd.f32 0.0, %v1521
        %v1523 = vpop.f32.mrb[0].mxu0
        %1524 = vmatprep.mubr.f32.mxu0 0.0
        %1525 = vmatmul.mubr.f32.gmra.mrb[0].mxu0 %v1340
        %v1526 = vpop.f32.mrb[0].mxu0
        %v1527 = vadd.f32 0.0, %v1526
        %v1528 = vpop.f32.mrb[0].mxu0
        %1529 = vmatprep.mubr.f32.mxu0 0.0
        %1530 = vmatmul.mubr.f32.gmra.mrb[0].mxu0 %v1343
        %v1531 = vpop.f32.mrb[0].mxu0
        %v1532 = vadd.f32 0.0, %v1531
        %v1533 = vpop.f32.mrb[0].mxu0
        %1534 = vmatprep.mubr.f32.mxu0 0.0
        %1535 = vmatmul.mubr.f32.gmra.mrb[0].mxu0 %v1346
        %v1536 = vpop.f32.mrb[0].mxu0
        %v1537 = vadd.f32 0.0, %v1536
        %v1538 = vpop.f32.mrb[0].mxu0
        %1539 = vmatprep.mubr.f32.mxu0 0.0
        %1540 = vmatmul.mubr.f32.gmra.mrb[0].mxu0 %v1349
        %v1541 = vpop.f32.mrb[0].mxu0
        %v1542 = vadd.f32 0.0, %v1541
        %v1543 = vpop.f32.mrb[0].mxu0
        %1544 = vmatprep.mubr.f32.mxu0 0.0
        %1545 = vmatmul.mubr.f32.gmra.mrb[0].mxu0 %v1352
        %v1546 = vpop.f32.mrb[0].mxu0
        %v1547 = vadd.f32 0.0, %v1546
        %v1548 = vpop.f32.mrb[0].mxu0
        %1549 = vmatprep.mubr.f32.mxu0 0.0
        %1550 = vmatmul.mubr.f32.gmra.mrb[0].mxu0 %v1355
        %v1551 = vpop.f32.mrb[0].mxu0
        %v1552 = vadd.f32 0.0, %v1551
        %v1553 = vpop.f32.mrb[0].mxu0
        %1554 = vmatprep.mubr.f32.mxu0 0.0
        %1555 = vmatmul.mubr.f32.gmra.mrb[0].mxu0 %v1358
        %v1556 = vpop.f32.mrb[0].mxu0
        %v1557 = vadd.f32 0.0, %v1556
        %v1558 = vpop.f32.mrb[0].mxu0
        %1559 = vmatprep.mubr.f32.mxu0 0.0
        %1560 = vmatmul.mubr.f32.gmra.mrb[0].mxu0 %v1361
        %v1561 = vpop.f32.mrb[0].mxu0
        %v1562 = vadd.f32 0.0, %v1561
        %v1563 = vpop.f32.mrb[0].mxu0
        %1564 = vmatprep.mubr.f32.mxu0 0.0
        %1565 = vmatmul.mubr.f32.gmra.mrb[0].mxu0 %v1364
        %v1566 = vpop.f32.mrb[0].mxu0
        %v1567 = vadd.f32 0.0, %v1566
        %v1568 = vpop.f32.mrb[0].mxu0
        %1569 = vmatprep.mubr.f32.mxu0 0.0
        %1570 = vmatmul.mubr.f32.gmra.mrb[0].mxu0 %v1367
        %v1571 = vpop.f32.mrb[0].mxu0
        %v1572 = vadd.f32 0.0, %v1571
        %v1573 = vpop.f32.mrb[0].mxu0
        %1574 = vmatprep.mubr.f32.mxu0 0.0
        %1575 = vmatmul.mubr.f32.gmra.mrb[0].mxu0 %v1370
        %v1576 = vpop.f32.mrb[0].mxu0
        %v1577 = vadd.f32 0.0, %v1576
        %v1578 = vpop.f32.mrb[0].mxu0
        %1579 = vmatprep.mubr.f32.mxu0 0.0
        %1580 = vmatmul.mubr.f32.gmra.mrb[0].mxu0 %v1373
        %v1581 = vpop.f32.mrb[0].mxu0
        %v1582 = vadd.f32 0.0, %v1581
        %v1583 = vpop.f32.mrb[0].mxu0
        %1584 = vmatprep.mubr.f32.mxu0 0.0
        %1585 = vmatmul.mubr.f32.gmra.mrb[0].mxu0 %v1376
        %v1586 = vpop.f32.mrb[0].mxu0
        %v1587 = vadd.f32 0.0, %v1586
        %v1588 = vpop.f32.mrb[0].mxu0
        %1589 = vmatprep.mubr.f32.mxu0 0.0
        %1590 = vmatmul.mubr.f32.gmra.mrb[0].mxu0 %v1379
        %v1591 = vpop.f32.mrb[0].mxu0
        %v1592 = vadd.f32 0.0, %v1591
        %v1593 = vpop.f32.mrb[0].mxu0
        %1594 = vmatprep.mubr.f32.mxu0 0.0
        %1595 = vmatmul.mubr.f32.gmra.mrb[0].mxu0 %v1382
        %v1596 = vpop.f32.mrb[0].mxu0
        %v1597 = vadd.f32 0.0, %v1596
        %v1598 = vpop.f32.mrb[0].mxu0
        %1599 = vmatprep.mubr.f32.mxu0 0.0
        %1600 = vmatmul.mubr.f32.gmra.mrb[0].mxu0 %v1385
        %v1601 = vpop.f32.mrb[0].mxu0
        %v1602 = vadd.f32 0.0, %v1601
        %v1603 = vpop.f32.mrb[0].mxu0
        %1604 = vmatprep.mubr.f32.mxu0 0.0
        %1605 = vmatmul.mubr.f32.gmra.mrb[0].mxu0 %v1388
        %v1606 = vpop.f32.mrb[0].mxu0
        %v1607 = vadd.f32 0.0, %v1606
        %v1608 = vpop.f32.mrb[0].mxu0
        %1609 = vmatprep.mubr.f32.mxu0 0.0
        %1610 = vmatmul.mubr.f32.gmra.mrb[0].mxu0 %v1391
        %v1611 = vpop.f32.mrb[0].mxu0
        %v1612 = vadd.f32 0.0, %v1611
        %v1613 = vpop.f32.mrb[0].mxu0
        %1614 = vmatprep.mubr.f32.mxu0 0.0
        %1615 = vmatmul.mubr.f32.gmra.mrb[0].mxu0 %v1394
        %v1616 = vpop.f32.mrb[0].mxu0
        %v1617 = vadd.f32 0.0, %v1616
        %v1618 = vpop.f32.mrb[0].mxu0
        %1619 = vmatprep.mubr.f32.mxu0 0.0
        %1620 = vmatmul.mubr.f32.gmra.mrb[0].mxu0 %v1397
        %v1621 = vpop.f32.mrb[0].mxu0
        %v1622 = vadd.f32 0.0, %v1621
        %v1623 = vpop.f32.mrb[0].mxu0
        %1624 = vmatprep.mubr.f32.mxu0 0.0
        %1625 = vmatmul.mubr.f32.gmra.mrb[0].mxu0 %v1400
        %v1626 = vpop.f32.mrb[0].mxu0
        %v1627 = vadd.f32 0.0, %v1626
        %v1628 = vpop.f32.mrb[0].mxu0
        %1629 = vdwg.mxu0
        %v1630 = vadd.f32 %v1114, %v1472
        %v1631 = vadd.f32 %v1119, %v1477
        %v1632 = vadd.f32 %v1124, %v1482
        %v1633 = vadd.f32 %v1129, %v1487
        %v1634 = vadd.f32 %v1134, %v1492
        %v1635 = vadd.f32 %v1139, %v1497
        %v1636 = vadd.f32 %v1144, %v1502
        %v1637 = vadd.f32 %v1149, %v1507
        %v1638 = vadd.f32 %v1154, %v1512
        %v1639 = vadd.f32 %v1159, %v1517
        %v1640 = vadd.f32 %v1164, %v1522
        %v1641 = vadd.f32 %v1169, %v1527
        %v1642 = vadd.f32 %v1174, %v1532
        %v1643 = vadd.f32 %v1179, %v1537
        %v1644 = vadd.f32 %v1184, %v1542
        %v1645 = vadd.f32 %v1189, %v1547
        %v1646 = vadd.f32 %v1194, %v1552
        %v1647 = vadd.f32 %v1199, %v1557
        %v1648 = vadd.f32 %v1204, %v1562
        %v1649 = vadd.f32 %v1209, %v1567
        %v1650 = vadd.f32 %v1214, %v1572
        %v1651 = vadd.f32 %v1219, %v1577
        %v1652 = vadd.f32 %v1224, %v1582
        %v1653 = vadd.f32 %v1229, %v1587
        %v1654 = vadd.f32 %v1234, %v1592
        %v1655 = vadd.f32 %v1239, %v1597
        %v1656 = vadd.f32 %v1244, %v1602
        %v1657 = vadd.f32 %v1249, %v1607
        %v1658 = vadd.f32 %v1254, %v1612
        %v1659 = vadd.f32 %v1259, %v1617
        %v1660 = vadd.f32 %v1264, %v1622
        %v1661 = vadd.f32 %v1269, %v1627
        %v1662 = vld [vmem:[%s523 + $0x7] sm:$0xff]
        %v1663 = vld [vmem:[%s523 + $0xf] sm:$0xff]
        %v1664 = vld [vmem:[%s523 + $0x27] sm:$0xff]
        %v1665 = vld [vmem:[%s523 + $0x2f] sm:$0xff]
        %v1666 = vld [vmem:[%s523 + $0x47] sm:$0xff]
        %v1667 = vld [vmem:[%s523 + $0x4f] sm:$0xff]
        %v1668 = vld [vmem:[%s523 + $0x67] sm:$0xff]
        %v1669 = vld [vmem:[%s523 + $0x6f] sm:$0xff]
        %v1670 = vld [vmem:[%s523 + $0x87] sm:$0xff]
        %v1671 = vld [vmem:[%s523 + $0x8f] sm:$0xff]
        %v1672 = vld [vmem:[%s523 + $0xa7] sm:$0xff]
        %v1673 = vld [vmem:[%s523 + $0xaf] sm:$0xff]
        %v1674 = vld [vmem:[%s523 + $0xc7] sm:$0xff]
        %v1675 = vld [vmem:[%s523 + $0xcf] sm:$0xff]
        %v1676 = vld [vmem:[%s523 + $0xe7] sm:$0xff]
        %v1677 = vld [vmem:[%s523 + $0xef] sm:$0xff]
        %v1678 = vld [vmem:[%s523 + $0x107] sm:$0xff]
        %v1679 = vld [vmem:[%s523 + $0x10f] sm:$0xff]
        %v1680 = vld [vmem:[%s523 + $0x127] sm:$0xff]
        %v1681 = vld [vmem:[%s523 + $0x12f] sm:$0xff]
        %v1682 = vld [vmem:[%s523 + $0x147] sm:$0xff]
        %v1683 = vld [vmem:[%s523 + $0x14f] sm:$0xff]
        %v1684 = vld [vmem:[%s523 + $0x167] sm:$0xff]
        %v1685 = vld [vmem:[%s523 + $0x16f] sm:$0xff]
        %v1686 = vld [vmem:[%s523 + $0x187] sm:$0xff]
        %v1687 = vld [vmem:[%s523 + $0x18f] sm:$0xff]
        %v1688 = vld [vmem:[%s523 + $0x1a7] sm:$0xff]
        %v1689 = vld [vmem:[%s523 + $0x1af] sm:$0xff]
        %v1690 = vld [vmem:[%s523 + $0x1c7] sm:$0xff]
        %v1691 = vld [vmem:[%s523 + $0x1cf] sm:$0xff]
        %v1692 = vld [vmem:[%s523 + $0x1e7] sm:$0xff]
        %v1693 = vld [vmem:[%s523 + $0x1ef] sm:$0xff]
        %s1694 = scalar_lea.vmem %s1, 12
        %v1695 = vld [vmem:[%s1694] sm:$0xf]
        %v1697 = vsel %vm417, %v1662, 0
        %v1700 = vsel %vm417, %v1663, 0
        %v1703 = vsel %vm417, %v1664, 0
        %v1706 = vsel %vm417, %v1665, 0
        %v1709 = vsel %vm417, %v1666, 0
        %v1712 = vsel %vm417, %v1667, 0
        %v1715 = vsel %vm417, %v1668, 0
        %v1718 = vsel %vm417, %v1669, 0
        %v1721 = vsel %vm417, %v1670, 0
        %v1724 = vsel %vm417, %v1671, 0
        %v1727 = vsel %vm417, %v1672, 0
        %v1730 = vsel %vm417, %v1673, 0
        %v1733 = vsel %vm417, %v1674, 0
        %v1736 = vsel %vm417, %v1675, 0
        %v1739 = vsel %vm417, %v1676, 0
        %v1742 = vsel %vm417, %v1677, 0
        %v1745 = vsel %vm417, %v1678, 0
        %v1748 = vsel %vm417, %v1679, 0
        %v1751 = vsel %vm417, %v1680, 0
        %v1754 = vsel %vm417, %v1681, 0
        %v1757 = vsel %vm417, %v1682, 0
        %v1760 = vsel %vm417, %v1683, 0
        %v1763 = vsel %vm417, %v1684, 0
        %v1766 = vsel %vm417, %v1685, 0
        %v1769 = vsel %vm417, %v1686, 0
        %v1772 = vsel %vm417, %v1687, 0
        %v1775 = vsel %vm417, %v1688, 0
        %v1778 = vsel %vm417, %v1689, 0
        %v1781 = vsel %vm417, %v1690, 0
        %v1784 = vsel %vm417, %v1691, 0
        %v1787 = vsel %vm417, %v1692, 0
        %v1790 = vsel %vm417, %v1693, 0
        %v1793 = vsel %vm719, %v1695, 0
        %1795 = vmatprep.subr.mxu0 0.0
        %1796 = vmatpush1.msra.mxu0 %v1793
        %1797 = vmatprep.subr.mxu0 0.0
        %1798 = vmatpush1.msra.mxu0 0.0
        %1799 = vmatprep.subr.mxu0 0.0
        %1800 = vmatpush1.msra.mxu0 0.0
        %1801 = vmatprep.subr.mxu0 0.0
        %1802 = vmatpush1.msra.mxu0 0.0
        %1803 = vmatprep.subr.mxu0 0.0
        %1804 = vmatpush1.msra.mxu0 0.0
        %1805 = vmatprep.subr.mxu0 0.0
        %1806 = vmatpush1.msra.mxu0 0.0
        %1807 = vmatprep.subr.mxu0 0.0
        %1808 = vmatpush1.msra.mxu0 0.0
        %1809 = vmatprep.subr.mxu0 0.0
        %1810 = vmatpush1.msra.mxu0 0.0
        %1811 = vmatprep.subr.mxu0 0.0
        %1812 = vmatpush1.msra.mxu0 0.0
        %1813 = vmatprep.subr.mxu0 0.0
        %1814 = vmatpush1.msra.mxu0 0.0
        %1815 = vmatprep.subr.mxu0 0.0
        %1816 = vmatpush1.msra.mxu0 0.0
        %1817 = vmatprep.subr.mxu0 0.0
        %1818 = vmatpush1.msra.mxu0 0.0
        %1819 = vmatprep.subr.mxu0 0.0
        %1820 = vmatpush1.msra.mxu0 0.0
        %1821 = vmatprep.subr.mxu0 0.0
        %1822 = vmatpush1.msra.mxu0 0.0
        %1823 = vmatprep.subr.mxu0 0.0
        %1824 = vmatpush1.msra.mxu0 0.0
        %1825 = vmatprep.subr.mxu0 0.0
        %1826 = vmatpush1.msra.mxu0 0.0
        %1827 = vmatprep.subr.mxu0 0.0
        %1828 = vmatpush1.msra.mxu0 0.0
        %1829 = vmatprep.subr.mxu0 0.0
        %1830 = vmatpush1.msra.mxu0 0.0
        %1831 = vmatprep.subr.mxu0 0.0
        %1832 = vmatpush1.msra.mxu0 0.0
        %1833 = vmatprep.subr.mxu0 0.0
        %1834 = vmatpush1.msra.mxu0 0.0
        %1835 = vmatprep.subr.mxu0 0.0
        %1836 = vmatpush1.msra.mxu0 0.0
        %1837 = vmatprep.subr.mxu0 0.0
        %1838 = vmatpush1.msra.mxu0 0.0
        %1839 = vmatprep.subr.mxu0 0.0
        %1840 = vmatpush1.msra.mxu0 0.0
        %1841 = vmatprep.subr.mxu0 0.0
        %1842 = vmatpush1.msra.mxu0 0.0
        %1843 = vmatprep.subr.mxu0 0.0
        %1844 = vmatpush1.msra.mxu0 0.0
        %1845 = vmatprep.subr.mxu0 0.0
        %1846 = vmatpush1.msra.mxu0 0.0
        %1847 = vmatprep.subr.mxu0 0.0
        %1848 = vmatpush1.msra.mxu0 0.0
        %1849 = vmatprep.subr.mxu0 0.0
        %1850 = vmatpush1.msra.mxu0 0.0
        %1851 = vmatprep.subr.mxu0 0.0
        %1852 = vmatpush1.msra.mxu0 0.0
        %1853 = vmatprep.subr.mxu0 0.0
        %1854 = vmatpush1.msra.mxu0 0.0
        %1855 = vmatprep.subr.mxu0 0.0
        %1856 = vmatpush1.msra.mxu0 0.0
        %1857 = vmatprep.subr.mxu0 0.0
        %1858 = vmatpush1.msra.mxu0 0.0
        %1859 = vmatprep.mubr.f32.mxu0 0.0
        %1860 = vmatmul.mubr.f32.gmra.mrb[0].mxu0 %v1697
        %v1861 = vpop.f32.mrb[0].mxu0
        %v1862 = vadd.f32 0.0, %v1861
        %v1863 = vpop.f32.mrb[0].mxu0
        %1864 = vmatprep.mubr.f32.mxu0 0.0
        %1865 = vmatmul.mubr.f32.gmra.mrb[0].mxu0 %v1700
        %v1866 = vpop.f32.mrb[0].mxu0
        %v1867 = vadd.f32 0.0, %v1866
        %v1868 = vpop.f32.mrb[0].mxu0
        %1869 = vmatprep.mubr.f32.mxu0 0.0
        %1870 = vmatmul.mubr.f32.gmra.mrb[0].mxu0 %v1703
        %v1871 = vpop.f32.mrb[0].mxu0
        %v1872 = vadd.f32 0.0, %v1871
        %v1873 = vpop.f32.mrb[0].mxu0
        %1874 = vmatprep.mubr.f32.mxu0 0.0
        %1875 = vmatmul.mubr.f32.gmra.mrb[0].mxu0 %v1706
        %v1876 = vpop.f32.mrb[0].mxu0
        %v1877 = vadd.f32 0.0, %v1876
        %v1878 = vpop.f32.mrb[0].mxu0
        %1879 = vmatprep.mubr.f32.mxu0 0.0
        %1880 = vmatmul.mubr.f32.gmra.mrb[0].mxu0 %v1709
        %v1881 = vpop.f32.mrb[0].mxu0
        %v1882 = vadd.f32 0.0, %v1881
        %v1883 = vpop.f32.mrb[0].mxu0
        %1884 = vmatprep.mubr.f32.mxu0 0.0
        %1885 = vmatmul.mubr.f32.gmra.mrb[0].mxu0 %v1712
        %v1886 = vpop.f32.mrb[0].mxu0
        %v1887 = vadd.f32 0.0, %v1886
        %v1888 = vpop.f32.mrb[0].mxu0
        %1889 = vmatprep.mubr.f32.mxu0 0.0
        %1890 = vmatmul.mubr.f32.gmra.mrb[0].mxu0 %v1715
        %v1891 = vpop.f32.mrb[0].mxu0
        %v1892 = vadd.f32 0.0, %v1891
        %v1893 = vpop.f32.mrb[0].mxu0
        %1894 = vmatprep.mubr.f32.mxu0 0.0
        %1895 = vmatmul.mubr.f32.gmra.mrb[0].mxu0 %v1718
        %v1896 = vpop.f32.mrb[0].mxu0
        %v1897 = vadd.f32 0.0, %v1896
        %v1898 = vpop.f32.mrb[0].mxu0
        %1899 = vmatprep.mubr.f32.mxu0 0.0
        %1900 = vmatmul.mubr.f32.gmra.mrb[0].mxu0 %v1721
        %v1901 = vpop.f32.mrb[0].mxu0
        %v1902 = vadd.f32 0.0, %v1901
        %v1903 = vpop.f32.mrb[0].mxu0
        %1904 = vmatprep.mubr.f32.mxu0 0.0
        %1905 = vmatmul.mubr.f32.gmra.mrb[0].mxu0 %v1724
        %v1906 = vpop.f32.mrb[0].mxu0
        %v1907 = vadd.f32 0.0, %v1906
        %v1908 = vpop.f32.mrb[0].mxu0
        %1909 = vmatprep.mubr.f32.mxu0 0.0
        %1910 = vmatmul.mubr.f32.gmra.mrb[0].mxu0 %v1727
        %v1911 = vpop.f32.mrb[0].mxu0
        %v1912 = vadd.f32 0.0, %v1911
        %v1913 = vpop.f32.mrb[0].mxu0
        %1914 = vmatprep.mubr.f32.mxu0 0.0
        %1915 = vmatmul.mubr.f32.gmra.mrb[0].mxu0 %v1730
        %v1916 = vpop.f32.mrb[0].mxu0
        %v1917 = vadd.f32 0.0, %v1916
        %v1918 = vpop.f32.mrb[0].mxu0
        %1919 = vmatprep.mubr.f32.mxu0 0.0
        %1920 = vmatmul.mubr.f32.gmra.mrb[0].mxu0 %v1733
        %v1921 = vpop.f32.mrb[0].mxu0
        %v1922 = vadd.f32 0.0, %v1921
        %v1923 = vpop.f32.mrb[0].mxu0
        %1924 = vmatprep.mubr.f32.mxu0 0.0
        %1925 = vmatmul.mubr.f32.gmra.mrb[0].mxu0 %v1736
        %v1926 = vpop.f32.mrb[0].mxu0
        %v1927 = vadd.f32 0.0, %v1926
        %v1928 = vpop.f32.mrb[0].mxu0
        %1929 = vmatprep.mubr.f32.mxu0 0.0
        %1930 = vmatmul.mubr.f32.gmra.mrb[0].mxu0 %v1739
        %v1931 = vpop.f32.mrb[0].mxu0
        %v1932 = vadd.f32 0.0, %v1931
        %v1933 = vpop.f32.mrb[0].mxu0
        %1934 = vmatprep.mubr.f32.mxu0 0.0
        %1935 = vmatmul.mubr.f32.gmra.mrb[0].mxu0 %v1742
        %v1936 = vpop.f32.mrb[0].mxu0
        %v1937 = vadd.f32 0.0, %v1936
        %v1938 = vpop.f32.mrb[0].mxu0
        %1939 = vmatprep.mubr.f32.mxu0 0.0
        %1940 = vmatmul.mubr.f32.gmra.mrb[0].mxu0 %v1745
        %v1941 = vpop.f32.mrb[0].mxu0
        %v1942 = vadd.f32 0.0, %v1941
        %v1943 = vpop.f32.mrb[0].mxu0
        %1944 = vmatprep.mubr.f32.mxu0 0.0
        %1945 = vmatmul.mubr.f32.gmra.mrb[0].mxu0 %v1748
        %v1946 = vpop.f32.mrb[0].mxu0
        %v1947 = vadd.f32 0.0, %v1946
        %v1948 = vpop.f32.mrb[0].mxu0
        %1949 = vmatprep.mubr.f32.mxu0 0.0
        %1950 = vmatmul.mubr.f32.gmra.mrb[0].mxu0 %v1751
        %v1951 = vpop.f32.mrb[0].mxu0
        %v1952 = vadd.f32 0.0, %v1951
        %v1953 = vpop.f32.mrb[0].mxu0
        %1954 = vmatprep.mubr.f32.mxu0 0.0
        %1955 = vmatmul.mubr.f32.gmra.mrb[0].mxu0 %v1754
        %v1956 = vpop.f32.mrb[0].mxu0
        %v1957 = vadd.f32 0.0, %v1956
        %v1958 = vpop.f32.mrb[0].mxu0
        %1959 = vmatprep.mubr.f32.mxu0 0.0
        %1960 = vmatmul.mubr.f32.gmra.mrb[0].mxu0 %v1757
        %v1961 = vpop.f32.mrb[0].mxu0
        %v1962 = vadd.f32 0.0, %v1961
        %v1963 = vpop.f32.mrb[0].mxu0
        %1964 = vmatprep.mubr.f32.mxu0 0.0
        %1965 = vmatmul.mubr.f32.gmra.mrb[0].mxu0 %v1760
        %v1966 = vpop.f32.mrb[0].mxu0
        %v1967 = vadd.f32 0.0, %v1966
        %v1968 = vpop.f32.mrb[0].mxu0
        %1969 = vmatprep.mubr.f32.mxu0 0.0
        %1970 = vmatmul.mubr.f32.gmra.mrb[0].mxu0 %v1763
        %v1971 = vpop.f32.mrb[0].mxu0
        %v1972 = vadd.f32 0.0, %v1971
        %v1973 = vpop.f32.mrb[0].mxu0
        %1974 = vmatprep.mubr.f32.mxu0 0.0
        %1975 = vmatmul.mubr.f32.gmra.mrb[0].mxu0 %v1766
        %v1976 = vpop.f32.mrb[0].mxu0
        %v1977 = vadd.f32 0.0, %v1976
        %v1978 = vpop.f32.mrb[0].mxu0
        %1979 = vmatprep.mubr.f32.mxu0 0.0
        %1980 = vmatmul.mubr.f32.gmra.mrb[0].mxu0 %v1769
        %v1981 = vpop.f32.mrb[0].mxu0
        %v1982 = vadd.f32 0.0, %v1981
        %v1983 = vpop.f32.mrb[0].mxu0
        %1984 = vmatprep.mubr.f32.mxu0 0.0
        %1985 = vmatmul.mubr.f32.gmra.mrb[0].mxu0 %v1772
        %v1986 = vpop.f32.mrb[0].mxu0
        %v1987 = vadd.f32 0.0, %v1986
        %v1988 = vpop.f32.mrb[0].mxu0
        %1989 = vmatprep.mubr.f32.mxu0 0.0
        %1990 = vmatmul.mubr.f32.gmra.mrb[0].mxu0 %v1775
        %v1991 = vpop.f32.mrb[0].mxu0
        %v1992 = vadd.f32 0.0, %v1991
        %v1993 = vpop.f32.mrb[0].mxu0
        %1994 = vmatprep.mubr.f32.mxu0 0.0
        %1995 = vmatmul.mubr.f32.gmra.mrb[0].mxu0 %v1778
        %v1996 = vpop.f32.mrb[0].mxu0
        %v1997 = vadd.f32 0.0, %v1996
        %v1998 = vpop.f32.mrb[0].mxu0
        %1999 = vmatprep.mubr.f32.mxu0 0.0
        %2000 = vmatmul.mubr.f32.gmra.mrb[0].mxu0 %v1781
        %v2001 = vpop.f32.mrb[0].mxu0
        %v2002 = vadd.f32 0.0, %v2001
        %v2003 = vpop.f32.mrb[0].mxu0
        %2004 = vmatprep.mubr.f32.mxu0 0.0
        %2005 = vmatmul.mubr.f32.gmra.mrb[0].mxu0 %v1784
        %v2006 = vpop.f32.mrb[0].mxu0
        %v2007 = vadd.f32 0.0, %v2006
        %v2008 = vpop.f32.mrb[0].mxu0
        %2009 = vmatprep.mubr.f32.mxu0 0.0
        %2010 = vmatmul.mubr.f32.gmra.mrb[0].mxu0 %v1787
        %v2011 = vpop.f32.mrb[0].mxu0
        %v2012 = vadd.f32 0.0, %v2011
        %v2013 = vpop.f32.mrb[0].mxu0
        %2014 = vmatprep.mubr.f32.mxu0 0.0
        %2015 = vmatmul.mubr.f32.gmra.mrb[0].mxu0 %v1790
        %v2016 = vpop.f32.mrb[0].mxu0
        %v2017 = vadd.f32 0.0, %v2016
        %v2018 = vpop.f32.mrb[0].mxu0
        %2019 = vdwg.mxu0
        %v2020 = vadd.f32 %v1630, %v1862
        %v2021 = vadd.f32 %v1631, %v1867
        %v2022 = vadd.f32 %v1632, %v1872
        %v2023 = vadd.f32 %v1633, %v1877
        %v2024 = vadd.f32 %v1634, %v1882
        %v2025 = vadd.f32 %v1635, %v1887
        %v2026 = vadd.f32 %v1636, %v1892
        %v2027 = vadd.f32 %v1637, %v1897
        %v2028 = vadd.f32 %v1638, %v1902
        %v2029 = vadd.f32 %v1639, %v1907
        %v2030 = vadd.f32 %v1640, %v1912
        %v2031 = vadd.f32 %v1641, %v1917
        %v2032 = vadd.f32 %v1642, %v1922
        %v2033 = vadd.f32 %v1643, %v1927
        %v2034 = vadd.f32 %v1644, %v1932
        %v2035 = vadd.f32 %v1645, %v1937
        %v2036 = vadd.f32 %v1646, %v1942
        %v2037 = vadd.f32 %v1647, %v1947
        %v2038 = vadd.f32 %v1648, %v1952
        %v2039 = vadd.f32 %v1649, %v1957
        %v2040 = vadd.f32 %v1650, %v1962
        %v2041 = vadd.f32 %v1651, %v1967
        %v2042 = vadd.f32 %v1652, %v1972
        %v2043 = vadd.f32 %v1653, %v1977
        %v2044 = vadd.f32 %v1654, %v1982
        %v2045 = vadd.f32 %v1655, %v1987
        %v2046 = vadd.f32 %v1656, %v1992
        %v2047 = vadd.f32 %v1657, %v1997
        %v2048 = vadd.f32 %v1658, %v2002
        %v2049 = vadd.f32 %v1659, %v2007
        %v2050 = vadd.f32 %v1660, %v2012
        %v2051 = vadd.f32 %v1661, %v2017
        %v2052 = vld [vmem:[%s523 + $0x8] sm:$0xff]
        %v2053 = vld [vmem:[%s523 + $0x10] sm:$0xff]
        %v2054 = vld [vmem:[%s523 + $0x28] sm:$0xff]
        %v2055 = vld [vmem:[%s523 + $0x30] sm:$0xff]
        %v2056 = vld [vmem:[%s523 + $0x48] sm:$0xff]
        %v2057 = vld [vmem:[%s523 + $0x50] sm:$0xff]
        %v2058 = vld [vmem:[%s523 + $0x68] sm:$0xff]
        %v2059 = vld [vmem:[%s523 + $0x70] sm:$0xff]
        %v2060 = vld [vmem:[%s523 + $0x88] sm:$0xff]
        %v2061 = vld [vmem:[%s523 + $0x90] sm:$0xff]
        %v2062 = vld [vmem:[%s523 + $0xa8] sm:$0xff]
        %v2063 = vld [vmem:[%s523 + $0xb0] sm:$0xff]
        %v2064 = vld [vmem:[%s523 + $0xc8] sm:$0xff]
        %v2065 = vld [vmem:[%s523 + $0xd0] sm:$0xff]
        %v2066 = vld [vmem:[%s523 + $0xe8] sm:$0xff]
        %v2067 = vld [vmem:[%s523 + $0xf0] sm:$0xff]
        %v2068 = vld [vmem:[%s523 + $0x108] sm:$0xff]
        %v2069 = vld [vmem:[%s523 + $0x110] sm:$0xff]
        %v2070 = vld [vmem:[%s523 + $0x128] sm:$0xff]
        %v2071 = vld [vmem:[%s523 + $0x130] sm:$0xff]
        %v2072 = vld [vmem:[%s523 + $0x148] sm:$0xff]
        %v2073 = vld [vmem:[%s523 + $0x150] sm:$0xff]
        %v2074 = vld [vmem:[%s523 + $0x168] sm:$0xff]
        %v2075 = vld [vmem:[%s523 + $0x170] sm:$0xff]
        %v2076 = vld [vmem:[%s523 + $0x188] sm:$0xff]
        %v2077 = vld [vmem:[%s523 + $0x190] sm:$0xff]
        %v2078 = vld [vmem:[%s523 + $0x1a8] sm:$0xff]
        %v2079 = vld [vmem:[%s523 + $0x1b0] sm:$0xff]
        %v2080 = vld [vmem:[%s523 + $0x1c8] sm:$0xff]
        %v2081 = vld [vmem:[%s523 + $0x1d0] sm:$0xff]
        %v2082 = vld [vmem:[%s523 + $0x1e8] sm:$0xff]
        %v2083 = vld [vmem:[%s523 + $0x1f0] sm:$0xff]
        %s2084 = scalar_lea.vmem %s1, 16
        %v2085 = vld [vmem:[%s2084] sm:$0xf]
        %v2087 = vsel %vm417, %v2052, 0
        %v2090 = vsel %vm417, %v2053, 0
        %v2093 = vsel %vm417, %v2054, 0
        %v2096 = vsel %vm417, %v2055, 0
        %v2099 = vsel %vm417, %v2056, 0
        %v2102 = vsel %vm417, %v2057, 0
        %v2105 = vsel %vm417, %v2058, 0
        %v2108 = vsel %vm417, %v2059, 0
        %v2111 = vsel %vm417, %v2060, 0
        %v2114 = vsel %vm417, %v2061, 0
        %v2117 = vsel %vm417, %v2062, 0
        %v2120 = vsel %vm417, %v2063, 0
        %v2123 = vsel %vm417, %v2064, 0
        %v2126 = vsel %vm417, %v2065, 0
        %v2129 = vsel %vm417, %v2066, 0
        %v2132 = vsel %vm417, %v2067, 0
        %v2135 = vsel %vm417, %v2068, 0
        %v2138 = vsel %vm417, %v2069, 0
        %v2141 = vsel %vm417, %v2070, 0
        %v2144 = vsel %vm417, %v2071, 0
        %v2147 = vsel %vm417, %v2072, 0
        %v2150 = vsel %vm417, %v2073, 0
        %v2153 = vsel %vm417, %v2074, 0
        %v2156 = vsel %vm417, %v2075, 0
        %v2159 = vsel %vm417, %v2076, 0
        %v2162 = vsel %vm417, %v2077, 0
        %v2165 = vsel %vm417, %v2078, 0
        %v2168 = vsel %vm417, %v2079, 0
        %v2171 = vsel %vm417, %v2080, 0
        %v2174 = vsel %vm417, %v2081, 0
        %v2177 = vsel %vm417, %v2082, 0
        %v2180 = vsel %vm417, %v2083, 0
        %v2183 = vsel %vm719, %v2085, 0
        %2185 = vmatprep.subr.mxu0 0.0
        %2186 = vmatpush1.msra.mxu0 %v2183
        %2187 = vmatprep.subr.mxu0 0.0
        %2188 = vmatpush1.msra.mxu0 0.0
        %2189 = vmatprep.subr.mxu0 0.0
        %2190 = vmatpush1.msra.mxu0 0.0
        %2191 = vmatprep.subr.mxu0 0.0
        %2192 = vmatpush1.msra.mxu0 0.0
        %2193 = vmatprep.subr.mxu0 0.0
        %2194 = vmatpush1.msra.mxu0 0.0
        %2195 = vmatprep.subr.mxu0 0.0
        %2196 = vmatpush1.msra.mxu0 0.0
        %2197 = vmatprep.subr.mxu0 0.0
        %2198 = vmatpush1.msra.mxu0 0.0
        %2199 = vmatprep.subr.mxu0 0.0
        %2200 = vmatpush1.msra.mxu0 0.0
        %2201 = vmatprep.subr.mxu0 0.0
        %2202 = vmatpush1.msra.mxu0 0.0
        %2203 = vmatprep.subr.mxu0 0.0
        %2204 = vmatpush1.msra.mxu0 0.0
        %2205 = vmatprep.subr.mxu0 0.0
        %2206 = vmatpush1.msra.mxu0 0.0
        %2207 = vmatprep.subr.mxu0 0.0
        %2208 = vmatpush1.msra.mxu0 0.0
        %2209 = vmatprep.subr.mxu0 0.0
        %2210 = vmatpush1.msra.mxu0 0.0
        %2211 = vmatprep.subr.mxu0 0.0
        %2212 = vmatpush1.msra.mxu0 0.0
        %2213 = vmatprep.subr.mxu0 0.0
        %2214 = vmatpush1.msra.mxu0 0.0
        %2215 = vmatprep.subr.mxu0 0.0
        %2216 = vmatpush1.msra.mxu0 0.0
        %2217 = vmatprep.subr.mxu0 0.0
        %2218 = vmatpush1.msra.mxu0 0.0
        %2219 = vmatprep.subr.mxu0 0.0
        %2220 = vmatpush1.msra.mxu0 0.0
        %2221 = vmatprep.subr.mxu0 0.0
        %2222 = vmatpush1.msra.mxu0 0.0
        %2223 = vmatprep.subr.mxu0 0.0
        %2224 = vmatpush1.msra.mxu0 0.0
        %2225 = vmatprep.subr.mxu0 0.0
        %2226 = vmatpush1.msra.mxu0 0.0
        %2227 = vmatprep.subr.mxu0 0.0
        %2228 = vmatpush1.msra.mxu0 0.0
        %2229 = vmatprep.subr.mxu0 0.0
        %2230 = vmatpush1.msra.mxu0 0.0
        %2231 = vmatprep.subr.mxu0 0.0
        %2232 = vmatpush1.msra.mxu0 0.0
        %2233 = vmatprep.subr.mxu0 0.0
        %2234 = vmatpush1.msra.mxu0 0.0
        %2235 = vmatprep.subr.mxu0 0.0
        %2236 = vmatpush1.msra.mxu0 0.0
        %2237 = vmatprep.subr.mxu0 0.0
        %2238 = vmatpush1.msra.mxu0 0.0
        %2239 = vmatprep.subr.mxu0 0.0
        %2240 = vmatpush1.msra.mxu0 0.0
        %2241 = vmatprep.subr.mxu0 0.0
        %2242 = vmatpush1.msra.mxu0 0.0
        %2243 = vmatprep.subr.mxu0 0.0
        %2244 = vmatpush1.msra.mxu0 0.0
        %2245 = vmatprep.subr.mxu0 0.0
        %2246 = vmatpush1.msra.mxu0 0.0
        %2247 = vmatprep.subr.mxu0 0.0
        %2248 = vmatpush1.msra.mxu0 0.0
        %2249 = vmatprep.mubr.f32.mxu0 0.0
        %2250 = vmatmul.mubr.f32.gmra.mrb[0].mxu0 %v2087
        %v2251 = vpop.f32.mrb[0].mxu0
        %v2252 = vadd.f32 0.0, %v2251
        %v2253 = vpop.f32.mrb[0].mxu0
        %2254 = vmatprep.mubr.f32.mxu0 0.0
        %2255 = vmatmul.mubr.f32.gmra.mrb[0].mxu0 %v2090
        %v2256 = vpop.f32.mrb[0].mxu0
        %v2257 = vadd.f32 0.0, %v2256
        %v2258 = vpop.f32.mrb[0].mxu0
        %2259 = vmatprep.mubr.f32.mxu0 0.0
        %2260 = vmatmul.mubr.f32.gmra.mrb[0].mxu0 %v2093
        %v2261 = vpop.f32.mrb[0].mxu0
        %v2262 = vadd.f32 0.0, %v2261
        %v2263 = vpop.f32.mrb[0].mxu0
        %2264 = vmatprep.mubr.f32.mxu0 0.0
        %2265 = vmatmul.mubr.f32.gmra.mrb[0].mxu0 %v2096
        %v2266 = vpop.f32.mrb[0].mxu0
        %v2267 = vadd.f32 0.0, %v2266
        %v2268 = vpop.f32.mrb[0].mxu0
        %2269 = vmatprep.mubr.f32.mxu0 0.0
        %2270 = vmatmul.mubr.f32.gmra.mrb[0].mxu0 %v2099
        %v2271 = vpop.f32.mrb[0].mxu0
        %v2272 = vadd.f32 0.0, %v2271
        %v2273 = vpop.f32.mrb[0].mxu0
        %2274 = vmatprep.mubr.f32.mxu0 0.0
        %2275 = vmatmul.mubr.f32.gmra.mrb[0].mxu0 %v2102
        %v2276 = vpop.f32.mrb[0].mxu0
        %v2277 = vadd.f32 0.0, %v2276
        %v2278 = vpop.f32.mrb[0].mxu0
        %2279 = vmatprep.mubr.f32.mxu0 0.0
        %2280 = vmatmul.mubr.f32.gmra.mrb[0].mxu0 %v2105
        %v2281 = vpop.f32.mrb[0].mxu0
        %v2282 = vadd.f32 0.0, %v2281
        %v2283 = vpop.f32.mrb[0].mxu0
        %2284 = vmatprep.mubr.f32.mxu0 0.0
        %2285 = vmatmul.mubr.f32.gmra.mrb[0].mxu0 %v2108
        %v2286 = vpop.f32.mrb[0].mxu0
        %v2287 = vadd.f32 0.0, %v2286
        %v2288 = vpop.f32.mrb[0].mxu0
        %2289 = vmatprep.mubr.f32.mxu0 0.0
        %2290 = vmatmul.mubr.f32.gmra.mrb[0].mxu0 %v2111
        %v2291 = vpop.f32.mrb[0].mxu0
        %v2292 = vadd.f32 0.0, %v2291
        %v2293 = vpop.f32.mrb[0].mxu0
        %2294 = vmatprep.mubr.f32.mxu0 0.0
        %2295 = vmatmul.mubr.f32.gmra.mrb[0].mxu0 %v2114
        %v2296 = vpop.f32.mrb[0].mxu0
        %v2297 = vadd.f32 0.0, %v2296
        %v2298 = vpop.f32.mrb[0].mxu0
        %2299 = vmatprep.mubr.f32.mxu0 0.0
        %2300 = vmatmul.mubr.f32.gmra.mrb[0].mxu0 %v2117
        %v2301 = vpop.f32.mrb[0].mxu0
        %v2302 = vadd.f32 0.0, %v2301
        %v2303 = vpop.f32.mrb[0].mxu0
        %2304 = vmatprep.mubr.f32.mxu0 0.0
        %2305 = vmatmul.mubr.f32.gmra.mrb[0].mxu0 %v2120
        %v2306 = vpop.f32.mrb[0].mxu0
        %v2307 = vadd.f32 0.0, %v2306
        %v2308 = vpop.f32.mrb[0].mxu0
        %2309 = vmatprep.mubr.f32.mxu0 0.0
        %2310 = vmatmul.mubr.f32.gmra.mrb[0].mxu0 %v2123
        %v2311 = vpop.f32.mrb[0].mxu0
        %v2312 = vadd.f32 0.0, %v2311
        %v2313 = vpop.f32.mrb[0].mxu0
        %2314 = vmatprep.mubr.f32.mxu0 0.0
        %2315 = vmatmul.mubr.f32.gmra.mrb[0].mxu0 %v2126
        %v2316 = vpop.f32.mrb[0].mxu0
        %v2317 = vadd.f32 0.0, %v2316
        %v2318 = vpop.f32.mrb[0].mxu0
        %2319 = vmatprep.mubr.f32.mxu0 0.0
        %2320 = vmatmul.mubr.f32.gmra.mrb[0].mxu0 %v2129
        %v2321 = vpop.f32.mrb[0].mxu0
        %v2322 = vadd.f32 0.0, %v2321
        %v2323 = vpop.f32.mrb[0].mxu0
        %2324 = vmatprep.mubr.f32.mxu0 0.0
        %2325 = vmatmul.mubr.f32.gmra.mrb[0].mxu0 %v2132
        %v2326 = vpop.f32.mrb[0].mxu0
        %v2327 = vadd.f32 0.0, %v2326
        %v2328 = vpop.f32.mrb[0].mxu0
        %2329 = vmatprep.mubr.f32.mxu0 0.0
        %2330 = vmatmul.mubr.f32.gmra.mrb[0].mxu0 %v2135
        %v2331 = vpop.f32.mrb[0].mxu0
        %v2332 = vadd.f32 0.0, %v2331
        %v2333 = vpop.f32.mrb[0].mxu0
        %2334 = vmatprep.mubr.f32.mxu0 0.0
        %2335 = vmatmul.mubr.f32.gmra.mrb[0].mxu0 %v2138
        %v2336 = vpop.f32.mrb[0].mxu0
        %v2337 = vadd.f32 0.0, %v2336
        %v2338 = vpop.f32.mrb[0].mxu0
        %2339 = vmatprep.mubr.f32.mxu0 0.0
        %2340 = vmatmul.mubr.f32.gmra.mrb[0].mxu0 %v2141
        %v2341 = vpop.f32.mrb[0].mxu0
        %v2342 = vadd.f32 0.0, %v2341
        %v2343 = vpop.f32.mrb[0].mxu0
        %2344 = vmatprep.mubr.f32.mxu0 0.0
        %2345 = vmatmul.mubr.f32.gmra.mrb[0].mxu0 %v2144
        %v2346 = vpop.f32.mrb[0].mxu0
        %v2347 = vadd.f32 0.0, %v2346
        %v2348 = vpop.f32.mrb[0].mxu0
        %2349 = vmatprep.mubr.f32.mxu0 0.0
        %2350 = vmatmul.mubr.f32.gmra.mrb[0].mxu0 %v2147
        %v2351 = vpop.f32.mrb[0].mxu0
        %v2352 = vadd.f32 0.0, %v2351
        %v2353 = vpop.f32.mrb[0].mxu0
        %2354 = vmatprep.mubr.f32.mxu0 0.0
        %2355 = vmatmul.mubr.f32.gmra.mrb[0].mxu0 %v2150
        %v2356 = vpop.f32.mrb[0].mxu0
        %v2357 = vadd.f32 0.0, %v2356
        %v2358 = vpop.f32.mrb[0].mxu0
        %2359 = vmatprep.mubr.f32.mxu0 0.0
        %2360 = vmatmul.mubr.f32.gmra.mrb[0].mxu0 %v2153
        %v2361 = vpop.f32.mrb[0].mxu0
        %v2362 = vadd.f32 0.0, %v2361
        %v2363 = vpop.f32.mrb[0].mxu0
        %2364 = vmatprep.mubr.f32.mxu0 0.0
        %2365 = vmatmul.mubr.f32.gmra.mrb[0].mxu0 %v2156
        %v2366 = vpop.f32.mrb[0].mxu0
        %v2367 = vadd.f32 0.0, %v2366
        %v2368 = vpop.f32.mrb[0].mxu0
        %2369 = vmatprep.mubr.f32.mxu0 0.0
        %2370 = vmatmul.mubr.f32.gmra.mrb[0].mxu0 %v2159
        %v2371 = vpop.f32.mrb[0].mxu0
        %v2372 = vadd.f32 0.0, %v2371
        %v2373 = vpop.f32.mrb[0].mxu0
        %2374 = vmatprep.mubr.f32.mxu0 0.0
        %2375 = vmatmul.mubr.f32.gmra.mrb[0].mxu0 %v2162
        %v2376 = vpop.f32.mrb[0].mxu0
        %v2377 = vadd.f32 0.0, %v2376
        %v2378 = vpop.f32.mrb[0].mxu0
        %2379 = vmatprep.mubr.f32.mxu0 0.0
        %2380 = vmatmul.mubr.f32.gmra.mrb[0].mxu0 %v2165
        %v2381 = vpop.f32.mrb[0].mxu0
        %v2382 = vadd.f32 0.0, %v2381
        %v2383 = vpop.f32.mrb[0].mxu0
        %2384 = vmatprep.mubr.f32.mxu0 0.0
        %2385 = vmatmul.mubr.f32.gmra.mrb[0].mxu0 %v2168
        %v2386 = vpop.f32.mrb[0].mxu0
        %v2387 = vadd.f32 0.0, %v2386
        %v2388 = vpop.f32.mrb[0].mxu0
        %2389 = vmatprep.mubr.f32.mxu0 0.0
        %2390 = vmatmul.mubr.f32.gmra.mrb[0].mxu0 %v2171
        %v2391 = vpop.f32.mrb[0].mxu0
        %v2392 = vadd.f32 0.0, %v2391
        %v2393 = vpop.f32.mrb[0].mxu0
        %2394 = vmatprep.mubr.f32.mxu0 0.0
        %2395 = vmatmul.mubr.f32.gmra.mrb[0].mxu0 %v2174
        %v2396 = vpop.f32.mrb[0].mxu0
        %v2397 = vadd.f32 0.0, %v2396
        %v2398 = vpop.f32.mrb[0].mxu0
        %2399 = vmatprep.mubr.f32.mxu0 0.0
        %2400 = vmatmul.mubr.f32.gmra.mrb[0].mxu0 %v2177
        %v2401 = vpop.f32.mrb[0].mxu0
        %v2402 = vadd.f32 0.0, %v2401
        %v2403 = vpop.f32.mrb[0].mxu0
        %2404 = vmatprep.mubr.f32.mxu0 0.0
        %2405 = vmatmul.mubr.f32.gmra.mrb[0].mxu0 %v2180
        %v2406 = vpop.f32.mrb[0].mxu0
        %v2407 = vadd.f32 0.0, %v2406
        %v2408 = vpop.f32.mrb[0].mxu0
        %2409 = vdwg.mxu0
        %v2410 = vadd.f32 %v2020, %v2252
        %v2411 = vadd.f32 %v2021, %v2257
        %v2412 = vadd.f32 %v2022, %v2262
        %v2413 = vadd.f32 %v2023, %v2267
        %v2414 = vadd.f32 %v2024, %v2272
        %v2415 = vadd.f32 %v2025, %v2277
        %v2416 = vadd.f32 %v2026, %v2282
        %v2417 = vadd.f32 %v2027, %v2287
        %v2418 = vadd.f32 %v2028, %v2292
        %v2419 = vadd.f32 %v2029, %v2297
        %v2420 = vadd.f32 %v2030, %v2302
        %v2421 = vadd.f32 %v2031, %v2307
        %v2422 = vadd.f32 %v2032, %v2312
        %v2423 = vadd.f32 %v2033, %v2317
        %v2424 = vadd.f32 %v2034, %v2322
        %v2425 = vadd.f32 %v2035, %v2327
        %v2426 = vadd.f32 %v2036, %v2332
        %v2427 = vadd.f32 %v2037, %v2337
        %v2428 = vadd.f32 %v2038, %v2342
        %v2429 = vadd.f32 %v2039, %v2347
        %v2430 = vadd.f32 %v2040, %v2352
        %v2431 = vadd.f32 %v2041, %v2357
        %v2432 = vadd.f32 %v2042, %v2362
        %v2433 = vadd.f32 %v2043, %v2367
        %v2434 = vadd.f32 %v2044, %v2372
        %v2435 = vadd.f32 %v2045, %v2377
        %v2436 = vadd.f32 %v2046, %v2382
        %v2437 = vadd.f32 %v2047, %v2387
        %v2438 = vadd.f32 %v2048, %v2392
        %v2439 = vadd.f32 %v2049, %v2397
        %v2440 = vadd.f32 %v2050, %v2402
        %v2441 = vadd.f32 %v2051, %v2407
        %v2442 = vld [vmem:[%s523 + $0x9] sm:$0xff]
        %v2443 = vld [vmem:[%s523 + $0x11] sm:$0xff]
        %v2444 = vld [vmem:[%s523 + $0x29] sm:$0xff]
        %v2445 = vld [vmem:[%s523 + $0x31] sm:$0xff]
        %v2446 = vld [vmem:[%s523 + $0x49] sm:$0xff]
        %v2447 = vld [vmem:[%s523 + $0x51] sm:$0xff]
        %v2448 = vld [vmem:[%s523 + $0x69] sm:$0xff]
        %v2449 = vld [vmem:[%s523 + $0x71] sm:$0xff]
        %v2450 = vld [vmem:[%s523 + $0x89] sm:$0xff]
        %v2451 = vld [vmem:[%s523 + $0x91] sm:$0xff]
        %v2452 = vld [vmem:[%s523 + $0xa9] sm:$0xff]
        %v2453 = vld [vmem:[%s523 + $0xb1] sm:$0xff]
        %v2454 = vld [vmem:[%s523 + $0xc9] sm:$0xff]
        %v2455 = vld [vmem:[%s523 + $0xd1] sm:$0xff]
        %v2456 = vld [vmem:[%s523 + $0xe9] sm:$0xff]
        %v2457 = vld [vmem:[%s523 + $0xf1] sm:$0xff]
        %v2458 = vld [vmem:[%s523 + $0x109] sm:$0xff]
        %v2459 = vld [vmem:[%s523 + $0x111] sm:$0xff]
        %v2460 = vld [vmem:[%s523 + $0x129] sm:$0xff]
        %v2461 = vld [vmem:[%s523 + $0x131] sm:$0xff]
        %v2462 = vld [vmem:[%s523 + $0x149] sm:$0xff]
        %v2463 = vld [vmem:[%s523 + $0x151] sm:$0xff]
        %v2464 = vld [vmem:[%s523 + $0x169] sm:$0xff]
        %v2465 = vld [vmem:[%s523 + $0x171] sm:$0xff]
        %v2466 = vld [vmem:[%s523 + $0x189] sm:$0xff]
        %v2467 = vld [vmem:[%s523 + $0x191] sm:$0xff]
        %v2468 = vld [vmem:[%s523 + $0x1a9] sm:$0xff]
        %v2469 = vld [vmem:[%s523 + $0x1b1] sm:$0xff]
        %v2470 = vld [vmem:[%s523 + $0x1c9] sm:$0xff]
        %v2471 = vld [vmem:[%s523 + $0x1d1] sm:$0xff]
        %v2472 = vld [vmem:[%s523 + $0x1e9] sm:$0xff]
        %v2473 = vld [vmem:[%s523 + $0x1f1] sm:$0xff]
        %s2474 = scalar_lea.vmem %s1, 20
        %v2475 = vld [vmem:[%s2474] sm:$0xf]
        %v2477 = vsel %vm417, %v2442, 0
        %v2480 = vsel %vm417, %v2443, 0
        %v2483 = vsel %vm417, %v2444, 0
        %v2486 = vsel %vm417, %v2445, 0
        %v2489 = vsel %vm417, %v2446, 0
        %v2492 = vsel %vm417, %v2447, 0
        %v2495 = vsel %vm417, %v2448, 0
        %v2498 = vsel %vm417, %v2449, 0
        %v2501 = vsel %vm417, %v2450, 0
        %v2504 = vsel %vm417, %v2451, 0
        %v2507 = vsel %vm417, %v2452, 0
        %v2510 = vsel %vm417, %v2453, 0
        %v2513 = vsel %vm417, %v2454, 0
        %v2516 = vsel %vm417, %v2455, 0
        %v2519 = vsel %vm417, %v2456, 0
        %v2522 = vsel %vm417, %v2457, 0
        %v2525 = vsel %vm417, %v2458, 0
        %v2528 = vsel %vm417, %v2459, 0
        %v2531 = vsel %vm417, %v2460, 0
        %v2534 = vsel %vm417, %v2461, 0
        %v2537 = vsel %vm417, %v2462, 0
        %v2540 = vsel %vm417, %v2463, 0
        %v2543 = vsel %vm417, %v2464, 0
        %v2546 = vsel %vm417, %v2465, 0
        %v2549 = vsel %vm417, %v2466, 0
        %v2552 = vsel %vm417, %v2467, 0
        %v2555 = vsel %vm417, %v2468, 0
        %v2558 = vsel %vm417, %v2469, 0
        %v2561 = vsel %vm417, %v2470, 0
        %v2564 = vsel %vm417, %v2471, 0
        %v2567 = vsel %vm417, %v2472, 0
        %v2570 = vsel %vm417, %v2473, 0
        %v2573 = vsel %vm719, %v2475, 0
        %2575 = vmatprep.subr.mxu0 0.0
        %2576 = vmatpush1.msra.mxu0 %v2573
        %2577 = vmatprep.subr.mxu0 0.0
        %2578 = vmatpush1.msra.mxu0 0.0
        %2579 = vmatprep.subr.mxu0 0.0
        %2580 = vmatpush1.msra.mxu0 0.0
        %2581 = vmatprep.subr.mxu0 0.0
        %2582 = vmatpush1.msra.mxu0 0.0
        %2583 = vmatprep.subr.mxu0 0.0
        %2584 = vmatpush1.msra.mxu0 0.0
        %2585 = vmatprep.subr.mxu0 0.0
        %2586 = vmatpush1.msra.mxu0 0.0
        %2587 = vmatprep.subr.mxu0 0.0
        %2588 = vmatpush1.msra.mxu0 0.0
        %2589 = vmatprep.subr.mxu0 0.0
        %2590 = vmatpush1.msra.mxu0 0.0
        %2591 = vmatprep.subr.mxu0 0.0
        %2592 = vmatpush1.msra.mxu0 0.0
        %2593 = vmatprep.subr.mxu0 0.0
        %2594 = vmatpush1.msra.mxu0 0.0
        %2595 = vmatprep.subr.mxu0 0.0
        %2596 = vmatpush1.msra.mxu0 0.0
        %2597 = vmatprep.subr.mxu0 0.0
        %2598 = vmatpush1.msra.mxu0 0.0
        %2599 = vmatprep.subr.mxu0 0.0
        %2600 = vmatpush1.msra.mxu0 0.0
        %2601 = vmatprep.subr.mxu0 0.0
        %2602 = vmatpush1.msra.mxu0 0.0
        %2603 = vmatprep.subr.mxu0 0.0
        %2604 = vmatpush1.msra.mxu0 0.0
        %2605 = vmatprep.subr.mxu0 0.0
        %2606 = vmatpush1.msra.mxu0 0.0
        %2607 = vmatprep.subr.mxu0 0.0
        %2608 = vmatpush1.msra.mxu0 0.0
        %2609 = vmatprep.subr.mxu0 0.0
        %2610 = vmatpush1.msra.mxu0 0.0
        %2611 = vmatprep.subr.mxu0 0.0
        %2612 = vmatpush1.msra.mxu0 0.0
        %2613 = vmatprep.subr.mxu0 0.0
        %2614 = vmatpush1.msra.mxu0 0.0
        %2615 = vmatprep.subr.mxu0 0.0
        %2616 = vmatpush1.msra.mxu0 0.0
        %2617 = vmatprep.subr.mxu0 0.0
        %2618 = vmatpush1.msra.mxu0 0.0
        %2619 = vmatprep.subr.mxu0 0.0
        %2620 = vmatpush1.msra.mxu0 0.0
        %2621 = vmatprep.subr.mxu0 0.0
        %2622 = vmatpush1.msra.mxu0 0.0
        %2623 = vmatprep.subr.mxu0 0.0
        %2624 = vmatpush1.msra.mxu0 0.0
        %2625 = vmatprep.subr.mxu0 0.0
        %2626 = vmatpush1.msra.mxu0 0.0
        %2627 = vmatprep.subr.mxu0 0.0
        %2628 = vmatpush1.msra.mxu0 0.0
        %2629 = vmatprep.subr.mxu0 0.0
        %2630 = vmatpush1.msra.mxu0 0.0
        %2631 = vmatprep.subr.mxu0 0.0
        %2632 = vmatpush1.msra.mxu0 0.0
        %2633 = vmatprep.subr.mxu0 0.0
        %2634 = vmatpush1.msra.mxu0 0.0
        %2635 = vmatprep.subr.mxu0 0.0
        %2636 = vmatpush1.msra.mxu0 0.0
        %2637 = vmatprep.subr.mxu0 0.0
        %2638 = vmatpush1.msra.mxu0 0.0
        %2639 = vmatprep.mubr.f32.mxu0 0.0
        %2640 = vmatmul.mubr.f32.gmra.mrb[0].mxu0 %v2477
        %v2641 = vpop.f32.mrb[0].mxu0
        %v2642 = vadd.f32 0.0, %v2641
        %v2643 = vpop.f32.mrb[0].mxu0
        %2644 = vmatprep.mubr.f32.mxu0 0.0
        %2645 = vmatmul.mubr.f32.gmra.mrb[0].mxu0 %v2480
        %v2646 = vpop.f32.mrb[0].mxu0
        %v2647 = vadd.f32 0.0, %v2646
        %v2648 = vpop.f32.mrb[0].mxu0
        %2649 = vmatprep.mubr.f32.mxu0 0.0
        %2650 = vmatmul.mubr.f32.gmra.mrb[0].mxu0 %v2483
        %v2651 = vpop.f32.mrb[0].mxu0
        %v2652 = vadd.f32 0.0, %v2651
        %v2653 = vpop.f32.mrb[0].mxu0
        %2654 = vmatprep.mubr.f32.mxu0 0.0
        %2655 = vmatmul.mubr.f32.gmra.mrb[0].mxu0 %v2486
        %v2656 = vpop.f32.mrb[0].mxu0
        %v2657 = vadd.f32 0.0, %v2656
        %v2658 = vpop.f32.mrb[0].mxu0
        %2659 = vmatprep.mubr.f32.mxu0 0.0
        %2660 = vmatmul.mubr.f32.gmra.mrb[0].mxu0 %v2489
        %v2661 = vpop.f32.mrb[0].mxu0
        %v2662 = vadd.f32 0.0, %v2661
        %v2663 = vpop.f32.mrb[0].mxu0
        %2664 = vmatprep.mubr.f32.mxu0 0.0
        %2665 = vmatmul.mubr.f32.gmra.mrb[0].mxu0 %v2492
        %v2666 = vpop.f32.mrb[0].mxu0
        %v2667 = vadd.f32 0.0, %v2666
        %v2668 = vpop.f32.mrb[0].mxu0
        %2669 = vmatprep.mubr.f32.mxu0 0.0
        %2670 = vmatmul.mubr.f32.gmra.mrb[0].mxu0 %v2495
        %v2671 = vpop.f32.mrb[0].mxu0
        %v2672 = vadd.f32 0.0, %v2671
        %v2673 = vpop.f32.mrb[0].mxu0
        %2674 = vmatprep.mubr.f32.mxu0 0.0
        %2675 = vmatmul.mubr.f32.gmra.mrb[0].mxu0 %v2498
        %v2676 = vpop.f32.mrb[0].mxu0
        %v2677 = vadd.f32 0.0, %v2676
        %v2678 = vpop.f32.mrb[0].mxu0
        %2679 = vmatprep.mubr.f32.mxu0 0.0
        %2680 = vmatmul.mubr.f32.gmra.mrb[0].mxu0 %v2501
        %v2681 = vpop.f32.mrb[0].mxu0
        %v2682 = vadd.f32 0.0, %v2681
        %v2683 = vpop.f32.mrb[0].mxu0
        %2684 = vmatprep.mubr.f32.mxu0 0.0
        %2685 = vmatmul.mubr.f32.gmra.mrb[0].mxu0 %v2504
        %v2686 = vpop.f32.mrb[0].mxu0
        %v2687 = vadd.f32 0.0, %v2686
        %v2688 = vpop.f32.mrb[0].mxu0
        %2689 = vmatprep.mubr.f32.mxu0 0.0
        %2690 = vmatmul.mubr.f32.gmra.mrb[0].mxu0 %v2507
        %v2691 = vpop.f32.mrb[0].mxu0
        %v2692 = vadd.f32 0.0, %v2691
        %v2693 = vpop.f32.mrb[0].mxu0
        %2694 = vmatprep.mubr.f32.mxu0 0.0
        %2695 = vmatmul.mubr.f32.gmra.mrb[0].mxu0 %v2510
        %v2696 = vpop.f32.mrb[0].mxu0
        %v2697 = vadd.f32 0.0, %v2696
        %v2698 = vpop.f32.mrb[0].mxu0
        %2699 = vmatprep.mubr.f32.mxu0 0.0
        %2700 = vmatmul.mubr.f32.gmra.mrb[0].mxu0 %v2513
        %v2701 = vpop.f32.mrb[0].mxu0
        %v2702 = vadd.f32 0.0, %v2701
        %v2703 = vpop.f32.mrb[0].mxu0
        %2704 = vmatprep.mubr.f32.mxu0 0.0
        %2705 = vmatmul.mubr.f32.gmra.mrb[0].mxu0 %v2516
        %v2706 = vpop.f32.mrb[0].mxu0
        %v2707 = vadd.f32 0.0, %v2706
        %v2708 = vpop.f32.mrb[0].mxu0
        %2709 = vmatprep.mubr.f32.mxu0 0.0
        %2710 = vmatmul.mubr.f32.gmra.mrb[0].mxu0 %v2519
        %v2711 = vpop.f32.mrb[0].mxu0
        %v2712 = vadd.f32 0.0, %v2711
        %v2713 = vpop.f32.mrb[0].mxu0
        %2714 = vmatprep.mubr.f32.mxu0 0.0
        %2715 = vmatmul.mubr.f32.gmra.mrb[0].mxu0 %v2522
        %v2716 = vpop.f32.mrb[0].mxu0
        %v2717 = vadd.f32 0.0, %v2716
        %v2718 = vpop.f32.mrb[0].mxu0
        %2719 = vmatprep.mubr.f32.mxu0 0.0
        %2720 = vmatmul.mubr.f32.gmra.mrb[0].mxu0 %v2525
        %v2721 = vpop.f32.mrb[0].mxu0
        %v2722 = vadd.f32 0.0, %v2721
        %v2723 = vpop.f32.mrb[0].mxu0
        %2724 = vmatprep.mubr.f32.mxu0 0.0
        %2725 = vmatmul.mubr.f32.gmra.mrb[0].mxu0 %v2528
        %v2726 = vpop.f32.mrb[0].mxu0
        %v2727 = vadd.f32 0.0, %v2726
        %v2728 = vpop.f32.mrb[0].mxu0
        %2729 = vmatprep.mubr.f32.mxu0 0.0
        %2730 = vmatmul.mubr.f32.gmra.mrb[0].mxu0 %v2531
        %v2731 = vpop.f32.mrb[0].mxu0
        %v2732 = vadd.f32 0.0, %v2731
        %v2733 = vpop.f32.mrb[0].mxu0
        %2734 = vmatprep.mubr.f32.mxu0 0.0
        %2735 = vmatmul.mubr.f32.gmra.mrb[0].mxu0 %v2534
        %v2736 = vpop.f32.mrb[0].mxu0
        %v2737 = vadd.f32 0.0, %v2736
        %v2738 = vpop.f32.mrb[0].mxu0
        %2739 = vmatprep.mubr.f32.mxu0 0.0
        %2740 = vmatmul.mubr.f32.gmra.mrb[0].mxu0 %v2537
        %v2741 = vpop.f32.mrb[0].mxu0
        %v2742 = vadd.f32 0.0, %v2741
        %v2743 = vpop.f32.mrb[0].mxu0
        %2744 = vmatprep.mubr.f32.mxu0 0.0
        %2745 = vmatmul.mubr.f32.gmra.mrb[0].mxu0 %v2540
        %v2746 = vpop.f32.mrb[0].mxu0
        %v2747 = vadd.f32 0.0, %v2746
        %v2748 = vpop.f32.mrb[0].mxu0
        %2749 = vmatprep.mubr.f32.mxu0 0.0
        %2750 = vmatmul.mubr.f32.gmra.mrb[0].mxu0 %v2543
        %v2751 = vpop.f32.mrb[0].mxu0
        %v2752 = vadd.f32 0.0, %v2751
        %v2753 = vpop.f32.mrb[0].mxu0
        %2754 = vmatprep.mubr.f32.mxu0 0.0
        %2755 = vmatmul.mubr.f32.gmra.mrb[0].mxu0 %v2546
        %v2756 = vpop.f32.mrb[0].mxu0
        %v2757 = vadd.f32 0.0, %v2756
        %v2758 = vpop.f32.mrb[0].mxu0
        %2759 = vmatprep.mubr.f32.mxu0 0.0
        %2760 = vmatmul.mubr.f32.gmra.mrb[0].mxu0 %v2549
        %v2761 = vpop.f32.mrb[0].mxu0
        %v2762 = vadd.f32 0.0, %v2761
        %v2763 = vpop.f32.mrb[0].mxu0
        %2764 = vmatprep.mubr.f32.mxu0 0.0
        %2765 = vmatmul.mubr.f32.gmra.mrb[0].mxu0 %v2552
        %v2766 = vpop.f32.mrb[0].mxu0
        %v2767 = vadd.f32 0.0, %v2766
        %v2768 = vpop.f32.mrb[0].mxu0
        %2769 = vmatprep.mubr.f32.mxu0 0.0
        %2770 = vmatmul.mubr.f32.gmra.mrb[0].mxu0 %v2555
        %v2771 = vpop.f32.mrb[0].mxu0
        %v2772 = vadd.f32 0.0, %v2771
        %v2773 = vpop.f32.mrb[0].mxu0
        %2774 = vmatprep.mubr.f32.mxu0 0.0
        %2775 = vmatmul.mubr.f32.gmra.mrb[0].mxu0 %v2558
        %v2776 = vpop.f32.mrb[0].mxu0
        %v2777 = vadd.f32 0.0, %v2776
        %v2778 = vpop.f32.mrb[0].mxu0
        %2779 = vmatprep.mubr.f32.mxu0 0.0
        %2780 = vmatmul.mubr.f32.gmra.mrb[0].mxu0 %v2561
        %v2781 = vpop.f32.mrb[0].mxu0
        %v2782 = vadd.f32 0.0, %v2781
        %v2783 = vpop.f32.mrb[0].mxu0
        %2784 = vmatprep.mubr.f32.mxu0 0.0
        %2785 = vmatmul.mubr.f32.gmra.mrb[0].mxu0 %v2564
        %v2786 = vpop.f32.mrb[0].mxu0
        %v2787 = vadd.f32 0.0, %v2786
        %v2788 = vpop.f32.mrb[0].mxu0
        %2789 = vmatprep.mubr.f32.mxu0 0.0
        %2790 = vmatmul.mubr.f32.gmra.mrb[0].mxu0 %v2567
        %v2791 = vpop.f32.mrb[0].mxu0
        %v2792 = vadd.f32 0.0, %v2791
        %v2793 = vpop.f32.mrb[0].mxu0
        %2794 = vmatprep.mubr.f32.mxu0 0.0
        %2795 = vmatmul.mubr.f32.gmra.mrb[0].mxu0 %v2570
        %v2796 = vpop.f32.mrb[0].mxu0
        %v2797 = vadd.f32 0.0, %v2796
        %v2798 = vpop.f32.mrb[0].mxu0
        %2799 = vdwg.mxu0
        %v2800 = vadd.f32 %v2410, %v2642
        %v2801 = vadd.f32 %v2411, %v2647
        %v2802 = vadd.f32 %v2412, %v2652
        %v2803 = vadd.f32 %v2413, %v2657
        %v2804 = vadd.f32 %v2414, %v2662
        %v2805 = vadd.f32 %v2415, %v2667
        %v2806 = vadd.f32 %v2416, %v2672
        %v2807 = vadd.f32 %v2417, %v2677
        %v2808 = vadd.f32 %v2418, %v2682
        %v2809 = vadd.f32 %v2419, %v2687
        %v2810 = vadd.f32 %v2420, %v2692
        %v2811 = vadd.f32 %v2421, %v2697
        %v2812 = vadd.f32 %v2422, %v2702
        %v2813 = vadd.f32 %v2423, %v2707
        %v2814 = vadd.f32 %v2424, %v2712
        %v2815 = vadd.f32 %v2425, %v2717
        %v2816 = vadd.f32 %v2426, %v2722
        %v2817 = vadd.f32 %v2427, %v2727
        %v2818 = vadd.f32 %v2428, %v2732
        %v2819 = vadd.f32 %v2429, %v2737
        %v2820 = vadd.f32 %v2430, %v2742
        %v2821 = vadd.f32 %v2431, %v2747
        %v2822 = vadd.f32 %v2432, %v2752
        %v2823 = vadd.f32 %v2433, %v2757
        %v2824 = vadd.f32 %v2434, %v2762
        %v2825 = vadd.f32 %v2435, %v2767
        %v2826 = vadd.f32 %v2436, %v2772
        %v2827 = vadd.f32 %v2437, %v2777
        %v2828 = vadd.f32 %v2438, %v2782
        %v2829 = vadd.f32 %v2439, %v2787
        %v2830 = vadd.f32 %v2440, %v2792
        %v2831 = vadd.f32 %v2441, %v2797
        %s2832 = scalar_lea.vmem [#allocation2], 64
        %v2833 = vld [vmem:[%s2832 + $0x7] sm:$0xff]
        %v2834 = vld [vmem:[%s2832 + $0xf] sm:$0xff]
        %v2835 = vld [vmem:[%s2832 + $0x27] sm:$0xff]
        %v2836 = vld [vmem:[%s2832 + $0x2f] sm:$0xff]
        %v2837 = vld [vmem:[%s2832 + $0x47] sm:$0xff]
        %v2838 = vld [vmem:[%s2832 + $0x4f] sm:$0xff]
        %v2839 = vld [vmem:[%s2832 + $0x67] sm:$0xff]
        %v2840 = vld [vmem:[%s2832 + $0x6f] sm:$0xff]
        %v2841 = vld [vmem:[%s2832 + $0x87] sm:$0xff]
        %v2842 = vld [vmem:[%s2832 + $0x8f] sm:$0xff]
        %v2843 = vld [vmem:[%s2832 + $0xa7] sm:$0xff]
        %v2844 = vld [vmem:[%s2832 + $0xaf] sm:$0xff]
        %v2845 = vld [vmem:[%s2832 + $0xc7] sm:$0xff]
        %v2846 = vld [vmem:[%s2832 + $0xcf] sm:$0xff]
        %v2847 = vld [vmem:[%s2832 + $0xe7] sm:$0xff]
        %v2848 = vld [vmem:[%s2832 + $0xef] sm:$0xff]
        %v2849 = vld [vmem:[%s2832 + $0x107] sm:$0xff]
        %v2850 = vld [vmem:[%s2832 + $0x10f] sm:$0xff]
        %v2851 = vld [vmem:[%s2832 + $0x127] sm:$0xff]
        %v2852 = vld [vmem:[%s2832 + $0x12f] sm:$0xff]
        %v2853 = vld [vmem:[%s2832 + $0x147] sm:$0xff]
        %v2854 = vld [vmem:[%s2832 + $0x14f] sm:$0xff]
        %v2855 = vld [vmem:[%s2832 + $0x167] sm:$0xff]
        %v2856 = vld [vmem:[%s2832 + $0x16f] sm:$0xff]
        %v2857 = vld [vmem:[%s2832 + $0x187] sm:$0xff]
        %v2858 = vld [vmem:[%s2832 + $0x18f] sm:$0xff]
        %v2859 = vld [vmem:[%s2832 + $0x1a7] sm:$0xff]
        %v2860 = vld [vmem:[%s2832 + $0x1af] sm:$0xff]
        %v2861 = vld [vmem:[%s2832 + $0x1c7] sm:$0xff]
        %v2862 = vld [vmem:[%s2832 + $0x1cf] sm:$0xff]
        %v2863 = vld [vmem:[%s2832 + $0x1e7] sm:$0xff]
        %v2864 = vld [vmem:[%s2832 + $0x1ef] sm:$0xff]
        %s2865 = scalar_lea.vmem %s1, 24
        %v2866 = vld [vmem:[%s2865] sm:$0xf]
        %v2868 = vsel %vm417, %v2833, 0
        %v2871 = vsel %vm417, %v2834, 0
        %v2874 = vsel %vm417, %v2835, 0
        %v2877 = vsel %vm417, %v2836, 0
        %v2880 = vsel %vm417, %v2837, 0
        %v2883 = vsel %vm417, %v2838, 0
        %v2886 = vsel %vm417, %v2839, 0
        %v2889 = vsel %vm417, %v2840, 0
        %v2892 = vsel %vm417, %v2841, 0
        %v2895 = vsel %vm417, %v2842, 0
        %v2898 = vsel %vm417, %v2843, 0
        %v2901 = vsel %vm417, %v2844, 0
        %v2904 = vsel %vm417, %v2845, 0
        %v2907 = vsel %vm417, %v2846, 0
        %v2910 = vsel %vm417, %v2847, 0
        %v2913 = vsel %vm417, %v2848, 0
        %v2916 = vsel %vm417, %v2849, 0
        %v2919 = vsel %vm417, %v2850, 0
        %v2922 = vsel %vm417, %v2851, 0
        %v2925 = vsel %vm417, %v2852, 0
        %v2928 = vsel %vm417, %v2853, 0
        %v2931 = vsel %vm417, %v2854, 0
        %v2934 = vsel %vm417, %v2855, 0
        %v2937 = vsel %vm417, %v2856, 0
        %v2940 = vsel %vm417, %v2857, 0
        %v2943 = vsel %vm417, %v2858, 0
        %v2946 = vsel %vm417, %v2859, 0
        %v2949 = vsel %vm417, %v2860, 0
        %v2952 = vsel %vm417, %v2861, 0
        %v2955 = vsel %vm417, %v2862, 0
        %v2958 = vsel %vm417, %v2863, 0
        %v2961 = vsel %vm417, %v2864, 0
        %v2964 = vsel %vm719, %v2866, 0
        %2966 = vmatprep.subr.mxu0 0.0
        %2967 = vmatpush1.msra.mxu0 %v2964
        %2968 = vmatprep.subr.mxu0 0.0
        %2969 = vmatpush1.msra.mxu0 0.0
        %2970 = vmatprep.subr.mxu0 0.0
        %2971 = vmatpush1.msra.mxu0 0.0
        %2972 = vmatprep.subr.mxu0 0.0
        %2973 = vmatpush1.msra.mxu0 0.0
        %2974 = vmatprep.subr.mxu0 0.0
        %2975 = vmatpush1.msra.mxu0 0.0
        %2976 = vmatprep.subr.mxu0 0.0
        %2977 = vmatpush1.msra.mxu0 0.0
        %2978 = vmatprep.subr.mxu0 0.0
        %2979 = vmatpush1.msra.mxu0 0.0
        %2980 = vmatprep.subr.mxu0 0.0
        %2981 = vmatpush1.msra.mxu0 0.0
        %2982 = vmatprep.subr.mxu0 0.0
        %2983 = vmatpush1.msra.mxu0 0.0
        %2984 = vmatprep.subr.mxu0 0.0
        %2985 = vmatpush1.msra.mxu0 0.0
        %2986 = vmatprep.subr.mxu0 0.0
        %2987 = vmatpush1.msra.mxu0 0.0
        %2988 = vmatprep.subr.mxu0 0.0
        %2989 = vmatpush1.msra.mxu0 0.0
        %2990 = vmatprep.subr.mxu0 0.0
        %2991 = vmatpush1.msra.mxu0 0.0
        %2992 = vmatprep.subr.mxu0 0.0
        %2993 = vmatpush1.msra.mxu0 0.0
        %2994 = vmatprep.subr.mxu0 0.0
        %2995 = vmatpush1.msra.mxu0 0.0
        %2996 = vmatprep.subr.mxu0 0.0
        %2997 = vmatpush1.msra.mxu0 0.0
        %2998 = vmatprep.subr.mxu0 0.0
        %2999 = vmatpush1.msra.mxu0 0.0
        %3000 = vmatprep.subr.mxu0 0.0
        %3001 = vmatpush1.msra.mxu0 0.0
        %3002 = vmatprep.subr.mxu0 0.0
        %3003 = vmatpush1.msra.mxu0 0.0
        %3004 = vmatprep.subr.mxu0 0.0
        %3005 = vmatpush1.msra.mxu0 0.0
        %3006 = vmatprep.subr.mxu0 0.0
        %3007 = vmatpush1.msra.mxu0 0.0
        %3008 = vmatprep.subr.mxu0 0.0
        %3009 = vmatpush1.msra.mxu0 0.0
        %3010 = vmatprep.subr.mxu0 0.0
        %3011 = vmatpush1.msra.mxu0 0.0
        %3012 = vmatprep.subr.mxu0 0.0
        %3013 = vmatpush1.msra.mxu0 0.0
        %3014 = vmatprep.subr.mxu0 0.0
        %3015 = vmatpush1.msra.mxu0 0.0
        %3016 = vmatprep.subr.mxu0 0.0
        %3017 = vmatpush1.msra.mxu0 0.0
        %3018 = vmatprep.subr.mxu0 0.0
        %3019 = vmatpush1.msra.mxu0 0.0
        %3020 = vmatprep.subr.mxu0 0.0
        %3021 = vmatpush1.msra.mxu0 0.0
        %3022 = vmatprep.subr.mxu0 0.0
        %3023 = vmatpush1.msra.mxu0 0.0
        %3024 = vmatprep.subr.mxu0 0.0
        %3025 = vmatpush1.msra.mxu0 0.0
        %3026 = vmatprep.subr.mxu0 0.0
        %3027 = vmatpush1.msra.mxu0 0.0
        %3028 = vmatprep.subr.mxu0 0.0
        %3029 = vmatpush1.msra.mxu0 0.0
        %3030 = vmatprep.mubr.f32.mxu0 0.0
        %3031 = vmatmul.mubr.f32.gmra.mrb[0].mxu0 %v2868
        %v3032 = vpop.f32.mrb[0].mxu0
        %v3033 = vadd.f32 0.0, %v3032
        %v3034 = vpop.f32.mrb[0].mxu0
        %3035 = vmatprep.mubr.f32.mxu0 0.0
        %3036 = vmatmul.mubr.f32.gmra.mrb[0].mxu0 %v2871
        %v3037 = vpop.f32.mrb[0].mxu0
        %v3038 = vadd.f32 0.0, %v3037
        %v3039 = vpop.f32.mrb[0].mxu0
        %3040 = vmatprep.mubr.f32.mxu0 0.0
        %3041 = vmatmul.mubr.f32.gmra.mrb[0].mxu0 %v2874
        %v3042 = vpop.f32.mrb[0].mxu0
        %v3043 = vadd.f32 0.0, %v3042
        %v3044 = vpop.f32.mrb[0].mxu0
        %3045 = vmatprep.mubr.f32.mxu0 0.0
        %3046 = vmatmul.mubr.f32.gmra.mrb[0].mxu0 %v2877
        %v3047 = vpop.f32.mrb[0].mxu0
        %v3048 = vadd.f32 0.0, %v3047
        %v3049 = vpop.f32.mrb[0].mxu0
        %3050 = vmatprep.mubr.f32.mxu0 0.0
        %3051 = vmatmul.mubr.f32.gmra.mrb[0].mxu0 %v2880
        %v3052 = vpop.f32.mrb[0].mxu0
        %v3053 = vadd.f32 0.0, %v3052
        %v3054 = vpop.f32.mrb[0].mxu0
        %3055 = vmatprep.mubr.f32.mxu0 0.0
        %3056 = vmatmul.mubr.f32.gmra.mrb[0].mxu0 %v2883
        %v3057 = vpop.f32.mrb[0].mxu0
        %v3058 = vadd.f32 0.0, %v3057
        %v3059 = vpop.f32.mrb[0].mxu0
        %3060 = vmatprep.mubr.f32.mxu0 0.0
        %3061 = vmatmul.mubr.f32.gmra.mrb[0].mxu0 %v2886
        %v3062 = vpop.f32.mrb[0].mxu0
        %v3063 = vadd.f32 0.0, %v3062
        %v3064 = vpop.f32.mrb[0].mxu0
        %3065 = vmatprep.mubr.f32.mxu0 0.0
        %3066 = vmatmul.mubr.f32.gmra.mrb[0].mxu0 %v2889
        %v3067 = vpop.f32.mrb[0].mxu0
        %v3068 = vadd.f32 0.0, %v3067
        %v3069 = vpop.f32.mrb[0].mxu0
        %3070 = vmatprep.mubr.f32.mxu0 0.0
        %3071 = vmatmul.mubr.f32.gmra.mrb[0].mxu0 %v2892
        %v3072 = vpop.f32.mrb[0].mxu0
        %v3073 = vadd.f32 0.0, %v3072
        %v3074 = vpop.f32.mrb[0].mxu0
        %3075 = vmatprep.mubr.f32.mxu0 0.0
        %3076 = vmatmul.mubr.f32.gmra.mrb[0].mxu0 %v2895
        %v3077 = vpop.f32.mrb[0].mxu0
        %v3078 = vadd.f32 0.0, %v3077
        %v3079 = vpop.f32.mrb[0].mxu0
        %3080 = vmatprep.mubr.f32.mxu0 0.0
        %3081 = vmatmul.mubr.f32.gmra.mrb[0].mxu0 %v2898
        %v3082 = vpop.f32.mrb[0].mxu0
        %v3083 = vadd.f32 0.0, %v3082
        %v3084 = vpop.f32.mrb[0].mxu0
        %3085 = vmatprep.mubr.f32.mxu0 0.0
        %3086 = vmatmul.mubr.f32.gmra.mrb[0].mxu0 %v2901
        %v3087 = vpop.f32.mrb[0].mxu0
        %v3088 = vadd.f32 0.0, %v3087
        %v3089 = vpop.f32.mrb[0].mxu0
        %3090 = vmatprep.mubr.f32.mxu0 0.0
        %3091 = vmatmul.mubr.f32.gmra.mrb[0].mxu0 %v2904
        %v3092 = vpop.f32.mrb[0].mxu0
        %v3093 = vadd.f32 0.0, %v3092
        %v3094 = vpop.f32.mrb[0].mxu0
        %3095 = vmatprep.mubr.f32.mxu0 0.0
        %3096 = vmatmul.mubr.f32.gmra.mrb[0].mxu0 %v2907
        %v3097 = vpop.f32.mrb[0].mxu0
        %v3098 = vadd.f32 0.0, %v3097
        %v3099 = vpop.f32.mrb[0].mxu0
        %3100 = vmatprep.mubr.f32.mxu0 0.0
        %3101 = vmatmul.mubr.f32.gmra.mrb[0].mxu0 %v2910
        %v3102 = vpop.f32.mrb[0].mxu0
        %v3103 = vadd.f32 0.0, %v3102
        %v3104 = vpop.f32.mrb[0].mxu0
        %3105 = vmatprep.mubr.f32.mxu0 0.0
        %3106 = vmatmul.mubr.f32.gmra.mrb[0].mxu0 %v2913
        %v3107 = vpop.f32.mrb[0].mxu0
        %v3108 = vadd.f32 0.0, %v3107
        %v3109 = vpop.f32.mrb[0].mxu0
        %3110 = vmatprep.mubr.f32.mxu0 0.0
        %3111 = vmatmul.mubr.f32.gmra.mrb[0].mxu0 %v2916
        %v3112 = vpop.f32.mrb[0].mxu0
        %v3113 = vadd.f32 0.0, %v3112
        %v3114 = vpop.f32.mrb[0].mxu0
        %3115 = vmatprep.mubr.f32.mxu0 0.0
        %3116 = vmatmul.mubr.f32.gmra.mrb[0].mxu0 %v2919
        %v3117 = vpop.f32.mrb[0].mxu0
        %v3118 = vadd.f32 0.0, %v3117
        %v3119 = vpop.f32.mrb[0].mxu0
        %3120 = vmatprep.mubr.f32.mxu0 0.0
        %3121 = vmatmul.mubr.f32.gmra.mrb[0].mxu0 %v2922
        %v3122 = vpop.f32.mrb[0].mxu0
        %v3123 = vadd.f32 0.0, %v3122
        %v3124 = vpop.f32.mrb[0].mxu0
        %3125 = vmatprep.mubr.f32.mxu0 0.0
        %3126 = vmatmul.mubr.f32.gmra.mrb[0].mxu0 %v2925
        %v3127 = vpop.f32.mrb[0].mxu0
        %v3128 = vadd.f32 0.0, %v3127
        %v3129 = vpop.f32.mrb[0].mxu0
        %3130 = vmatprep.mubr.f32.mxu0 0.0
        %3131 = vmatmul.mubr.f32.gmra.mrb[0].mxu0 %v2928
        %v3132 = vpop.f32.mrb[0].mxu0
        %v3133 = vadd.f32 0.0, %v3132
        %v3134 = vpop.f32.mrb[0].mxu0
        %3135 = vmatprep.mubr.f32.mxu0 0.0
        %3136 = vmatmul.mubr.f32.gmra.mrb[0].mxu0 %v2931
        %v3137 = vpop.f32.mrb[0].mxu0
        %v3138 = vadd.f32 0.0, %v3137
        %v3139 = vpop.f32.mrb[0].mxu0
        %3140 = vmatprep.mubr.f32.mxu0 0.0
        %3141 = vmatmul.mubr.f32.gmra.mrb[0].mxu0 %v2934
        %v3142 = vpop.f32.mrb[0].mxu0
        %v3143 = vadd.f32 0.0, %v3142
        %v3144 = vpop.f32.mrb[0].mxu0
        %3145 = vmatprep.mubr.f32.mxu0 0.0
        %3146 = vmatmul.mubr.f32.gmra.mrb[0].mxu0 %v2937
        %v3147 = vpop.f32.mrb[0].mxu0
        %v3148 = vadd.f32 0.0, %v3147
        %v3149 = vpop.f32.mrb[0].mxu0
        %3150 = vmatprep.mubr.f32.mxu0 0.0
        %3151 = vmatmul.mubr.f32.gmra.mrb[0].mxu0 %v2940
        %v3152 = vpop.f32.mrb[0].mxu0
        %v3153 = vadd.f32 0.0, %v3152
        %v3154 = vpop.f32.mrb[0].mxu0
        %3155 = vmatprep.mubr.f32.mxu0 0.0
        %3156 = vmatmul.mubr.f32.gmra.mrb[0].mxu0 %v2943
        %v3157 = vpop.f32.mrb[0].mxu0
        %v3158 = vadd.f32 0.0, %v3157
        %v3159 = vpop.f32.mrb[0].mxu0
        %3160 = vmatprep.mubr.f32.mxu0 0.0
        %3161 = vmatmul.mubr.f32.gmra.mrb[0].mxu0 %v2946
        %v3162 = vpop.f32.mrb[0].mxu0
        %v3163 = vadd.f32 0.0, %v3162
        %v3164 = vpop.f32.mrb[0].mxu0
        %3165 = vmatprep.mubr.f32.mxu0 0.0
        %3166 = vmatmul.mubr.f32.gmra.mrb[0].mxu0 %v2949
        %v3167 = vpop.f32.mrb[0].mxu0
        %v3168 = vadd.f32 0.0, %v3167
        %v3169 = vpop.f32.mrb[0].mxu0
        %3170 = vmatprep.mubr.f32.mxu0 0.0
        %3171 = vmatmul.mubr.f32.gmra.mrb[0].mxu0 %v2952
        %v3172 = vpop.f32.mrb[0].mxu0
        %v3173 = vadd.f32 0.0, %v3172
        %v3174 = vpop.f32.mrb[0].mxu0
        %3175 = vmatprep.mubr.f32.mxu0 0.0
        %3176 = vmatmul.mubr.f32.gmra.mrb[0].mxu0 %v2955
        %v3177 = vpop.f32.mrb[0].mxu0
        %v3178 = vadd.f32 0.0, %v3177
        %v3179 = vpop.f32.mrb[0].mxu0
        %3180 = vmatprep.mubr.f32.mxu0 0.0
        %3181 = vmatmul.mubr.f32.gmra.mrb[0].mxu0 %v2958
        %v3182 = vpop.f32.mrb[0].mxu0
        %v3183 = vadd.f32 0.0, %v3182
        %v3184 = vpop.f32.mrb[0].mxu0
        %3185 = vmatprep.mubr.f32.mxu0 0.0
        %3186 = vmatmul.mubr.f32.gmra.mrb[0].mxu0 %v2961
        %v3187 = vpop.f32.mrb[0].mxu0
        %v3188 = vadd.f32 0.0, %v3187
        %v3189 = vpop.f32.mrb[0].mxu0
        %3190 = vdwg.mxu0
        %v3191 = vadd.f32 %v2800, %v3033
        %v3192 = vadd.f32 %v2801, %v3038
        %v3193 = vadd.f32 %v2802, %v3043
        %v3194 = vadd.f32 %v2803, %v3048
        %v3195 = vadd.f32 %v2804, %v3053
        %v3196 = vadd.f32 %v2805, %v3058
        %v3197 = vadd.f32 %v2806, %v3063
        %v3198 = vadd.f32 %v2807, %v3068
        %v3199 = vadd.f32 %v2808, %v3073
        %v3200 = vadd.f32 %v2809, %v3078
        %v3201 = vadd.f32 %v2810, %v3083
        %v3202 = vadd.f32 %v2811, %v3088
        %v3203 = vadd.f32 %v2812, %v3093
        %v3204 = vadd.f32 %v2813, %v3098
        %v3205 = vadd.f32 %v2814, %v3103
        %v3206 = vadd.f32 %v2815, %v3108
        %v3207 = vadd.f32 %v2816, %v3113
        %v3208 = vadd.f32 %v2817, %v3118
        %v3209 = vadd.f32 %v2818, %v3123
        %v3210 = vadd.f32 %v2819, %v3128
        %v3211 = vadd.f32 %v2820, %v3133
        %v3212 = vadd.f32 %v2821, %v3138
        %v3213 = vadd.f32 %v2822, %v3143
        %v3214 = vadd.f32 %v2823, %v3148
        %v3215 = vadd.f32 %v2824, %v3153
        %v3216 = vadd.f32 %v2825, %v3158
        %v3217 = vadd.f32 %v2826, %v3163
        %v3218 = vadd.f32 %v2827, %v3168
        %v3219 = vadd.f32 %v2828, %v3173
        %v3220 = vadd.f32 %v2829, %v3178
        %v3221 = vadd.f32 %v2830, %v3183
        %v3222 = vadd.f32 %v2831, %v3188
        %v3223 = vld [vmem:[%s2832 + $0x8] sm:$0xff]
        %v3224 = vld [vmem:[%s2832 + $0x10] sm:$0xff]
        %v3225 = vld [vmem:[%s2832 + $0x28] sm:$0xff]
        %v3226 = vld [vmem:[%s2832 + $0x30] sm:$0xff]
        %v3227 = vld [vmem:[%s2832 + $0x48] sm:$0xff]
        %v3228 = vld [vmem:[%s2832 + $0x50] sm:$0xff]
        %v3229 = vld [vmem:[%s2832 + $0x68] sm:$0xff]
        %v3230 = vld [vmem:[%s2832 + $0x70] sm:$0xff]
        %v3231 = vld [vmem:[%s2832 + $0x88] sm:$0xff]
        %v3232 = vld [vmem:[%s2832 + $0x90] sm:$0xff]
        %v3233 = vld [vmem:[%s2832 + $0xa8] sm:$0xff]
        %v3234 = vld [vmem:[%s2832 + $0xb0] sm:$0xff]
        %v3235 = vld [vmem:[%s2832 + $0xc8] sm:$0xff]
        %v3236 = vld [vmem:[%s2832 + $0xd0] sm:$0xff]
        %v3237 = vld [vmem:[%s2832 + $0xe8] sm:$0xff]
        %v3238 = vld [vmem:[%s2832 + $0xf0] sm:$0xff]
        %v3239 = vld [vmem:[%s2832 + $0x108] sm:$0xff]
        %v3240 = vld [vmem:[%s2832 + $0x110] sm:$0xff]
        %v3241 = vld [vmem:[%s2832 + $0x128] sm:$0xff]
        %v3242 = vld [vmem:[%s2832 + $0x130] sm:$0xff]
        %v3243 = vld [vmem:[%s2832 + $0x148] sm:$0xff]
        %v3244 = vld [vmem:[%s2832 + $0x150] sm:$0xff]
        %v3245 = vld [vmem:[%s2832 + $0x168] sm:$0xff]
        %v3246 = vld [vmem:[%s2832 + $0x170] sm:$0xff]
        %v3247 = vld [vmem:[%s2832 + $0x188] sm:$0xff]
        %v3248 = vld [vmem:[%s2832 + $0x190] sm:$0xff]
        %v3249 = vld [vmem:[%s2832 + $0x1a8] sm:$0xff]
        %v3250 = vld [vmem:[%s2832 + $0x1b0] sm:$0xff]
        %v3251 = vld [vmem:[%s2832 + $0x1c8] sm:$0xff]
        %v3252 = vld [vmem:[%s2832 + $0x1d0] sm:$0xff]
        %v3253 = vld [vmem:[%s2832 + $0x1e8] sm:$0xff]
        %v3254 = vld [vmem:[%s2832 + $0x1f0] sm:$0xff]
        %s3255 = scalar_lea.vmem %s1, 28
        %v3256 = vld [vmem:[%s3255] sm:$0xf]
        %v3258 = vsel %vm417, %v3223, 0
        %v3261 = vsel %vm417, %v3224, 0
        %v3264 = vsel %vm417, %v3225, 0
        %v3267 = vsel %vm417, %v3226, 0
        %v3270 = vsel %vm417, %v3227, 0
        %v3273 = vsel %vm417, %v3228, 0
        %v3276 = vsel %vm417, %v3229, 0
        %v3279 = vsel %vm417, %v3230, 0
        %v3282 = vsel %vm417, %v3231, 0
        %v3285 = vsel %vm417, %v3232, 0
        %v3288 = vsel %vm417, %v3233, 0
        %v3291 = vsel %vm417, %v3234, 0
        %v3294 = vsel %vm417, %v3235, 0
        %v3297 = vsel %vm417, %v3236, 0
        %v3300 = vsel %vm417, %v3237, 0
        %v3303 = vsel %vm417, %v3238, 0
        %v3306 = vsel %vm417, %v3239, 0
        %v3309 = vsel %vm417, %v3240, 0
        %v3312 = vsel %vm417, %v3241, 0
        %v3315 = vsel %vm417, %v3242, 0
        %v3318 = vsel %vm417, %v3243, 0
        %v3321 = vsel %vm417, %v3244, 0
        %v3324 = vsel %vm417, %v3245, 0
        %v3327 = vsel %vm417, %v3246, 0
        %v3330 = vsel %vm417, %v3247, 0
        %v3333 = vsel %vm417, %v3248, 0
        %v3336 = vsel %vm417, %v3249, 0
        %v3339 = vsel %vm417, %v3250, 0
        %v3342 = vsel %vm417, %v3251, 0
        %v3345 = vsel %vm417, %v3252, 0
        %v3348 = vsel %vm417, %v3253, 0
        %v3351 = vsel %vm417, %v3254, 0
        %v3354 = vsel %vm719, %v3256, 0
        %3356 = vmatprep.subr.mxu0 0.0
        %3357 = vmatpush1.msra.mxu0 %v3354
        %3358 = vmatprep.subr.mxu0 0.0
        %3359 = vmatpush1.msra.mxu0 0.0
        %3360 = vmatprep.subr.mxu0 0.0
        %3361 = vmatpush1.msra.mxu0 0.0
        %3362 = vmatprep.subr.mxu0 0.0
        %3363 = vmatpush1.msra.mxu0 0.0
        %3364 = vmatprep.subr.mxu0 0.0
        %3365 = vmatpush1.msra.mxu0 0.0
        %3366 = vmatprep.subr.mxu0 0.0
        %3367 = vmatpush1.msra.mxu0 0.0
        %3368 = vmatprep.subr.mxu0 0.0
        %3369 = vmatpush1.msra.mxu0 0.0
        %3370 = vmatprep.subr.mxu0 0.0
        %3371 = vmatpush1.msra.mxu0 0.0
        %3372 = vmatprep.subr.mxu0 0.0
        %3373 = vmatpush1.msra.mxu0 0.0
        %3374 = vmatprep.subr.mxu0 0.0
        %3375 = vmatpush1.msra.mxu0 0.0
        %3376 = vmatprep.subr.mxu0 0.0
        %3377 = vmatpush1.msra.mxu0 0.0
        %3378 = vmatprep.subr.mxu0 0.0
        %3379 = vmatpush1.msra.mxu0 0.0
        %3380 = vmatprep.subr.mxu0 0.0
        %3381 = vmatpush1.msra.mxu0 0.0
        %3382 = vmatprep.subr.mxu0 0.0
        %3383 = vmatpush1.msra.mxu0 0.0
        %3384 = vmatprep.subr.mxu0 0.0
        %3385 = vmatpush1.msra.mxu0 0.0
        %3386 = vmatprep.subr.mxu0 0.0
        %3387 = vmatpush1.msra.mxu0 0.0
        %3388 = vmatprep.subr.mxu0 0.0
        %3389 = vmatpush1.msra.mxu0 0.0
        %3390 = vmatprep.subr.mxu0 0.0
        %3391 = vmatpush1.msra.mxu0 0.0
        %3392 = vmatprep.subr.mxu0 0.0
        %3393 = vmatpush1.msra.mxu0 0.0
        %3394 = vmatprep.subr.mxu0 0.0
        %3395 = vmatpush1.msra.mxu0 0.0
        %3396 = vmatprep.subr.mxu0 0.0
        %3397 = vmatpush1.msra.mxu0 0.0
        %3398 = vmatprep.subr.mxu0 0.0
        %3399 = vmatpush1.msra.mxu0 0.0
        %3400 = vmatprep.subr.mxu0 0.0
        %3401 = vmatpush1.msra.mxu0 0.0
        %3402 = vmatprep.subr.mxu0 0.0
        %3403 = vmatpush1.msra.mxu0 0.0
        %3404 = vmatprep.subr.mxu0 0.0
        %3405 = vmatpush1.msra.mxu0 0.0
        %3406 = vmatprep.subr.mxu0 0.0
        %3407 = vmatpush1.msra.mxu0 0.0
        %3408 = vmatprep.subr.mxu0 0.0
        %3409 = vmatpush1.msra.mxu0 0.0
        %3410 = vmatprep.subr.mxu0 0.0
        %3411 = vmatpush1.msra.mxu0 0.0
        %3412 = vmatprep.subr.mxu0 0.0
        %3413 = vmatpush1.msra.mxu0 0.0
        %3414 = vmatprep.subr.mxu0 0.0
        %3415 = vmatpush1.msra.mxu0 0.0
        %3416 = vmatprep.subr.mxu0 0.0
        %3417 = vmatpush1.msra.mxu0 0.0
        %3418 = vmatprep.subr.mxu0 0.0
        %3419 = vmatpush1.msra.mxu0 0.0
        %3420 = vmatprep.mubr.f32.mxu0 0.0
        %3421 = vmatmul.mubr.f32.gmra.mrb[0].mxu0 %v3258
        %v3422 = vpop.f32.mrb[0].mxu0
        %v3423 = vadd.f32 0.0, %v3422
        %v3424 = vpop.f32.mrb[0].mxu0
        %3425 = vmatprep.mubr.f32.mxu0 0.0
        %3426 = vmatmul.mubr.f32.gmra.mrb[0].mxu0 %v3261
        %v3427 = vpop.f32.mrb[0].mxu0
        %v3428 = vadd.f32 0.0, %v3427
        %v3429 = vpop.f32.mrb[0].mxu0
        %3430 = vmatprep.mubr.f32.mxu0 0.0
        %3431 = vmatmul.mubr.f32.gmra.mrb[0].mxu0 %v3264
        %v3432 = vpop.f32.mrb[0].mxu0
        %v3433 = vadd.f32 0.0, %v3432
        %v3434 = vpop.f32.mrb[0].mxu0
        %3435 = vmatprep.mubr.f32.mxu0 0.0
        %3436 = vmatmul.mubr.f32.gmra.mrb[0].mxu0 %v3267
        %v3437 = vpop.f32.mrb[0].mxu0
        %v3438 = vadd.f32 0.0, %v3437
        %v3439 = vpop.f32.mrb[0].mxu0
        %3440 = vmatprep.mubr.f32.mxu0 0.0
        %3441 = vmatmul.mubr.f32.gmra.mrb[0].mxu0 %v3270
        %v3442 = vpop.f32.mrb[0].mxu0
        %v3443 = vadd.f32 0.0, %v3442
        %v3444 = vpop.f32.mrb[0].mxu0
        %3445 = vmatprep.mubr.f32.mxu0 0.0
        %3446 = vmatmul.mubr.f32.gmra.mrb[0].mxu0 %v3273
        %v3447 = vpop.f32.mrb[0].mxu0
        %v3448 = vadd.f32 0.0, %v3447
        %v3449 = vpop.f32.mrb[0].mxu0
        %3450 = vmatprep.mubr.f32.mxu0 0.0
        %3451 = vmatmul.mubr.f32.gmra.mrb[0].mxu0 %v3276
        %v3452 = vpop.f32.mrb[0].mxu0
        %v3453 = vadd.f32 0.0, %v3452
        %v3454 = vpop.f32.mrb[0].mxu0
        %3455 = vmatprep.mubr.f32.mxu0 0.0
        %3456 = vmatmul.mubr.f32.gmra.mrb[0].mxu0 %v3279
        %v3457 = vpop.f32.mrb[0].mxu0
        %v3458 = vadd.f32 0.0, %v3457
        %v3459 = vpop.f32.mrb[0].mxu0
        %3460 = vmatprep.mubr.f32.mxu0 0.0
        %3461 = vmatmul.mubr.f32.gmra.mrb[0].mxu0 %v3282
        %v3462 = vpop.f32.mrb[0].mxu0
        %v3463 = vadd.f32 0.0, %v3462
        %v3464 = vpop.f32.mrb[0].mxu0
        %3465 = vmatprep.mubr.f32.mxu0 0.0
        %3466 = vmatmul.mubr.f32.gmra.mrb[0].mxu0 %v3285
        %v3467 = vpop.f32.mrb[0].mxu0
        %v3468 = vadd.f32 0.0, %v3467
        %v3469 = vpop.f32.mrb[0].mxu0
        %3470 = vmatprep.mubr.f32.mxu0 0.0
        %3471 = vmatmul.mubr.f32.gmra.mrb[0].mxu0 %v3288
        %v3472 = vpop.f32.mrb[0].mxu0
        %v3473 = vadd.f32 0.0, %v3472
        %v3474 = vpop.f32.mrb[0].mxu0
        %3475 = vmatprep.mubr.f32.mxu0 0.0
        %3476 = vmatmul.mubr.f32.gmra.mrb[0].mxu0 %v3291
        %v3477 = vpop.f32.mrb[0].mxu0
        %v3478 = vadd.f32 0.0, %v3477
        %v3479 = vpop.f32.mrb[0].mxu0
        %3480 = vmatprep.mubr.f32.mxu0 0.0
        %3481 = vmatmul.mubr.f32.gmra.mrb[0].mxu0 %v3294
        %v3482 = vpop.f32.mrb[0].mxu0
        %v3483 = vadd.f32 0.0, %v3482
        %v3484 = vpop.f32.mrb[0].mxu0
        %3485 = vmatprep.mubr.f32.mxu0 0.0
        %3486 = vmatmul.mubr.f32.gmra.mrb[0].mxu0 %v3297
        %v3487 = vpop.f32.mrb[0].mxu0
        %v3488 = vadd.f32 0.0, %v3487
        %v3489 = vpop.f32.mrb[0].mxu0
        %3490 = vmatprep.mubr.f32.mxu0 0.0
        %3491 = vmatmul.mubr.f32.gmra.mrb[0].mxu0 %v3300
        %v3492 = vpop.f32.mrb[0].mxu0
        %v3493 = vadd.f32 0.0, %v3492
        %v3494 = vpop.f32.mrb[0].mxu0
        %3495 = vmatprep.mubr.f32.mxu0 0.0
        %3496 = vmatmul.mubr.f32.gmra.mrb[0].mxu0 %v3303
        %v3497 = vpop.f32.mrb[0].mxu0
        %v3498 = vadd.f32 0.0, %v3497
        %v3499 = vpop.f32.mrb[0].mxu0
        %3500 = vmatprep.mubr.f32.mxu0 0.0
        %3501 = vmatmul.mubr.f32.gmra.mrb[0].mxu0 %v3306
        %v3502 = vpop.f32.mrb[0].mxu0
        %v3503 = vadd.f32 0.0, %v3502
        %v3504 = vpop.f32.mrb[0].mxu0
        %3505 = vmatprep.mubr.f32.mxu0 0.0
        %3506 = vmatmul.mubr.f32.gmra.mrb[0].mxu0 %v3309
        %v3507 = vpop.f32.mrb[0].mxu0
        %v3508 = vadd.f32 0.0, %v3507
        %v3509 = vpop.f32.mrb[0].mxu0
        %3510 = vmatprep.mubr.f32.mxu0 0.0
        %3511 = vmatmul.mubr.f32.gmra.mrb[0].mxu0 %v3312
        %v3512 = vpop.f32.mrb[0].mxu0
        %v3513 = vadd.f32 0.0, %v3512
        %v3514 = vpop.f32.mrb[0].mxu0
        %3515 = vmatprep.mubr.f32.mxu0 0.0
        %3516 = vmatmul.mubr.f32.gmra.mrb[0].mxu0 %v3315
        %v3517 = vpop.f32.mrb[0].mxu0
        %v3518 = vadd.f32 0.0, %v3517
        %v3519 = vpop.f32.mrb[0].mxu0
        %3520 = vmatprep.mubr.f32.mxu0 0.0
        %3521 = vmatmul.mubr.f32.gmra.mrb[0].mxu0 %v3318
        %v3522 = vpop.f32.mrb[0].mxu0
        %v3523 = vadd.f32 0.0, %v3522
        %v3524 = vpop.f32.mrb[0].mxu0
        %3525 = vmatprep.mubr.f32.mxu0 0.0
        %3526 = vmatmul.mubr.f32.gmra.mrb[0].mxu0 %v3321
        %v3527 = vpop.f32.mrb[0].mxu0
        %v3528 = vadd.f32 0.0, %v3527
        %v3529 = vpop.f32.mrb[0].mxu0
        %3530 = vmatprep.mubr.f32.mxu0 0.0
        %3531 = vmatmul.mubr.f32.gmra.mrb[0].mxu0 %v3324
        %v3532 = vpop.f32.mrb[0].mxu0
        %v3533 = vadd.f32 0.0, %v3532
        %v3534 = vpop.f32.mrb[0].mxu0
        %3535 = vmatprep.mubr.f32.mxu0 0.0
        %3536 = vmatmul.mubr.f32.gmra.mrb[0].mxu0 %v3327
        %v3537 = vpop.f32.mrb[0].mxu0
        %v3538 = vadd.f32 0.0, %v3537
        %v3539 = vpop.f32.mrb[0].mxu0
        %3540 = vmatprep.mubr.f32.mxu0 0.0
        %3541 = vmatmul.mubr.f32.gmra.mrb[0].mxu0 %v3330
        %v3542 = vpop.f32.mrb[0].mxu0
        %v3543 = vadd.f32 0.0, %v3542
        %v3544 = vpop.f32.mrb[0].mxu0
        %3545 = vmatprep.mubr.f32.mxu0 0.0
        %3546 = vmatmul.mubr.f32.gmra.mrb[0].mxu0 %v3333
        %v3547 = vpop.f32.mrb[0].mxu0
        %v3548 = vadd.f32 0.0, %v3547
        %v3549 = vpop.f32.mrb[0].mxu0
        %3550 = vmatprep.mubr.f32.mxu0 0.0
        %3551 = vmatmul.mubr.f32.gmra.mrb[0].mxu0 %v3336
        %v3552 = vpop.f32.mrb[0].mxu0
        %v3553 = vadd.f32 0.0, %v3552
        %v3554 = vpop.f32.mrb[0].mxu0
        %3555 = vmatprep.mubr.f32.mxu0 0.0
        %3556 = vmatmul.mubr.f32.gmra.mrb[0].mxu0 %v3339
        %v3557 = vpop.f32.mrb[0].mxu0
        %v3558 = vadd.f32 0.0, %v3557
        %v3559 = vpop.f32.mrb[0].mxu0
        %3560 = vmatprep.mubr.f32.mxu0 0.0
        %3561 = vmatmul.mubr.f32.gmra.mrb[0].mxu0 %v3342
        %v3562 = vpop.f32.mrb[0].mxu0
        %v3563 = vadd.f32 0.0, %v3562
        %v3564 = vpop.f32.mrb[0].mxu0
        %3565 = vmatprep.mubr.f32.mxu0 0.0
        %3566 = vmatmul.mubr.f32.gmra.mrb[0].mxu0 %v3345
        %v3567 = vpop.f32.mrb[0].mxu0
        %v3568 = vadd.f32 0.0, %v3567
        %v3569 = vpop.f32.mrb[0].mxu0
        %3570 = vmatprep.mubr.f32.mxu0 0.0
        %3571 = vmatmul.mubr.f32.gmra.mrb[0].mxu0 %v3348
        %v3572 = vpop.f32.mrb[0].mxu0
        %v3573 = vadd.f32 0.0, %v3572
        %v3574 = vpop.f32.mrb[0].mxu0
        %3575 = vmatprep.mubr.f32.mxu0 0.0
        %3576 = vmatmul.mubr.f32.gmra.mrb[0].mxu0 %v3351
        %v3577 = vpop.f32.mrb[0].mxu0
        %v3578 = vadd.f32 0.0, %v3577
        %v3579 = vpop.f32.mrb[0].mxu0
        %3580 = vdwg.mxu0
        %v3581 = vadd.f32 %v3191, %v3423
        %v3582 = vadd.f32 %v3192, %v3428
        %v3583 = vadd.f32 %v3193, %v3433
        %v3584 = vadd.f32 %v3194, %v3438
        %v3585 = vadd.f32 %v3195, %v3443
        %v3586 = vadd.f32 %v3196, %v3448
        %v3587 = vadd.f32 %v3197, %v3453
        %v3588 = vadd.f32 %v3198, %v3458
        %v3589 = vadd.f32 %v3199, %v3463
        %v3590 = vadd.f32 %v3200, %v3468
        %v3591 = vadd.f32 %v3201, %v3473
        %v3592 = vadd.f32 %v3202, %v3478
        %v3593 = vadd.f32 %v3203, %v3483
        %v3594 = vadd.f32 %v3204, %v3488
        %v3595 = vadd.f32 %v3205, %v3493
        %v3596 = vadd.f32 %v3206, %v3498
        %v3597 = vadd.f32 %v3207, %v3503
        %v3598 = vadd.f32 %v3208, %v3508
        %v3599 = vadd.f32 %v3209, %v3513
        %v3600 = vadd.f32 %v3210, %v3518
        %v3601 = vadd.f32 %v3211, %v3523
        %v3602 = vadd.f32 %v3212, %v3528
        %v3603 = vadd.f32 %v3213, %v3533
        %v3604 = vadd.f32 %v3214, %v3538
        %v3605 = vadd.f32 %v3215, %v3543
        %v3606 = vadd.f32 %v3216, %v3548
        %v3607 = vadd.f32 %v3217, %v3553
        %v3608 = vadd.f32 %v3218, %v3558
        %v3609 = vadd.f32 %v3219, %v3563
        %v3610 = vadd.f32 %v3220, %v3568
        %v3611 = vadd.f32 %v3221, %v3573
        %v3612 = vadd.f32 %v3222, %v3578
        %v3613 = vld [vmem:[%s2832 + $0x9] sm:$0xff]
        %v3614 = vld [vmem:[%s2832 + $0x11] sm:$0xff]
        %v3615 = vld [vmem:[%s2832 + $0x29] sm:$0xff]
        %v3616 = vld [vmem:[%s2832 + $0x31] sm:$0xff]
        %v3617 = vld [vmem:[%s2832 + $0x49] sm:$0xff]
        %v3618 = vld [vmem:[%s2832 + $0x51] sm:$0xff]
        %v3619 = vld [vmem:[%s2832 + $0x69] sm:$0xff]
        %v3620 = vld [vmem:[%s2832 + $0x71] sm:$0xff]
        %v3621 = vld [vmem:[%s2832 + $0x89] sm:$0xff]
        %v3622 = vld [vmem:[%s2832 + $0x91] sm:$0xff]
        %v3623 = vld [vmem:[%s2832 + $0xa9] sm:$0xff]
        %v3624 = vld [vmem:[%s2832 + $0xb1] sm:$0xff]
        %v3625 = vld [vmem:[%s2832 + $0xc9] sm:$0xff]
        %v3626 = vld [vmem:[%s2832 + $0xd1] sm:$0xff]
        %v3627 = vld [vmem:[%s2832 + $0xe9] sm:$0xff]
        %v3628 = vld [vmem:[%s2832 + $0xf1] sm:$0xff]
        %v3629 = vld [vmem:[%s2832 + $0x109] sm:$0xff]
        %v3630 = vld [vmem:[%s2832 + $0x111] sm:$0xff]
        %v3631 = vld [vmem:[%s2832 + $0x129] sm:$0xff]
        %v3632 = vld [vmem:[%s2832 + $0x131] sm:$0xff]
        %v3633 = vld [vmem:[%s2832 + $0x149] sm:$0xff]
        %v3634 = vld [vmem:[%s2832 + $0x151] sm:$0xff]
        %v3635 = vld [vmem:[%s2832 + $0x169] sm:$0xff]
        %v3636 = vld [vmem:[%s2832 + $0x171] sm:$0xff]
        %v3637 = vld [vmem:[%s2832 + $0x189] sm:$0xff]
        %v3638 = vld [vmem:[%s2832 + $0x191] sm:$0xff]
        %v3639 = vld [vmem:[%s2832 + $0x1a9] sm:$0xff]
        %v3640 = vld [vmem:[%s2832 + $0x1b1] sm:$0xff]
        %v3641 = vld [vmem:[%s2832 + $0x1c9] sm:$0xff]
        %v3642 = vld [vmem:[%s2832 + $0x1d1] sm:$0xff]
        %v3643 = vld [vmem:[%s2832 + $0x1e9] sm:$0xff]
        %v3644 = vld [vmem:[%s2832 + $0x1f1] sm:$0xff]
        %s3645 = scalar_lea.vmem %s1, 32
        %v3646 = vld [vmem:[%s3645] sm:$0xf]
        %v3648 = vsel %vm417, %v3613, 0
        %v3651 = vsel %vm417, %v3614, 0
        %v3654 = vsel %vm417, %v3615, 0
        %v3657 = vsel %vm417, %v3616, 0
        %v3660 = vsel %vm417, %v3617, 0
        %v3663 = vsel %vm417, %v3618, 0
        %v3666 = vsel %vm417, %v3619, 0
        %v3669 = vsel %vm417, %v3620, 0
        %v3672 = vsel %vm417, %v3621, 0
        %v3675 = vsel %vm417, %v3622, 0
        %v3678 = vsel %vm417, %v3623, 0
        %v3681 = vsel %vm417, %v3624, 0
        %v3684 = vsel %vm417, %v3625, 0
        %v3687 = vsel %vm417, %v3626, 0
        %v3690 = vsel %vm417, %v3627, 0
        %v3693 = vsel %vm417, %v3628, 0
        %v3696 = vsel %vm417, %v3629, 0
        %v3699 = vsel %vm417, %v3630, 0
        %v3702 = vsel %vm417, %v3631, 0
        %v3705 = vsel %vm417, %v3632, 0
        %v3708 = vsel %vm417, %v3633, 0
        %v3711 = vsel %vm417, %v3634, 0
        %v3714 = vsel %vm417, %v3635, 0
        %v3717 = vsel %vm417, %v3636, 0
        %v3720 = vsel %vm417, %v3637, 0
        %v3723 = vsel %vm417, %v3638, 0
        %v3726 = vsel %vm417, %v3639, 0
        %v3729 = vsel %vm417, %v3640, 0
        %v3732 = vsel %vm417, %v3641, 0
        %v3735 = vsel %vm417, %v3642, 0
        %v3738 = vsel %vm417, %v3643, 0
        %v3741 = vsel %vm417, %v3644, 0
        %v3744 = vsel %vm719, %v3646, 0
        %3746 = vmatprep.subr.mxu0 0.0
        %3747 = vmatpush1.msra.mxu0 %v3744
        %3748 = vmatprep.subr.mxu0 0.0
        %3749 = vmatpush1.msra.mxu0 0.0
        %3750 = vmatprep.subr.mxu0 0.0
        %3751 = vmatpush1.msra.mxu0 0.0
        %3752 = vmatprep.subr.mxu0 0.0
        %3753 = vmatpush1.msra.mxu0 0.0
        %3754 = vmatprep.subr.mxu0 0.0
        %3755 = vmatpush1.msra.mxu0 0.0
        %3756 = vmatprep.subr.mxu0 0.0
        %3757 = vmatpush1.msra.mxu0 0.0
        %3758 = vmatprep.subr.mxu0 0.0
        %3759 = vmatpush1.msra.mxu0 0.0
        %3760 = vmatprep.subr.mxu0 0.0
        %3761 = vmatpush1.msra.mxu0 0.0
        %3762 = vmatprep.subr.mxu0 0.0
        %3763 = vmatpush1.msra.mxu0 0.0
        %3764 = vmatprep.subr.mxu0 0.0
        %3765 = vmatpush1.msra.mxu0 0.0
        %3766 = vmatprep.subr.mxu0 0.0
        %3767 = vmatpush1.msra.mxu0 0.0
        %3768 = vmatprep.subr.mxu0 0.0
        %3769 = vmatpush1.msra.mxu0 0.0
        %3770 = vmatprep.subr.mxu0 0.0
        %3771 = vmatpush1.msra.mxu0 0.0
        %3772 = vmatprep.subr.mxu0 0.0
        %3773 = vmatpush1.msra.mxu0 0.0
        %3774 = vmatprep.subr.mxu0 0.0
        %3775 = vmatpush1.msra.mxu0 0.0
        %3776 = vmatprep.subr.mxu0 0.0
        %3777 = vmatpush1.msra.mxu0 0.0
        %3778 = vmatprep.subr.mxu0 0.0
        %3779 = vmatpush1.msra.mxu0 0.0
        %3780 = vmatprep.subr.mxu0 0.0
        %3781 = vmatpush1.msra.mxu0 0.0
        %3782 = vmatprep.subr.mxu0 0.0
        %3783 = vmatpush1.msra.mxu0 0.0
        %3784 = vmatprep.subr.mxu0 0.0
        %3785 = vmatpush1.msra.mxu0 0.0
        %3786 = vmatprep.subr.mxu0 0.0
        %3787 = vmatpush1.msra.mxu0 0.0
        %3788 = vmatprep.subr.mxu0 0.0
        %3789 = vmatpush1.msra.mxu0 0.0
        %3790 = vmatprep.subr.mxu0 0.0
        %3791 = vmatpush1.msra.mxu0 0.0
        %3792 = vmatprep.subr.mxu0 0.0
        %3793 = vmatpush1.msra.mxu0 0.0
        %3794 = vmatprep.subr.mxu0 0.0
        %3795 = vmatpush1.msra.mxu0 0.0
        %3796 = vmatprep.subr.mxu0 0.0
        %3797 = vmatpush1.msra.mxu0 0.0
        %3798 = vmatprep.subr.mxu0 0.0
        %3799 = vmatpush1.msra.mxu0 0.0
        %3800 = vmatprep.subr.mxu0 0.0
        %3801 = vmatpush1.msra.mxu0 0.0
        %3802 = vmatprep.subr.mxu0 0.0
        %3803 = vmatpush1.msra.mxu0 0.0
        %3804 = vmatprep.subr.mxu0 0.0
        %3805 = vmatpush1.msra.mxu0 0.0
        %3806 = vmatprep.subr.mxu0 0.0
        %3807 = vmatpush1.msra.mxu0 0.0
        %3808 = vmatprep.subr.mxu0 0.0
        %3809 = vmatpush1.msra.mxu0 0.0
        %3810 = vmatprep.mubr.f32.mxu0 0.0
        %3811 = vmatmul.mubr.f32.gmra.mrb[0].mxu0 %v3648
        %v3812 = vpop.f32.mrb[0].mxu0
        %v3813 = vadd.f32 0.0, %v3812
        %v3814 = vpop.f32.mrb[0].mxu0
        %3815 = vmatprep.mubr.f32.mxu0 0.0
        %3816 = vmatmul.mubr.f32.gmra.mrb[0].mxu0 %v3651
        %v3817 = vpop.f32.mrb[0].mxu0
        %v3818 = vadd.f32 0.0, %v3817
        %v3819 = vpop.f32.mrb[0].mxu0
        %3820 = vmatprep.mubr.f32.mxu0 0.0
        %3821 = vmatmul.mubr.f32.gmra.mrb[0].mxu0 %v3654
        %v3822 = vpop.f32.mrb[0].mxu0
        %v3823 = vadd.f32 0.0, %v3822
        %v3824 = vpop.f32.mrb[0].mxu0
        %3825 = vmatprep.mubr.f32.mxu0 0.0
        %3826 = vmatmul.mubr.f32.gmra.mrb[0].mxu0 %v3657
        %v3827 = vpop.f32.mrb[0].mxu0
        %v3828 = vadd.f32 0.0, %v3827
        %v3829 = vpop.f32.mrb[0].mxu0
        %3830 = vmatprep.mubr.f32.mxu0 0.0
        %3831 = vmatmul.mubr.f32.gmra.mrb[0].mxu0 %v3660
        %v3832 = vpop.f32.mrb[0].mxu0
        %v3833 = vadd.f32 0.0, %v3832
        %v3834 = vpop.f32.mrb[0].mxu0
        %3835 = vmatprep.mubr.f32.mxu0 0.0
        %3836 = vmatmul.mubr.f32.gmra.mrb[0].mxu0 %v3663
        %v3837 = vpop.f32.mrb[0].mxu0
        %v3838 = vadd.f32 0.0, %v3837
        %v3839 = vpop.f32.mrb[0].mxu0
        %3840 = vmatprep.mubr.f32.mxu0 0.0
        %3841 = vmatmul.mubr.f32.gmra.mrb[0].mxu0 %v3666
        %v3842 = vpop.f32.mrb[0].mxu0
        %v3843 = vadd.f32 0.0, %v3842
        %v3844 = vpop.f32.mrb[0].mxu0
        %3845 = vmatprep.mubr.f32.mxu0 0.0
        %3846 = vmatmul.mubr.f32.gmra.mrb[0].mxu0 %v3669
        %v3847 = vpop.f32.mrb[0].mxu0
        %v3848 = vadd.f32 0.0, %v3847
        %v3849 = vpop.f32.mrb[0].mxu0
        %3850 = vmatprep.mubr.f32.mxu0 0.0
        %3851 = vmatmul.mubr.f32.gmra.mrb[0].mxu0 %v3672
        %v3852 = vpop.f32.mrb[0].mxu0
        %v3853 = vadd.f32 0.0, %v3852
        %v3854 = vpop.f32.mrb[0].mxu0
        %3855 = vmatprep.mubr.f32.mxu0 0.0
        %3856 = vmatmul.mubr.f32.gmra.mrb[0].mxu0 %v3675
        %v3857 = vpop.f32.mrb[0].mxu0
        %v3858 = vadd.f32 0.0, %v3857
        %v3859 = vpop.f32.mrb[0].mxu0
        %3860 = vmatprep.mubr.f32.mxu0 0.0
        %3861 = vmatmul.mubr.f32.gmra.mrb[0].mxu0 %v3678
        %v3862 = vpop.f32.mrb[0].mxu0
        %v3863 = vadd.f32 0.0, %v3862
        %v3864 = vpop.f32.mrb[0].mxu0
        %3865 = vmatprep.mubr.f32.mxu0 0.0
        %3866 = vmatmul.mubr.f32.gmra.mrb[0].mxu0 %v3681
        %v3867 = vpop.f32.mrb[0].mxu0
        %v3868 = vadd.f32 0.0, %v3867
        %v3869 = vpop.f32.mrb[0].mxu0
        %3870 = vmatprep.mubr.f32.mxu0 0.0
        %3871 = vmatmul.mubr.f32.gmra.mrb[0].mxu0 %v3684
        %v3872 = vpop.f32.mrb[0].mxu0
        %v3873 = vadd.f32 0.0, %v3872
        %v3874 = vpop.f32.mrb[0].mxu0
        %3875 = vmatprep.mubr.f32.mxu0 0.0
        %3876 = vmatmul.mubr.f32.gmra.mrb[0].mxu0 %v3687
        %v3877 = vpop.f32.mrb[0].mxu0
        %v3878 = vadd.f32 0.0, %v3877
        %v3879 = vpop.f32.mrb[0].mxu0
        %3880 = vmatprep.mubr.f32.mxu0 0.0
        %3881 = vmatmul.mubr.f32.gmra.mrb[0].mxu0 %v3690
        %v3882 = vpop.f32.mrb[0].mxu0
        %v3883 = vadd.f32 0.0, %v3882
        %v3884 = vpop.f32.mrb[0].mxu0
        %3885 = vmatprep.mubr.f32.mxu0 0.0
        %3886 = vmatmul.mubr.f32.gmra.mrb[0].mxu0 %v3693
        %v3887 = vpop.f32.mrb[0].mxu0
        %v3888 = vadd.f32 0.0, %v3887
        %v3889 = vpop.f32.mrb[0].mxu0
        %3890 = vmatprep.mubr.f32.mxu0 0.0
        %3891 = vmatmul.mubr.f32.gmra.mrb[0].mxu0 %v3696
        %v3892 = vpop.f32.mrb[0].mxu0
        %v3893 = vadd.f32 0.0, %v3892
        %v3894 = vpop.f32.mrb[0].mxu0
        %3895 = vmatprep.mubr.f32.mxu0 0.0
        %3896 = vmatmul.mubr.f32.gmra.mrb[0].mxu0 %v3699
        %v3897 = vpop.f32.mrb[0].mxu0
        %v3898 = vadd.f32 0.0, %v3897
        %v3899 = vpop.f32.mrb[0].mxu0
        %3900 = vmatprep.mubr.f32.mxu0 0.0
        %3901 = vmatmul.mubr.f32.gmra.mrb[0].mxu0 %v3702
        %v3902 = vpop.f32.mrb[0].mxu0
        %v3903 = vadd.f32 0.0, %v3902
        %v3904 = vpop.f32.mrb[0].mxu0
        %3905 = vmatprep.mubr.f32.mxu0 0.0
        %3906 = vmatmul.mubr.f32.gmra.mrb[0].mxu0 %v3705
        %v3907 = vpop.f32.mrb[0].mxu0
        %v3908 = vadd.f32 0.0, %v3907
        %v3909 = vpop.f32.mrb[0].mxu0
        %3910 = vmatprep.mubr.f32.mxu0 0.0
        %3911 = vmatmul.mubr.f32.gmra.mrb[0].mxu0 %v3708
        %v3912 = vpop.f32.mrb[0].mxu0
        %v3913 = vadd.f32 0.0, %v3912
        %v3914 = vpop.f32.mrb[0].mxu0
        %3915 = vmatprep.mubr.f32.mxu0 0.0
        %3916 = vmatmul.mubr.f32.gmra.mrb[0].mxu0 %v3711
        %v3917 = vpop.f32.mrb[0].mxu0
        %v3918 = vadd.f32 0.0, %v3917
        %v3919 = vpop.f32.mrb[0].mxu0
        %3920 = vmatprep.mubr.f32.mxu0 0.0
        %3921 = vmatmul.mubr.f32.gmra.mrb[0].mxu0 %v3714
        %v3922 = vpop.f32.mrb[0].mxu0
        %v3923 = vadd.f32 0.0, %v3922
        %v3924 = vpop.f32.mrb[0].mxu0
        %3925 = vmatprep.mubr.f32.mxu0 0.0
        %3926 = vmatmul.mubr.f32.gmra.mrb[0].mxu0 %v3717
        %v3927 = vpop.f32.mrb[0].mxu0
        %v3928 = vadd.f32 0.0, %v3927
        %v3929 = vpop.f32.mrb[0].mxu0
        %3930 = vmatprep.mubr.f32.mxu0 0.0
        %3931 = vmatmul.mubr.f32.gmra.mrb[0].mxu0 %v3720
        %v3932 = vpop.f32.mrb[0].mxu0
        %v3933 = vadd.f32 0.0, %v3932
        %v3934 = vpop.f32.mrb[0].mxu0
        %3935 = vmatprep.mubr.f32.mxu0 0.0
        %3936 = vmatmul.mubr.f32.gmra.mrb[0].mxu0 %v3723
        %v3937 = vpop.f32.mrb[0].mxu0
        %v3938 = vadd.f32 0.0, %v3937
        %v3939 = vpop.f32.mrb[0].mxu0
        %3940 = vmatprep.mubr.f32.mxu0 0.0
        %3941 = vmatmul.mubr.f32.gmra.mrb[0].mxu0 %v3726
        %v3942 = vpop.f32.mrb[0].mxu0
        %v3943 = vadd.f32 0.0, %v3942
        %v3944 = vpop.f32.mrb[0].mxu0
        %3945 = vmatprep.mubr.f32.mxu0 0.0
        %3946 = vmatmul.mubr.f32.gmra.mrb[0].mxu0 %v3729
        %v3947 = vpop.f32.mrb[0].mxu0
        %v3948 = vadd.f32 0.0, %v3947
        %v3949 = vpop.f32.mrb[0].mxu0
        %3950 = vmatprep.mubr.f32.mxu0 0.0
        %3951 = vmatmul.mubr.f32.gmra.mrb[0].mxu0 %v3732
        %v3952 = vpop.f32.mrb[0].mxu0
        %v3953 = vadd.f32 0.0, %v3952
        %v3954 = vpop.f32.mrb[0].mxu0
        %3955 = vmatprep.mubr.f32.mxu0 0.0
        %3956 = vmatmul.mubr.f32.gmra.mrb[0].mxu0 %v3735
        %v3957 = vpop.f32.mrb[0].mxu0
        %v3958 = vadd.f32 0.0, %v3957
        %v3959 = vpop.f32.mrb[0].mxu0
        %3960 = vmatprep.mubr.f32.mxu0 0.0
        %3961 = vmatmul.mubr.f32.gmra.mrb[0].mxu0 %v3738
        %v3962 = vpop.f32.mrb[0].mxu0
        %v3963 = vadd.f32 0.0, %v3962
        %v3964 = vpop.f32.mrb[0].mxu0
        %3965 = vmatprep.mubr.f32.mxu0 0.0
        %3966 = vmatmul.mubr.f32.gmra.mrb[0].mxu0 %v3741
        %v3967 = vpop.f32.mrb[0].mxu0
        %v3968 = vadd.f32 0.0, %v3967
        %v3969 = vpop.f32.mrb[0].mxu0
        %3970 = vdwg.mxu0
        %v3971 = vadd.f32 %v3581, %v3813
        %v3972 = vadd.f32 %v3582, %v3818
        %v3973 = vadd.f32 %v3583, %v3823
        %v3974 = vadd.f32 %v3584, %v3828
        %v3975 = vadd.f32 %v3585, %v3833
        %v3976 = vadd.f32 %v3586, %v3838
        %v3977 = vadd.f32 %v3587, %v3843
        %v3978 = vadd.f32 %v3588, %v3848
        %v3979 = vadd.f32 %v3589, %v3853
        %v3980 = vadd.f32 %v3590, %v3858
        %v3981 = vadd.f32 %v3591, %v3863
        %v3982 = vadd.f32 %v3592, %v3868
        %v3983 = vadd.f32 %v3593, %v3873
        %v3984 = vadd.f32 %v3594, %v3878
        %v3985 = vadd.f32 %v3595, %v3883
        %v3986 = vadd.f32 %v3596, %v3888
        %v3987 = vadd.f32 %v3597, %v3893
        %v3988 = vadd.f32 %v3598, %v3898
        %v3989 = vadd.f32 %v3599, %v3903
        %v3990 = vadd.f32 %v3600, %v3908
        %v3991 = vadd.f32 %v3601, %v3913
        %v3992 = vadd.f32 %v3602, %v3918
        %v3993 = vadd.f32 %v3603, %v3923
        %v3994 = vadd.f32 %v3604, %v3928
        %v3995 = vadd.f32 %v3605, %v3933
        %v3996 = vadd.f32 %v3606, %v3938
        %v3997 = vadd.f32 %v3607, %v3943
        %v3998 = vadd.f32 %v3608, %v3948
        %v3999 = vadd.f32 %v3609, %v3953
        %v4000 = vadd.f32 %v3610, %v3958
        %v4001 = vadd.f32 %v3611, %v3963
        %v4002 = vadd.f32 %v3612, %v3968
        %v4003 = vld [vmem:[%s2] sm:$0x1]
        %v4005 = vlaneseq
        %v4006 = vshrl.u32 %v4005, 7
        %v4007 = vsub.s32 0, %v4006
        %v4008 = vrot.slane %v4003, %v4007
        %v4010 = vadd.f32 %v3971, %v4008
        %v4011 = vadd.f32 %v3972, %v4008
        %v4012 = vadd.f32 %v3973, %v4008
        %v4013 = vadd.f32 %v3974, %v4008
        %v4014 = vadd.f32 %v3975, %v4008
        %v4015 = vadd.f32 %v3976, %v4008
        %v4016 = vadd.f32 %v3977, %v4008
        %v4017 = vadd.f32 %v3978, %v4008
        %v4018 = vadd.f32 %v3979, %v4008
        %v4019 = vadd.f32 %v3980, %v4008
        %v4020 = vadd.f32 %v3981, %v4008
        %v4021 = vadd.f32 %v3982, %v4008
        %v4022 = vadd.f32 %v3983, %v4008
        %v4023 = vadd.f32 %v3984, %v4008
        %v4024 = vadd.f32 %v3985, %v4008
        %v4025 = vadd.f32 %v3986, %v4008
        %v4026 = vadd.f32 %v3987, %v4008
        %v4027 = vadd.f32 %v3988, %v4008
        %v4028 = vadd.f32 %v3989, %v4008
        %v4029 = vadd.f32 %v3990, %v4008
        %v4030 = vadd.f32 %v3991, %v4008
        %v4031 = vadd.f32 %v3992, %v4008
        %v4032 = vadd.f32 %v3993, %v4008
        %v4033 = vadd.f32 %v3994, %v4008
        %v4034 = vadd.f32 %v3995, %v4008
        %v4035 = vadd.f32 %v3996, %v4008
        %v4036 = vadd.f32 %v3997, %v4008
        %v4037 = vadd.f32 %v3998, %v4008
        %v4038 = vadd.f32 %v3999, %v4008
        %v4039 = vadd.f32 %v4000, %v4008
        %v4040 = vadd.f32 %v4001, %v4008
        %v4041 = vadd.f32 %v4002, %v4008
        %v4042 = vmax.f32 %v4010, 0.0
        %v4043 = vmax.f32 %v4011, 0.0
        %v4044 = vmax.f32 %v4012, 0.0
        %v4045 = vmax.f32 %v4013, 0.0
        %v4046 = vmax.f32 %v4014, 0.0
        %v4047 = vmax.f32 %v4015, 0.0
        %v4048 = vmax.f32 %v4016, 0.0
        %v4049 = vmax.f32 %v4017, 0.0
        %v4050 = vmax.f32 %v4018, 0.0
        %v4051 = vmax.f32 %v4019, 0.0
        %v4052 = vmax.f32 %v4020, 0.0
        %v4053 = vmax.f32 %v4021, 0.0
        %v4054 = vmax.f32 %v4022, 0.0
        %v4055 = vmax.f32 %v4023, 0.0
        %v4056 = vmax.f32 %v4024, 0.0
        %v4057 = vmax.f32 %v4025, 0.0
        %v4058 = vmax.f32 %v4026, 0.0
        %v4059 = vmax.f32 %v4027, 0.0
        %v4060 = vmax.f32 %v4028, 0.0
        %v4061 = vmax.f32 %v4029, 0.0
        %v4062 = vmax.f32 %v4030, 0.0
        %v4063 = vmax.f32 %v4031, 0.0
        %v4064 = vmax.f32 %v4032, 0.0
        %v4065 = vmax.f32 %v4033, 0.0
        %v4066 = vmax.f32 %v4034, 0.0
        %v4067 = vmax.f32 %v4035, 0.0
        %v4068 = vmax.f32 %v4036, 0.0
        %v4069 = vmax.f32 %v4037, 0.0
        %v4070 = vmax.f32 %v4038, 0.0
        %v4071 = vmax.f32 %v4039, 0.0
        %v4072 = vmax.f32 %v4040, 0.0
        %v4073 = vmax.f32 %v4041, 0.0
        %v4074 = vld [vmem:[%s9] sm:$0xff]
        %v4075 = vld [vmem:[%s9 + $0x8] sm:$0xff]
        %v4076 = vld [vmem:[%s9 + $0x10] sm:$0xff]
        %v4077 = vld [vmem:[%s9 + $0x18] sm:$0xff]
        %v4078 = vld [vmem:[%s9 + $0x20] sm:$0xff]
        %v4079 = vld [vmem:[%s9 + $0x28] sm:$0xff]
        %v4080 = vld [vmem:[%s9 + $0x30] sm:$0xff]
        %v4081 = vld [vmem:[%s9 + $0x38] sm:$0xff]
        %v4082 = vld [vmem:[%s9 + $0x40] sm:$0xff]
        %v4083 = vld [vmem:[%s9 + $0x48] sm:$0xff]
        %v4084 = vld [vmem:[%s9 + $0x50] sm:$0xff]
        %v4085 = vld [vmem:[%s9 + $0x58] sm:$0xff]
        %v4086 = vld [vmem:[%s9 + $0x60] sm:$0xff]
        %v4087 = vld [vmem:[%s9 + $0x68] sm:$0xff]
        %v4088 = vld [vmem:[%s9 + $0x70] sm:$0xff]
        %v4089 = vld [vmem:[%s9 + $0x78] sm:$0xff]
        %4090 = vmatprep.subr.mxu0 0.0
        %4091 = vmatpush1.msra.mxu0 %v4042
        %4092 = vmatprep.subr.mxu0 0.0
        %4093 = vmatpush1.msra.mxu0 %v4043
        %4094 = vmatprep.subr.mxu0 0.0
        %4095 = vmatpush1.msra.mxu0 %v4044
        %4096 = vmatprep.subr.mxu0 0.0
        %4097 = vmatpush1.msra.mxu0 %v4045
        %4098 = vmatprep.subr.mxu0 0.0
        %4099 = vmatpush1.msra.mxu0 %v4046
        %4100 = vmatprep.subr.mxu0 0.0
        %4101 = vmatpush1.msra.mxu0 %v4047
        %4102 = vmatprep.subr.mxu0 0.0
        %4103 = vmatpush1.msra.mxu0 %v4048
        %4104 = vmatprep.subr.mxu0 0.0
        %4105 = vmatpush1.msra.mxu0 %v4049
        %4106 = vmatprep.subr.mxu0 0.0
        %4107 = vmatpush1.msra.mxu0 %v4050
        %4108 = vmatprep.subr.mxu0 0.0
        %4109 = vmatpush1.msra.mxu0 %v4051
        %4110 = vmatprep.subr.mxu0 0.0
        %4111 = vmatpush1.msra.mxu0 %v4052
        %4112 = vmatprep.subr.mxu0 0.0
        %4113 = vmatpush1.msra.mxu0 %v4053
        %4114 = vmatprep.subr.mxu0 0.0
        %4115 = vmatpush1.msra.mxu0 %v4054
        %4116 = vmatprep.subr.mxu0 0.0
        %4117 = vmatpush1.msra.mxu0 %v4055
        %4118 = vmatprep.subr.mxu0 0.0
        %4119 = vmatpush1.msra.mxu0 %v4056
        %4120 = vmatprep.subr.mxu0 0.0
        %4121 = vmatpush1.msra.mxu0 %v4057
        %4122 = vmatprep.subr.mxu0 0.0
        %4123 = vmatpush1.msra.mxu0 %v4058
        %4124 = vmatprep.subr.mxu0 0.0
        %4125 = vmatpush1.msra.mxu0 %v4059
        %4126 = vmatprep.subr.mxu0 0.0
        %4127 = vmatpush1.msra.mxu0 %v4060
        %4128 = vmatprep.subr.mxu0 0.0
        %4129 = vmatpush1.msra.mxu0 %v4061
        %4130 = vmatprep.subr.mxu0 0.0
        %4131 = vmatpush1.msra.mxu0 %v4062
        %4132 = vmatprep.subr.mxu0 0.0
        %4133 = vmatpush1.msra.mxu0 %v4063
        %4134 = vmatprep.subr.mxu0 0.0
        %4135 = vmatpush1.msra.mxu0 %v4064
        %4136 = vmatprep.subr.mxu0 0.0
        %4137 = vmatpush1.msra.mxu0 %v4065
        %4138 = vmatprep.subr.mxu0 0.0
        %4139 = vmatpush1.msra.mxu0 %v4066
        %4140 = vmatprep.subr.mxu0 0.0
        %4141 = vmatpush1.msra.mxu0 %v4067
        %4142 = vmatprep.subr.mxu0 0.0
        %4143 = vmatpush1.msra.mxu0 %v4068
        %4144 = vmatprep.subr.mxu0 0.0
        %4145 = vmatpush1.msra.mxu0 %v4069
        %4146 = vmatprep.subr.mxu0 0.0
        %4147 = vmatpush1.msra.mxu0 %v4070
        %4148 = vmatprep.subr.mxu0 0.0
        %4149 = vmatpush1.msra.mxu0 %v4071
        %4150 = vmatprep.subr.mxu0 0.0
        %4151 = vmatpush1.msra.mxu0 %v4072
        %4152 = vmatprep.subr.mxu0 0.0
        %4153 = vmatpush1.msra.mxu0 %v4073
        %4154 = vmatprep.mubr.f32.mxu0 %v4075
        %4155 = vmatmul.mubr.f32.gmra.mrb[0].mxu0 %v4074
        %v4156 = vpop.f32.mrb[0].mxu0
        %v4157 = vadd.f32 0.0, %v4156
        %v4158 = vpop.f32.mrb[0].mxu0
        %4159 = vmatprep.mubr.f32.mxu0 %v4077
        %4160 = vmatmul.mubr.f32.gmra.mrb[0].mxu0 %v4076
        %v4161 = vpop.f32.mrb[0].mxu0
        %v4162 = vadd.f32 0.0, %v4161
        %v4163 = vpop.f32.mrb[0].mxu0
        %4164 = vmatprep.mubr.f32.mxu0 %v4079
        %4165 = vmatmul.mubr.f32.gmra.mrb[0].mxu0 %v4078
        %v4166 = vpop.f32.mrb[0].mxu0
        %v4167 = vadd.f32 0.0, %v4166
        %v4168 = vpop.f32.mrb[0].mxu0
        %4169 = vmatprep.mubr.f32.mxu0 %v4081
        %4170 = vmatmul.mubr.f32.gmra.mrb[0].mxu0 %v4080
        %v4171 = vpop.f32.mrb[0].mxu0
        %v4172 = vadd.f32 0.0, %v4171
        %v4173 = vpop.f32.mrb[0].mxu0
        %4174 = vmatprep.mubr.f32.mxu0 %v4083
        %4175 = vmatmul.mubr.f32.gmra.mrb[0].mxu0 %v4082
        %v4176 = vpop.f32.mrb[0].mxu0
        %v4177 = vadd.f32 0.0, %v4176
        %v4178 = vpop.f32.mrb[0].mxu0
        %4179 = vmatprep.mubr.f32.mxu0 %v4085
        %4180 = vmatmul.mubr.f32.gmra.mrb[0].mxu0 %v4084
        %v4181 = vpop.f32.mrb[0].mxu0
        %v4182 = vadd.f32 0.0, %v4181
        %v4183 = vpop.f32.mrb[0].mxu0
        %4184 = vmatprep.mubr.f32.mxu0 %v4087
        %4185 = vmatmul.mubr.f32.gmra.mrb[0].mxu0 %v4086
        %v4186 = vpop.f32.mrb[0].mxu0
        %v4187 = vadd.f32 0.0, %v4186
        %v4188 = vpop.f32.mrb[0].mxu0
        %4189 = vmatprep.mubr.f32.mxu0 %v4089
        %4190 = vmatmul.mubr.f32.gmra.mrb[0].mxu0 %v4088
        %v4191 = vpop.f32.mrb[0].mxu0
        %v4192 = vadd.f32 0.0, %v4191
        %v4193 = vpop.f32.mrb[0].mxu0
        %4194 = vdwg.mxu0
        %s4195 = scalar_lea.vmem %s9, 128
        %v4196 = vld [vmem:[%s4195] sm:$0xff]
        %v4197 = vld [vmem:[%s4195 + $0x8] sm:$0xff]
        %v4198 = vld [vmem:[%s4195 + $0x10] sm:$0xff]
        %v4199 = vld [vmem:[%s4195 + $0x18] sm:$0xff]
        %v4200 = vld [vmem:[%s4195 + $0x20] sm:$0xff]
        %v4201 = vld [vmem:[%s4195 + $0x28] sm:$0xff]
        %v4202 = vld [vmem:[%s4195 + $0x30] sm:$0xff]
        %v4203 = vld [vmem:[%s4195 + $0x38] sm:$0xff]
        %v4204 = vld [vmem:[%s4195 + $0x40] sm:$0xff]
        %v4205 = vld [vmem:[%s4195 + $0x48] sm:$0xff]
        %v4206 = vld [vmem:[%s4195 + $0x50] sm:$0xff]
        %v4207 = vld [vmem:[%s4195 + $0x58] sm:$0xff]
        %v4208 = vld [vmem:[%s4195 + $0x60] sm:$0xff]
        %v4209 = vld [vmem:[%s4195 + $0x68] sm:$0xff]
        %v4210 = vld [vmem:[%s4195 + $0x70] sm:$0xff]
        %v4211 = vld [vmem:[%s4195 + $0x78] sm:$0xff]
        %4212 = vmatprep.subr.mxu0 0.0
        %4213 = vmatpush1.msra.mxu0 %v4042
        %4214 = vmatprep.subr.mxu0 0.0
        %4215 = vmatpush1.msra.mxu0 %v4043
        %4216 = vmatprep.subr.mxu0 0.0
        %4217 = vmatpush1.msra.mxu0 %v4044
        %4218 = vmatprep.subr.mxu0 0.0
        %4219 = vmatpush1.msra.mxu0 %v4045
        %4220 = vmatprep.subr.mxu0 0.0
        %4221 = vmatpush1.msra.mxu0 %v4046
        %4222 = vmatprep.subr.mxu0 0.0
        %4223 = vmatpush1.msra.mxu0 %v4047
        %4224 = vmatprep.subr.mxu0 0.0
        %4225 = vmatpush1.msra.mxu0 %v4048
        %4226 = vmatprep.subr.mxu0 0.0
        %4227 = vmatpush1.msra.mxu0 %v4049
        %4228 = vmatprep.subr.mxu0 0.0
        %4229 = vmatpush1.msra.mxu0 %v4050
        %4230 = vmatprep.subr.mxu0 0.0
        %4231 = vmatpush1.msra.mxu0 %v4051
        %4232 = vmatprep.subr.mxu0 0.0
        %4233 = vmatpush1.msra.mxu0 %v4052
        %4234 = vmatprep.subr.mxu0 0.0
        %4235 = vmatpush1.msra.mxu0 %v4053
        %4236 = vmatprep.subr.mxu0 0.0
        %4237 = vmatpush1.msra.mxu0 %v4054
        %4238 = vmatprep.subr.mxu0 0.0
        %4239 = vmatpush1.msra.mxu0 %v4055
        %4240 = vmatprep.subr.mxu0 0.0
        %4241 = vmatpush1.msra.mxu0 %v4056
        %4242 = vmatprep.subr.mxu0 0.0
        %4243 = vmatpush1.msra.mxu0 %v4057
        %4244 = vmatprep.subr.mxu0 0.0
        %4245 = vmatpush1.msra.mxu0 %v4058
        %4246 = vmatprep.subr.mxu0 0.0
        %4247 = vmatpush1.msra.mxu0 %v4059
        %4248 = vmatprep.subr.mxu0 0.0
        %4249 = vmatpush1.msra.mxu0 %v4060
        %4250 = vmatprep.subr.mxu0 0.0
        %4251 = vmatpush1.msra.mxu0 %v4061
        %4252 = vmatprep.subr.mxu0 0.0
        %4253 = vmatpush1.msra.mxu0 %v4062
        %4254 = vmatprep.subr.mxu0 0.0
        %4255 = vmatpush1.msra.mxu0 %v4063
        %4256 = vmatprep.subr.mxu0 0.0
        %4257 = vmatpush1.msra.mxu0 %v4064
        %4258 = vmatprep.subr.mxu0 0.0
        %4259 = vmatpush1.msra.mxu0 %v4065
        %4260 = vmatprep.subr.mxu0 0.0
        %4261 = vmatpush1.msra.mxu0 %v4066
        %4262 = vmatprep.subr.mxu0 0.0
        %4263 = vmatpush1.msra.mxu0 %v4067
        %4264 = vmatprep.subr.mxu0 0.0
        %4265 = vmatpush1.msra.mxu0 %v4068
        %4266 = vmatprep.subr.mxu0 0.0
        %4267 = vmatpush1.msra.mxu0 %v4069
        %4268 = vmatprep.subr.mxu0 0.0
        %4269 = vmatpush1.msra.mxu0 %v4070
        %4270 = vmatprep.subr.mxu0 0.0
        %4271 = vmatpush1.msra.mxu0 %v4071
        %4272 = vmatprep.subr.mxu0 0.0
        %4273 = vmatpush1.msra.mxu0 %v4072
        %4274 = vmatprep.subr.mxu0 0.0
        %4275 = vmatpush1.msra.mxu0 %v4073
        %4276 = vmatprep.mubr.f32.mxu0 %v4197
        %4277 = vmatmul.mubr.f32.gmra.mrb[0].mxu0 %v4196
        %v4278 = vpop.f32.mrb[0].mxu0
        %v4279 = vadd.f32 0.0, %v4278
        %v4280 = vpop.f32.mrb[0].mxu0
        %4281 = vmatprep.mubr.f32.mxu0 %v4199
        %4282 = vmatmul.mubr.f32.gmra.mrb[0].mxu0 %v4198
        %v4283 = vpop.f32.mrb[0].mxu0
        %v4284 = vadd.f32 0.0, %v4283
        %v4285 = vpop.f32.mrb[0].mxu0
        %4286 = vmatprep.mubr.f32.mxu0 %v4201
        %4287 = vmatmul.mubr.f32.gmra.mrb[0].mxu0 %v4200
        %v4288 = vpop.f32.mrb[0].mxu0
        %v4289 = vadd.f32 0.0, %v4288
        %v4290 = vpop.f32.mrb[0].mxu0
        %4291 = vmatprep.mubr.f32.mxu0 %v4203
        %4292 = vmatmul.mubr.f32.gmra.mrb[0].mxu0 %v4202
        %v4293 = vpop.f32.mrb[0].mxu0
        %v4294 = vadd.f32 0.0, %v4293
        %v4295 = vpop.f32.mrb[0].mxu0
        %4296 = vmatprep.mubr.f32.mxu0 %v4205
        %4297 = vmatmul.mubr.f32.gmra.mrb[0].mxu0 %v4204
        %v4298 = vpop.f32.mrb[0].mxu0
        %v4299 = vadd.f32 0.0, %v4298
        %v4300 = vpop.f32.mrb[0].mxu0
        %4301 = vmatprep.mubr.f32.mxu0 %v4207
        %4302 = vmatmul.mubr.f32.gmra.mrb[0].mxu0 %v4206
        %v4303 = vpop.f32.mrb[0].mxu0
        %v4304 = vadd.f32 0.0, %v4303
        %v4305 = vpop.f32.mrb[0].mxu0
        %4306 = vmatprep.mubr.f32.mxu0 %v4209
        %4307 = vmatmul.mubr.f32.gmra.mrb[0].mxu0 %v4208
        %v4308 = vpop.f32.mrb[0].mxu0
        %v4309 = vadd.f32 0.0, %v4308
        %v4310 = vpop.f32.mrb[0].mxu0
        %4311 = vmatprep.mubr.f32.mxu0 %v4211
        %4312 = vmatmul.mubr.f32.gmra.mrb[0].mxu0 %v4210
        %v4313 = vpop.f32.mrb[0].mxu0
        %v4314 = vadd.f32 0.0, %v4313
        %v4315 = vpop.f32.mrb[0].mxu0
        %4316 = vdwg.mxu0
        %s4317 = scalar_lea.vmem %s9, 256
        %v4318 = vld [vmem:[%s4317] sm:$0xff]
        %v4319 = vld [vmem:[%s4317 + $0x8] sm:$0xff]
        %v4320 = vld [vmem:[%s4317 + $0x10] sm:$0xff]
        %v4321 = vld [vmem:[%s4317 + $0x18] sm:$0xff]
        %v4322 = vld [vmem:[%s4317 + $0x20] sm:$0xff]
        %v4323 = vld [vmem:[%s4317 + $0x28] sm:$0xff]
        %v4324 = vld [vmem:[%s4317 + $0x30] sm:$0xff]
        %v4325 = vld [vmem:[%s4317 + $0x38] sm:$0xff]
        %v4326 = vld [vmem:[%s4317 + $0x40] sm:$0xff]
        %v4327 = vld [vmem:[%s4317 + $0x48] sm:$0xff]
        %v4328 = vld [vmem:[%s4317 + $0x50] sm:$0xff]
        %v4329 = vld [vmem:[%s4317 + $0x58] sm:$0xff]
        %v4330 = vld [vmem:[%s4317 + $0x60] sm:$0xff]
        %v4331 = vld [vmem:[%s4317 + $0x68] sm:$0xff]
        %v4332 = vld [vmem:[%s4317 + $0x70] sm:$0xff]
        %v4333 = vld [vmem:[%s4317 + $0x78] sm:$0xff]
        %4334 = vmatprep.subr.mxu0 0.0
        %4335 = vmatpush1.msra.mxu0 %v4042
        %4336 = vmatprep.subr.mxu0 0.0
        %4337 = vmatpush1.msra.mxu0 %v4043
        %4338 = vmatprep.subr.mxu0 0.0
        %4339 = vmatpush1.msra.mxu0 %v4044
        %4340 = vmatprep.subr.mxu0 0.0
        %4341 = vmatpush1.msra.mxu0 %v4045
        %4342 = vmatprep.subr.mxu0 0.0
        %4343 = vmatpush1.msra.mxu0 %v4046
        %4344 = vmatprep.subr.mxu0 0.0
        %4345 = vmatpush1.msra.mxu0 %v4047
        %4346 = vmatprep.subr.mxu0 0.0
        %4347 = vmatpush1.msra.mxu0 %v4048
        %4348 = vmatprep.subr.mxu0 0.0
        %4349 = vmatpush1.msra.mxu0 %v4049
        %4350 = vmatprep.subr.mxu0 0.0
        %4351 = vmatpush1.msra.mxu0 %v4050
        %4352 = vmatprep.subr.mxu0 0.0
        %4353 = vmatpush1.msra.mxu0 %v4051
        %4354 = vmatprep.subr.mxu0 0.0
        %4355 = vmatpush1.msra.mxu0 %v4052
        %4356 = vmatprep.subr.mxu0 0.0
        %4357 = vmatpush1.msra.mxu0 %v4053
        %4358 = vmatprep.subr.mxu0 0.0
        %4359 = vmatpush1.msra.mxu0 %v4054
        %4360 = vmatprep.subr.mxu0 0.0
        %4361 = vmatpush1.msra.mxu0 %v4055
        %4362 = vmatprep.subr.mxu0 0.0
        %4363 = vmatpush1.msra.mxu0 %v4056
        %4364 = vmatprep.subr.mxu0 0.0
        %4365 = vmatpush1.msra.mxu0 %v4057
        %4366 = vmatprep.subr.mxu0 0.0
        %4367 = vmatpush1.msra.mxu0 %v4058
        %4368 = vmatprep.subr.mxu0 0.0
        %4369 = vmatpush1.msra.mxu0 %v4059
        %4370 = vmatprep.subr.mxu0 0.0
        %4371 = vmatpush1.msra.mxu0 %v4060
        %4372 = vmatprep.subr.mxu0 0.0
        %4373 = vmatpush1.msra.mxu0 %v4061
        %4374 = vmatprep.subr.mxu0 0.0
        %4375 = vmatpush1.msra.mxu0 %v4062
        %4376 = vmatprep.subr.mxu0 0.0
        %4377 = vmatpush1.msra.mxu0 %v4063
        %4378 = vmatprep.subr.mxu0 0.0
        %4379 = vmatpush1.msra.mxu0 %v4064
        %4380 = vmatprep.subr.mxu0 0.0
        %4381 = vmatpush1.msra.mxu0 %v4065
        %4382 = vmatprep.subr.mxu0 0.0
        %4383 = vmatpush1.msra.mxu0 %v4066
        %4384 = vmatprep.subr.mxu0 0.0
        %4385 = vmatpush1.msra.mxu0 %v4067
        %4386 = vmatprep.subr.mxu0 0.0
        %4387 = vmatpush1.msra.mxu0 %v4068
        %4388 = vmatprep.subr.mxu0 0.0
        %4389 = vmatpush1.msra.mxu0 %v4069
        %4390 = vmatprep.subr.mxu0 0.0
        %4391 = vmatpush1.msra.mxu0 %v4070
        %4392 = vmatprep.subr.mxu0 0.0
        %4393 = vmatpush1.msra.mxu0 %v4071
        %4394 = vmatprep.subr.mxu0 0.0
        %4395 = vmatpush1.msra.mxu0 %v4072
        %4396 = vmatprep.subr.mxu0 0.0
        %4397 = vmatpush1.msra.mxu0 %v4073
        %4398 = vmatprep.mubr.f32.mxu0 %v4319
        %4399 = vmatmul.mubr.f32.gmra.mrb[0].mxu0 %v4318
        %v4400 = vpop.f32.mrb[0].mxu0
        %v4401 = vadd.f32 0.0, %v4400
        %v4402 = vpop.f32.mrb[0].mxu0
        %4403 = vmatprep.mubr.f32.mxu0 %v4321
        %4404 = vmatmul.mubr.f32.gmra.mrb[0].mxu0 %v4320
        %v4405 = vpop.f32.mrb[0].mxu0
        %v4406 = vadd.f32 0.0, %v4405
        %v4407 = vpop.f32.mrb[0].mxu0
        %4408 = vmatprep.mubr.f32.mxu0 %v4323
        %4409 = vmatmul.mubr.f32.gmra.mrb[0].mxu0 %v4322
        %v4410 = vpop.f32.mrb[0].mxu0
        %v4411 = vadd.f32 0.0, %v4410
        %v4412 = vpop.f32.mrb[0].mxu0
        %4413 = vmatprep.mubr.f32.mxu0 %v4325
        %4414 = vmatmul.mubr.f32.gmra.mrb[0].mxu0 %v4324
        %v4415 = vpop.f32.mrb[0].mxu0
        %v4416 = vadd.f32 0.0, %v4415
        %v4417 = vpop.f32.mrb[0].mxu0
        %4418 = vmatprep.mubr.f32.mxu0 %v4327
        %4419 = vmatmul.mubr.f32.gmra.mrb[0].mxu0 %v4326
        %v4420 = vpop.f32.mrb[0].mxu0
        %v4421 = vadd.f32 0.0, %v4420
        %v4422 = vpop.f32.mrb[0].mxu0
        %4423 = vmatprep.mubr.f32.mxu0 %v4329
        %4424 = vmatmul.mubr.f32.gmra.mrb[0].mxu0 %v4328
        %v4425 = vpop.f32.mrb[0].mxu0
        %v4426 = vadd.f32 0.0, %v4425
        %v4427 = vpop.f32.mrb[0].mxu0
        %4428 = vmatprep.mubr.f32.mxu0 %v4331
        %4429 = vmatmul.mubr.f32.gmra.mrb[0].mxu0 %v4330
        %v4430 = vpop.f32.mrb[0].mxu0
        %v4431 = vadd.f32 0.0, %v4430
        %v4432 = vpop.f32.mrb[0].mxu0
        %4433 = vmatprep.mubr.f32.mxu0 %v4333
        %4434 = vmatmul.mubr.f32.gmra.mrb[0].mxu0 %v4332
        %v4435 = vpop.f32.mrb[0].mxu0
        %v4436 = vadd.f32 0.0, %v4435
        %v4437 = vpop.f32.mrb[0].mxu0
        %4438 = vdwg.mxu0
        %s4439 = scalar_lea.vmem %s9, 384
        %v4440 = vld [vmem:[%s4439] sm:$0xff]
        %v4441 = vld [vmem:[%s4439 + $0x8] sm:$0xff]
        %v4442 = vld [vmem:[%s4439 + $0x10] sm:$0xff]
        %v4443 = vld [vmem:[%s4439 + $0x18] sm:$0xff]
        %v4444 = vld [vmem:[%s4439 + $0x20] sm:$0xff]
        %v4445 = vld [vmem:[%s4439 + $0x28] sm:$0xff]
        %v4446 = vld [vmem:[%s4439 + $0x30] sm:$0xff]
        %v4447 = vld [vmem:[%s4439 + $0x38] sm:$0xff]
        %v4448 = vld [vmem:[%s4439 + $0x40] sm:$0xff]
        %v4449 = vld [vmem:[%s4439 + $0x48] sm:$0xff]
        %v4450 = vld [vmem:[%s4439 + $0x50] sm:$0xff]
        %v4451 = vld [vmem:[%s4439 + $0x58] sm:$0xff]
        %v4452 = vld [vmem:[%s4439 + $0x60] sm:$0xff]
        %v4453 = vld [vmem:[%s4439 + $0x68] sm:$0xff]
        %v4454 = vld [vmem:[%s4439 + $0x70] sm:$0xff]
        %v4455 = vld [vmem:[%s4439 + $0x78] sm:$0xff]
        %4456 = vmatprep.subr.mxu0 0.0
        %4457 = vmatpush1.msra.mxu0 %v4042
        %4458 = vmatprep.subr.mxu0 0.0
        %4459 = vmatpush1.msra.mxu0 %v4043
        %4460 = vmatprep.subr.mxu0 0.0
        %4461 = vmatpush1.msra.mxu0 %v4044
        %4462 = vmatprep.subr.mxu0 0.0
        %4463 = vmatpush1.msra.mxu0 %v4045
        %4464 = vmatprep.subr.mxu0 0.0
        %4465 = vmatpush1.msra.mxu0 %v4046
        %4466 = vmatprep.subr.mxu0 0.0
        %4467 = vmatpush1.msra.mxu0 %v4047
        %4468 = vmatprep.subr.mxu0 0.0
        %4469 = vmatpush1.msra.mxu0 %v4048
        %4470 = vmatprep.subr.mxu0 0.0
        %4471 = vmatpush1.msra.mxu0 %v4049
        %4472 = vmatprep.subr.mxu0 0.0
        %4473 = vmatpush1.msra.mxu0 %v4050
        %4474 = vmatprep.subr.mxu0 0.0
        %4475 = vmatpush1.msra.mxu0 %v4051
        %4476 = vmatprep.subr.mxu0 0.0
        %4477 = vmatpush1.msra.mxu0 %v4052
        %4478 = vmatprep.subr.mxu0 0.0
        %4479 = vmatpush1.msra.mxu0 %v4053
        %4480 = vmatprep.subr.mxu0 0.0
        %4481 = vmatpush1.msra.mxu0 %v4054
        %4482 = vmatprep.subr.mxu0 0.0
        %4483 = vmatpush1.msra.mxu0 %v4055
        %4484 = vmatprep.subr.mxu0 0.0
        %4485 = vmatpush1.msra.mxu0 %v4056
        %4486 = vmatprep.subr.mxu0 0.0
        %4487 = vmatpush1.msra.mxu0 %v4057
        %4488 = vmatprep.subr.mxu0 0.0
        %4489 = vmatpush1.msra.mxu0 %v4058
        %4490 = vmatprep.subr.mxu0 0.0
        %4491 = vmatpush1.msra.mxu0 %v4059
        %4492 = vmatprep.subr.mxu0 0.0
        %4493 = vmatpush1.msra.mxu0 %v4060
        %4494 = vmatprep.subr.mxu0 0.0
        %4495 = vmatpush1.msra.mxu0 %v4061
        %4496 = vmatprep.subr.mxu0 0.0
        %4497 = vmatpush1.msra.mxu0 %v4062
        %4498 = vmatprep.subr.mxu0 0.0
        %4499 = vmatpush1.msra.mxu0 %v4063
        %4500 = vmatprep.subr.mxu0 0.0
        %4501 = vmatpush1.msra.mxu0 %v4064
        %4502 = vmatprep.subr.mxu0 0.0
        %4503 = vmatpush1.msra.mxu0 %v4065
        %4504 = vmatprep.subr.mxu0 0.0
        %4505 = vmatpush1.msra.mxu0 %v4066
        %4506 = vmatprep.subr.mxu0 0.0
        %4507 = vmatpush1.msra.mxu0 %v4067
        %4508 = vmatprep.subr.mxu0 0.0
        %4509 = vmatpush1.msra.mxu0 %v4068
        %4510 = vmatprep.subr.mxu0 0.0
        %4511 = vmatpush1.msra.mxu0 %v4069
        %4512 = vmatprep.subr.mxu0 0.0
        %4513 = vmatpush1.msra.mxu0 %v4070
        %4514 = vmatprep.subr.mxu0 0.0
        %4515 = vmatpush1.msra.mxu0 %v4071
        %4516 = vmatprep.subr.mxu0 0.0
        %4517 = vmatpush1.msra.mxu0 %v4072
        %4518 = vmatprep.subr.mxu0 0.0
        %4519 = vmatpush1.msra.mxu0 %v4073
        %4520 = vmatprep.mubr.f32.mxu0 %v4441
        %4521 = vmatmul.mubr.f32.gmra.mrb[0].mxu0 %v4440
        %v4522 = vpop.f32.mrb[0].mxu0
        %v4523 = vadd.f32 0.0, %v4522
        %v4524 = vpop.f32.mrb[0].mxu0
        %4525 = vmatprep.mubr.f32.mxu0 %v4443
        %4526 = vmatmul.mubr.f32.gmra.mrb[0].mxu0 %v4442
        %v4527 = vpop.f32.mrb[0].mxu0
        %v4528 = vadd.f32 0.0, %v4527
        %v4529 = vpop.f32.mrb[0].mxu0
        %4530 = vmatprep.mubr.f32.mxu0 %v4445
        %4531 = vmatmul.mubr.f32.gmra.mrb[0].mxu0 %v4444
        %v4532 = vpop.f32.mrb[0].mxu0
        %v4533 = vadd.f32 0.0, %v4532
        %v4534 = vpop.f32.mrb[0].mxu0
        %4535 = vmatprep.mubr.f32.mxu0 %v4447
        %4536 = vmatmul.mubr.f32.gmra.mrb[0].mxu0 %v4446
        %v4537 = vpop.f32.mrb[0].mxu0
        %v4538 = vadd.f32 0.0, %v4537
        %v4539 = vpop.f32.mrb[0].mxu0
        %4540 = vmatprep.mubr.f32.mxu0 %v4449
        %4541 = vmatmul.mubr.f32.gmra.mrb[0].mxu0 %v4448
        %v4542 = vpop.f32.mrb[0].mxu0
        %v4543 = vadd.f32 0.0, %v4542
        %v4544 = vpop.f32.mrb[0].mxu0
        %4545 = vmatprep.mubr.f32.mxu0 %v4451
        %4546 = vmatmul.mubr.f32.gmra.mrb[0].mxu0 %v4450
        %v4547 = vpop.f32.mrb[0].mxu0
        %v4548 = vadd.f32 0.0, %v4547
        %v4549 = vpop.f32.mrb[0].mxu0
        %4550 = vmatprep.mubr.f32.mxu0 %v4453
        %4551 = vmatmul.mubr.f32.gmra.mrb[0].mxu0 %v4452
        %v4552 = vpop.f32.mrb[0].mxu0
        %v4553 = vadd.f32 0.0, %v4552
        %v4554 = vpop.f32.mrb[0].mxu0
        %4555 = vmatprep.mubr.f32.mxu0 %v4455
        %4556 = vmatmul.mubr.f32.gmra.mrb[0].mxu0 %v4454
        %v4557 = vpop.f32.mrb[0].mxu0
        %v4558 = vadd.f32 0.0, %v4557
        %v4559 = vpop.f32.mrb[0].mxu0
        %4560 = vdwg.mxu0
        %v4561 = vmax.f32 %v4157, %v4279
        %v4562 = vmax.f32 %v4162, %v4284
        %v4563 = vmax.f32 %v4167, %v4289
        %v4564 = vmax.f32 %v4172, %v4294
        %v4565 = vmax.f32 %v4177, %v4299
        %v4566 = vmax.f32 %v4182, %v4304
        %v4567 = vmax.f32 %v4187, %v4309
        %v4568 = vmax.f32 %v4192, %v4314
        %v4569 = vmax.f32 %v4401, %v4523
        %v4570 = vmax.f32 %v4406, %v4528
        %v4571 = vmax.f32 %v4411, %v4533
        %v4572 = vmax.f32 %v4416, %v4538
        %v4573 = vmax.f32 %v4421, %v4543
        %v4574 = vmax.f32 %v4426, %v4548
        %v4575 = vmax.f32 %v4431, %v4553
        %v4576 = vmax.f32 %v4436, %v4558
        %v4577 = vmax.f32 %v4561, %v4569
        %v4578 = vmax.f32 %v4562, %v4570
        %v4579 = vmax.f32 %v4563, %v4571
        %v4580 = vmax.f32 %v4564, %v4572
        %v4581 = vmax.f32 %v4565, %v4573
        %v4582 = vmax.f32 %v4566, %v4574
        %v4583 = vmax.f32 %v4567, %v4575
        %v4584 = vmax.f32 %v4568, %v4576
        %vm4585 = vcmask 64512
        %4586 = vst.msk [vmem:[#allocation3] sm:$0xff] %vm4585, 0.0
        %4587 = vst.msk [vmem:[#allocation3 + $0x8] sm:$0xff] %vm4585, 0.0
        %vm4588 = vcmask 57344
        %4589 = vst.msk [vmem:[#allocation3 + $0x10] sm:$0x1] %vm4588, 0.0
        %4590 = vst.msk [vmem:[#allocation3 + $0x18] sm:$0xff] %vm4585, 0.0
        %4591 = vst.msk [vmem:[#allocation3 + $0x20] sm:$0xff] %vm4585, 0.0
        %4592 = vst.msk [vmem:[#allocation3 + $0x28] sm:$0x1] %vm4588, 0.0
        %4593 = vst.msk [vmem:[#allocation3 + $0x30] sm:$0xff] %vm4585, 0.0
        %4594 = vst.msk [vmem:[#allocation3 + $0x38] sm:$0xff] %vm4585, 0.0
        %4595 = vst.msk [vmem:[#allocation3 + $0x40] sm:$0x1] %vm4588, 0.0
        %4596 = vst.msk [vmem:[#allocation3 + $0x48] sm:$0xff] %vm4585, 0.0
        %4597 = vst.msk [vmem:[#allocation3 + $0x50] sm:$0xff] %vm4585, 0.0
        %4598 = vst.msk [vmem:[#allocation3 + $0x58] sm:$0x1] %vm4588, 0.0
        %4599 = vst.msk [vmem:[#allocation3 + $0x60] sm:$0xff] %vm4585, 0.0
        %4600 = vst.msk [vmem:[#allocation3 + $0x68] sm:$0xff] %vm4585, 0.0
        %4601 = vst.msk [vmem:[#allocation3 + $0x70] sm:$0x1] %vm4588, 0.0
        %4602 = vst.msk [vmem:[#allocation3 + $0x78] sm:$0xff] %vm4585, 0.0
        %4603 = vst.msk [vmem:[#allocation3 + $0x80] sm:$0xff] %vm4585, 0.0
        %4604 = vst.msk [vmem:[#allocation3 + $0x88] sm:$0x1] %vm4588, 0.0
        %4605 = vst.msk [vmem:[#allocation3 + $0x90] sm:$0xff] %vm4585, 0.0
        %4606 = vst.msk [vmem:[#allocation3 + $0x98] sm:$0xff] %vm4585, 0.0
        %4607 = vst.msk [vmem:[#allocation3 + $0xa0] sm:$0x1] %vm4588, 0.0
        %4608 = vst.msk [vmem:[#allocation3 + $0xa8] sm:$0xff] %vm4585, 0.0
        %4609 = vst.msk [vmem:[#allocation3 + $0xb0] sm:$0xff] %vm4585, 0.0
        %4610 = vst.msk [vmem:[#allocation3 + $0xb8] sm:$0x1] %vm4588, 0.0
        %4611 = vst.msk [vmem:[#allocation3 + $0xc0] sm:$0xff] %vm4585, 0.0
        %4612 = vst.msk [vmem:[#allocation3 + $0xc8] sm:$0xff] %vm4585, 0.0
        %4613 = vst.msk [vmem:[#allocation3 + $0xd0] sm:$0x1] %vm4588, 0.0
        %4614 = vst.msk [vmem:[#allocation3 + $0xd8] sm:$0xff] %vm4585, 0.0
        %4615 = vst.msk [vmem:[#allocation3 + $0xe0] sm:$0xff] %vm4585, 0.0
        %4616 = vst.msk [vmem:[#allocation3 + $0xe8] sm:$0x1] %vm4588, 0.0
        %s4617 = scalar_lea.vmem [#allocation3], 24
        %4618 = vst.msk [vmem:[%s4617 + $0x8] sm:$0xff] %vm4585, %v4577
        %4619 = vst.msk [vmem:[%s4617 + $0x20] sm:$0xff] %vm4585, %v4578
        %4620 = vst.msk [vmem:[%s4617 + $0x38] sm:$0xff] %vm4585, %v4579
        %4621 = vst.msk [vmem:[%s4617 + $0x50] sm:$0xff] %vm4585, %v4580
        %4622 = vst.msk [vmem:[%s4617 + $0x68] sm:$0xff] %vm4585, %v4581
        %4623 = vst.msk [vmem:[%s4617 + $0x80] sm:$0xff] %vm4585, %v4582
        %4624 = vst.msk [vmem:[%s4617 + $0x98] sm:$0xff] %vm4585, %v4583
        %4625 = vst.msk [vmem:[%s4617 + $0xb0] sm:$0xff] %vm4585, %v4584
        %v4626 = vld [vmem:[#allocation3 + $0x7] sm:$0xff]
        %v4627 = vld [vmem:[#allocation3 + $0x1f] sm:$0xff]
        %v4628 = vld [vmem:[#allocation3 + $0x37] sm:$0xff]
        %v4629 = vld [vmem:[#allocation3 + $0x4f] sm:$0xff]
        %v4630 = vld [vmem:[#allocation3 + $0x67] sm:$0xff]
        %v4631 = vld [vmem:[#allocation3 + $0x7f] sm:$0xff]
        %v4632 = vld [vmem:[#allocation3 + $0x97] sm:$0xff]
        %v4633 = vld [vmem:[#allocation3 + $0xaf] sm:$0xff]
        %v4634 = vld [vmem:[%s3] sm:$0xff]
        %v4635 = vld [vmem:[#allocation3 + $0x8] sm:$0xff]
        %v4636 = vld [vmem:[#allocation3 + $0x20] sm:$0xff]
        %v4637 = vld [vmem:[#allocation3 + $0x38] sm:$0xff]
        %v4638 = vld [vmem:[#allocation3 + $0x50] sm:$0xff]
        %v4639 = vld [vmem:[#allocation3 + $0x68] sm:$0xff]
        %v4640 = vld [vmem:[#allocation3 + $0x80] sm:$0xff]
        %v4641 = vld [vmem:[#allocation3 + $0x98] sm:$0xff]
        %v4642 = vld [vmem:[#allocation3 + $0xb0] sm:$0xff]
        %s4643 = scalar_lea.vmem %s3, 8
        %v4644 = vld [vmem:[%s4643] sm:$0xff]
        %v4646 = vsel %vm4585, %v4635, 0
        %v4649 = vsel %vm4585, %v4636, 0
        %v4652 = vsel %vm4585, %v4637, 0
        %v4655 = vsel %vm4585, %v4638, 0
        %v4658 = vsel %vm4585, %v4639, 0
        %v4661 = vsel %vm4585, %v4640, 0
        %v4664 = vsel %vm4585, %v4641, 0
        %v4667 = vsel %vm4585, %v4642, 0
        %4669 = vmatprep.subr.mxu0 0.0
        %4670 = vmatpush1.msra.mxu0 %v4644
        %4671 = vmatprep.subr.mxu0 0.0
        %4672 = vmatpush1.msra.mxu0 0.0
        %4673 = vmatprep.subr.mxu0 0.0
        %4674 = vmatpush1.msra.mxu0 0.0
        %4675 = vmatprep.subr.mxu0 0.0
        %4676 = vmatpush1.msra.mxu0 0.0
        %4677 = vmatprep.subr.mxu0 0.0
        %4678 = vmatpush1.msra.mxu0 0.0
        %4679 = vmatprep.subr.mxu0 0.0
        %4680 = vmatpush1.msra.mxu0 0.0
        %4681 = vmatprep.subr.mxu0 0.0
        %4682 = vmatpush1.msra.mxu0 0.0
        %4683 = vmatprep.subr.mxu0 0.0
        %4684 = vmatpush1.msra.mxu0 0.0
        %4685 = vmatprep.subr.mxu0 0.0
        %4686 = vmatpush1.msra.mxu0 0.0
        %4687 = vmatprep.subr.mxu0 0.0
        %4688 = vmatpush1.msra.mxu0 0.0
        %4689 = vmatprep.subr.mxu0 0.0
        %4690 = vmatpush1.msra.mxu0 0.0
        %4691 = vmatprep.subr.mxu0 0.0
        %4692 = vmatpush1.msra.mxu0 0.0
        %4693 = vmatprep.subr.mxu0 0.0
        %4694 = vmatpush1.msra.mxu0 0.0
        %4695 = vmatprep.subr.mxu0 0.0
        %4696 = vmatpush1.msra.mxu0 0.0
        %4697 = vmatprep.subr.mxu0 0.0
        %4698 = vmatpush1.msra.mxu0 0.0
        %4699 = vmatprep.subr.mxu0 0.0
        %4700 = vmatpush1.msra.mxu0 0.0
        %4701 = vmatprep.subr.mxu0 0.0
        %4702 = vmatpush1.msra.mxu0 0.0
        %4703 = vmatprep.subr.mxu0 0.0
        %4704 = vmatpush1.msra.mxu0 0.0
        %4705 = vmatprep.subr.mxu0 0.0
        %4706 = vmatpush1.msra.mxu0 0.0
        %4707 = vmatprep.subr.mxu0 0.0
        %4708 = vmatpush1.msra.mxu0 0.0
        %4709 = vmatprep.subr.mxu0 0.0
        %4710 = vmatpush1.msra.mxu0 0.0
        %4711 = vmatprep.subr.mxu0 0.0
        %4712 = vmatpush1.msra.mxu0 0.0
        %4713 = vmatprep.subr.mxu0 0.0
        %4714 = vmatpush1.msra.mxu0 0.0
        %4715 = vmatprep.subr.mxu0 0.0
        %4716 = vmatpush1.msra.mxu0 0.0
        %4717 = vmatprep.subr.mxu0 0.0
        %4718 = vmatpush1.msra.mxu0 0.0
        %4719 = vmatprep.subr.mxu0 0.0
        %4720 = vmatpush1.msra.mxu0 0.0
        %4721 = vmatprep.subr.mxu0 0.0
        %4722 = vmatpush1.msra.mxu0 0.0
        %4723 = vmatprep.subr.mxu0 0.0
        %4724 = vmatpush1.msra.mxu0 0.0
        %4725 = vmatprep.subr.mxu0 0.0
        %4726 = vmatpush1.msra.mxu0 0.0
        %4727 = vmatprep.subr.mxu0 0.0
        %4728 = vmatpush1.msra.mxu0 0.0
        %4729 = vmatprep.subr.mxu0 0.0
        %4730 = vmatpush1.msra.mxu0 0.0
        %4731 = vmatprep.subr.mxu0 0.0
        %4732 = vmatpush1.msra.mxu0 0.0
        %4733 = vmatprep.mubr.f32.mxu0 0.0
        %4734 = vmatmul.mubr.f32.gmra.mrb[0].mxu0 %v4646
        %v4735 = vpop.f32.mrb[0].mxu0
        %v4736 = vadd.f32 0.0, %v4735
        %v4737 = vpop.f32.mrb[0].mxu0
        %4738 = vmatprep.mubr.f32.mxu0 0.0
        %4739 = vmatmul.mubr.f32.gmra.mrb[0].mxu0 %v4649
        %v4740 = vpop.f32.mrb[0].mxu0
        %v4741 = vadd.f32 0.0, %v4740
        %v4742 = vpop.f32.mrb[0].mxu0
        %4743 = vmatprep.mubr.f32.mxu0 0.0
        %4744 = vmatmul.mubr.f32.gmra.mrb[0].mxu0 %v4652
        %v4745 = vpop.f32.mrb[0].mxu0
        %v4746 = vadd.f32 0.0, %v4745
        %v4747 = vpop.f32.mrb[0].mxu0
        %4748 = vmatprep.mubr.f32.mxu0 0.0
        %4749 = vmatmul.mubr.f32.gmra.mrb[0].mxu0 %v4655
        %v4750 = vpop.f32.mrb[0].mxu0
        %v4751 = vadd.f32 0.0, %v4750
        %v4752 = vpop.f32.mrb[0].mxu0
        %4753 = vmatprep.mubr.f32.mxu0 0.0
        %4754 = vmatmul.mubr.f32.gmra.mrb[0].mxu0 %v4658
        %v4755 = vpop.f32.mrb[0].mxu0
        %v4756 = vadd.f32 0.0, %v4755
        %v4757 = vpop.f32.mrb[0].mxu0
        %4758 = vmatprep.mubr.f32.mxu0 0.0
        %4759 = vmatmul.mubr.f32.gmra.mrb[0].mxu0 %v4661
        %v4760 = vpop.f32.mrb[0].mxu0
        %v4761 = vadd.f32 0.0, %v4760
        %v4762 = vpop.f32.mrb[0].mxu0
        %4763 = vmatprep.mubr.f32.mxu0 0.0
        %4764 = vmatmul.mubr.f32.gmra.mrb[0].mxu0 %v4664
        %v4765 = vpop.f32.mrb[0].mxu0
        %v4766 = vadd.f32 0.0, %v4765
        %v4767 = vpop.f32.mrb[0].mxu0
        %4768 = vmatprep.mubr.f32.mxu0 0.0
        %4769 = vmatmul.mubr.f32.gmra.mrb[0].mxu0 %v4667
        %v4770 = vpop.f32.mrb[0].mxu0
        %v4771 = vadd.f32 0.0, %v4770
        %v4772 = vpop.f32.mrb[0].mxu0
        %4773 = vdwg.mxu0
        %v4775 = vsel %vm4585, %v4626, 0
        %v4778 = vsel %vm4585, %v4627, 0
        %v4781 = vsel %vm4585, %v4628, 0
        %v4784 = vsel %vm4585, %v4629, 0
        %v4787 = vsel %vm4585, %v4630, 0
        %v4790 = vsel %vm4585, %v4631, 0
        %v4793 = vsel %vm4585, %v4632, 0
        %v4796 = vsel %vm4585, %v4633, 0
        %4798 = vmatprep.subr.mxu0 0.0
        %4799 = vmatpush1.msra.mxu0 %v4634
        %4800 = vmatprep.subr.mxu0 0.0
        %4801 = vmatpush1.msra.mxu0 0.0
        %4802 = vmatprep.subr.mxu0 0.0
        %4803 = vmatpush1.msra.mxu0 0.0
        %4804 = vmatprep.subr.mxu0 0.0
        %4805 = vmatpush1.msra.mxu0 0.0
        %4806 = vmatprep.subr.mxu0 0.0
        %4807 = vmatpush1.msra.mxu0 0.0
        %4808 = vmatprep.subr.mxu0 0.0
        %4809 = vmatpush1.msra.mxu0 0.0
        %4810 = vmatprep.subr.mxu0 0.0
        %4811 = vmatpush1.msra.mxu0 0.0
        %4812 = vmatprep.subr.mxu0 0.0
        %4813 = vmatpush1.msra.mxu0 0.0
        %4814 = vmatprep.subr.mxu0 0.0
        %4815 = vmatpush1.msra.mxu0 0.0
        %4816 = vmatprep.subr.mxu0 0.0
        %4817 = vmatpush1.msra.mxu0 0.0
        %4818 = vmatprep.subr.mxu0 0.0
        %4819 = vmatpush1.msra.mxu0 0.0
        %4820 = vmatprep.subr.mxu0 0.0
        %4821 = vmatpush1.msra.mxu0 0.0
        %4822 = vmatprep.subr.mxu0 0.0
        %4823 = vmatpush1.msra.mxu0 0.0
        %4824 = vmatprep.subr.mxu0 0.0
        %4825 = vmatpush1.msra.mxu0 0.0
        %4826 = vmatprep.subr.mxu0 0.0
        %4827 = vmatpush1.msra.mxu0 0.0
        %4828 = vmatprep.subr.mxu0 0.0
        %4829 = vmatpush1.msra.mxu0 0.0
        %4830 = vmatprep.subr.mxu0 0.0
        %4831 = vmatpush1.msra.mxu0 0.0
        %4832 = vmatprep.subr.mxu0 0.0
        %4833 = vmatpush1.msra.mxu0 0.0
        %4834 = vmatprep.subr.mxu0 0.0
        %4835 = vmatpush1.msra.mxu0 0.0
        %4836 = vmatprep.subr.mxu0 0.0
        %4837 = vmatpush1.msra.mxu0 0.0
        %4838 = vmatprep.subr.mxu0 0.0
        %4839 = vmatpush1.msra.mxu0 0.0
        %4840 = vmatprep.subr.mxu0 0.0
        %4841 = vmatpush1.msra.mxu0 0.0
        %4842 = vmatprep.subr.mxu0 0.0
        %4843 = vmatpush1.msra.mxu0 0.0
        %4844 = vmatprep.subr.mxu0 0.0
        %4845 = vmatpush1.msra.mxu0 0.0
        %4846 = vmatprep.subr.mxu0 0.0
        %4847 = vmatpush1.msra.mxu0 0.0
        %4848 = vmatprep.subr.mxu0 0.0
        %4849 = vmatpush1.msra.mxu0 0.0
        %4850 = vmatprep.subr.mxu0 0.0
        %4851 = vmatpush1.msra.mxu0 0.0
        %4852 = vmatprep.subr.mxu0 0.0
        %4853 = vmatpush1.msra.mxu0 0.0
        %4854 = vmatprep.subr.mxu0 0.0
        %4855 = vmatpush1.msra.mxu0 0.0
        %4856 = vmatprep.subr.mxu0 0.0
        %4857 = vmatpush1.msra.mxu0 0.0
        %4858 = vmatprep.subr.mxu0 0.0
        %4859 = vmatpush1.msra.mxu0 0.0
        %4860 = vmatprep.subr.mxu0 0.0
        %4861 = vmatpush1.msra.mxu0 0.0
        %4862 = vmatprep.mubr.f32.mxu0 0.0
        %4863 = vmatmul.mubr.f32.gmra.mrb[0].mxu0 %v4775
        %v4864 = vpop.f32.mrb[0].mxu0
        %v4865 = vadd.f32 %v4736, %v4864
        %v4866 = vpop.f32.mrb[0].mxu0
        %4867 = vmatprep.mubr.f32.mxu0 0.0
        %4868 = vmatmul.mubr.f32.gmra.mrb[0].mxu0 %v4778
        %v4869 = vpop.f32.mrb[0].mxu0
        %v4870 = vadd.f32 %v4741, %v4869
        %v4871 = vpop.f32.mrb[0].mxu0
        %4872 = vmatprep.mubr.f32.mxu0 0.0
        %4873 = vmatmul.mubr.f32.gmra.mrb[0].mxu0 %v4781
        %v4874 = vpop.f32.mrb[0].mxu0
        %v4875 = vadd.f32 %v4746, %v4874
        %v4876 = vpop.f32.mrb[0].mxu0
        %4877 = vmatprep.mubr.f32.mxu0 0.0
        %4878 = vmatmul.mubr.f32.gmra.mrb[0].mxu0 %v4784
        %v4879 = vpop.f32.mrb[0].mxu0
        %v4880 = vadd.f32 %v4751, %v4879
        %v4881 = vpop.f32.mrb[0].mxu0
        %4882 = vmatprep.mubr.f32.mxu0 0.0
        %4883 = vmatmul.mubr.f32.gmra.mrb[0].mxu0 %v4787
        %v4884 = vpop.f32.mrb[0].mxu0
        %v4885 = vadd.f32 %v4756, %v4884
        %v4886 = vpop.f32.mrb[0].mxu0
        %4887 = vmatprep.mubr.f32.mxu0 0.0
        %4888 = vmatmul.mubr.f32.gmra.mrb[0].mxu0 %v4790
        %v4889 = vpop.f32.mrb[0].mxu0
        %v4890 = vadd.f32 %v4761, %v4889
        %v4891 = vpop.f32.mrb[0].mxu0
        %4892 = vmatprep.mubr.f32.mxu0 0.0
        %4893 = vmatmul.mubr.f32.gmra.mrb[0].mxu0 %v4793
        %v4894 = vpop.f32.mrb[0].mxu0
        %v4895 = vadd.f32 %v4766, %v4894
        %v4896 = vpop.f32.mrb[0].mxu0
        %4897 = vmatprep.mubr.f32.mxu0 0.0
        %4898 = vmatmul.mubr.f32.gmra.mrb[0].mxu0 %v4796
        %v4899 = vpop.f32.mrb[0].mxu0
        %v4900 = vadd.f32 %v4771, %v4899
        %v4901 = vpop.f32.mrb[0].mxu0
        %4902 = vdwg.mxu0
        %v4903 = vld [vmem:[#allocation3 + $0x9] sm:$0xff]
        %v4904 = vld [vmem:[#allocation3 + $0x21] sm:$0xff]
        %v4905 = vld [vmem:[#allocation3 + $0x39] sm:$0xff]
        %v4906 = vld [vmem:[#allocation3 + $0x51] sm:$0xff]
        %v4907 = vld [vmem:[#allocation3 + $0x69] sm:$0xff]
        %v4908 = vld [vmem:[#allocation3 + $0x81] sm:$0xff]
        %v4909 = vld [vmem:[#allocation3 + $0x99] sm:$0xff]
        %v4910 = vld [vmem:[#allocation3 + $0xb1] sm:$0xff]
        %s4911 = scalar_lea.vmem %s3, 16
        %v4912 = vld [vmem:[%s4911] sm:$0xff]
        %v4914 = vsel %vm4585, %v4903, 0
        %v4917 = vsel %vm4585, %v4904, 0
        %v4920 = vsel %vm4585, %v4905, 0
        %v4923 = vsel %vm4585, %v4906, 0
        %v4926 = vsel %vm4585, %v4907, 0
        %v4929 = vsel %vm4585, %v4908, 0
        %v4932 = vsel %vm4585, %v4909, 0
        %v4935 = vsel %vm4585, %v4910, 0
        %4937 = vmatprep.subr.mxu0 0.0
        %4938 = vmatpush1.msra.mxu0 %v4912
        %4939 = vmatprep.subr.mxu0 0.0
        %4940 = vmatpush1.msra.mxu0 0.0
        %4941 = vmatprep.subr.mxu0 0.0
        %4942 = vmatpush1.msra.mxu0 0.0
        %4943 = vmatprep.subr.mxu0 0.0
        %4944 = vmatpush1.msra.mxu0 0.0
        %4945 = vmatprep.subr.mxu0 0.0
        %4946 = vmatpush1.msra.mxu0 0.0
        %4947 = vmatprep.subr.mxu0 0.0
        %4948 = vmatpush1.msra.mxu0 0.0
        %4949 = vmatprep.subr.mxu0 0.0
        %4950 = vmatpush1.msra.mxu0 0.0
        %4951 = vmatprep.subr.mxu0 0.0
        %4952 = vmatpush1.msra.mxu0 0.0
        %4953 = vmatprep.subr.mxu0 0.0
        %4954 = vmatpush1.msra.mxu0 0.0
        %4955 = vmatprep.subr.mxu0 0.0
        %4956 = vmatpush1.msra.mxu0 0.0
        %4957 = vmatprep.subr.mxu0 0.0
        %4958 = vmatpush1.msra.mxu0 0.0
        %4959 = vmatprep.subr.mxu0 0.0
        %4960 = vmatpush1.msra.mxu0 0.0
        %4961 = vmatprep.subr.mxu0 0.0
        %4962 = vmatpush1.msra.mxu0 0.0
        %4963 = vmatprep.subr.mxu0 0.0
        %4964 = vmatpush1.msra.mxu0 0.0
        %4965 = vmatprep.subr.mxu0 0.0
        %4966 = vmatpush1.msra.mxu0 0.0
        %4967 = vmatprep.subr.mxu0 0.0
        %4968 = vmatpush1.msra.mxu0 0.0
        %4969 = vmatprep.subr.mxu0 0.0
        %4970 = vmatpush1.msra.mxu0 0.0
        %4971 = vmatprep.subr.mxu0 0.0
        %4972 = vmatpush1.msra.mxu0 0.0
        %4973 = vmatprep.subr.mxu0 0.0
        %4974 = vmatpush1.msra.mxu0 0.0
        %4975 = vmatprep.subr.mxu0 0.0
        %4976 = vmatpush1.msra.mxu0 0.0
        %4977 = vmatprep.subr.mxu0 0.0
        %4978 = vmatpush1.msra.mxu0 0.0
        %4979 = vmatprep.subr.mxu0 0.0
        %4980 = vmatpush1.msra.mxu0 0.0
        %4981 = vmatprep.subr.mxu0 0.0
        %4982 = vmatpush1.msra.mxu0 0.0
        %4983 = vmatprep.subr.mxu0 0.0
        %4984 = vmatpush1.msra.mxu0 0.0
        %4985 = vmatprep.subr.mxu0 0.0
        %4986 = vmatpush1.msra.mxu0 0.0
        %4987 = vmatprep.subr.mxu0 0.0
        %4988 = vmatpush1.msra.mxu0 0.0
        %4989 = vmatprep.subr.mxu0 0.0
        %4990 = vmatpush1.msra.mxu0 0.0
        %4991 = vmatprep.subr.mxu0 0.0
        %4992 = vmatpush1.msra.mxu0 0.0
        %4993 = vmatprep.subr.mxu0 0.0
        %4994 = vmatpush1.msra.mxu0 0.0
        %4995 = vmatprep.subr.mxu0 0.0
        %4996 = vmatpush1.msra.mxu0 0.0
        %4997 = vmatprep.subr.mxu0 0.0
        %4998 = vmatpush1.msra.mxu0 0.0
        %4999 = vmatprep.subr.mxu0 0.0
        %5000 = vmatpush1.msra.mxu0 0.0
        %5001 = vmatprep.mubr.f32.mxu0 0.0
        %5002 = vmatmul.mubr.f32.gmra.mrb[0].mxu0 %v4914
        %v5003 = vpop.f32.mrb[0].mxu0
        %v5004 = vadd.f32 0.0, %v5003
        %v5005 = vpop.f32.mrb[0].mxu0
        %5006 = vmatprep.mubr.f32.mxu0 0.0
        %5007 = vmatmul.mubr.f32.gmra.mrb[0].mxu0 %v4917
        %v5008 = vpop.f32.mrb[0].mxu0
        %v5009 = vadd.f32 0.0, %v5008
        %v5010 = vpop.f32.mrb[0].mxu0
        %5011 = vmatprep.mubr.f32.mxu0 0.0
        %5012 = vmatmul.mubr.f32.gmra.mrb[0].mxu0 %v4920
        %v5013 = vpop.f32.mrb[0].mxu0
        %v5014 = vadd.f32 0.0, %v5013
        %v5015 = vpop.f32.mrb[0].mxu0
        %5016 = vmatprep.mubr.f32.mxu0 0.0
        %5017 = vmatmul.mubr.f32.gmra.mrb[0].mxu0 %v4923
        %v5018 = vpop.f32.mrb[0].mxu0
        %v5019 = vadd.f32 0.0, %v5018
        %v5020 = vpop.f32.mrb[0].mxu0
        %5021 = vmatprep.mubr.f32.mxu0 0.0
        %5022 = vmatmul.mubr.f32.gmra.mrb[0].mxu0 %v4926
        %v5023 = vpop.f32.mrb[0].mxu0
        %v5024 = vadd.f32 0.0, %v5023
        %v5025 = vpop.f32.mrb[0].mxu0
        %5026 = vmatprep.mubr.f32.mxu0 0.0
        %5027 = vmatmul.mubr.f32.gmra.mrb[0].mxu0 %v4929
        %v5028 = vpop.f32.mrb[0].mxu0
        %v5029 = vadd.f32 0.0, %v5028
        %v5030 = vpop.f32.mrb[0].mxu0
        %5031 = vmatprep.mubr.f32.mxu0 0.0
        %5032 = vmatmul.mubr.f32.gmra.mrb[0].mxu0 %v4932
        %v5033 = vpop.f32.mrb[0].mxu0
        %v5034 = vadd.f32 0.0, %v5033
        %v5035 = vpop.f32.mrb[0].mxu0
        %5036 = vmatprep.mubr.f32.mxu0 0.0
        %5037 = vmatmul.mubr.f32.gmra.mrb[0].mxu0 %v4935
        %v5038 = vpop.f32.mrb[0].mxu0
        %v5039 = vadd.f32 0.0, %v5038
        %v5040 = vpop.f32.mrb[0].mxu0
        %5041 = vdwg.mxu0
        %v5042 = vadd.f32 %v4865, %v5004
        %v5043 = vadd.f32 %v4870, %v5009
        %v5044 = vadd.f32 %v4875, %v5014
        %v5045 = vadd.f32 %v4880, %v5019
        %v5046 = vadd.f32 %v4885, %v5024
        %v5047 = vadd.f32 %v4890, %v5029
        %v5048 = vadd.f32 %v4895, %v5034
        %v5049 = vadd.f32 %v4900, %v5039
        %v5050 = vld [vmem:[%s4617 + $0x7] sm:$0xff]
        %v5051 = vld [vmem:[%s4617 + $0x1f] sm:$0xff]
        %v5052 = vld [vmem:[%s4617 + $0x37] sm:$0xff]
        %v5053 = vld [vmem:[%s4617 + $0x4f] sm:$0xff]
        %v5054 = vld [vmem:[%s4617 + $0x67] sm:$0xff]
        %v5055 = vld [vmem:[%s4617 + $0x7f] sm:$0xff]
        %v5056 = vld [vmem:[%s4617 + $0x97] sm:$0xff]
        %v5057 = vld [vmem:[%s4617 + $0xaf] sm:$0xff]
        %s5058 = scalar_lea.vmem %s3, 24
        %v5059 = vld [vmem:[%s5058] sm:$0xff]
        %v5061 = vsel %vm4585, %v5050, 0
        %v5064 = vsel %vm4585, %v5051, 0
        %v5067 = vsel %vm4585, %v5052, 0
        %v5070 = vsel %vm4585, %v5053, 0
        %v5073 = vsel %vm4585, %v5054, 0
        %v5076 = vsel %vm4585, %v5055, 0
        %v5079 = vsel %vm4585, %v5056, 0
        %v5082 = vsel %vm4585, %v5057, 0
        %5084 = vmatprep.subr.mxu0 0.0
        %5085 = vmatpush1.msra.mxu0 %v5059
        %5086 = vmatprep.subr.mxu0 0.0
        %5087 = vmatpush1.msra.mxu0 0.0
        %5088 = vmatprep.subr.mxu0 0.0
        %5089 = vmatpush1.msra.mxu0 0.0
        %5090 = vmatprep.subr.mxu0 0.0
        %5091 = vmatpush1.msra.mxu0 0.0
        %5092 = vmatprep.subr.mxu0 0.0
        %5093 = vmatpush1.msra.mxu0 0.0
        %5094 = vmatprep.subr.mxu0 0.0
        %5095 = vmatpush1.msra.mxu0 0.0
        %5096 = vmatprep.subr.mxu0 0.0
        %5097 = vmatpush1.msra.mxu0 0.0
        %5098 = vmatprep.subr.mxu0 0.0
        %5099 = vmatpush1.msra.mxu0 0.0
        %5100 = vmatprep.subr.mxu0 0.0
        %5101 = vmatpush1.msra.mxu0 0.0
        %5102 = vmatprep.subr.mxu0 0.0
        %5103 = vmatpush1.msra.mxu0 0.0
        %5104 = vmatprep.subr.mxu0 0.0
        %5105 = vmatpush1.msra.mxu0 0.0
        %5106 = vmatprep.subr.mxu0 0.0
        %5107 = vmatpush1.msra.mxu0 0.0
        %5108 = vmatprep.subr.mxu0 0.0
        %5109 = vmatpush1.msra.mxu0 0.0
        %5110 = vmatprep.subr.mxu0 0.0
        %5111 = vmatpush1.msra.mxu0 0.0
        %5112 = vmatprep.subr.mxu0 0.0
        %5113 = vmatpush1.msra.mxu0 0.0
        %5114 = vmatprep.subr.mxu0 0.0
        %5115 = vmatpush1.msra.mxu0 0.0
        %5116 = vmatprep.subr.mxu0 0.0
        %5117 = vmatpush1.msra.mxu0 0.0
        %5118 = vmatprep.subr.mxu0 0.0
        %5119 = vmatpush1.msra.mxu0 0.0
        %5120 = vmatprep.subr.mxu0 0.0
        %5121 = vmatpush1.msra.mxu0 0.0
        %5122 = vmatprep.subr.mxu0 0.0
        %5123 = vmatpush1.msra.mxu0 0.0
        %5124 = vmatprep.subr.mxu0 0.0
        %5125 = vmatpush1.msra.mxu0 0.0
        %5126 = vmatprep.subr.mxu0 0.0
        %5127 = vmatpush1.msra.mxu0 0.0
        %5128 = vmatprep.subr.mxu0 0.0
        %5129 = vmatpush1.msra.mxu0 0.0
        %5130 = vmatprep.subr.mxu0 0.0
        %5131 = vmatpush1.msra.mxu0 0.0
        %5132 = vmatprep.subr.mxu0 0.0
        %5133 = vmatpush1.msra.mxu0 0.0
        %5134 = vmatprep.subr.mxu0 0.0
        %5135 = vmatpush1.msra.mxu0 0.0
        %5136 = vmatprep.subr.mxu0 0.0
        %5137 = vmatpush1.msra.mxu0 0.0
        %5138 = vmatprep.subr.mxu0 0.0
        %5139 = vmatpush1.msra.mxu0 0.0
        %5140 = vmatprep.subr.mxu0 0.0
        %5141 = vmatpush1.msra.mxu0 0.0
        %5142 = vmatprep.subr.mxu0 0.0
        %5143 = vmatpush1.msra.mxu0 0.0
        %5144 = vmatprep.subr.mxu0 0.0
        %5145 = vmatpush1.msra.mxu0 0.0
        %5146 = vmatprep.subr.mxu0 0.0
        %5147 = vmatpush1.msra.mxu0 0.0
        %5148 = vmatprep.mubr.f32.mxu0 0.0
        %5149 = vmatmul.mubr.f32.gmra.mrb[0].mxu0 %v5061
        %v5150 = vpop.f32.mrb[0].mxu0
        %v5151 = vadd.f32 0.0, %v5150
        %v5152 = vpop.f32.mrb[0].mxu0
        %5153 = vmatprep.mubr.f32.mxu0 0.0
        %5154 = vmatmul.mubr.f32.gmra.mrb[0].mxu0 %v5064
        %v5155 = vpop.f32.mrb[0].mxu0
        %v5156 = vadd.f32 0.0, %v5155
        %v5157 = vpop.f32.mrb[0].mxu0
        %5158 = vmatprep.mubr.f32.mxu0 0.0
        %5159 = vmatmul.mubr.f32.gmra.mrb[0].mxu0 %v5067
        %v5160 = vpop.f32.mrb[0].mxu0
        %v5161 = vadd.f32 0.0, %v5160
        %v5162 = vpop.f32.mrb[0].mxu0
        %5163 = vmatprep.mubr.f32.mxu0 0.0
        %5164 = vmatmul.mubr.f32.gmra.mrb[0].mxu0 %v5070
        %v5165 = vpop.f32.mrb[0].mxu0
        %v5166 = vadd.f32 0.0, %v5165
        %v5167 = vpop.f32.mrb[0].mxu0
        %5168 = vmatprep.mubr.f32.mxu0 0.0
        %5169 = vmatmul.mubr.f32.gmra.mrb[0].mxu0 %v5073
        %v5170 = vpop.f32.mrb[0].mxu0
        %v5171 = vadd.f32 0.0, %v5170
        %v5172 = vpop.f32.mrb[0].mxu0
        %5173 = vmatprep.mubr.f32.mxu0 0.0
        %5174 = vmatmul.mubr.f32.gmra.mrb[0].mxu0 %v5076
        %v5175 = vpop.f32.mrb[0].mxu0
        %v5176 = vadd.f32 0.0, %v5175
        %v5177 = vpop.f32.mrb[0].mxu0
        %5178 = vmatprep.mubr.f32.mxu0 0.0
        %5179 = vmatmul.mubr.f32.gmra.mrb[0].mxu0 %v5079
        %v5180 = vpop.f32.mrb[0].mxu0
        %v5181 = vadd.f32 0.0, %v5180
        %v5182 = vpop.f32.mrb[0].mxu0
        %5183 = vmatprep.mubr.f32.mxu0 0.0
        %5184 = vmatmul.mubr.f32.gmra.mrb[0].mxu0 %v5082
        %v5185 = vpop.f32.mrb[0].mxu0
        %v5186 = vadd.f32 0.0, %v5185
        %v5187 = vpop.f32.mrb[0].mxu0
        %5188 = vdwg.mxu0
        %v5189 = vadd.f32 %v5042, %v5151
        %v5190 = vadd.f32 %v5043, %v5156
        %v5191 = vadd.f32 %v5044, %v5161
        %v5192 = vadd.f32 %v5045, %v5166
        %v5193 = vadd.f32 %v5046, %v5171
        %v5194 = vadd.f32 %v5047, %v5176
        %v5195 = vadd.f32 %v5048, %v5181
        %v5196 = vadd.f32 %v5049, %v5186
        %v5197 = vld [vmem:[%s4617 + $0x8] sm:$0xff]
        %v5198 = vld [vmem:[%s4617 + $0x20] sm:$0xff]
        %v5199 = vld [vmem:[%s4617 + $0x38] sm:$0xff]
        %v5200 = vld [vmem:[%s4617 + $0x50] sm:$0xff]
        %v5201 = vld [vmem:[%s4617 + $0x68] sm:$0xff]
        %v5202 = vld [vmem:[%s4617 + $0x80] sm:$0xff]
        %v5203 = vld [vmem:[%s4617 + $0x98] sm:$0xff]
        %v5204 = vld [vmem:[%s4617 + $0xb0] sm:$0xff]
        %s5205 = scalar_lea.vmem %s3, 32
        %v5206 = vld [vmem:[%s5205] sm:$0xff]
        %v5208 = vsel %vm4585, %v5197, 0
        %v5211 = vsel %vm4585, %v5198, 0
        %v5214 = vsel %vm4585, %v5199, 0
        %v5217 = vsel %vm4585, %v5200, 0
        %v5220 = vsel %vm4585, %v5201, 0
        %v5223 = vsel %vm4585, %v5202, 0
        %v5226 = vsel %vm4585, %v5203, 0
        %v5229 = vsel %vm4585, %v5204, 0
        %5231 = vmatprep.subr.mxu0 0.0
        %5232 = vmatpush1.msra.mxu0 %v5206
        %5233 = vmatprep.subr.mxu0 0.0
        %5234 = vmatpush1.msra.mxu0 0.0
        %5235 = vmatprep.subr.mxu0 0.0
        %5236 = vmatpush1.msra.mxu0 0.0
        %5237 = vmatprep.subr.mxu0 0.0
        %5238 = vmatpush1.msra.mxu0 0.0
        %5239 = vmatprep.subr.mxu0 0.0
        %5240 = vmatpush1.msra.mxu0 0.0
        %5241 = vmatprep.subr.mxu0 0.0
        %5242 = vmatpush1.msra.mxu0 0.0
        %5243 = vmatprep.subr.mxu0 0.0
        %5244 = vmatpush1.msra.mxu0 0.0
        %5245 = vmatprep.subr.mxu0 0.0
        %5246 = vmatpush1.msra.mxu0 0.0
        %5247 = vmatprep.subr.mxu0 0.0
        %5248 = vmatpush1.msra.mxu0 0.0
        %5249 = vmatprep.subr.mxu0 0.0
        %5250 = vmatpush1.msra.mxu0 0.0
        %5251 = vmatprep.subr.mxu0 0.0
        %5252 = vmatpush1.msra.mxu0 0.0
        %5253 = vmatprep.subr.mxu0 0.0
        %5254 = vmatpush1.msra.mxu0 0.0
        %5255 = vmatprep.subr.mxu0 0.0
        %5256 = vmatpush1.msra.mxu0 0.0
        %5257 = vmatprep.subr.mxu0 0.0
        %5258 = vmatpush1.msra.mxu0 0.0
        %5259 = vmatprep.subr.mxu0 0.0
        %5260 = vmatpush1.msra.mxu0 0.0
        %5261 = vmatprep.subr.mxu0 0.0
        %5262 = vmatpush1.msra.mxu0 0.0
        %5263 = vmatprep.subr.mxu0 0.0
        %5264 = vmatpush1.msra.mxu0 0.0
        %5265 = vmatprep.subr.mxu0 0.0
        %5266 = vmatpush1.msra.mxu0 0.0
        %5267 = vmatprep.subr.mxu0 0.0
        %5268 = vmatpush1.msra.mxu0 0.0
        %5269 = vmatprep.subr.mxu0 0.0
        %5270 = vmatpush1.msra.mxu0 0.0
        %5271 = vmatprep.subr.mxu0 0.0
        %5272 = vmatpush1.msra.mxu0 0.0
        %5273 = vmatprep.subr.mxu0 0.0
        %5274 = vmatpush1.msra.mxu0 0.0
        %5275 = vmatprep.subr.mxu0 0.0
        %5276 = vmatpush1.msra.mxu0 0.0
        %5277 = vmatprep.subr.mxu0 0.0
        %5278 = vmatpush1.msra.mxu0 0.0
        %5279 = vmatprep.subr.mxu0 0.0
        %5280 = vmatpush1.msra.mxu0 0.0
        %5281 = vmatprep.subr.mxu0 0.0
        %5282 = vmatpush1.msra.mxu0 0.0
        %5283 = vmatprep.subr.mxu0 0.0
        %5284 = vmatpush1.msra.mxu0 0.0
        %5285 = vmatprep.subr.mxu0 0.0
        %5286 = vmatpush1.msra.mxu0 0.0
        %5287 = vmatprep.subr.mxu0 0.0
        %5288 = vmatpush1.msra.mxu0 0.0
        %5289 = vmatprep.subr.mxu0 0.0
        %5290 = vmatpush1.msra.mxu0 0.0
        %5291 = vmatprep.subr.mxu0 0.0
        %5292 = vmatpush1.msra.mxu0 0.0
        %5293 = vmatprep.subr.mxu0 0.0
        %5294 = vmatpush1.msra.mxu0 0.0
        %5295 = vmatprep.mubr.f32.mxu0 0.0
        %5296 = vmatmul.mubr.f32.gmra.mrb[0].mxu0 %v5208
        %v5297 = vpop.f32.mrb[0].mxu0
        %v5298 = vadd.f32 0.0, %v5297
        %v5299 = vpop.f32.mrb[0].mxu0
        %5300 = vmatprep.mubr.f32.mxu0 0.0
        %5301 = vmatmul.mubr.f32.gmra.mrb[0].mxu0 %v5211
        %v5302 = vpop.f32.mrb[0].mxu0
        %v5303 = vadd.f32 0.0, %v5302
        %v5304 = vpop.f32.mrb[0].mxu0
        %5305 = vmatprep.mubr.f32.mxu0 0.0
        %5306 = vmatmul.mubr.f32.gmra.mrb[0].mxu0 %v5214
        %v5307 = vpop.f32.mrb[0].mxu0
        %v5308 = vadd.f32 0.0, %v5307
        %v5309 = vpop.f32.mrb[0].mxu0
        %5310 = vmatprep.mubr.f32.mxu0 0.0
        %5311 = vmatmul.mubr.f32.gmra.mrb[0].mxu0 %v5217
        %v5312 = vpop.f32.mrb[0].mxu0
        %v5313 = vadd.f32 0.0, %v5312
        %v5314 = vpop.f32.mrb[0].mxu0
        %5315 = vmatprep.mubr.f32.mxu0 0.0
        %5316 = vmatmul.mubr.f32.gmra.mrb[0].mxu0 %v5220
        %v5317 = vpop.f32.mrb[0].mxu0
        %v5318 = vadd.f32 0.0, %v5317
        %v5319 = vpop.f32.mrb[0].mxu0
        %5320 = vmatprep.mubr.f32.mxu0 0.0
        %5321 = vmatmul.mubr.f32.gmra.mrb[0].mxu0 %v5223
        %v5322 = vpop.f32.mrb[0].mxu0
        %v5323 = vadd.f32 0.0, %v5322
        %v5324 = vpop.f32.mrb[0].mxu0
        %5325 = vmatprep.mubr.f32.mxu0 0.0
        %5326 = vmatmul.mubr.f32.gmra.mrb[0].mxu0 %v5226
        %v5327 = vpop.f32.mrb[0].mxu0
        %v5328 = vadd.f32 0.0, %v5327
        %v5329 = vpop.f32.mrb[0].mxu0
        %5330 = vmatprep.mubr.f32.mxu0 0.0
        %5331 = vmatmul.mubr.f32.gmra.mrb[0].mxu0 %v5229
        %v5332 = vpop.f32.mrb[0].mxu0
        %v5333 = vadd.f32 0.0, %v5332
        %v5334 = vpop.f32.mrb[0].mxu0
        %5335 = vdwg.mxu0
        %v5336 = vadd.f32 %v5189, %v5298
        %v5337 = vadd.f32 %v5190, %v5303
        %v5338 = vadd.f32 %v5191, %v5308
        %v5339 = vadd.f32 %v5192, %v5313
        %v5340 = vadd.f32 %v5193, %v5318
        %v5341 = vadd.f32 %v5194, %v5323
        %v5342 = vadd.f32 %v5195, %v5328
        %v5343 = vadd.f32 %v5196, %v5333
        %v5344 = vld [vmem:[%s4617 + $0x9] sm:$0xff]
        %v5345 = vld [vmem:[%s4617 + $0x21] sm:$0xff]
        %v5346 = vld [vmem:[%s4617 + $0x39] sm:$0xff]
        %v5347 = vld [vmem:[%s4617 + $0x51] sm:$0xff]
        %v5348 = vld [vmem:[%s4617 + $0x69] sm:$0xff]
        %v5349 = vld [vmem:[%s4617 + $0x81] sm:$0xff]
        %v5350 = vld [vmem:[%s4617 + $0x99] sm:$0xff]
        %v5351 = vld [vmem:[%s4617 + $0xb1] sm:$0xff]
        %s5352 = scalar_lea.vmem %s3, 40
        %v5353 = vld [vmem:[%s5352] sm:$0xff]
        %v5355 = vsel %vm4585, %v5344, 0
        %v5358 = vsel %vm4585, %v5345, 0
        %v5361 = vsel %vm4585, %v5346, 0
        %v5364 = vsel %vm4585, %v5347, 0
        %v5367 = vsel %vm4585, %v5348, 0
        %v5370 = vsel %vm4585, %v5349, 0
        %v5373 = vsel %vm4585, %v5350, 0
        %v5376 = vsel %vm4585, %v5351, 0
        %5378 = vmatprep.subr.mxu0 0.0
        %5379 = vmatpush1.msra.mxu0 %v5353
        %5380 = vmatprep.subr.mxu0 0.0
        %5381 = vmatpush1.msra.mxu0 0.0
        %5382 = vmatprep.subr.mxu0 0.0
        %5383 = vmatpush1.msra.mxu0 0.0
        %5384 = vmatprep.subr.mxu0 0.0
        %5385 = vmatpush1.msra.mxu0 0.0
        %5386 = vmatprep.subr.mxu0 0.0
        %5387 = vmatpush1.msra.mxu0 0.0
        %5388 = vmatprep.subr.mxu0 0.0
        %5389 = vmatpush1.msra.mxu0 0.0
        %5390 = vmatprep.subr.mxu0 0.0
        %5391 = vmatpush1.msra.mxu0 0.0
        %5392 = vmatprep.subr.mxu0 0.0
        %5393 = vmatpush1.msra.mxu0 0.0
        %5394 = vmatprep.subr.mxu0 0.0
        %5395 = vmatpush1.msra.mxu0 0.0
        %5396 = vmatprep.subr.mxu0 0.0
        %5397 = vmatpush1.msra.mxu0 0.0
        %5398 = vmatprep.subr.mxu0 0.0
        %5399 = vmatpush1.msra.mxu0 0.0
        %5400 = vmatprep.subr.mxu0 0.0
        %5401 = vmatpush1.msra.mxu0 0.0
        %5402 = vmatprep.subr.mxu0 0.0
        %5403 = vmatpush1.msra.mxu0 0.0
        %5404 = vmatprep.subr.mxu0 0.0
        %5405 = vmatpush1.msra.mxu0 0.0
        %5406 = vmatprep.subr.mxu0 0.0
        %5407 = vmatpush1.msra.mxu0 0.0
        %5408 = vmatprep.subr.mxu0 0.0
        %5409 = vmatpush1.msra.mxu0 0.0
        %5410 = vmatprep.subr.mxu0 0.0
        %5411 = vmatpush1.msra.mxu0 0.0
        %5412 = vmatprep.subr.mxu0 0.0
        %5413 = vmatpush1.msra.mxu0 0.0
        %5414 = vmatprep.subr.mxu0 0.0
        %5415 = vmatpush1.msra.mxu0 0.0
        %5416 = vmatprep.subr.mxu0 0.0
        %5417 = vmatpush1.msra.mxu0 0.0
        %5418 = vmatprep.subr.mxu0 0.0
        %5419 = vmatpush1.msra.mxu0 0.0
        %5420 = vmatprep.subr.mxu0 0.0
        %5421 = vmatpush1.msra.mxu0 0.0
        %5422 = vmatprep.subr.mxu0 0.0
        %5423 = vmatpush1.msra.mxu0 0.0
        %5424 = vmatprep.subr.mxu0 0.0
        %5425 = vmatpush1.msra.mxu0 0.0
        %5426 = vmatprep.subr.mxu0 0.0
        %5427 = vmatpush1.msra.mxu0 0.0
        %5428 = vmatprep.subr.mxu0 0.0
        %5429 = vmatpush1.msra.mxu0 0.0
        %5430 = vmatprep.subr.mxu0 0.0
        %5431 = vmatpush1.msra.mxu0 0.0
        %5432 = vmatprep.subr.mxu0 0.0
        %5433 = vmatpush1.msra.mxu0 0.0
        %5434 = vmatprep.subr.mxu0 0.0
        %5435 = vmatpush1.msra.mxu0 0.0
        %5436 = vmatprep.subr.mxu0 0.0
        %5437 = vmatpush1.msra.mxu0 0.0
        %5438 = vmatprep.subr.mxu0 0.0
        %5439 = vmatpush1.msra.mxu0 0.0
        %5440 = vmatprep.subr.mxu0 0.0
        %5441 = vmatpush1.msra.mxu0 0.0
        %5442 = vmatprep.mubr.f32.mxu0 0.0
        %5443 = vmatmul.mubr.f32.gmra.mrb[0].mxu0 %v5355
        %v5444 = vpop.f32.mrb[0].mxu0
        %v5445 = vadd.f32 0.0, %v5444
        %v5446 = vpop.f32.mrb[0].mxu0
        %5447 = vmatprep.mubr.f32.mxu0 0.0
        %5448 = vmatmul.mubr.f32.gmra.mrb[0].mxu0 %v5358
        %v5449 = vpop.f32.mrb[0].mxu0
        %v5450 = vadd.f32 0.0, %v5449
        %v5451 = vpop.f32.mrb[0].mxu0
        %5452 = vmatprep.mubr.f32.mxu0 0.0
        %5453 = vmatmul.mubr.f32.gmra.mrb[0].mxu0 %v5361
        %v5454 = vpop.f32.mrb[0].mxu0
        %v5455 = vadd.f32 0.0, %v5454
        %v5456 = vpop.f32.mrb[0].mxu0
        %5457 = vmatprep.mubr.f32.mxu0 0.0
        %5458 = vmatmul.mubr.f32.gmra.mrb[0].mxu0 %v5364
        %v5459 = vpop.f32.mrb[0].mxu0
        %v5460 = vadd.f32 0.0, %v5459
        %v5461 = vpop.f32.mrb[0].mxu0
        %5462 = vmatprep.mubr.f32.mxu0 0.0
        %5463 = vmatmul.mubr.f32.gmra.mrb[0].mxu0 %v5367
        %v5464 = vpop.f32.mrb[0].mxu0
        %v5465 = vadd.f32 0.0, %v5464
        %v5466 = vpop.f32.mrb[0].mxu0
        %5467 = vmatprep.mubr.f32.mxu0 0.0
        %5468 = vmatmul.mubr.f32.gmra.mrb[0].mxu0 %v5370
        %v5469 = vpop.f32.mrb[0].mxu0
        %v5470 = vadd.f32 0.0, %v5469
        %v5471 = vpop.f32.mrb[0].mxu0
        %5472 = vmatprep.mubr.f32.mxu0 0.0
        %5473 = vmatmul.mubr.f32.gmra.mrb[0].mxu0 %v5373
        %v5474 = vpop.f32.mrb[0].mxu0
        %v5475 = vadd.f32 0.0, %v5474
        %v5476 = vpop.f32.mrb[0].mxu0
        %5477 = vmatprep.mubr.f32.mxu0 0.0
        %5478 = vmatmul.mubr.f32.gmra.mrb[0].mxu0 %v5376
        %v5479 = vpop.f32.mrb[0].mxu0
        %v5480 = vadd.f32 0.0, %v5479
        %v5481 = vpop.f32.mrb[0].mxu0
        %5482 = vdwg.mxu0
        %v5483 = vadd.f32 %v5336, %v5445
        %v5484 = vadd.f32 %v5337, %v5450
        %v5485 = vadd.f32 %v5338, %v5455
        %v5486 = vadd.f32 %v5339, %v5460
        %v5487 = vadd.f32 %v5340, %v5465
        %v5488 = vadd.f32 %v5341, %v5470
        %v5489 = vadd.f32 %v5342, %v5475
        %v5490 = vadd.f32 %v5343, %v5480
        %s5491 = scalar_lea.vmem [#allocation3], 48
        %v5492 = vld [vmem:[%s5491 + $0x7] sm:$0xff]
        %v5493 = vld [vmem:[%s5491 + $0x1f] sm:$0xff]
        %v5494 = vld [vmem:[%s5491 + $0x37] sm:$0xff]
        %v5495 = vld [vmem:[%s5491 + $0x4f] sm:$0xff]
        %v5496 = vld [vmem:[%s5491 + $0x67] sm:$0xff]
        %v5497 = vld [vmem:[%s5491 + $0x7f] sm:$0xff]
        %v5498 = vld [vmem:[%s5491 + $0x97] sm:$0xff]
        %v5499 = vld [vmem:[%s5491 + $0xaf] sm:$0xff]
        %s5500 = scalar_lea.vmem %s3, 48
        %v5501 = vld [vmem:[%s5500] sm:$0xff]
        %v5503 = vsel %vm4585, %v5492, 0
        %v5506 = vsel %vm4585, %v5493, 0
        %v5509 = vsel %vm4585, %v5494, 0
        %v5512 = vsel %vm4585, %v5495, 0
        %v5515 = vsel %vm4585, %v5496, 0
        %v5518 = vsel %vm4585, %v5497, 0
        %v5521 = vsel %vm4585, %v5498, 0
        %v5524 = vsel %vm4585, %v5499, 0
        %5526 = vmatprep.subr.mxu0 0.0
        %5527 = vmatpush1.msra.mxu0 %v5501
        %5528 = vmatprep.subr.mxu0 0.0
        %5529 = vmatpush1.msra.mxu0 0.0
        %5530 = vmatprep.subr.mxu0 0.0
        %5531 = vmatpush1.msra.mxu0 0.0
        %5532 = vmatprep.subr.mxu0 0.0
        %5533 = vmatpush1.msra.mxu0 0.0
        %5534 = vmatprep.subr.mxu0 0.0
        %5535 = vmatpush1.msra.mxu0 0.0
        %5536 = vmatprep.subr.mxu0 0.0
        %5537 = vmatpush1.msra.mxu0 0.0
        %5538 = vmatprep.subr.mxu0 0.0
        %5539 = vmatpush1.msra.mxu0 0.0
        %5540 = vmatprep.subr.mxu0 0.0
        %5541 = vmatpush1.msra.mxu0 0.0
        %5542 = vmatprep.subr.mxu0 0.0
        %5543 = vmatpush1.msra.mxu0 0.0
        %5544 = vmatprep.subr.mxu0 0.0
        %5545 = vmatpush1.msra.mxu0 0.0
        %5546 = vmatprep.subr.mxu0 0.0
        %5547 = vmatpush1.msra.mxu0 0.0
        %5548 = vmatprep.subr.mxu0 0.0
        %5549 = vmatpush1.msra.mxu0 0.0
        %5550 = vmatprep.subr.mxu0 0.0
        %5551 = vmatpush1.msra.mxu0 0.0
        %5552 = vmatprep.subr.mxu0 0.0
        %5553 = vmatpush1.msra.mxu0 0.0
        %5554 = vmatprep.subr.mxu0 0.0
        %5555 = vmatpush1.msra.mxu0 0.0
        %5556 = vmatprep.subr.mxu0 0.0
        %5557 = vmatpush1.msra.mxu0 0.0
        %5558 = vmatprep.subr.mxu0 0.0
        %5559 = vmatpush1.msra.mxu0 0.0
        %5560 = vmatprep.subr.mxu0 0.0
        %5561 = vmatpush1.msra.mxu0 0.0
        %5562 = vmatprep.subr.mxu0 0.0
        %5563 = vmatpush1.msra.mxu0 0.0
        %5564 = vmatprep.subr.mxu0 0.0
        %5565 = vmatpush1.msra.mxu0 0.0
        %5566 = vmatprep.subr.mxu0 0.0
        %5567 = vmatpush1.msra.mxu0 0.0
        %5568 = vmatprep.subr.mxu0 0.0
        %5569 = vmatpush1.msra.mxu0 0.0
        %5570 = vmatprep.subr.mxu0 0.0
        %5571 = vmatpush1.msra.mxu0 0.0
        %5572 = vmatprep.subr.mxu0 0.0
        %5573 = vmatpush1.msra.mxu0 0.0
        %5574 = vmatprep.subr.mxu0 0.0
        %5575 = vmatpush1.msra.mxu0 0.0
        %5576 = vmatprep.subr.mxu0 0.0
        %5577 = vmatpush1.msra.mxu0 0.0
        %5578 = vmatprep.subr.mxu0 0.0
        %5579 = vmatpush1.msra.mxu0 0.0
        %5580 = vmatprep.subr.mxu0 0.0
        %5581 = vmatpush1.msra.mxu0 0.0
        %5582 = vmatprep.subr.mxu0 0.0
        %5583 = vmatpush1.msra.mxu0 0.0
        %5584 = vmatprep.subr.mxu0 0.0
        %5585 = vmatpush1.msra.mxu0 0.0
        %5586 = vmatprep.subr.mxu0 0.0
        %5587 = vmatpush1.msra.mxu0 0.0
        %5588 = vmatprep.subr.mxu0 0.0
        %5589 = vmatpush1.msra.mxu0 0.0
        %5590 = vmatprep.mubr.f32.mxu0 0.0
        %5591 = vmatmul.mubr.f32.gmra.mrb[0].mxu0 %v5503
        %v5592 = vpop.f32.mrb[0].mxu0
        %v5593 = vadd.f32 0.0, %v5592
        %v5594 = vpop.f32.mrb[0].mxu0
        %5595 = vmatprep.mubr.f32.mxu0 0.0
        %5596 = vmatmul.mubr.f32.gmra.mrb[0].mxu0 %v5506
        %v5597 = vpop.f32.mrb[0].mxu0
        %v5598 = vadd.f32 0.0, %v5597
        %v5599 = vpop.f32.mrb[0].mxu0
        %5600 = vmatprep.mubr.f32.mxu0 0.0
        %5601 = vmatmul.mubr.f32.gmra.mrb[0].mxu0 %v5509
        %v5602 = vpop.f32.mrb[0].mxu0
        %v5603 = vadd.f32 0.0, %v5602
        %v5604 = vpop.f32.mrb[0].mxu0
        %5605 = vmatprep.mubr.f32.mxu0 0.0
        %5606 = vmatmul.mubr.f32.gmra.mrb[0].mxu0 %v5512
        %v5607 = vpop.f32.mrb[0].mxu0
        %v5608 = vadd.f32 0.0, %v5607
        %v5609 = vpop.f32.mrb[0].mxu0
        %5610 = vmatprep.mubr.f32.mxu0 0.0
        %5611 = vmatmul.mubr.f32.gmra.mrb[0].mxu0 %v5515
        %v5612 = vpop.f32.mrb[0].mxu0
        %v5613 = vadd.f32 0.0, %v5612
        %v5614 = vpop.f32.mrb[0].mxu0
        %5615 = vmatprep.mubr.f32.mxu0 0.0
        %5616 = vmatmul.mubr.f32.gmra.mrb[0].mxu0 %v5518
        %v5617 = vpop.f32.mrb[0].mxu0
        %v5618 = vadd.f32 0.0, %v5617
        %v5619 = vpop.f32.mrb[0].mxu0
        %5620 = vmatprep.mubr.f32.mxu0 0.0
        %5621 = vmatmul.mubr.f32.gmra.mrb[0].mxu0 %v5521
        %v5622 = vpop.f32.mrb[0].mxu0
        %v5623 = vadd.f32 0.0, %v5622
        %v5624 = vpop.f32.mrb[0].mxu0
        %5625 = vmatprep.mubr.f32.mxu0 0.0
        %5626 = vmatmul.mubr.f32.gmra.mrb[0].mxu0 %v5524
        %v5627 = vpop.f32.mrb[0].mxu0
        %v5628 = vadd.f32 0.0, %v5627
        %v5629 = vpop.f32.mrb[0].mxu0
        %5630 = vdwg.mxu0
        %v5631 = vadd.f32 %v5483, %v5593
        %v5632 = vadd.f32 %v5484, %v5598
        %v5633 = vadd.f32 %v5485, %v5603
        %v5634 = vadd.f32 %v5486, %v5608
        %v5635 = vadd.f32 %v5487, %v5613
        %v5636 = vadd.f32 %v5488, %v5618
        %v5637 = vadd.f32 %v5489, %v5623
        %v5638 = vadd.f32 %v5490, %v5628
        %v5639 = vld [vmem:[%s5491 + $0x8] sm:$0xff]
        %v5640 = vld [vmem:[%s5491 + $0x20] sm:$0xff]
        %v5641 = vld [vmem:[%s5491 + $0x38] sm:$0xff]
        %v5642 = vld [vmem:[%s5491 + $0x50] sm:$0xff]
        %v5643 = vld [vmem:[%s5491 + $0x68] sm:$0xff]
        %v5644 = vld [vmem:[%s5491 + $0x80] sm:$0xff]
        %v5645 = vld [vmem:[%s5491 + $0x98] sm:$0xff]
        %v5646 = vld [vmem:[%s5491 + $0xb0] sm:$0xff]
        %s5647 = scalar_lea.vmem %s3, 56
        %v5648 = vld [vmem:[%s5647] sm:$0xff]
        %v5650 = vsel %vm4585, %v5639, 0
        %v5653 = vsel %vm4585, %v5640, 0
        %v5656 = vsel %vm4585, %v5641, 0
        %v5659 = vsel %vm4585, %v5642, 0
        %v5662 = vsel %vm4585, %v5643, 0
        %v5665 = vsel %vm4585, %v5644, 0
        %v5668 = vsel %vm4585, %v5645, 0
        %v5671 = vsel %vm4585, %v5646, 0
        %5673 = vmatprep.subr.mxu0 0.0
        %5674 = vmatpush1.msra.mxu0 %v5648
        %5675 = vmatprep.subr.mxu0 0.0
        %5676 = vmatpush1.msra.mxu0 0.0
        %5677 = vmatprep.subr.mxu0 0.0
        %5678 = vmatpush1.msra.mxu0 0.0
        %5679 = vmatprep.subr.mxu0 0.0
        %5680 = vmatpush1.msra.mxu0 0.0
        %5681 = vmatprep.subr.mxu0 0.0
        %5682 = vmatpush1.msra.mxu0 0.0
        %5683 = vmatprep.subr.mxu0 0.0
        %5684 = vmatpush1.msra.mxu0 0.0
        %5685 = vmatprep.subr.mxu0 0.0
        %5686 = vmatpush1.msra.mxu0 0.0
        %5687 = vmatprep.subr.mxu0 0.0
        %5688 = vmatpush1.msra.mxu0 0.0
        %5689 = vmatprep.subr.mxu0 0.0
        %5690 = vmatpush1.msra.mxu0 0.0
        %5691 = vmatprep.subr.mxu0 0.0
        %5692 = vmatpush1.msra.mxu0 0.0
        %5693 = vmatprep.subr.mxu0 0.0
        %5694 = vmatpush1.msra.mxu0 0.0
        %5695 = vmatprep.subr.mxu0 0.0
        %5696 = vmatpush1.msra.mxu0 0.0
        %5697 = vmatprep.subr.mxu0 0.0
        %5698 = vmatpush1.msra.mxu0 0.0
        %5699 = vmatprep.subr.mxu0 0.0
        %5700 = vmatpush1.msra.mxu0 0.0
        %5701 = vmatprep.subr.mxu0 0.0
        %5702 = vmatpush1.msra.mxu0 0.0
        %5703 = vmatprep.subr.mxu0 0.0
        %5704 = vmatpush1.msra.mxu0 0.0
        %5705 = vmatprep.subr.mxu0 0.0
        %5706 = vmatpush1.msra.mxu0 0.0
        %5707 = vmatprep.subr.mxu0 0.0
        %5708 = vmatpush1.msra.mxu0 0.0
        %5709 = vmatprep.subr.mxu0 0.0
        %5710 = vmatpush1.msra.mxu0 0.0
        %5711 = vmatprep.subr.mxu0 0.0
        %5712 = vmatpush1.msra.mxu0 0.0
        %5713 = vmatprep.subr.mxu0 0.0
        %5714 = vmatpush1.msra.mxu0 0.0
        %5715 = vmatprep.subr.mxu0 0.0
        %5716 = vmatpush1.msra.mxu0 0.0
        %5717 = vmatprep.subr.mxu0 0.0
        %5718 = vmatpush1.msra.mxu0 0.0
        %5719 = vmatprep.subr.mxu0 0.0
        %5720 = vmatpush1.msra.mxu0 0.0
        %5721 = vmatprep.subr.mxu0 0.0
        %5722 = vmatpush1.msra.mxu0 0.0
        %5723 = vmatprep.subr.mxu0 0.0
        %5724 = vmatpush1.msra.mxu0 0.0
        %5725 = vmatprep.subr.mxu0 0.0
        %5726 = vmatpush1.msra.mxu0 0.0
        %5727 = vmatprep.subr.mxu0 0.0
        %5728 = vmatpush1.msra.mxu0 0.0
        %5729 = vmatprep.subr.mxu0 0.0
        %5730 = vmatpush1.msra.mxu0 0.0
        %5731 = vmatprep.subr.mxu0 0.0
        %5732 = vmatpush1.msra.mxu0 0.0
        %5733 = vmatprep.subr.mxu0 0.0
        %5734 = vmatpush1.msra.mxu0 0.0
        %5735 = vmatprep.subr.mxu0 0.0
        %5736 = vmatpush1.msra.mxu0 0.0
        %5737 = vmatprep.mubr.f32.mxu0 0.0
        %5738 = vmatmul.mubr.f32.gmra.mrb[0].mxu0 %v5650
        %v5739 = vpop.f32.mrb[0].mxu0
        %v5740 = vadd.f32 0.0, %v5739
        %v5741 = vpop.f32.mrb[0].mxu0
        %5742 = vmatprep.mubr.f32.mxu0 0.0
        %5743 = vmatmul.mubr.f32.gmra.mrb[0].mxu0 %v5653
        %v5744 = vpop.f32.mrb[0].mxu0
        %v5745 = vadd.f32 0.0, %v5744
        %v5746 = vpop.f32.mrb[0].mxu0
        %5747 = vmatprep.mubr.f32.mxu0 0.0
        %5748 = vmatmul.mubr.f32.gmra.mrb[0].mxu0 %v5656
        %v5749 = vpop.f32.mrb[0].mxu0
        %v5750 = vadd.f32 0.0, %v5749
        %v5751 = vpop.f32.mrb[0].mxu0
        %5752 = vmatprep.mubr.f32.mxu0 0.0
        %5753 = vmatmul.mubr.f32.gmra.mrb[0].mxu0 %v5659
        %v5754 = vpop.f32.mrb[0].mxu0
        %v5755 = vadd.f32 0.0, %v5754
        %v5756 = vpop.f32.mrb[0].mxu0
        %5757 = vmatprep.mubr.f32.mxu0 0.0
        %5758 = vmatmul.mubr.f32.gmra.mrb[0].mxu0 %v5662
        %v5759 = vpop.f32.mrb[0].mxu0
        %v5760 = vadd.f32 0.0, %v5759
        %v5761 = vpop.f32.mrb[0].mxu0
        %5762 = vmatprep.mubr.f32.mxu0 0.0
        %5763 = vmatmul.mubr.f32.gmra.mrb[0].mxu0 %v5665
        %v5764 = vpop.f32.mrb[0].mxu0
        %v5765 = vadd.f32 0.0, %v5764
        %v5766 = vpop.f32.mrb[0].mxu0
        %5767 = vmatprep.mubr.f32.mxu0 0.0
        %5768 = vmatmul.mubr.f32.gmra.mrb[0].mxu0 %v5668
        %v5769 = vpop.f32.mrb[0].mxu0
        %v5770 = vadd.f32 0.0, %v5769
        %v5771 = vpop.f32.mrb[0].mxu0
        %5772 = vmatprep.mubr.f32.mxu0 0.0
        %5773 = vmatmul.mubr.f32.gmra.mrb[0].mxu0 %v5671
        %v5774 = vpop.f32.mrb[0].mxu0
        %v5775 = vadd.f32 0.0, %v5774
        %v5776 = vpop.f32.mrb[0].mxu0
        %5777 = vdwg.mxu0
        %v5778 = vadd.f32 %v5631, %v5740
        %v5779 = vadd.f32 %v5632, %v5745
        %v5780 = vadd.f32 %v5633, %v5750
        %v5781 = vadd.f32 %v5634, %v5755
        %v5782 = vadd.f32 %v5635, %v5760
        %v5783 = vadd.f32 %v5636, %v5765
        %v5784 = vadd.f32 %v5637, %v5770
        %v5785 = vadd.f32 %v5638, %v5775
        %v5786 = vld [vmem:[%s5491 + $0x9] sm:$0xff]
        %v5787 = vld [vmem:[%s5491 + $0x21] sm:$0xff]
        %v5788 = vld [vmem:[%s5491 + $0x39] sm:$0xff]
        %v5789 = vld [vmem:[%s5491 + $0x51] sm:$0xff]
        %v5790 = vld [vmem:[%s5491 + $0x69] sm:$0xff]
        %v5791 = vld [vmem:[%s5491 + $0x81] sm:$0xff]
        %v5792 = vld [vmem:[%s5491 + $0x99] sm:$0xff]
        %v5793 = vld [vmem:[%s5491 + $0xb1] sm:$0xff]
        %s5794 = scalar_lea.vmem %s3, 64
        %v5795 = vld [vmem:[%s5794] sm:$0xff]
        %v5797 = vsel %vm4585, %v5786, 0
        %v5800 = vsel %vm4585, %v5787, 0
        %v5803 = vsel %vm4585, %v5788, 0
        %v5806 = vsel %vm4585, %v5789, 0
        %v5809 = vsel %vm4585, %v5790, 0
        %v5812 = vsel %vm4585, %v5791, 0
        %v5815 = vsel %vm4585, %v5792, 0
        %v5818 = vsel %vm4585, %v5793, 0
        %5820 = vmatprep.subr.mxu0 0.0
        %5821 = vmatpush1.msra.mxu0 %v5795
        %5822 = vmatprep.subr.mxu0 0.0
        %5823 = vmatpush1.msra.mxu0 0.0
        %5824 = vmatprep.subr.mxu0 0.0
        %5825 = vmatpush1.msra.mxu0 0.0
        %5826 = vmatprep.subr.mxu0 0.0
        %5827 = vmatpush1.msra.mxu0 0.0
        %5828 = vmatprep.subr.mxu0 0.0
        %5829 = vmatpush1.msra.mxu0 0.0
        %5830 = vmatprep.subr.mxu0 0.0
        %5831 = vmatpush1.msra.mxu0 0.0
        %5832 = vmatprep.subr.mxu0 0.0
        %5833 = vmatpush1.msra.mxu0 0.0
        %5834 = vmatprep.subr.mxu0 0.0
        %5835 = vmatpush1.msra.mxu0 0.0
        %5836 = vmatprep.subr.mxu0 0.0
        %5837 = vmatpush1.msra.mxu0 0.0
        %5838 = vmatprep.subr.mxu0 0.0
        %5839 = vmatpush1.msra.mxu0 0.0
        %5840 = vmatprep.subr.mxu0 0.0
        %5841 = vmatpush1.msra.mxu0 0.0
        %5842 = vmatprep.subr.mxu0 0.0
        %5843 = vmatpush1.msra.mxu0 0.0
        %5844 = vmatprep.subr.mxu0 0.0
        %5845 = vmatpush1.msra.mxu0 0.0
        %5846 = vmatprep.subr.mxu0 0.0
        %5847 = vmatpush1.msra.mxu0 0.0
        %5848 = vmatprep.subr.mxu0 0.0
        %5849 = vmatpush1.msra.mxu0 0.0
        %5850 = vmatprep.subr.mxu0 0.0
        %5851 = vmatpush1.msra.mxu0 0.0
        %5852 = vmatprep.subr.mxu0 0.0
        %5853 = vmatpush1.msra.mxu0 0.0
        %5854 = vmatprep.subr.mxu0 0.0
        %5855 = vmatpush1.msra.mxu0 0.0
        %5856 = vmatprep.subr.mxu0 0.0
        %5857 = vmatpush1.msra.mxu0 0.0
        %5858 = vmatprep.subr.mxu0 0.0
        %5859 = vmatpush1.msra.mxu0 0.0
        %5860 = vmatprep.subr.mxu0 0.0
        %5861 = vmatpush1.msra.mxu0 0.0
        %5862 = vmatprep.subr.mxu0 0.0
        %5863 = vmatpush1.msra.mxu0 0.0
        %5864 = vmatprep.subr.mxu0 0.0
        %5865 = vmatpush1.msra.mxu0 0.0
        %5866 = vmatprep.subr.mxu0 0.0
        %5867 = vmatpush1.msra.mxu0 0.0
        %5868 = vmatprep.subr.mxu0 0.0
        %5869 = vmatpush1.msra.mxu0 0.0
        %5870 = vmatprep.subr.mxu0 0.0
        %5871 = vmatpush1.msra.mxu0 0.0
        %5872 = vmatprep.subr.mxu0 0.0
        %5873 = vmatpush1.msra.mxu0 0.0
        %5874 = vmatprep.subr.mxu0 0.0
        %5875 = vmatpush1.msra.mxu0 0.0
        %5876 = vmatprep.subr.mxu0 0.0
        %5877 = vmatpush1.msra.mxu0 0.0
        %5878 = vmatprep.subr.mxu0 0.0
        %5879 = vmatpush1.msra.mxu0 0.0
        %5880 = vmatprep.subr.mxu0 0.0
        %5881 = vmatpush1.msra.mxu0 0.0
        %5882 = vmatprep.subr.mxu0 0.0
        %5883 = vmatpush1.msra.mxu0 0.0
        %5884 = vmatprep.mubr.f32.mxu0 0.0
        %5885 = vmatmul.mubr.f32.gmra.mrb[0].mxu0 %v5797
        %v5886 = vpop.f32.mrb[0].mxu0
        %v5887 = vadd.f32 0.0, %v5886
        %v5888 = vpop.f32.mrb[0].mxu0
        %5889 = vmatprep.mubr.f32.mxu0 0.0
        %5890 = vmatmul.mubr.f32.gmra.mrb[0].mxu0 %v5800
        %v5891 = vpop.f32.mrb[0].mxu0
        %v5892 = vadd.f32 0.0, %v5891
        %v5893 = vpop.f32.mrb[0].mxu0
        %5894 = vmatprep.mubr.f32.mxu0 0.0
        %5895 = vmatmul.mubr.f32.gmra.mrb[0].mxu0 %v5803
        %v5896 = vpop.f32.mrb[0].mxu0
        %v5897 = vadd.f32 0.0, %v5896
        %v5898 = vpop.f32.mrb[0].mxu0
        %5899 = vmatprep.mubr.f32.mxu0 0.0
        %5900 = vmatmul.mubr.f32.gmra.mrb[0].mxu0 %v5806
        %v5901 = vpop.f32.mrb[0].mxu0
        %v5902 = vadd.f32 0.0, %v5901
        %v5903 = vpop.f32.mrb[0].mxu0
        %5904 = vmatprep.mubr.f32.mxu0 0.0
        %5905 = vmatmul.mubr.f32.gmra.mrb[0].mxu0 %v5809
        %v5906 = vpop.f32.mrb[0].mxu0
        %v5907 = vadd.f32 0.0, %v5906
        %v5908 = vpop.f32.mrb[0].mxu0
        %5909 = vmatprep.mubr.f32.mxu0 0.0
        %5910 = vmatmul.mubr.f32.gmra.mrb[0].mxu0 %v5812
        %v5911 = vpop.f32.mrb[0].mxu0
        %v5912 = vadd.f32 0.0, %v5911
        %v5913 = vpop.f32.mrb[0].mxu0
        %5914 = vmatprep.mubr.f32.mxu0 0.0
        %5915 = vmatmul.mubr.f32.gmra.mrb[0].mxu0 %v5815
        %v5916 = vpop.f32.mrb[0].mxu0
        %v5917 = vadd.f32 0.0, %v5916
        %v5918 = vpop.f32.mrb[0].mxu0
        %5919 = vmatprep.mubr.f32.mxu0 0.0
        %5920 = vmatmul.mubr.f32.gmra.mrb[0].mxu0 %v5818
        %v5921 = vpop.f32.mrb[0].mxu0
        %v5922 = vadd.f32 0.0, %v5921
        %v5923 = vpop.f32.mrb[0].mxu0
        %5924 = vdwg.mxu0
        %v5925 = vadd.f32 %v5778, %v5887
        %v5926 = vadd.f32 %v5779, %v5892
        %v5927 = vadd.f32 %v5780, %v5897
        %v5928 = vadd.f32 %v5781, %v5902
        %v5929 = vadd.f32 %v5782, %v5907
        %v5930 = vadd.f32 %v5783, %v5912
        %v5931 = vadd.f32 %v5784, %v5917
        %v5932 = vadd.f32 %v5785, %v5922
        %v5933 = vld [vmem:[%s4] sm:$0x1]
        %v5935 = vlaneseq
        %v5936 = vshrl.u32 %v5935, 7
        %v5937 = vsub.s32 0, %v5936
        %v5938 = vrot.slane %v5933, %v5937
        %v5940 = vadd.f32 %v5925, %v5938
        %v5941 = vadd.f32 %v5926, %v5938
        %v5942 = vadd.f32 %v5927, %v5938
        %v5943 = vadd.f32 %v5928, %v5938
        %v5944 = vadd.f32 %v5929, %v5938
        %v5945 = vadd.f32 %v5930, %v5938
        %v5946 = vadd.f32 %v5931, %v5938
        %v5947 = vadd.f32 %v5932, %v5938
        %v5948 = vmax.f32 %v5940, 0.0
        %v5949 = vmax.f32 %v5941, 0.0
        %v5950 = vmax.f32 %v5942, 0.0
        %v5951 = vmax.f32 %v5943, 0.0
        %v5952 = vmax.f32 %v5944, 0.0
        %v5953 = vmax.f32 %v5945, 0.0
        %v5954 = vmax.f32 %v5946, 0.0
        %v5955 = vmax.f32 %v5947, 0.0
        %v5956 = vld [vmem:[#allocation8] sm:$0xff]
        %v5957 = vld [vmem:[#allocation8 + $0x8] sm:$0xff]
        %v5958 = vld [vmem:[#allocation8 + $0x10] sm:$0xff]
        %v5959 = vld [vmem:[#allocation8 + $0x18] sm:$0xff]
        %v5960 = vld [vmem:[#allocation8 + $0x20] sm:$0xff]
        %v5961 = vld [vmem:[#allocation8 + $0x28] sm:$0xff]
        %v5962 = vld [vmem:[#allocation8 + $0x30] sm:$0xff]
        %v5963 = vld [vmem:[#allocation8 + $0x38] sm:$0xff]
        %v5964 = vld [vmem:[#allocation8 + $0x40] sm:$0xff]
        %v5965 = vld [vmem:[#allocation8 + $0x48] sm:$0xff]
        %v5966 = vld [vmem:[#allocation8 + $0x50] sm:$0xff]
        %v5967 = vld [vmem:[#allocation8 + $0x58] sm:$0xff]
        %v5968 = vld [vmem:[#allocation8 + $0x60] sm:$0xff]
        %v5969 = vld [vmem:[#allocation8 + $0x68] sm:$0xff]
        %v5970 = vld [vmem:[#allocation8 + $0x70] sm:$0xff]
        %v5971 = vld [vmem:[#allocation8 + $0x78] sm:$0xff]
        %v5972 = vld [vmem:[#allocation8 + $0x80] sm:$0xff]
        %v5973 = vld [vmem:[#allocation8 + $0x88] sm:$0xff]
        %v5974 = vld [vmem:[#allocation8 + $0x90] sm:$0xff]
        %v5975 = vld [vmem:[#allocation8 + $0x98] sm:$0xff]
        %v5976 = vld [vmem:[#allocation8 + $0xa0] sm:$0xff]
        %v5977 = vld [vmem:[#allocation8 + $0xa8] sm:$0xff]
        %v5978 = vld [vmem:[#allocation8 + $0xb0] sm:$0xff]
        %v5979 = vld [vmem:[#allocation8 + $0xb8] sm:$0xff]
        %v5980 = vld [vmem:[#allocation8 + $0xc0] sm:$0xff]
        %v5981 = vld [vmem:[#allocation8 + $0xc8] sm:$0xff]
        %v5982 = vld [vmem:[#allocation8 + $0xd0] sm:$0xff]
        %v5983 = vld [vmem:[#allocation8 + $0xd8] sm:$0xff]
        %v5984 = vld [vmem:[#allocation8 + $0xe0] sm:$0xff]
        %v5985 = vld [vmem:[#allocation8 + $0xe8] sm:$0xff]
        %v5986 = vld [vmem:[#allocation8 + $0xf0] sm:$0xff]
        %v5987 = vld [vmem:[#allocation8 + $0xf8] sm:$0xff]
        %vm5988 = vcmask 523264
        %v5990 = vsel %vm5988, %v5956, 0
        %v5993 = vsel %vm5988, %v5957, 0
        %v5996 = vsel %vm5988, %v5958, 0
        %v5999 = vsel %vm5988, %v5959, 0
        %v6002 = vsel %vm5988, %v5960, 0
        %v6005 = vsel %vm5988, %v5961, 0
        %v6008 = vsel %vm5988, %v5962, 0
        %v6011 = vsel %vm5988, %v5963, 0
        %v6014 = vsel %vm5988, %v5964, 0
        %v6017 = vsel %vm5988, %v5965, 0
        %v6020 = vsel %vm5988, %v5966, 0
        %v6023 = vsel %vm5988, %v5967, 0
        %v6026 = vsel %vm5988, %v5968, 0
        %v6029 = vsel %vm5988, %v5969, 0
        %v6032 = vsel %vm5988, %v5970, 0
        %v6035 = vsel %vm5988, %v5971, 0
        %v6038 = vsel %vm5988, %v5972, 0
        %v6041 = vsel %vm5988, %v5973, 0
        %v6044 = vsel %vm5988, %v5974, 0
        %v6047 = vsel %vm5988, %v5975, 0
        %v6050 = vsel %vm5988, %v5976, 0
        %v6053 = vsel %vm5988, %v5977, 0
        %v6056 = vsel %vm5988, %v5978, 0
        %v6059 = vsel %vm5988, %v5979, 0
        %v6062 = vsel %vm5988, %v5980, 0
        %v6065 = vsel %vm5988, %v5981, 0
        %v6068 = vsel %vm5988, %v5982, 0
        %v6071 = vsel %vm5988, %v5983, 0
        %v6074 = vsel %vm5988, %v5984, 0
        %v6077 = vsel %vm5988, %v5985, 0
        %v6080 = vsel %vm5988, %v5986, 0
        %v6083 = vsel %vm5988, %v5987, 0
        %6085 = vmatprep.subr.mxu0 0.0
        %6086 = vmatpush1.msra.mxu0 %v5948
        %6087 = vmatprep.subr.mxu0 0.0
        %6088 = vmatpush1.msra.mxu0 %v5949
        %6089 = vmatprep.subr.mxu0 0.0
        %6090 = vmatpush1.msra.mxu0 %v5950
        %6091 = vmatprep.subr.mxu0 0.0
        %6092 = vmatpush1.msra.mxu0 %v5951
        %6093 = vmatprep.subr.mxu0 0.0
        %6094 = vmatpush1.msra.mxu0 %v5952
        %6095 = vmatprep.subr.mxu0 0.0
        %6096 = vmatpush1.msra.mxu0 %v5953
        %6097 = vmatprep.subr.mxu0 0.0
        %6098 = vmatpush1.msra.mxu0 %v5954
        %6099 = vmatprep.subr.mxu0 0.0
        %6100 = vmatpush1.msra.mxu0 %v5955
        %6101 = vmatprep.subr.mxu0 0.0
        %6102 = vmatpush1.msra.mxu0 0.0
        %6103 = vmatprep.subr.mxu0 0.0
        %6104 = vmatpush1.msra.mxu0 0.0
        %6105 = vmatprep.subr.mxu0 0.0
        %6106 = vmatpush1.msra.mxu0 0.0
        %6107 = vmatprep.subr.mxu0 0.0
        %6108 = vmatpush1.msra.mxu0 0.0
        %6109 = vmatprep.subr.mxu0 0.0
        %6110 = vmatpush1.msra.mxu0 0.0
        %6111 = vmatprep.subr.mxu0 0.0
        %6112 = vmatpush1.msra.mxu0 0.0
        %6113 = vmatprep.subr.mxu0 0.0
        %6114 = vmatpush1.msra.mxu0 0.0
        %6115 = vmatprep.subr.mxu0 0.0
        %6116 = vmatpush1.msra.mxu0 0.0
        %6117 = vmatprep.subr.mxu0 0.0
        %6118 = vmatpush1.msra.mxu0 0.0
        %6119 = vmatprep.subr.mxu0 0.0
        %6120 = vmatpush1.msra.mxu0 0.0
        %6121 = vmatprep.subr.mxu0 0.0
        %6122 = vmatpush1.msra.mxu0 0.0
        %6123 = vmatprep.subr.mxu0 0.0
        %6124 = vmatpush1.msra.mxu0 0.0
        %6125 = vmatprep.subr.mxu0 0.0
        %6126 = vmatpush1.msra.mxu0 0.0
        %6127 = vmatprep.subr.mxu0 0.0
        %6128 = vmatpush1.msra.mxu0 0.0
        %6129 = vmatprep.subr.mxu0 0.0
        %6130 = vmatpush1.msra.mxu0 0.0
        %6131 = vmatprep.subr.mxu0 0.0
        %6132 = vmatpush1.msra.mxu0 0.0
        %6133 = vmatprep.subr.mxu0 0.0
        %6134 = vmatpush1.msra.mxu0 0.0
        %6135 = vmatprep.subr.mxu0 0.0
        %6136 = vmatpush1.msra.mxu0 0.0
        %6137 = vmatprep.subr.mxu0 0.0
        %6138 = vmatpush1.msra.mxu0 0.0
        %6139 = vmatprep.subr.mxu0 0.0
        %6140 = vmatpush1.msra.mxu0 0.0
        %6141 = vmatprep.subr.mxu0 0.0
        %6142 = vmatpush1.msra.mxu0 0.0
        %6143 = vmatprep.subr.mxu0 0.0
        %6144 = vmatpush1.msra.mxu0 0.0
        %6145 = vmatprep.subr.mxu0 0.0
        %6146 = vmatpush1.msra.mxu0 0.0
        %6147 = vmatprep.subr.mxu0 0.0
        %6148 = vmatpush1.msra.mxu0 0.0
        %6149 = vmatprep.mubr.f32.mxu0 0.0
        %6150 = vmatmul.mubr.f32.gmra.mrb[0].mxu0 %v5990
        %v6151 = vpop.f32.mrb[0].mxu0
        %v6152 = vadd.f32 0.0, %v6151
        %v6153 = vpop.f32.mrb[0].mxu0
        %6154 = vmatprep.mubr.f32.mxu0 0.0
        %6155 = vmatmul.mubr.f32.gmra.mrb[0].mxu0 %v5993
        %v6156 = vpop.f32.mrb[0].mxu0
        %v6157 = vadd.f32 0.0, %v6156
        %v6158 = vpop.f32.mrb[0].mxu0
        %6159 = vmatprep.mubr.f32.mxu0 0.0
        %6160 = vmatmul.mubr.f32.gmra.mrb[0].mxu0 %v5996
        %v6161 = vpop.f32.mrb[0].mxu0
        %v6162 = vadd.f32 0.0, %v6161
        %v6163 = vpop.f32.mrb[0].mxu0
        %6164 = vmatprep.mubr.f32.mxu0 0.0
        %6165 = vmatmul.mubr.f32.gmra.mrb[0].mxu0 %v5999
        %v6166 = vpop.f32.mrb[0].mxu0
        %v6167 = vadd.f32 0.0, %v6166
        %v6168 = vpop.f32.mrb[0].mxu0
        %6169 = vmatprep.mubr.f32.mxu0 0.0
        %6170 = vmatmul.mubr.f32.gmra.mrb[0].mxu0 %v6002
        %v6171 = vpop.f32.mrb[0].mxu0
        %v6172 = vadd.f32 0.0, %v6171
        %v6173 = vpop.f32.mrb[0].mxu0
        %6174 = vmatprep.mubr.f32.mxu0 0.0
        %6175 = vmatmul.mubr.f32.gmra.mrb[0].mxu0 %v6005
        %v6176 = vpop.f32.mrb[0].mxu0
        %v6177 = vadd.f32 0.0, %v6176
        %v6178 = vpop.f32.mrb[0].mxu0
        %6179 = vmatprep.mubr.f32.mxu0 0.0
        %6180 = vmatmul.mubr.f32.gmra.mrb[0].mxu0 %v6008
        %v6181 = vpop.f32.mrb[0].mxu0
        %v6182 = vadd.f32 0.0, %v6181
        %v6183 = vpop.f32.mrb[0].mxu0
        %6184 = vmatprep.mubr.f32.mxu0 0.0
        %6185 = vmatmul.mubr.f32.gmra.mrb[0].mxu0 %v6011
        %v6186 = vpop.f32.mrb[0].mxu0
        %v6187 = vadd.f32 0.0, %v6186
        %v6188 = vpop.f32.mrb[0].mxu0
        %6189 = vmatprep.mubr.f32.mxu0 0.0
        %6190 = vmatmul.mubr.f32.gmra.mrb[0].mxu0 %v6014
        %v6191 = vpop.f32.mrb[0].mxu0
        %v6192 = vadd.f32 0.0, %v6191
        %v6193 = vpop.f32.mrb[0].mxu0
        %6194 = vmatprep.mubr.f32.mxu0 0.0
        %6195 = vmatmul.mubr.f32.gmra.mrb[0].mxu0 %v6017
        %v6196 = vpop.f32.mrb[0].mxu0
        %v6197 = vadd.f32 0.0, %v6196
        %v6198 = vpop.f32.mrb[0].mxu0
        %6199 = vmatprep.mubr.f32.mxu0 0.0
        %6200 = vmatmul.mubr.f32.gmra.mrb[0].mxu0 %v6020
        %v6201 = vpop.f32.mrb[0].mxu0
        %v6202 = vadd.f32 0.0, %v6201
        %v6203 = vpop.f32.mrb[0].mxu0
        %6204 = vmatprep.mubr.f32.mxu0 0.0
        %6205 = vmatmul.mubr.f32.gmra.mrb[0].mxu0 %v6023
        %v6206 = vpop.f32.mrb[0].mxu0
        %v6207 = vadd.f32 0.0, %v6206
        %v6208 = vpop.f32.mrb[0].mxu0
        %6209 = vmatprep.mubr.f32.mxu0 0.0
        %6210 = vmatmul.mubr.f32.gmra.mrb[0].mxu0 %v6026
        %v6211 = vpop.f32.mrb[0].mxu0
        %v6212 = vadd.f32 0.0, %v6211
        %v6213 = vpop.f32.mrb[0].mxu0
        %6214 = vmatprep.mubr.f32.mxu0 0.0
        %6215 = vmatmul.mubr.f32.gmra.mrb[0].mxu0 %v6029
        %v6216 = vpop.f32.mrb[0].mxu0
        %v6217 = vadd.f32 0.0, %v6216
        %v6218 = vpop.f32.mrb[0].mxu0
        %6219 = vmatprep.mubr.f32.mxu0 0.0
        %6220 = vmatmul.mubr.f32.gmra.mrb[0].mxu0 %v6032
        %v6221 = vpop.f32.mrb[0].mxu0
        %v6222 = vadd.f32 0.0, %v6221
        %v6223 = vpop.f32.mrb[0].mxu0
        %6224 = vmatprep.mubr.f32.mxu0 0.0
        %6225 = vmatmul.mubr.f32.gmra.mrb[0].mxu0 %v6035
        %v6226 = vpop.f32.mrb[0].mxu0
        %v6227 = vadd.f32 0.0, %v6226
        %v6228 = vpop.f32.mrb[0].mxu0
        %6229 = vmatprep.mubr.f32.mxu0 0.0
        %6230 = vmatmul.mubr.f32.gmra.mrb[0].mxu0 %v6038
        %v6231 = vpop.f32.mrb[0].mxu0
        %v6232 = vadd.f32 0.0, %v6231
        %v6233 = vpop.f32.mrb[0].mxu0
        %6234 = vmatprep.mubr.f32.mxu0 0.0
        %6235 = vmatmul.mubr.f32.gmra.mrb[0].mxu0 %v6041
        %v6236 = vpop.f32.mrb[0].mxu0
        %v6237 = vadd.f32 0.0, %v6236
        %v6238 = vpop.f32.mrb[0].mxu0
        %6239 = vmatprep.mubr.f32.mxu0 0.0
        %6240 = vmatmul.mubr.f32.gmra.mrb[0].mxu0 %v6044
        %v6241 = vpop.f32.mrb[0].mxu0
        %v6242 = vadd.f32 0.0, %v6241
        %v6243 = vpop.f32.mrb[0].mxu0
        %6244 = vmatprep.mubr.f32.mxu0 0.0
        %6245 = vmatmul.mubr.f32.gmra.mrb[0].mxu0 %v6047
        %v6246 = vpop.f32.mrb[0].mxu0
        %v6247 = vadd.f32 0.0, %v6246
        %v6248 = vpop.f32.mrb[0].mxu0
        %6249 = vmatprep.mubr.f32.mxu0 0.0
        %6250 = vmatmul.mubr.f32.gmra.mrb[0].mxu0 %v6050
        %v6251 = vpop.f32.mrb[0].mxu0
        %v6252 = vadd.f32 0.0, %v6251
        %v6253 = vpop.f32.mrb[0].mxu0
        %6254 = vmatprep.mubr.f32.mxu0 0.0
        %6255 = vmatmul.mubr.f32.gmra.mrb[0].mxu0 %v6053
        %v6256 = vpop.f32.mrb[0].mxu0
        %v6257 = vadd.f32 0.0, %v6256
        %v6258 = vpop.f32.mrb[0].mxu0
        %6259 = vmatprep.mubr.f32.mxu0 0.0
        %6260 = vmatmul.mubr.f32.gmra.mrb[0].mxu0 %v6056
        %v6261 = vpop.f32.mrb[0].mxu0
        %v6262 = vadd.f32 0.0, %v6261
        %v6263 = vpop.f32.mrb[0].mxu0
        %6264 = vmatprep.mubr.f32.mxu0 0.0
        %6265 = vmatmul.mubr.f32.gmra.mrb[0].mxu0 %v6059
        %v6266 = vpop.f32.mrb[0].mxu0
        %v6267 = vadd.f32 0.0, %v6266
        %v6268 = vpop.f32.mrb[0].mxu0
        %6269 = vmatprep.mubr.f32.mxu0 0.0
        %6270 = vmatmul.mubr.f32.gmra.mrb[0].mxu0 %v6062
        %v6271 = vpop.f32.mrb[0].mxu0
        %v6272 = vadd.f32 0.0, %v6271
        %v6273 = vpop.f32.mrb[0].mxu0
        %6274 = vmatprep.mubr.f32.mxu0 0.0
        %6275 = vmatmul.mubr.f32.gmra.mrb[0].mxu0 %v6065
        %v6276 = vpop.f32.mrb[0].mxu0
        %v6277 = vadd.f32 0.0, %v6276
        %v6278 = vpop.f32.mrb[0].mxu0
        %6279 = vmatprep.mubr.f32.mxu0 0.0
        %6280 = vmatmul.mubr.f32.gmra.mrb[0].mxu0 %v6068
        %v6281 = vpop.f32.mrb[0].mxu0
        %v6282 = vadd.f32 0.0, %v6281
        %v6283 = vpop.f32.mrb[0].mxu0
        %6284 = vmatprep.mubr.f32.mxu0 0.0
        %6285 = vmatmul.mubr.f32.gmra.mrb[0].mxu0 %v6071
        %v6286 = vpop.f32.mrb[0].mxu0
        %v6287 = vadd.f32 0.0, %v6286
        %v6288 = vpop.f32.mrb[0].mxu0
        %6289 = vmatprep.mubr.f32.mxu0 0.0
        %6290 = vmatmul.mubr.f32.gmra.mrb[0].mxu0 %v6074
        %v6291 = vpop.f32.mrb[0].mxu0
        %v6292 = vadd.f32 0.0, %v6291
        %v6293 = vpop.f32.mrb[0].mxu0
        %6294 = vmatprep.mubr.f32.mxu0 0.0
        %6295 = vmatmul.mubr.f32.gmra.mrb[0].mxu0 %v6077
        %v6296 = vpop.f32.mrb[0].mxu0
        %v6297 = vadd.f32 0.0, %v6296
        %v6298 = vpop.f32.mrb[0].mxu0
        %6299 = vmatprep.mubr.f32.mxu0 0.0
        %6300 = vmatmul.mubr.f32.gmra.mrb[0].mxu0 %v6080
        %v6301 = vpop.f32.mrb[0].mxu0
        %v6302 = vadd.f32 0.0, %v6301
        %v6303 = vpop.f32.mrb[0].mxu0
        %6304 = vmatprep.mubr.f32.mxu0 0.0
        %6305 = vmatmul.mubr.f32.gmra.mrb[0].mxu0 %v6083
        %v6306 = vpop.f32.mrb[0].mxu0
        %v6307 = vadd.f32 0.0, %v6306
        %v6308 = vpop.f32.mrb[0].mxu0
        %6309 = vdwg.mxu0
        %vm6310 = vcmask 195584
        %6311 = vst.msk [vmem:[#allocation4] sm:$0xff] %vm6310, 0.0
        %6312 = vst.msk [vmem:[#allocation4 + $0x8] sm:$0xff] %vm6310, 0.0
        %6313 = vst.msk [vmem:[#allocation4 + $0x10] sm:$0xff] %vm6310, 0.0
        %vm6314 = vcmask 188416
        %6315 = vst.msk [vmem:[#allocation4 + $0x18] sm:$0x1] %vm6314, 0.0
        %6316 = vst.msk [vmem:[#allocation4 + $0x20] sm:$0xff] %vm6310, 0.0
        %6317 = vst.msk [vmem:[#allocation4 + $0x28] sm:$0xff] %vm6310, 0.0
        %6318 = vst.msk [vmem:[#allocation4 + $0x30] sm:$0xff] %vm6310, 0.0
        %6319 = vst.msk [vmem:[#allocation4 + $0x38] sm:$0x1] %vm6314, 0.0
        %6320 = vst.msk [vmem:[#allocation4 + $0x40] sm:$0xff] %vm6310, 0.0
        %6321 = vst.msk [vmem:[#allocation4 + $0x48] sm:$0xff] %vm6310, 0.0
        %6322 = vst.msk [vmem:[#allocation4 + $0x50] sm:$0xff] %vm6310, 0.0
        %6323 = vst.msk [vmem:[#allocation4 + $0x58] sm:$0x1] %vm6314, 0.0
        %6324 = vst.msk [vmem:[#allocation4 + $0x60] sm:$0xff] %vm6310, 0.0
        %6325 = vst.msk [vmem:[#allocation4 + $0x68] sm:$0xff] %vm6310, 0.0
        %6326 = vst.msk [vmem:[#allocation4 + $0x70] sm:$0xff] %vm6310, 0.0
        %6327 = vst.msk [vmem:[#allocation4 + $0x78] sm:$0x1] %vm6314, 0.0
        %6328 = vst.msk [vmem:[#allocation4 + $0x80] sm:$0xff] %vm6310, 0.0
        %6329 = vst.msk [vmem:[#allocation4 + $0x88] sm:$0xff] %vm6310, 0.0
        %6330 = vst.msk [vmem:[#allocation4 + $0x90] sm:$0xff] %vm6310, 0.0
        %6331 = vst.msk [vmem:[#allocation4 + $0x98] sm:$0x1] %vm6314, 0.0
        %6332 = vst.msk [vmem:[#allocation4 + $0xa0] sm:$0xff] %vm6310, 0.0
        %6333 = vst.msk [vmem:[#allocation4 + $0xa8] sm:$0xff] %vm6310, 0.0
        %6334 = vst.msk [vmem:[#allocation4 + $0xb0] sm:$0xff] %vm6310, 0.0
        %6335 = vst.msk [vmem:[#allocation4 + $0xb8] sm:$0x1] %vm6314, 0.0
        %6336 = vst.msk [vmem:[#allocation4 + $0xc0] sm:$0xff] %vm6310, 0.0
        %6337 = vst.msk [vmem:[#allocation4 + $0xc8] sm:$0xff] %vm6310, 0.0
        %6338 = vst.msk [vmem:[#allocation4 + $0xd0] sm:$0xff] %vm6310, 0.0
        %6339 = vst.msk [vmem:[#allocation4 + $0xd8] sm:$0x1] %vm6314, 0.0
        %6340 = vst.msk [vmem:[#allocation4 + $0xe0] sm:$0xff] %vm6310, 0.0
        %6341 = vst.msk [vmem:[#allocation4 + $0xe8] sm:$0xff] %vm6310, 0.0
        %6342 = vst.msk [vmem:[#allocation4 + $0xf0] sm:$0xff] %vm6310, 0.0
        %6343 = vst.msk [vmem:[#allocation4 + $0xf8] sm:$0x1] %vm6314, 0.0
        %6344 = vst.msk [vmem:[#allocation4 + $0x100] sm:$0xff] %vm6310, 0.0
        %6345 = vst.msk [vmem:[#allocation4 + $0x108] sm:$0xff] %vm6310, 0.0
        %6346 = vst.msk [vmem:[#allocation4 + $0x110] sm:$0xff] %vm6310, 0.0
        %6347 = vst.msk [vmem:[#allocation4 + $0x118] sm:$0x1] %vm6314, 0.0
        %6348 = vst.msk [vmem:[#allocation4 + $0x120] sm:$0xff] %vm6310, 0.0
        %6349 = vst.msk [vmem:[#allocation4 + $0x128] sm:$0xff] %vm6310, 0.0
        %6350 = vst.msk [vmem:[#allocation4 + $0x130] sm:$0xff] %vm6310, 0.0
        %6351 = vst.msk [vmem:[#allocation4 + $0x138] sm:$0x1] %vm6314, 0.0
        %6352 = vst.msk [vmem:[#allocation4 + $0x140] sm:$0xff] %vm6310, 0.0
        %6353 = vst.msk [vmem:[#allocation4 + $0x148] sm:$0xff] %vm6310, 0.0
        %6354 = vst.msk [vmem:[#allocation4 + $0x150] sm:$0xff] %vm6310, 0.0
        %6355 = vst.msk [vmem:[#allocation4 + $0x158] sm:$0x1] %vm6314, 0.0
        %6356 = vst.msk [vmem:[#allocation4 + $0x160] sm:$0xff] %vm6310, 0.0
        %6357 = vst.msk [vmem:[#allocation4 + $0x168] sm:$0xff] %vm6310, 0.0
        %6358 = vst.msk [vmem:[#allocation4 + $0x170] sm:$0xff] %vm6310, 0.0
        %6359 = vst.msk [vmem:[#allocation4 + $0x178] sm:$0x1] %vm6314, 0.0
        %6360 = vst.msk [vmem:[#allocation4 + $0x180] sm:$0xff] %vm6310, 0.0
        %6361 = vst.msk [vmem:[#allocation4 + $0x188] sm:$0xff] %vm6310, 0.0
        %6362 = vst.msk [vmem:[#allocation4 + $0x190] sm:$0xff] %vm6310, 0.0
        %6363 = vst.msk [vmem:[#allocation4 + $0x198] sm:$0x1] %vm6314, 0.0
        %6364 = vst.msk [vmem:[#allocation4 + $0x1a0] sm:$0xff] %vm6310, 0.0
        %6365 = vst.msk [vmem:[#allocation4 + $0x1a8] sm:$0xff] %vm6310, 0.0
        %6366 = vst.msk [vmem:[#allocation4 + $0x1b0] sm:$0xff] %vm6310, 0.0
        %6367 = vst.msk [vmem:[#allocation4 + $0x1b8] sm:$0x1] %vm6314, 0.0
        %6368 = vst.msk [vmem:[#allocation4 + $0x1c0] sm:$0xff] %vm6310, 0.0
        %6369 = vst.msk [vmem:[#allocation4 + $0x1c8] sm:$0xff] %vm6310, 0.0
        %6370 = vst.msk [vmem:[#allocation4 + $0x1d0] sm:$0xff] %vm6310, 0.0
        %6371 = vst.msk [vmem:[#allocation4 + $0x1d8] sm:$0x1] %vm6314, 0.0
        %6372 = vst.msk [vmem:[#allocation4 + $0x1e0] sm:$0xff] %vm6310, 0.0
        %6373 = vst.msk [vmem:[#allocation4 + $0x1e8] sm:$0xff] %vm6310, 0.0
        %6374 = vst.msk [vmem:[#allocation4 + $0x1f0] sm:$0xff] %vm6310, 0.0
        %6375 = vst.msk [vmem:[#allocation4 + $0x1f8] sm:$0x1] %vm6314, 0.0
        %6376 = vst.msk [vmem:[#allocation4 + $0x200] sm:$0xff] %vm6310, 0.0
        %6377 = vst.msk [vmem:[#allocation4 + $0x208] sm:$0xff] %vm6310, 0.0
        %6378 = vst.msk [vmem:[#allocation4 + $0x210] sm:$0xff] %vm6310, 0.0
        %6379 = vst.msk [vmem:[#allocation4 + $0x218] sm:$0x1] %vm6314, 0.0
        %6380 = vst.msk [vmem:[#allocation4 + $0x220] sm:$0xff] %vm6310, 0.0
        %6381 = vst.msk [vmem:[#allocation4 + $0x228] sm:$0xff] %vm6310, 0.0
        %6382 = vst.msk [vmem:[#allocation4 + $0x230] sm:$0xff] %vm6310, 0.0
        %6383 = vst.msk [vmem:[#allocation4 + $0x238] sm:$0x1] %vm6314, 0.0
        %s6384 = scalar_lea.vmem [#allocation4], 32
        %vm6385 = vcmask 130048
        %6386 = vst.msk [vmem:[%s6384 + $0x8] sm:$0xff] %vm6385, %v6152
        %6387 = vst.msk [vmem:[%s6384 + $0x10] sm:$0xff] %vm6385, %v6157
        %6388 = vst.msk [vmem:[%s6384 + $0x28] sm:$0xff] %vm6385, %v6162
        %6389 = vst.msk [vmem:[%s6384 + $0x30] sm:$0xff] %vm6385, %v6167
        %6390 = vst.msk [vmem:[%s6384 + $0x48] sm:$0xff] %vm6385, %v6172
        %6391 = vst.msk [vmem:[%s6384 + $0x50] sm:$0xff] %vm6385, %v6177
        %6392 = vst.msk [vmem:[%s6384 + $0x68] sm:$0xff] %vm6385, %v6182
        %6393 = vst.msk [vmem:[%s6384 + $0x70] sm:$0xff] %vm6385, %v6187
        %6394 = vst.msk [vmem:[%s6384 + $0x88] sm:$0xff] %vm6385, %v6192
        %6395 = vst.msk [vmem:[%s6384 + $0x90] sm:$0xff] %vm6385, %v6197
        %6396 = vst.msk [vmem:[%s6384 + $0xa8] sm:$0xff] %vm6385, %v6202
        %6397 = vst.msk [vmem:[%s6384 + $0xb0] sm:$0xff] %vm6385, %v6207
        %6398 = vst.msk [vmem:[%s6384 + $0xc8] sm:$0xff] %vm6385, %v6212
        %6399 = vst.msk [vmem:[%s6384 + $0xd0] sm:$0xff] %vm6385, %v6217
        %6400 = vst.msk [vmem:[%s6384 + $0xe8] sm:$0xff] %vm6385, %v6222
        %6401 = vst.msk [vmem:[%s6384 + $0xf0] sm:$0xff] %vm6385, %v6227
        %6402 = vst.msk [vmem:[%s6384 + $0x108] sm:$0xff] %vm6385, %v6232
        %6403 = vst.msk [vmem:[%s6384 + $0x110] sm:$0xff] %vm6385, %v6237
        %6404 = vst.msk [vmem:[%s6384 + $0x128] sm:$0xff] %vm6385, %v6242
        %6405 = vst.msk [vmem:[%s6384 + $0x130] sm:$0xff] %vm6385, %v6247
        %6406 = vst.msk [vmem:[%s6384 + $0x148] sm:$0xff] %vm6385, %v6252
        %6407 = vst.msk [vmem:[%s6384 + $0x150] sm:$0xff] %vm6385, %v6257
        %6408 = vst.msk [vmem:[%s6384 + $0x168] sm:$0xff] %vm6385, %v6262
        %6409 = vst.msk [vmem:[%s6384 + $0x170] sm:$0xff] %vm6385, %v6267
        %6410 = vst.msk [vmem:[%s6384 + $0x188] sm:$0xff] %vm6385, %v6272
        %6411 = vst.msk [vmem:[%s6384 + $0x190] sm:$0xff] %vm6385, %v6277
        %6412 = vst.msk [vmem:[%s6384 + $0x1a8] sm:$0xff] %vm6385, %v6282
        %6413 = vst.msk [vmem:[%s6384 + $0x1b0] sm:$0xff] %vm6385, %v6287
        %6414 = vst.msk [vmem:[%s6384 + $0x1c8] sm:$0xff] %vm6385, %v6292
        %6415 = vst.msk [vmem:[%s6384 + $0x1d0] sm:$0xff] %vm6385, %v6297
        %6416 = vst.msk [vmem:[%s6384 + $0x1e8] sm:$0xff] %vm6385, %v6302
        %6417 = vst.msk [vmem:[%s6384 + $0x1f0] sm:$0xff] %vm6385, %v6307
        %6450 = vrot.lane.b32.xlu0 %v4042, 16
        %v6451 = vpop.permute.xlu0 %6450
        %6452 = vrot.lane.b32.xlu0 %v4043, 16
        %v6453 = vpop.permute.xlu0 %6452
        %6454 = vrot.lane.b32.xlu0 %v4044, 16
        %v6455 = vpop.permute.xlu0 %6454
        %6456 = vrot.lane.b32.xlu0 %v4045, 16
        %v6457 = vpop.permute.xlu0 %6456
        %6458 = vrot.lane.b32.xlu0 %v4046, 16
        %v6459 = vpop.permute.xlu0 %6458
        %6460 = vrot.lane.b32.xlu0 %v4047, 16
        %v6461 = vpop.permute.xlu0 %6460
        %6462 = vrot.lane.b32.xlu0 %v4048, 16
        %v6463 = vpop.permute.xlu0 %6462
        %6464 = vrot.lane.b32.xlu0 %v4049, 16
        %v6465 = vpop.permute.xlu0 %6464
        %6466 = vrot.lane.b32.xlu0 %v4050, 16
        %v6467 = vpop.permute.xlu0 %6466
        %6468 = vrot.lane.b32.xlu0 %v4051, 16
        %v6469 = vpop.permute.xlu0 %6468
        %6470 = vrot.lane.b32.xlu0 %v4052, 16
        %v6471 = vpop.permute.xlu0 %6470
        %6472 = vrot.lane.b32.xlu0 %v4053, 16
        %v6473 = vpop.permute.xlu0 %6472
        %6474 = vrot.lane.b32.xlu0 %v4054, 16
        %v6475 = vpop.permute.xlu0 %6474
        %6476 = vrot.lane.b32.xlu0 %v4055, 16
        %v6477 = vpop.permute.xlu0 %6476
        %6478 = vrot.lane.b32.xlu0 %v4056, 16
        %v6479 = vpop.permute.xlu0 %6478
        %6480 = vrot.lane.b32.xlu0 %v4057, 16
        %v6481 = vpop.permute.xlu0 %6480
        %6482 = vrot.lane.b32.xlu0 %v4058, 16
        %v6483 = vpop.permute.xlu0 %6482
        %6484 = vrot.lane.b32.xlu0 %v4059, 16
        %v6485 = vpop.permute.xlu0 %6484
        %6486 = vrot.lane.b32.xlu0 %v4060, 16
        %v6487 = vpop.permute.xlu0 %6486
        %6488 = vrot.lane.b32.xlu0 %v4061, 16
        %v6489 = vpop.permute.xlu0 %6488
        %6490 = vrot.lane.b32.xlu0 %v4062, 16
        %v6491 = vpop.permute.xlu0 %6490
        %6492 = vrot.lane.b32.xlu0 %v4063, 16
        %v6493 = vpop.permute.xlu0 %6492
        %6494 = vrot.lane.b32.xlu0 %v4064, 16
        %v6495 = vpop.permute.xlu0 %6494
        %6496 = vrot.lane.b32.xlu0 %v4065, 16
        %v6497 = vpop.permute.xlu0 %6496
        %6498 = vrot.lane.b32.xlu0 %v4066, 16
        %v6499 = vpop.permute.xlu0 %6498
        %6500 = vrot.lane.b32.xlu0 %v4067, 16
        %v6501 = vpop.permute.xlu0 %6500
        %6502 = vrot.lane.b32.xlu0 %v4068, 16
        %v6503 = vpop.permute.xlu0 %6502
        %6504 = vrot.lane.b32.xlu0 %v4069, 16
        %v6505 = vpop.permute.xlu0 %6504
        %6506 = vrot.lane.b32.xlu0 %v4070, 16
        %v6507 = vpop.permute.xlu0 %6506
        %6508 = vrot.lane.b32.xlu0 %v4071, 16
        %v6509 = vpop.permute.xlu0 %6508
        %6510 = vrot.lane.b32.xlu0 %v4072, 16
        %v6511 = vpop.permute.xlu0 %6510
        %6512 = vrot.lane.b32.xlu0 %v4073, 16
        %v6513 = vpop.permute.xlu0 %6512
        %vm6546 = vcmask 195712
        %6547 = vst.msk [vmem:[%s6384 + $0x8] sm:$0xff] %vm6546, %v6451
        %6548 = vst.msk [vmem:[%s6384 + $0x10] sm:$0xff] %vm6546, %v6453
        %6549 = vst.msk [vmem:[%s6384 + $0x28] sm:$0xff] %vm6546, %v6455
        %6550 = vst.msk [vmem:[%s6384 + $0x30] sm:$0xff] %vm6546, %v6457
        %6551 = vst.msk [vmem:[%s6384 + $0x48] sm:$0xff] %vm6546, %v6459
        %6552 = vst.msk [vmem:[%s6384 + $0x50] sm:$0xff] %vm6546, %v6461
        %6553 = vst.msk [vmem:[%s6384 + $0x68] sm:$0xff] %vm6546, %v6463
        %6554 = vst.msk [vmem:[%s6384 + $0x70] sm:$0xff] %vm6546, %v6465
        %6555 = vst.msk [vmem:[%s6384 + $0x88] sm:$0xff] %vm6546, %v6467
        %6556 = vst.msk [vmem:[%s6384 + $0x90] sm:$0xff] %vm6546, %v6469
        %6557 = vst.msk [vmem:[%s6384 + $0xa8] sm:$0xff] %vm6546, %v6471
        %6558 = vst.msk [vmem:[%s6384 + $0xb0] sm:$0xff] %vm6546, %v6473
        %6559 = vst.msk [vmem:[%s6384 + $0xc8] sm:$0xff] %vm6546, %v6475
        %6560 = vst.msk [vmem:[%s6384 + $0xd0] sm:$0xff] %vm6546, %v6477
        %6561 = vst.msk [vmem:[%s6384 + $0xe8] sm:$0xff] %vm6546, %v6479
        %6562 = vst.msk [vmem:[%s6384 + $0xf0] sm:$0xff] %vm6546, %v6481
        %6563 = vst.msk [vmem:[%s6384 + $0x108] sm:$0xff] %vm6546, %v6483
        %6564 = vst.msk [vmem:[%s6384 + $0x110] sm:$0xff] %vm6546, %v6485
        %6565 = vst.msk [vmem:[%s6384 + $0x128] sm:$0xff] %vm6546, %v6487
        %6566 = vst.msk [vmem:[%s6384 + $0x130] sm:$0xff] %vm6546, %v6489
        %6567 = vst.msk [vmem:[%s6384 + $0x148] sm:$0xff] %vm6546, %v6491
        %6568 = vst.msk [vmem:[%s6384 + $0x150] sm:$0xff] %vm6546, %v6493
        %6569 = vst.msk [vmem:[%s6384 + $0x168] sm:$0xff] %vm6546, %v6495
        %6570 = vst.msk [vmem:[%s6384 + $0x170] sm:$0xff] %vm6546, %v6497
        %6571 = vst.msk [vmem:[%s6384 + $0x188] sm:$0xff] %vm6546, %v6499
        %6572 = vst.msk [vmem:[%s6384 + $0x190] sm:$0xff] %vm6546, %v6501
        %6573 = vst.msk [vmem:[%s6384 + $0x1a8] sm:$0xff] %vm6546, %v6503
        %6574 = vst.msk [vmem:[%s6384 + $0x1b0] sm:$0xff] %vm6546, %v6505
        %6575 = vst.msk [vmem:[%s6384 + $0x1c8] sm:$0xff] %vm6546, %v6507
        %6576 = vst.msk [vmem:[%s6384 + $0x1d0] sm:$0xff] %vm6546, %v6509
        %6577 = vst.msk [vmem:[%s6384 + $0x1e8] sm:$0xff] %vm6546, %v6511
        %6578 = vst.msk [vmem:[%s6384 + $0x1f0] sm:$0xff] %vm6546, %v6513
        %v6579 = vld [vmem:[#allocation4 + $0x7] sm:$0xff]
        %v6580 = vld [vmem:[#allocation4 + $0xf] sm:$0xff]
        %v6581 = vld [vmem:[#allocation4 + $0x27] sm:$0xff]
        %v6582 = vld [vmem:[#allocation4 + $0x2f] sm:$0xff]
        %v6583 = vld [vmem:[#allocation4 + $0x47] sm:$0xff]
        %v6584 = vld [vmem:[#allocation4 + $0x4f] sm:$0xff]
        %v6585 = vld [vmem:[#allocation4 + $0x67] sm:$0xff]
        %v6586 = vld [vmem:[#allocation4 + $0x6f] sm:$0xff]
        %v6587 = vld [vmem:[#allocation4 + $0x87] sm:$0xff]
        %v6588 = vld [vmem:[#allocation4 + $0x8f] sm:$0xff]
        %v6589 = vld [vmem:[#allocation4 + $0xa7] sm:$0xff]
        %v6590 = vld [vmem:[#allocation4 + $0xaf] sm:$0xff]
        %v6591 = vld [vmem:[#allocation4 + $0xc7] sm:$0xff]
        %v6592 = vld [vmem:[#allocation4 + $0xcf] sm:$0xff]
        %v6593 = vld [vmem:[#allocation4 + $0xe7] sm:$0xff]
        %v6594 = vld [vmem:[#allocation4 + $0xef] sm:$0xff]
        %v6595 = vld [vmem:[#allocation4 + $0x107] sm:$0xff]
        %v6596 = vld [vmem:[#allocation4 + $0x10f] sm:$0xff]
        %v6597 = vld [vmem:[#allocation4 + $0x127] sm:$0xff]
        %v6598 = vld [vmem:[#allocation4 + $0x12f] sm:$0xff]
        %v6599 = vld [vmem:[#allocation4 + $0x147] sm:$0xff]
        %v6600 = vld [vmem:[#allocation4 + $0x14f] sm:$0xff]
        %v6601 = vld [vmem:[#allocation4 + $0x167] sm:$0xff]
        %v6602 = vld [vmem:[#allocation4 + $0x16f] sm:$0xff]
        %v6603 = vld [vmem:[#allocation4 + $0x187] sm:$0xff]
        %v6604 = vld [vmem:[#allocation4 + $0x18f] sm:$0xff]
        %v6605 = vld [vmem:[#allocation4 + $0x1a7] sm:$0xff]
        %v6606 = vld [vmem:[#allocation4 + $0x1af] sm:$0xff]
        %v6607 = vld [vmem:[#allocation4 + $0x1c7] sm:$0xff]
        %v6608 = vld [vmem:[#allocation4 + $0x1cf] sm:$0xff]
        %v6609 = vld [vmem:[#allocation4 + $0x1e7] sm:$0xff]
        %v6610 = vld [vmem:[#allocation4 + $0x1ef] sm:$0xff]
        %v6611 = vld [vmem:[#allocation6] sm:$0xff]
        %v6612 = vld [vmem:[#allocation6 + $0x8] sm:$0xff]
        %v6613 = vld [vmem:[#allocation6 + $0x10] sm:$0xff]
        %v6614 = vld [vmem:[#allocation4 + $0x8] sm:$0xff]
        %v6615 = vld [vmem:[#allocation4 + $0x10] sm:$0xff]
        %v6616 = vld [vmem:[#allocation4 + $0x28] sm:$0xff]
        %v6617 = vld [vmem:[#allocation4 + $0x30] sm:$0xff]
        %v6618 = vld [vmem:[#allocation4 + $0x48] sm:$0xff]
        %v6619 = vld [vmem:[#allocation4 + $0x50] sm:$0xff]
        %v6620 = vld [vmem:[#allocation4 + $0x68] sm:$0xff]
        %v6621 = vld [vmem:[#allocation4 + $0x70] sm:$0xff]
        %v6622 = vld [vmem:[#allocation4 + $0x88] sm:$0xff]
        %v6623 = vld [vmem:[#allocation4 + $0x90] sm:$0xff]
        %v6624 = vld [vmem:[#allocation4 + $0xa8] sm:$0xff]
        %v6625 = vld [vmem:[#allocation4 + $0xb0] sm:$0xff]
        %v6626 = vld [vmem:[#allocation4 + $0xc8] sm:$0xff]
        %v6627 = vld [vmem:[#allocation4 + $0xd0] sm:$0xff]
        %v6628 = vld [vmem:[#allocation4 + $0xe8] sm:$0xff]
        %v6629 = vld [vmem:[#allocation4 + $0xf0] sm:$0xff]
        %v6630 = vld [vmem:[#allocation4 + $0x108] sm:$0xff]
        %v6631 = vld [vmem:[#allocation4 + $0x110] sm:$0xff]
        %v6632 = vld [vmem:[#allocation4 + $0x128] sm:$0xff]
        %v6633 = vld [vmem:[#allocation4 + $0x130] sm:$0xff]
        %v6634 = vld [vmem:[#allocation4 + $0x148] sm:$0xff]
        %v6635 = vld [vmem:[#allocation4 + $0x150] sm:$0xff]
        %v6636 = vld [vmem:[#allocation4 + $0x168] sm:$0xff]
        %v6637 = vld [vmem:[#allocation4 + $0x170] sm:$0xff]
        %v6638 = vld [vmem:[#allocation4 + $0x188] sm:$0xff]
        %v6639 = vld [vmem:[#allocation4 + $0x190] sm:$0xff]
        %v6640 = vld [vmem:[#allocation4 + $0x1a8] sm:$0xff]
        %v6641 = vld [vmem:[#allocation4 + $0x1b0] sm:$0xff]
        %v6642 = vld [vmem:[#allocation4 + $0x1c8] sm:$0xff]
        %v6643 = vld [vmem:[#allocation4 + $0x1d0] sm:$0xff]
        %v6644 = vld [vmem:[#allocation4 + $0x1e8] sm:$0xff]
        %v6645 = vld [vmem:[#allocation4 + $0x1f0] sm:$0xff]
        %s6646 = scalar_lea.vmem [#allocation6], 24
        %v6647 = vld [vmem:[%s6646] sm:$0xff]
        %v6648 = vld [vmem:[%s6646 + $0x8] sm:$0xff]
        %v6649 = vld [vmem:[%s6646 + $0x10] sm:$0xff]
        %v6651 = vsel %vm6310, %v6614, 0
        %v6654 = vsel %vm6310, %v6615, 0
        %v6657 = vsel %vm6310, %v6616, 0
        %v6660 = vsel %vm6310, %v6617, 0
        %v6663 = vsel %vm6310, %v6618, 0
        %v6666 = vsel %vm6310, %v6619, 0
        %v6669 = vsel %vm6310, %v6620, 0
        %v6672 = vsel %vm6310, %v6621, 0
        %v6675 = vsel %vm6310, %v6622, 0
        %v6678 = vsel %vm6310, %v6623, 0
        %v6681 = vsel %vm6310, %v6624, 0
        %v6684 = vsel %vm6310, %v6625, 0
        %v6687 = vsel %vm6310, %v6626, 0
        %v6690 = vsel %vm6310, %v6627, 0
        %v6693 = vsel %vm6310, %v6628, 0
        %v6696 = vsel %vm6310, %v6629, 0
        %v6699 = vsel %vm6310, %v6630, 0
        %v6702 = vsel %vm6310, %v6631, 0
        %v6705 = vsel %vm6310, %v6632, 0
        %v6708 = vsel %vm6310, %v6633, 0
        %v6711 = vsel %vm6310, %v6634, 0
        %v6714 = vsel %vm6310, %v6635, 0
        %v6717 = vsel %vm6310, %v6636, 0
        %v6720 = vsel %vm6310, %v6637, 0
        %v6723 = vsel %vm6310, %v6638, 0
        %v6726 = vsel %vm6310, %v6639, 0
        %v6729 = vsel %vm6310, %v6640, 0
        %v6732 = vsel %vm6310, %v6641, 0
        %v6735 = vsel %vm6310, %v6642, 0
        %v6738 = vsel %vm6310, %v6643, 0
        %v6741 = vsel %vm6310, %v6644, 0
        %v6744 = vsel %vm6310, %v6645, 0
        %6746 = vmatprep.subr.mxu0 0.0
        %6747 = vmatpush1.msra.mxu0 %v6647
        %6748 = vmatprep.subr.mxu0 0.0
        %6749 = vmatpush1.msra.mxu0 %v6648
        %6750 = vmatprep.subr.mxu0 0.0
        %6751 = vmatpush1.msra.mxu0 %v6649
        %6752 = vmatprep.subr.mxu0 0.0
        %6753 = vmatpush1.msra.mxu0 0.0
        %6754 = vmatprep.subr.mxu0 0.0
        %6755 = vmatpush1.msra.mxu0 0.0
        %6756 = vmatprep.subr.mxu0 0.0
        %6757 = vmatpush1.msra.mxu0 0.0
        %6758 = vmatprep.subr.mxu0 0.0
        %6759 = vmatpush1.msra.mxu0 0.0
        %6760 = vmatprep.subr.mxu0 0.0
        %6761 = vmatpush1.msra.mxu0 0.0
        %6762 = vmatprep.subr.mxu0 0.0
        %6763 = vmatpush1.msra.mxu0 0.0
        %6764 = vmatprep.subr.mxu0 0.0
        %6765 = vmatpush1.msra.mxu0 0.0
        %6766 = vmatprep.subr.mxu0 0.0
        %6767 = vmatpush1.msra.mxu0 0.0
        %6768 = vmatprep.subr.mxu0 0.0
        %6769 = vmatpush1.msra.mxu0 0.0
        %6770 = vmatprep.subr.mxu0 0.0
        %6771 = vmatpush1.msra.mxu0 0.0
        %6772 = vmatprep.subr.mxu0 0.0
        %6773 = vmatpush1.msra.mxu0 0.0
        %6774 = vmatprep.subr.mxu0 0.0
        %6775 = vmatpush1.msra.mxu0 0.0
        %6776 = vmatprep.subr.mxu0 0.0
        %6777 = vmatpush1.msra.mxu0 0.0
        %6778 = vmatprep.subr.mxu0 0.0
        %6779 = vmatpush1.msra.mxu0 0.0
        %6780 = vmatprep.subr.mxu0 0.0
        %6781 = vmatpush1.msra.mxu0 0.0
        %6782 = vmatprep.subr.mxu0 0.0
        %6783 = vmatpush1.msra.mxu0 0.0
        %6784 = vmatprep.subr.mxu0 0.0
        %6785 = vmatpush1.msra.mxu0 0.0
        %6786 = vmatprep.subr.mxu0 0.0
        %6787 = vmatpush1.msra.mxu0 0.0
        %6788 = vmatprep.subr.mxu0 0.0
        %6789 = vmatpush1.msra.mxu0 0.0
        %6790 = vmatprep.subr.mxu0 0.0
        %6791 = vmatpush1.msra.mxu0 0.0
        %6792 = vmatprep.subr.mxu0 0.0
        %6793 = vmatpush1.msra.mxu0 0.0
        %6794 = vmatprep.subr.mxu0 0.0
        %6795 = vmatpush1.msra.mxu0 0.0
        %6796 = vmatprep.subr.mxu0 0.0
        %6797 = vmatpush1.msra.mxu0 0.0
        %6798 = vmatprep.subr.mxu0 0.0
        %6799 = vmatpush1.msra.mxu0 0.0
        %6800 = vmatprep.subr.mxu0 0.0
        %6801 = vmatpush1.msra.mxu0 0.0
        %6802 = vmatprep.subr.mxu0 0.0
        %6803 = vmatpush1.msra.mxu0 0.0
        %6804 = vmatprep.subr.mxu0 0.0
        %6805 = vmatpush1.msra.mxu0 0.0
        %6806 = vmatprep.subr.mxu0 0.0
        %6807 = vmatpush1.msra.mxu0 0.0
        %6808 = vmatprep.subr.mxu0 0.0
        %6809 = vmatpush1.msra.mxu0 0.0
        %6810 = vmatprep.mubr.f32.mxu0 0.0
        %6811 = vmatmul.mubr.f32.gmra.mrb[0].mxu0 %v6651
        %v6812 = vpop.f32.mrb[0].mxu0
        %v6813 = vadd.f32 0.0, %v6812
        %v6814 = vpop.f32.mrb[0].mxu0
        %6815 = vmatprep.mubr.f32.mxu0 0.0
        %6816 = vmatmul.mubr.f32.gmra.mrb[0].mxu0 %v6654
        %v6817 = vpop.f32.mrb[0].mxu0
        %v6818 = vadd.f32 0.0, %v6817
        %v6819 = vpop.f32.mrb[0].mxu0
        %6820 = vmatprep.mubr.f32.mxu0 0.0
        %6821 = vmatmul.mubr.f32.gmra.mrb[0].mxu0 %v6657
        %v6822 = vpop.f32.mrb[0].mxu0
        %v6823 = vadd.f32 0.0, %v6822
        %v6824 = vpop.f32.mrb[0].mxu0
        %6825 = vmatprep.mubr.f32.mxu0 0.0
        %6826 = vmatmul.mubr.f32.gmra.mrb[0].mxu0 %v6660
        %v6827 = vpop.f32.mrb[0].mxu0
        %v6828 = vadd.f32 0.0, %v6827
        %v6829 = vpop.f32.mrb[0].mxu0
        %6830 = vmatprep.mubr.f32.mxu0 0.0
        %6831 = vmatmul.mubr.f32.gmra.mrb[0].mxu0 %v6663
        %v6832 = vpop.f32.mrb[0].mxu0
        %v6833 = vadd.f32 0.0, %v6832
        %v6834 = vpop.f32.mrb[0].mxu0
        %6835 = vmatprep.mubr.f32.mxu0 0.0
        %6836 = vmatmul.mubr.f32.gmra.mrb[0].mxu0 %v6666
        %v6837 = vpop.f32.mrb[0].mxu0
        %v6838 = vadd.f32 0.0, %v6837
        %v6839 = vpop.f32.mrb[0].mxu0
        %6840 = vmatprep.mubr.f32.mxu0 0.0
        %6841 = vmatmul.mubr.f32.gmra.mrb[0].mxu0 %v6669
        %v6842 = vpop.f32.mrb[0].mxu0
        %v6843 = vadd.f32 0.0, %v6842
        %v6844 = vpop.f32.mrb[0].mxu0
        %6845 = vmatprep.mubr.f32.mxu0 0.0
        %6846 = vmatmul.mubr.f32.gmra.mrb[0].mxu0 %v6672
        %v6847 = vpop.f32.mrb[0].mxu0
        %v6848 = vadd.f32 0.0, %v6847
        %v6849 = vpop.f32.mrb[0].mxu0
        %6850 = vmatprep.mubr.f32.mxu0 0.0
        %6851 = vmatmul.mubr.f32.gmra.mrb[0].mxu0 %v6675
        %v6852 = vpop.f32.mrb[0].mxu0
        %v6853 = vadd.f32 0.0, %v6852
        %v6854 = vpop.f32.mrb[0].mxu0
        %6855 = vmatprep.mubr.f32.mxu0 0.0
        %6856 = vmatmul.mubr.f32.gmra.mrb[0].mxu0 %v6678
        %v6857 = vpop.f32.mrb[0].mxu0
        %v6858 = vadd.f32 0.0, %v6857
        %v6859 = vpop.f32.mrb[0].mxu0
        %6860 = vmatprep.mubr.f32.mxu0 0.0
        %6861 = vmatmul.mubr.f32.gmra.mrb[0].mxu0 %v6681
        %v6862 = vpop.f32.mrb[0].mxu0
        %v6863 = vadd.f32 0.0, %v6862
        %v6864 = vpop.f32.mrb[0].mxu0
        %6865 = vmatprep.mubr.f32.mxu0 0.0
        %6866 = vmatmul.mubr.f32.gmra.mrb[0].mxu0 %v6684
        %v6867 = vpop.f32.mrb[0].mxu0
        %v6868 = vadd.f32 0.0, %v6867
        %v6869 = vpop.f32.mrb[0].mxu0
        %6870 = vmatprep.mubr.f32.mxu0 0.0
        %6871 = vmatmul.mubr.f32.gmra.mrb[0].mxu0 %v6687
        %v6872 = vpop.f32.mrb[0].mxu0
        %v6873 = vadd.f32 0.0, %v6872
        %v6874 = vpop.f32.mrb[0].mxu0
        %6875 = vmatprep.mubr.f32.mxu0 0.0
        %6876 = vmatmul.mubr.f32.gmra.mrb[0].mxu0 %v6690
        %v6877 = vpop.f32.mrb[0].mxu0
        %v6878 = vadd.f32 0.0, %v6877
        %v6879 = vpop.f32.mrb[0].mxu0
        %6880 = vmatprep.mubr.f32.mxu0 0.0
        %6881 = vmatmul.mubr.f32.gmra.mrb[0].mxu0 %v6693
        %v6882 = vpop.f32.mrb[0].mxu0
        %v6883 = vadd.f32 0.0, %v6882
        %v6884 = vpop.f32.mrb[0].mxu0
        %6885 = vmatprep.mubr.f32.mxu0 0.0
        %6886 = vmatmul.mubr.f32.gmra.mrb[0].mxu0 %v6696
        %v6887 = vpop.f32.mrb[0].mxu0
        %v6888 = vadd.f32 0.0, %v6887
        %v6889 = vpop.f32.mrb[0].mxu0
        %6890 = vmatprep.mubr.f32.mxu0 0.0
        %6891 = vmatmul.mubr.f32.gmra.mrb[0].mxu0 %v6699
        %v6892 = vpop.f32.mrb[0].mxu0
        %v6893 = vadd.f32 0.0, %v6892
        %v6894 = vpop.f32.mrb[0].mxu0
        %6895 = vmatprep.mubr.f32.mxu0 0.0
        %6896 = vmatmul.mubr.f32.gmra.mrb[0].mxu0 %v6702
        %v6897 = vpop.f32.mrb[0].mxu0
        %v6898 = vadd.f32 0.0, %v6897
        %v6899 = vpop.f32.mrb[0].mxu0
        %6900 = vmatprep.mubr.f32.mxu0 0.0
        %6901 = vmatmul.mubr.f32.gmra.mrb[0].mxu0 %v6705
        %v6902 = vpop.f32.mrb[0].mxu0
        %v6903 = vadd.f32 0.0, %v6902
        %v6904 = vpop.f32.mrb[0].mxu0
        %6905 = vmatprep.mubr.f32.mxu0 0.0
        %6906 = vmatmul.mubr.f32.gmra.mrb[0].mxu0 %v6708
        %v6907 = vpop.f32.mrb[0].mxu0
        %v6908 = vadd.f32 0.0, %v6907
        %v6909 = vpop.f32.mrb[0].mxu0
        %6910 = vmatprep.mubr.f32.mxu0 0.0
        %6911 = vmatmul.mubr.f32.gmra.mrb[0].mxu0 %v6711
        %v6912 = vpop.f32.mrb[0].mxu0
        %v6913 = vadd.f32 0.0, %v6912
        %v6914 = vpop.f32.mrb[0].mxu0
        %6915 = vmatprep.mubr.f32.mxu0 0.0
        %6916 = vmatmul.mubr.f32.gmra.mrb[0].mxu0 %v6714
        %v6917 = vpop.f32.mrb[0].mxu0
        %v6918 = vadd.f32 0.0, %v6917
        %v6919 = vpop.f32.mrb[0].mxu0
        %6920 = vmatprep.mubr.f32.mxu0 0.0
        %6921 = vmatmul.mubr.f32.gmra.mrb[0].mxu0 %v6717
        %v6922 = vpop.f32.mrb[0].mxu0
        %v6923 = vadd.f32 0.0, %v6922
        %v6924 = vpop.f32.mrb[0].mxu0
        %6925 = vmatprep.mubr.f32.mxu0 0.0
        %6926 = vmatmul.mubr.f32.gmra.mrb[0].mxu0 %v6720
        %v6927 = vpop.f32.mrb[0].mxu0
        %v6928 = vadd.f32 0.0, %v6927
        %v6929 = vpop.f32.mrb[0].mxu0
        %6930 = vmatprep.mubr.f32.mxu0 0.0
        %6931 = vmatmul.mubr.f32.gmra.mrb[0].mxu0 %v6723
        %v6932 = vpop.f32.mrb[0].mxu0
        %v6933 = vadd.f32 0.0, %v6932
        %v6934 = vpop.f32.mrb[0].mxu0
        %6935 = vmatprep.mubr.f32.mxu0 0.0
        %6936 = vmatmul.mubr.f32.gmra.mrb[0].mxu0 %v6726
        %v6937 = vpop.f32.mrb[0].mxu0
        %v6938 = vadd.f32 0.0, %v6937
        %v6939 = vpop.f32.mrb[0].mxu0
        %6940 = vmatprep.mubr.f32.mxu0 0.0
        %6941 = vmatmul.mubr.f32.gmra.mrb[0].mxu0 %v6729
        %v6942 = vpop.f32.mrb[0].mxu0
        %v6943 = vadd.f32 0.0, %v6942
        %v6944 = vpop.f32.mrb[0].mxu0
        %6945 = vmatprep.mubr.f32.mxu0 0.0
        %6946 = vmatmul.mubr.f32.gmra.mrb[0].mxu0 %v6732
        %v6947 = vpop.f32.mrb[0].mxu0
        %v6948 = vadd.f32 0.0, %v6947
        %v6949 = vpop.f32.mrb[0].mxu0
        %6950 = vmatprep.mubr.f32.mxu0 0.0
        %6951 = vmatmul.mubr.f32.gmra.mrb[0].mxu0 %v6735
        %v6952 = vpop.f32.mrb[0].mxu0
        %v6953 = vadd.f32 0.0, %v6952
        %v6954 = vpop.f32.mrb[0].mxu0
        %6955 = vmatprep.mubr.f32.mxu0 0.0
        %6956 = vmatmul.mubr.f32.gmra.mrb[0].mxu0 %v6738
        %v6957 = vpop.f32.mrb[0].mxu0
        %v6958 = vadd.f32 0.0, %v6957
        %v6959 = vpop.f32.mrb[0].mxu0
        %6960 = vmatprep.mubr.f32.mxu0 0.0
        %6961 = vmatmul.mubr.f32.gmra.mrb[0].mxu0 %v6741
        %v6962 = vpop.f32.mrb[0].mxu0
        %v6963 = vadd.f32 0.0, %v6962
        %v6964 = vpop.f32.mrb[0].mxu0
        %6965 = vmatprep.mubr.f32.mxu0 0.0
        %6966 = vmatmul.mubr.f32.gmra.mrb[0].mxu0 %v6744
        %v6967 = vpop.f32.mrb[0].mxu0
        %v6968 = vadd.f32 0.0, %v6967
        %v6969 = vpop.f32.mrb[0].mxu0
        %6970 = vdwg.mxu0
        %v6972 = vsel %vm6310, %v6579, 0
        %v6975 = vsel %vm6310, %v6580, 0
        %v6978 = vsel %vm6310, %v6581, 0
        %v6981 = vsel %vm6310, %v6582, 0
        %v6984 = vsel %vm6310, %v6583, 0
        %v6987 = vsel %vm6310, %v6584, 0
        %v6990 = vsel %vm6310, %v6585, 0
        %v6993 = vsel %vm6310, %v6586, 0
        %v6996 = vsel %vm6310, %v6587, 0
        %v6999 = vsel %vm6310, %v6588, 0
        %v7002 = vsel %vm6310, %v6589, 0
        %v7005 = vsel %vm6310, %v6590, 0
        %v7008 = vsel %vm6310, %v6591, 0
        %v7011 = vsel %vm6310, %v6592, 0
        %v7014 = vsel %vm6310, %v6593, 0
        %v7017 = vsel %vm6310, %v6594, 0
        %v7020 = vsel %vm6310, %v6595, 0
        %v7023 = vsel %vm6310, %v6596, 0
        %v7026 = vsel %vm6310, %v6597, 0
        %v7029 = vsel %vm6310, %v6598, 0
        %v7032 = vsel %vm6310, %v6599, 0
        %v7035 = vsel %vm6310, %v6600, 0
        %v7038 = vsel %vm6310, %v6601, 0
        %v7041 = vsel %vm6310, %v6602, 0
        %v7044 = vsel %vm6310, %v6603, 0
        %v7047 = vsel %vm6310, %v6604, 0
        %v7050 = vsel %vm6310, %v6605, 0
        %v7053 = vsel %vm6310, %v6606, 0
        %v7056 = vsel %vm6310, %v6607, 0
        %v7059 = vsel %vm6310, %v6608, 0
        %v7062 = vsel %vm6310, %v6609, 0
        %v7065 = vsel %vm6310, %v6610, 0
        %7067 = vmatprep.subr.mxu0 0.0
        %7068 = vmatpush1.msra.mxu0 %v6611
        %7069 = vmatprep.subr.mxu0 0.0
        %7070 = vmatpush1.msra.mxu0 %v6612
        %7071 = vmatprep.subr.mxu0 0.0
        %7072 = vmatpush1.msra.mxu0 %v6613
        %7073 = vmatprep.subr.mxu0 0.0
        %7074 = vmatpush1.msra.mxu0 0.0
        %7075 = vmatprep.subr.mxu0 0.0
        %7076 = vmatpush1.msra.mxu0 0.0
        %7077 = vmatprep.subr.mxu0 0.0
        %7078 = vmatpush1.msra.mxu0 0.0
        %7079 = vmatprep.subr.mxu0 0.0
        %7080 = vmatpush1.msra.mxu0 0.0
        %7081 = vmatprep.subr.mxu0 0.0
        %7082 = vmatpush1.msra.mxu0 0.0
        %7083 = vmatprep.subr.mxu0 0.0
        %7084 = vmatpush1.msra.mxu0 0.0
        %7085 = vmatprep.subr.mxu0 0.0
        %7086 = vmatpush1.msra.mxu0 0.0
        %7087 = vmatprep.subr.mxu0 0.0
        %7088 = vmatpush1.msra.mxu0 0.0
        %7089 = vmatprep.subr.mxu0 0.0
        %7090 = vmatpush1.msra.mxu0 0.0
        %7091 = vmatprep.subr.mxu0 0.0
        %7092 = vmatpush1.msra.mxu0 0.0
        %7093 = vmatprep.subr.mxu0 0.0
        %7094 = vmatpush1.msra.mxu0 0.0
        %7095 = vmatprep.subr.mxu0 0.0
        %7096 = vmatpush1.msra.mxu0 0.0
        %7097 = vmatprep.subr.mxu0 0.0
        %7098 = vmatpush1.msra.mxu0 0.0
        %7099 = vmatprep.subr.mxu0 0.0
        %7100 = vmatpush1.msra.mxu0 0.0
        %7101 = vmatprep.subr.mxu0 0.0
        %7102 = vmatpush1.msra.mxu0 0.0
        %7103 = vmatprep.subr.mxu0 0.0
        %7104 = vmatpush1.msra.mxu0 0.0
        %7105 = vmatprep.subr.mxu0 0.0
        %7106 = vmatpush1.msra.mxu0 0.0
        %7107 = vmatprep.subr.mxu0 0.0
        %7108 = vmatpush1.msra.mxu0 0.0
        %7109 = vmatprep.subr.mxu0 0.0
        %7110 = vmatpush1.msra.mxu0 0.0
        %7111 = vmatprep.subr.mxu0 0.0
        %7112 = vmatpush1.msra.mxu0 0.0
        %7113 = vmatprep.subr.mxu0 0.0
        %7114 = vmatpush1.msra.mxu0 0.0
        %7115 = vmatprep.subr.mxu0 0.0
        %7116 = vmatpush1.msra.mxu0 0.0
        %7117 = vmatprep.subr.mxu0 0.0
        %7118 = vmatpush1.msra.mxu0 0.0
        %7119 = vmatprep.subr.mxu0 0.0
        %7120 = vmatpush1.msra.mxu0 0.0
        %7121 = vmatprep.subr.mxu0 0.0
        %7122 = vmatpush1.msra.mxu0 0.0
        %7123 = vmatprep.subr.mxu0 0.0
        %7124 = vmatpush1.msra.mxu0 0.0
        %7125 = vmatprep.subr.mxu0 0.0
        %7126 = vmatpush1.msra.mxu0 0.0
        %7127 = vmatprep.subr.mxu0 0.0
        %7128 = vmatpush1.msra.mxu0 0.0
        %7129 = vmatprep.subr.mxu0 0.0
        %7130 = vmatpush1.msra.mxu0 0.0
        %7131 = vmatprep.mubr.f32.mxu0 0.0
        %7132 = vmatmul.mubr.f32.gmra.mrb[0].mxu0 %v6972
        %v7133 = vpop.f32.mrb[0].mxu0
        %v7134 = vadd.f32 %v6813, %v7133
        %v7135 = vpop.f32.mrb[0].mxu0
        %7136 = vmatprep.mubr.f32.mxu0 0.0
        %7137 = vmatmul.mubr.f32.gmra.mrb[0].mxu0 %v6975
        %v7138 = vpop.f32.mrb[0].mxu0
        %v7139 = vadd.f32 %v6818, %v7138
        %v7140 = vpop.f32.mrb[0].mxu0
        %7141 = vmatprep.mubr.f32.mxu0 0.0
        %7142 = vmatmul.mubr.f32.gmra.mrb[0].mxu0 %v6978
        %v7143 = vpop.f32.mrb[0].mxu0
        %v7144 = vadd.f32 %v6823, %v7143
        %v7145 = vpop.f32.mrb[0].mxu0
        %7146 = vmatprep.mubr.f32.mxu0 0.0
        %7147 = vmatmul.mubr.f32.gmra.mrb[0].mxu0 %v6981
        %v7148 = vpop.f32.mrb[0].mxu0
        %v7149 = vadd.f32 %v6828, %v7148
        %v7150 = vpop.f32.mrb[0].mxu0
        %7151 = vmatprep.mubr.f32.mxu0 0.0
        %7152 = vmatmul.mubr.f32.gmra.mrb[0].mxu0 %v6984
        %v7153 = vpop.f32.mrb[0].mxu0
        %v7154 = vadd.f32 %v6833, %v7153
        %v7155 = vpop.f32.mrb[0].mxu0
        %7156 = vmatprep.mubr.f32.mxu0 0.0
        %7157 = vmatmul.mubr.f32.gmra.mrb[0].mxu0 %v6987
        %v7158 = vpop.f32.mrb[0].mxu0
        %v7159 = vadd.f32 %v6838, %v7158
        %v7160 = vpop.f32.mrb[0].mxu0
        %7161 = vmatprep.mubr.f32.mxu0 0.0
        %7162 = vmatmul.mubr.f32.gmra.mrb[0].mxu0 %v6990
        %v7163 = vpop.f32.mrb[0].mxu0
        %v7164 = vadd.f32 %v6843, %v7163
        %v7165 = vpop.f32.mrb[0].mxu0
        %7166 = vmatprep.mubr.f32.mxu0 0.0
        %7167 = vmatmul.mubr.f32.gmra.mrb[0].mxu0 %v6993
        %v7168 = vpop.f32.mrb[0].mxu0
        %v7169 = vadd.f32 %v6848, %v7168
        %v7170 = vpop.f32.mrb[0].mxu0
        %7171 = vmatprep.mubr.f32.mxu0 0.0
        %7172 = vmatmul.mubr.f32.gmra.mrb[0].mxu0 %v6996
        %v7173 = vpop.f32.mrb[0].mxu0
        %v7174 = vadd.f32 %v6853, %v7173
        %v7175 = vpop.f32.mrb[0].mxu0
        %7176 = vmatprep.mubr.f32.mxu0 0.0
        %7177 = vmatmul.mubr.f32.gmra.mrb[0].mxu0 %v6999
        %v7178 = vpop.f32.mrb[0].mxu0
        %v7179 = vadd.f32 %v6858, %v7178
        %v7180 = vpop.f32.mrb[0].mxu0
        %7181 = vmatprep.mubr.f32.mxu0 0.0
        %7182 = vmatmul.mubr.f32.gmra.mrb[0].mxu0 %v7002
        %v7183 = vpop.f32.mrb[0].mxu0
        %v7184 = vadd.f32 %v6863, %v7183
        %v7185 = vpop.f32.mrb[0].mxu0
        %7186 = vmatprep.mubr.f32.mxu0 0.0
        %7187 = vmatmul.mubr.f32.gmra.mrb[0].mxu0 %v7005
        %v7188 = vpop.f32.mrb[0].mxu0
        %v7189 = vadd.f32 %v6868, %v7188
        %v7190 = vpop.f32.mrb[0].mxu0
        %7191 = vmatprep.mubr.f32.mxu0 0.0
        %7192 = vmatmul.mubr.f32.gmra.mrb[0].mxu0 %v7008
        %v7193 = vpop.f32.mrb[0].mxu0
        %v7194 = vadd.f32 %v6873, %v7193
        %v7195 = vpop.f32.mrb[0].mxu0
        %7196 = vmatprep.mubr.f32.mxu0 0.0
        %7197 = vmatmul.mubr.f32.gmra.mrb[0].mxu0 %v7011
        %v7198 = vpop.f32.mrb[0].mxu0
        %v7199 = vadd.f32 %v6878, %v7198
        %v7200 = vpop.f32.mrb[0].mxu0
        %7201 = vmatprep.mubr.f32.mxu0 0.0
        %7202 = vmatmul.mubr.f32.gmra.mrb[0].mxu0 %v7014
        %v7203 = vpop.f32.mrb[0].mxu0
        %v7204 = vadd.f32 %v6883, %v7203
        %v7205 = vpop.f32.mrb[0].mxu0
        %7206 = vmatprep.mubr.f32.mxu0 0.0
        %7207 = vmatmul.mubr.f32.gmra.mrb[0].mxu0 %v7017
        %v7208 = vpop.f32.mrb[0].mxu0
        %v7209 = vadd.f32 %v6888, %v7208
        %v7210 = vpop.f32.mrb[0].mxu0
        %7211 = vmatprep.mubr.f32.mxu0 0.0
        %7212 = vmatmul.mubr.f32.gmra.mrb[0].mxu0 %v7020
        %v7213 = vpop.f32.mrb[0].mxu0
        %v7214 = vadd.f32 %v6893, %v7213
        %v7215 = vpop.f32.mrb[0].mxu0
        %7216 = vmatprep.mubr.f32.mxu0 0.0
        %7217 = vmatmul.mubr.f32.gmra.mrb[0].mxu0 %v7023
        %v7218 = vpop.f32.mrb[0].mxu0
        %v7219 = vadd.f32 %v6898, %v7218
        %v7220 = vpop.f32.mrb[0].mxu0
        %7221 = vmatprep.mubr.f32.mxu0 0.0
        %7222 = vmatmul.mubr.f32.gmra.mrb[0].mxu0 %v7026
        %v7223 = vpop.f32.mrb[0].mxu0
        %v7224 = vadd.f32 %v6903, %v7223
        %v7225 = vpop.f32.mrb[0].mxu0
        %7226 = vmatprep.mubr.f32.mxu0 0.0
        %7227 = vmatmul.mubr.f32.gmra.mrb[0].mxu0 %v7029
        %v7228 = vpop.f32.mrb[0].mxu0
        %v7229 = vadd.f32 %v6908, %v7228
        %v7230 = vpop.f32.mrb[0].mxu0
        %7231 = vmatprep.mubr.f32.mxu0 0.0
        %7232 = vmatmul.mubr.f32.gmra.mrb[0].mxu0 %v7032
        %v7233 = vpop.f32.mrb[0].mxu0
        %v7234 = vadd.f32 %v6913, %v7233
        %v7235 = vpop.f32.mrb[0].mxu0
        %7236 = vmatprep.mubr.f32.mxu0 0.0
        %7237 = vmatmul.mubr.f32.gmra.mrb[0].mxu0 %v7035
        %v7238 = vpop.f32.mrb[0].mxu0
        %v7239 = vadd.f32 %v6918, %v7238
        %v7240 = vpop.f32.mrb[0].mxu0
        %7241 = vmatprep.mubr.f32.mxu0 0.0
        %7242 = vmatmul.mubr.f32.gmra.mrb[0].mxu0 %v7038
        %v7243 = vpop.f32.mrb[0].mxu0
        %v7244 = vadd.f32 %v6923, %v7243
        %v7245 = vpop.f32.mrb[0].mxu0
        %7246 = vmatprep.mubr.f32.mxu0 0.0
        %7247 = vmatmul.mubr.f32.gmra.mrb[0].mxu0 %v7041
        %v7248 = vpop.f32.mrb[0].mxu0
        %v7249 = vadd.f32 %v6928, %v7248
        %v7250 = vpop.f32.mrb[0].mxu0
        %7251 = vmatprep.mubr.f32.mxu0 0.0
        %7252 = vmatmul.mubr.f32.gmra.mrb[0].mxu0 %v7044
        %v7253 = vpop.f32.mrb[0].mxu0
        %v7254 = vadd.f32 %v6933, %v7253
        %v7255 = vpop.f32.mrb[0].mxu0
        %7256 = vmatprep.mubr.f32.mxu0 0.0
        %7257 = vmatmul.mubr.f32.gmra.mrb[0].mxu0 %v7047
        %v7258 = vpop.f32.mrb[0].mxu0
        %v7259 = vadd.f32 %v6938, %v7258
        %v7260 = vpop.f32.mrb[0].mxu0
        %7261 = vmatprep.mubr.f32.mxu0 0.0
        %7262 = vmatmul.mubr.f32.gmra.mrb[0].mxu0 %v7050
        %v7263 = vpop.f32.mrb[0].mxu0
        %v7264 = vadd.f32 %v6943, %v7263
        %v7265 = vpop.f32.mrb[0].mxu0
        %7266 = vmatprep.mubr.f32.mxu0 0.0
        %7267 = vmatmul.mubr.f32.gmra.mrb[0].mxu0 %v7053
        %v7268 = vpop.f32.mrb[0].mxu0
        %v7269 = vadd.f32 %v6948, %v7268
        %v7270 = vpop.f32.mrb[0].mxu0
        %7271 = vmatprep.mubr.f32.mxu0 0.0
        %7272 = vmatmul.mubr.f32.gmra.mrb[0].mxu0 %v7056
        %v7273 = vpop.f32.mrb[0].mxu0
        %v7274 = vadd.f32 %v6953, %v7273
        %v7275 = vpop.f32.mrb[0].mxu0
        %7276 = vmatprep.mubr.f32.mxu0 0.0
        %7277 = vmatmul.mubr.f32.gmra.mrb[0].mxu0 %v7059
        %v7278 = vpop.f32.mrb[0].mxu0
        %v7279 = vadd.f32 %v6958, %v7278
        %v7280 = vpop.f32.mrb[0].mxu0
        %7281 = vmatprep.mubr.f32.mxu0 0.0
        %7282 = vmatmul.mubr.f32.gmra.mrb[0].mxu0 %v7062
        %v7283 = vpop.f32.mrb[0].mxu0
        %v7284 = vadd.f32 %v6963, %v7283
        %v7285 = vpop.f32.mrb[0].mxu0
        %7286 = vmatprep.mubr.f32.mxu0 0.0
        %7287 = vmatmul.mubr.f32.gmra.mrb[0].mxu0 %v7065
        %v7288 = vpop.f32.mrb[0].mxu0
        %v7289 = vadd.f32 %v6968, %v7288
        %v7290 = vpop.f32.mrb[0].mxu0
        %7291 = vdwg.mxu0
        %v7292 = vld [vmem:[#allocation4 + $0x9] sm:$0xff]
        %v7293 = vld [vmem:[#allocation4 + $0x11] sm:$0xff]
        %v7294 = vld [vmem:[#allocation4 + $0x29] sm:$0xff]
        %v7295 = vld [vmem:[#allocation4 + $0x31] sm:$0xff]
        %v7296 = vld [vmem:[#allocation4 + $0x49] sm:$0xff]
        %v7297 = vld [vmem:[#allocation4 + $0x51] sm:$0xff]
        %v7298 = vld [vmem:[#allocation4 + $0x69] sm:$0xff]
        %v7299 = vld [vmem:[#allocation4 + $0x71] sm:$0xff]
        %v7300 = vld [vmem:[#allocation4 + $0x89] sm:$0xff]
        %v7301 = vld [vmem:[#allocation4 + $0x91] sm:$0xff]
        %v7302 = vld [vmem:[#allocation4 + $0xa9] sm:$0xff]
        %v7303 = vld [vmem:[#allocation4 + $0xb1] sm:$0xff]
        %v7304 = vld [vmem:[#allocation4 + $0xc9] sm:$0xff]
        %v7305 = vld [vmem:[#allocation4 + $0xd1] sm:$0xff]
        %v7306 = vld [vmem:[#allocation4 + $0xe9] sm:$0xff]
        %v7307 = vld [vmem:[#allocation4 + $0xf1] sm:$0xff]
        %v7308 = vld [vmem:[#allocation4 + $0x109] sm:$0xff]
        %v7309 = vld [vmem:[#allocation4 + $0x111] sm:$0xff]
        %v7310 = vld [vmem:[#allocation4 + $0x129] sm:$0xff]
        %v7311 = vld [vmem:[#allocation4 + $0x131] sm:$0xff]
        %v7312 = vld [vmem:[#allocation4 + $0x149] sm:$0xff]
        %v7313 = vld [vmem:[#allocation4 + $0x151] sm:$0xff]
        %v7314 = vld [vmem:[#allocation4 + $0x169] sm:$0xff]
        %v7315 = vld [vmem:[#allocation4 + $0x171] sm:$0xff]
        %v7316 = vld [vmem:[#allocation4 + $0x189] sm:$0xff]
        %v7317 = vld [vmem:[#allocation4 + $0x191] sm:$0xff]
        %v7318 = vld [vmem:[#allocation4 + $0x1a9] sm:$0xff]
        %v7319 = vld [vmem:[#allocation4 + $0x1b1] sm:$0xff]
        %v7320 = vld [vmem:[#allocation4 + $0x1c9] sm:$0xff]
        %v7321 = vld [vmem:[#allocation4 + $0x1d1] sm:$0xff]
        %v7322 = vld [vmem:[#allocation4 + $0x1e9] sm:$0xff]
        %v7323 = vld [vmem:[#allocation4 + $0x1f1] sm:$0xff]
        %s7324 = scalar_lea.vmem [#allocation6], 48
        %v7325 = vld [vmem:[%s7324] sm:$0xff]
        %v7326 = vld [vmem:[%s7324 + $0x8] sm:$0xff]
        %v7327 = vld [vmem:[%s7324 + $0x10] sm:$0xff]
        %v7329 = vsel %vm6310, %v7292, 0
        %v7332 = vsel %vm6310, %v7293, 0
        %v7335 = vsel %vm6310, %v7294, 0
        %v7338 = vsel %vm6310, %v7295, 0
        %v7341 = vsel %vm6310, %v7296, 0
        %v7344 = vsel %vm6310, %v7297, 0
        %v7347 = vsel %vm6310, %v7298, 0
        %v7350 = vsel %vm6310, %v7299, 0
        %v7353 = vsel %vm6310, %v7300, 0
        %v7356 = vsel %vm6310, %v7301, 0
        %v7359 = vsel %vm6310, %v7302, 0
        %v7362 = vsel %vm6310, %v7303, 0
        %v7365 = vsel %vm6310, %v7304, 0
        %v7368 = vsel %vm6310, %v7305, 0
        %v7371 = vsel %vm6310, %v7306, 0
        %v7374 = vsel %vm6310, %v7307, 0
        %v7377 = vsel %vm6310, %v7308, 0
        %v7380 = vsel %vm6310, %v7309, 0
        %v7383 = vsel %vm6310, %v7310, 0
        %v7386 = vsel %vm6310, %v7311, 0
        %v7389 = vsel %vm6310, %v7312, 0
        %v7392 = vsel %vm6310, %v7313, 0
        %v7395 = vsel %vm6310, %v7314, 0
        %v7398 = vsel %vm6310, %v7315, 0
        %v7401 = vsel %vm6310, %v7316, 0
        %v7404 = vsel %vm6310, %v7317, 0
        %v7407 = vsel %vm6310, %v7318, 0
        %v7410 = vsel %vm6310, %v7319, 0
        %v7413 = vsel %vm6310, %v7320, 0
        %v7416 = vsel %vm6310, %v7321, 0
        %v7419 = vsel %vm6310, %v7322, 0
        %v7422 = vsel %vm6310, %v7323, 0
        %7424 = vmatprep.subr.mxu0 0.0
        %7425 = vmatpush1.msra.mxu0 %v7325
        %7426 = vmatprep.subr.mxu0 0.0
        %7427 = vmatpush1.msra.mxu0 %v7326
        %7428 = vmatprep.subr.mxu0 0.0
        %7429 = vmatpush1.msra.mxu0 %v7327
        %7430 = vmatprep.subr.mxu0 0.0
        %7431 = vmatpush1.msra.mxu0 0.0
        %7432 = vmatprep.subr.mxu0 0.0
        %7433 = vmatpush1.msra.mxu0 0.0
        %7434 = vmatprep.subr.mxu0 0.0
        %7435 = vmatpush1.msra.mxu0 0.0
        %7436 = vmatprep.subr.mxu0 0.0
        %7437 = vmatpush1.msra.mxu0 0.0
        %7438 = vmatprep.subr.mxu0 0.0
        %7439 = vmatpush1.msra.mxu0 0.0
        %7440 = vmatprep.subr.mxu0 0.0
        %7441 = vmatpush1.msra.mxu0 0.0
        %7442 = vmatprep.subr.mxu0 0.0
        %7443 = vmatpush1.msra.mxu0 0.0
        %7444 = vmatprep.subr.mxu0 0.0
        %7445 = vmatpush1.msra.mxu0 0.0
        %7446 = vmatprep.subr.mxu0 0.0
        %7447 = vmatpush1.msra.mxu0 0.0
        %7448 = vmatprep.subr.mxu0 0.0
        %7449 = vmatpush1.msra.mxu0 0.0
        %7450 = vmatprep.subr.mxu0 0.0
        %7451 = vmatpush1.msra.mxu0 0.0
        %7452 = vmatprep.subr.mxu0 0.0
        %7453 = vmatpush1.msra.mxu0 0.0
        %7454 = vmatprep.subr.mxu0 0.0
        %7455 = vmatpush1.msra.mxu0 0.0
        %7456 = vmatprep.subr.mxu0 0.0
        %7457 = vmatpush1.msra.mxu0 0.0
        %7458 = vmatprep.subr.mxu0 0.0
        %7459 = vmatpush1.msra.mxu0 0.0
        %7460 = vmatprep.subr.mxu0 0.0
        %7461 = vmatpush1.msra.mxu0 0.0
        %7462 = vmatprep.subr.mxu0 0.0
        %7463 = vmatpush1.msra.mxu0 0.0
        %7464 = vmatprep.subr.mxu0 0.0
        %7465 = vmatpush1.msra.mxu0 0.0
        %7466 = vmatprep.subr.mxu0 0.0
        %7467 = vmatpush1.msra.mxu0 0.0
        %7468 = vmatprep.subr.mxu0 0.0
        %7469 = vmatpush1.msra.mxu0 0.0
        %7470 = vmatprep.subr.mxu0 0.0
        %7471 = vmatpush1.msra.mxu0 0.0
        %7472 = vmatprep.subr.mxu0 0.0
        %7473 = vmatpush1.msra.mxu0 0.0
        %7474 = vmatprep.subr.mxu0 0.0
        %7475 = vmatpush1.msra.mxu0 0.0
        %7476 = vmatprep.subr.mxu0 0.0
        %7477 = vmatpush1.msra.mxu0 0.0
        %7478 = vmatprep.subr.mxu0 0.0
        %7479 = vmatpush1.msra.mxu0 0.0
        %7480 = vmatprep.subr.mxu0 0.0
        %7481 = vmatpush1.msra.mxu0 0.0
        %7482 = vmatprep.subr.mxu0 0.0
        %7483 = vmatpush1.msra.mxu0 0.0
        %7484 = vmatprep.subr.mxu0 0.0
        %7485 = vmatpush1.msra.mxu0 0.0
        %7486 = vmatprep.subr.mxu0 0.0
        %7487 = vmatpush1.msra.mxu0 0.0
        %7488 = vmatprep.mubr.f32.mxu0 0.0
        %7489 = vmatmul.mubr.f32.gmra.mrb[0].mxu0 %v7329
        %v7490 = vpop.f32.mrb[0].mxu0
        %v7491 = vadd.f32 0.0, %v7490
        %v7492 = vpop.f32.mrb[0].mxu0
        %7493 = vmatprep.mubr.f32.mxu0 0.0
        %7494 = vmatmul.mubr.f32.gmra.mrb[0].mxu0 %v7332
        %v7495 = vpop.f32.mrb[0].mxu0
        %v7496 = vadd.f32 0.0, %v7495
        %v7497 = vpop.f32.mrb[0].mxu0
        %7498 = vmatprep.mubr.f32.mxu0 0.0
        %7499 = vmatmul.mubr.f32.gmra.mrb[0].mxu0 %v7335
        %v7500 = vpop.f32.mrb[0].mxu0
        %v7501 = vadd.f32 0.0, %v7500
        %v7502 = vpop.f32.mrb[0].mxu0
        %7503 = vmatprep.mubr.f32.mxu0 0.0
        %7504 = vmatmul.mubr.f32.gmra.mrb[0].mxu0 %v7338
        %v7505 = vpop.f32.mrb[0].mxu0
        %v7506 = vadd.f32 0.0, %v7505
        %v7507 = vpop.f32.mrb[0].mxu0
        %7508 = vmatprep.mubr.f32.mxu0 0.0
        %7509 = vmatmul.mubr.f32.gmra.mrb[0].mxu0 %v7341
        %v7510 = vpop.f32.mrb[0].mxu0
        %v7511 = vadd.f32 0.0, %v7510
        %v7512 = vpop.f32.mrb[0].mxu0
        %7513 = vmatprep.mubr.f32.mxu0 0.0
        %7514 = vmatmul.mubr.f32.gmra.mrb[0].mxu0 %v7344
        %v7515 = vpop.f32.mrb[0].mxu0
        %v7516 = vadd.f32 0.0, %v7515
        %v7517 = vpop.f32.mrb[0].mxu0
        %7518 = vmatprep.mubr.f32.mxu0 0.0
        %7519 = vmatmul.mubr.f32.gmra.mrb[0].mxu0 %v7347
        %v7520 = vpop.f32.mrb[0].mxu0
        %v7521 = vadd.f32 0.0, %v7520
        %v7522 = vpop.f32.mrb[0].mxu0
        %7523 = vmatprep.mubr.f32.mxu0 0.0
        %7524 = vmatmul.mubr.f32.gmra.mrb[0].mxu0 %v7350
        %v7525 = vpop.f32.mrb[0].mxu0
        %v7526 = vadd.f32 0.0, %v7525
        %v7527 = vpop.f32.mrb[0].mxu0
        %7528 = vmatprep.mubr.f32.mxu0 0.0
        %7529 = vmatmul.mubr.f32.gmra.mrb[0].mxu0 %v7353
        %v7530 = vpop.f32.mrb[0].mxu0
        %v7531 = vadd.f32 0.0, %v7530
        %v7532 = vpop.f32.mrb[0].mxu0
        %7533 = vmatprep.mubr.f32.mxu0 0.0
        %7534 = vmatmul.mubr.f32.gmra.mrb[0].mxu0 %v7356
        %v7535 = vpop.f32.mrb[0].mxu0
        %v7536 = vadd.f32 0.0, %v7535
        %v7537 = vpop.f32.mrb[0].mxu0
        %7538 = vmatprep.mubr.f32.mxu0 0.0
        %7539 = vmatmul.mubr.f32.gmra.mrb[0].mxu0 %v7359
        %v7540 = vpop.f32.mrb[0].mxu0
        %v7541 = vadd.f32 0.0, %v7540
        %v7542 = vpop.f32.mrb[0].mxu0
        %7543 = vmatprep.mubr.f32.mxu0 0.0
        %7544 = vmatmul.mubr.f32.gmra.mrb[0].mxu0 %v7362
        %v7545 = vpop.f32.mrb[0].mxu0
        %v7546 = vadd.f32 0.0, %v7545
        %v7547 = vpop.f32.mrb[0].mxu0
        %7548 = vmatprep.mubr.f32.mxu0 0.0
        %7549 = vmatmul.mubr.f32.gmra.mrb[0].mxu0 %v7365
        %v7550 = vpop.f32.mrb[0].mxu0
        %v7551 = vadd.f32 0.0, %v7550
        %v7552 = vpop.f32.mrb[0].mxu0
        %7553 = vmatprep.mubr.f32.mxu0 0.0
        %7554 = vmatmul.mubr.f32.gmra.mrb[0].mxu0 %v7368
        %v7555 = vpop.f32.mrb[0].mxu0
        %v7556 = vadd.f32 0.0, %v7555
        %v7557 = vpop.f32.mrb[0].mxu0
        %7558 = vmatprep.mubr.f32.mxu0 0.0
        %7559 = vmatmul.mubr.f32.gmra.mrb[0].mxu0 %v7371
        %v7560 = vpop.f32.mrb[0].mxu0
        %v7561 = vadd.f32 0.0, %v7560
        %v7562 = vpop.f32.mrb[0].mxu0
        %7563 = vmatprep.mubr.f32.mxu0 0.0
        %7564 = vmatmul.mubr.f32.gmra.mrb[0].mxu0 %v7374
        %v7565 = vpop.f32.mrb[0].mxu0
        %v7566 = vadd.f32 0.0, %v7565
        %v7567 = vpop.f32.mrb[0].mxu0
        %7568 = vmatprep.mubr.f32.mxu0 0.0
        %7569 = vmatmul.mubr.f32.gmra.mrb[0].mxu0 %v7377
        %v7570 = vpop.f32.mrb[0].mxu0
        %v7571 = vadd.f32 0.0, %v7570
        %v7572 = vpop.f32.mrb[0].mxu0
        %7573 = vmatprep.mubr.f32.mxu0 0.0
        %7574 = vmatmul.mubr.f32.gmra.mrb[0].mxu0 %v7380
        %v7575 = vpop.f32.mrb[0].mxu0
        %v7576 = vadd.f32 0.0, %v7575
        %v7577 = vpop.f32.mrb[0].mxu0
        %7578 = vmatprep.mubr.f32.mxu0 0.0
        %7579 = vmatmul.mubr.f32.gmra.mrb[0].mxu0 %v7383
        %v7580 = vpop.f32.mrb[0].mxu0
        %v7581 = vadd.f32 0.0, %v7580
        %v7582 = vpop.f32.mrb[0].mxu0
        %7583 = vmatprep.mubr.f32.mxu0 0.0
        %7584 = vmatmul.mubr.f32.gmra.mrb[0].mxu0 %v7386
        %v7585 = vpop.f32.mrb[0].mxu0
        %v7586 = vadd.f32 0.0, %v7585
        %v7587 = vpop.f32.mrb[0].mxu0
        %7588 = vmatprep.mubr.f32.mxu0 0.0
        %7589 = vmatmul.mubr.f32.gmra.mrb[0].mxu0 %v7389
        %v7590 = vpop.f32.mrb[0].mxu0
        %v7591 = vadd.f32 0.0, %v7590
        %v7592 = vpop.f32.mrb[0].mxu0
        %7593 = vmatprep.mubr.f32.mxu0 0.0
        %7594 = vmatmul.mubr.f32.gmra.mrb[0].mxu0 %v7392
        %v7595 = vpop.f32.mrb[0].mxu0
        %v7596 = vadd.f32 0.0, %v7595
        %v7597 = vpop.f32.mrb[0].mxu0
        %7598 = vmatprep.mubr.f32.mxu0 0.0
        %7599 = vmatmul.mubr.f32.gmra.mrb[0].mxu0 %v7395
        %v7600 = vpop.f32.mrb[0].mxu0
        %v7601 = vadd.f32 0.0, %v7600
        %v7602 = vpop.f32.mrb[0].mxu0
        %7603 = vmatprep.mubr.f32.mxu0 0.0
        %7604 = vmatmul.mubr.f32.gmra.mrb[0].mxu0 %v7398
        %v7605 = vpop.f32.mrb[0].mxu0
        %v7606 = vadd.f32 0.0, %v7605
        %v7607 = vpop.f32.mrb[0].mxu0
        %7608 = vmatprep.mubr.f32.mxu0 0.0
        %7609 = vmatmul.mubr.f32.gmra.mrb[0].mxu0 %v7401
        %v7610 = vpop.f32.mrb[0].mxu0
        %v7611 = vadd.f32 0.0, %v7610
        %v7612 = vpop.f32.mrb[0].mxu0
        %7613 = vmatprep.mubr.f32.mxu0 0.0
        %7614 = vmatmul.mubr.f32.gmra.mrb[0].mxu0 %v7404
        %v7615 = vpop.f32.mrb[0].mxu0
        %v7616 = vadd.f32 0.0, %v7615
        %v7617 = vpop.f32.mrb[0].mxu0
        %7618 = vmatprep.mubr.f32.mxu0 0.0
        %7619 = vmatmul.mubr.f32.gmra.mrb[0].mxu0 %v7407
        %v7620 = vpop.f32.mrb[0].mxu0
        %v7621 = vadd.f32 0.0, %v7620
        %v7622 = vpop.f32.mrb[0].mxu0
        %7623 = vmatprep.mubr.f32.mxu0 0.0
        %7624 = vmatmul.mubr.f32.gmra.mrb[0].mxu0 %v7410
        %v7625 = vpop.f32.mrb[0].mxu0
        %v7626 = vadd.f32 0.0, %v7625
        %v7627 = vpop.f32.mrb[0].mxu0
        %7628 = vmatprep.mubr.f32.mxu0 0.0
        %7629 = vmatmul.mubr.f32.gmra.mrb[0].mxu0 %v7413
        %v7630 = vpop.f32.mrb[0].mxu0
        %v7631 = vadd.f32 0.0, %v7630
        %v7632 = vpop.f32.mrb[0].mxu0
        %7633 = vmatprep.mubr.f32.mxu0 0.0
        %7634 = vmatmul.mubr.f32.gmra.mrb[0].mxu0 %v7416
        %v7635 = vpop.f32.mrb[0].mxu0
        %v7636 = vadd.f32 0.0, %v7635
        %v7637 = vpop.f32.mrb[0].mxu0
        %7638 = vmatprep.mubr.f32.mxu0 0.0
        %7639 = vmatmul.mubr.f32.gmra.mrb[0].mxu0 %v7419
        %v7640 = vpop.f32.mrb[0].mxu0
        %v7641 = vadd.f32 0.0, %v7640
        %v7642 = vpop.f32.mrb[0].mxu0
        %7643 = vmatprep.mubr.f32.mxu0 0.0
        %7644 = vmatmul.mubr.f32.gmra.mrb[0].mxu0 %v7422
        %v7645 = vpop.f32.mrb[0].mxu0
        %v7646 = vadd.f32 0.0, %v7645
        %v7647 = vpop.f32.mrb[0].mxu0
        %7648 = vdwg.mxu0
        %v7649 = vadd.f32 %v7134, %v7491
        %v7650 = vadd.f32 %v7139, %v7496
        %v7651 = vadd.f32 %v7144, %v7501
        %v7652 = vadd.f32 %v7149, %v7506
        %v7653 = vadd.f32 %v7154, %v7511
        %v7654 = vadd.f32 %v7159, %v7516
        %v7655 = vadd.f32 %v7164, %v7521
        %v7656 = vadd.f32 %v7169, %v7526
        %v7657 = vadd.f32 %v7174, %v7531
        %v7658 = vadd.f32 %v7179, %v7536
        %v7659 = vadd.f32 %v7184, %v7541
        %v7660 = vadd.f32 %v7189, %v7546
        %v7661 = vadd.f32 %v7194, %v7551
        %v7662 = vadd.f32 %v7199, %v7556
        %v7663 = vadd.f32 %v7204, %v7561
        %v7664 = vadd.f32 %v7209, %v7566
        %v7665 = vadd.f32 %v7214, %v7571
        %v7666 = vadd.f32 %v7219, %v7576
        %v7667 = vadd.f32 %v7224, %v7581
        %v7668 = vadd.f32 %v7229, %v7586
        %v7669 = vadd.f32 %v7234, %v7591
        %v7670 = vadd.f32 %v7239, %v7596
        %v7671 = vadd.f32 %v7244, %v7601
        %v7672 = vadd.f32 %v7249, %v7606
        %v7673 = vadd.f32 %v7254, %v7611
        %v7674 = vadd.f32 %v7259, %v7616
        %v7675 = vadd.f32 %v7264, %v7621
        %v7676 = vadd.f32 %v7269, %v7626
        %v7677 = vadd.f32 %v7274, %v7631
        %v7678 = vadd.f32 %v7279, %v7636
        %v7679 = vadd.f32 %v7284, %v7641
        %v7680 = vadd.f32 %v7289, %v7646
        %v7681 = vld [vmem:[%s6384 + $0x7] sm:$0xff]
        %v7682 = vld [vmem:[%s6384 + $0xf] sm:$0xff]
        %v7683 = vld [vmem:[%s6384 + $0x27] sm:$0xff]
        %v7684 = vld [vmem:[%s6384 + $0x2f] sm:$0xff]
        %v7685 = vld [vmem:[%s6384 + $0x47] sm:$0xff]
        %v7686 = vld [vmem:[%s6384 + $0x4f] sm:$0xff]
        %v7687 = vld [vmem:[%s6384 + $0x67] sm:$0xff]
        %v7688 = vld [vmem:[%s6384 + $0x6f] sm:$0xff]
        %v7689 = vld [vmem:[%s6384 + $0x87] sm:$0xff]
        %v7690 = vld [vmem:[%s6384 + $0x8f] sm:$0xff]
        %v7691 = vld [vmem:[%s6384 + $0xa7] sm:$0xff]
        %v7692 = vld [vmem:[%s6384 + $0xaf] sm:$0xff]
        %v7693 = vld [vmem:[%s6384 + $0xc7] sm:$0xff]
        %v7694 = vld [vmem:[%s6384 + $0xcf] sm:$0xff]
        %v7695 = vld [vmem:[%s6384 + $0xe7] sm:$0xff]
        %v7696 = vld [vmem:[%s6384 + $0xef] sm:$0xff]
        %v7697 = vld [vmem:[%s6384 + $0x107] sm:$0xff]
        %v7698 = vld [vmem:[%s6384 + $0x10f] sm:$0xff]
        %v7699 = vld [vmem:[%s6384 + $0x127] sm:$0xff]
        %v7700 = vld [vmem:[%s6384 + $0x12f] sm:$0xff]
        %v7701 = vld [vmem:[%s6384 + $0x147] sm:$0xff]
        %v7702 = vld [vmem:[%s6384 + $0x14f] sm:$0xff]
        %v7703 = vld [vmem:[%s6384 + $0x167] sm:$0xff]
        %v7704 = vld [vmem:[%s6384 + $0x16f] sm:$0xff]
        %v7705 = vld [vmem:[%s6384 + $0x187] sm:$0xff]
        %v7706 = vld [vmem:[%s6384 + $0x18f] sm:$0xff]
        %v7707 = vld [vmem:[%s6384 + $0x1a7] sm:$0xff]
        %v7708 = vld [vmem:[%s6384 + $0x1af] sm:$0xff]
        %v7709 = vld [vmem:[%s6384 + $0x1c7] sm:$0xff]
        %v7710 = vld [vmem:[%s6384 + $0x1cf] sm:$0xff]
        %v7711 = vld [vmem:[%s6384 + $0x1e7] sm:$0xff]
        %v7712 = vld [vmem:[%s6384 + $0x1ef] sm:$0xff]
        %s7713 = scalar_lea.vmem [#allocation6], 72
        %v7714 = vld [vmem:[%s7713] sm:$0xff]
        %v7715 = vld [vmem:[%s7713 + $0x8] sm:$0xff]
        %v7716 = vld [vmem:[%s7713 + $0x10] sm:$0xff]
        %v7718 = vsel %vm6310, %v7681, 0
        %v7721 = vsel %vm6310, %v7682, 0
        %v7724 = vsel %vm6310, %v7683, 0
        %v7727 = vsel %vm6310, %v7684, 0
        %v7730 = vsel %vm6310, %v7685, 0
        %v7733 = vsel %vm6310, %v7686, 0
        %v7736 = vsel %vm6310, %v7687, 0
        %v7739 = vsel %vm6310, %v7688, 0
        %v7742 = vsel %vm6310, %v7689, 0
        %v7745 = vsel %vm6310, %v7690, 0
        %v7748 = vsel %vm6310, %v7691, 0
        %v7751 = vsel %vm6310, %v7692, 0
        %v7754 = vsel %vm6310, %v7693, 0
        %v7757 = vsel %vm6310, %v7694, 0
        %v7760 = vsel %vm6310, %v7695, 0
        %v7763 = vsel %vm6310, %v7696, 0
        %v7766 = vsel %vm6310, %v7697, 0
        %v7769 = vsel %vm6310, %v7698, 0
        %v7772 = vsel %vm6310, %v7699, 0
        %v7775 = vsel %vm6310, %v7700, 0
        %v7778 = vsel %vm6310, %v7701, 0
        %v7781 = vsel %vm6310, %v7702, 0
        %v7784 = vsel %vm6310, %v7703, 0
        %v7787 = vsel %vm6310, %v7704, 0
        %v7790 = vsel %vm6310, %v7705, 0
        %v7793 = vsel %vm6310, %v7706, 0
        %v7796 = vsel %vm6310, %v7707, 0
        %v7799 = vsel %vm6310, %v7708, 0
        %v7802 = vsel %vm6310, %v7709, 0
        %v7805 = vsel %vm6310, %v7710, 0
        %v7808 = vsel %vm6310, %v7711, 0
        %v7811 = vsel %vm6310, %v7712, 0
        %7813 = vmatprep.subr.mxu0 0.0
        %7814 = vmatpush1.msra.mxu0 %v7714
        %7815 = vmatprep.subr.mxu0 0.0
        %7816 = vmatpush1.msra.mxu0 %v7715
        %7817 = vmatprep.subr.mxu0 0.0
        %7818 = vmatpush1.msra.mxu0 %v7716
        %7819 = vmatprep.subr.mxu0 0.0
        %7820 = vmatpush1.msra.mxu0 0.0
        %7821 = vmatprep.subr.mxu0 0.0
        %7822 = vmatpush1.msra.mxu0 0.0
        %7823 = vmatprep.subr.mxu0 0.0
        %7824 = vmatpush1.msra.mxu0 0.0
        %7825 = vmatprep.subr.mxu0 0.0
        %7826 = vmatpush1.msra.mxu0 0.0
        %7827 = vmatprep.subr.mxu0 0.0
        %7828 = vmatpush1.msra.mxu0 0.0
        %7829 = vmatprep.subr.mxu0 0.0
        %7830 = vmatpush1.msra.mxu0 0.0
        %7831 = vmatprep.subr.mxu0 0.0
        %7832 = vmatpush1.msra.mxu0 0.0
        %7833 = vmatprep.subr.mxu0 0.0
        %7834 = vmatpush1.msra.mxu0 0.0
        %7835 = vmatprep.subr.mxu0 0.0
        %7836 = vmatpush1.msra.mxu0 0.0
        %7837 = vmatprep.subr.mxu0 0.0
        %7838 = vmatpush1.msra.mxu0 0.0
        %7839 = vmatprep.subr.mxu0 0.0
        %7840 = vmatpush1.msra.mxu0 0.0
        %7841 = vmatprep.subr.mxu0 0.0
        %7842 = vmatpush1.msra.mxu0 0.0
        %7843 = vmatprep.subr.mxu0 0.0
        %7844 = vmatpush1.msra.mxu0 0.0
        %7845 = vmatprep.subr.mxu0 0.0
        %7846 = vmatpush1.msra.mxu0 0.0
        %7847 = vmatprep.subr.mxu0 0.0
        %7848 = vmatpush1.msra.mxu0 0.0
        %7849 = vmatprep.subr.mxu0 0.0
        %7850 = vmatpush1.msra.mxu0 0.0
        %7851 = vmatprep.subr.mxu0 0.0
        %7852 = vmatpush1.msra.mxu0 0.0
        %7853 = vmatprep.subr.mxu0 0.0
        %7854 = vmatpush1.msra.mxu0 0.0
        %7855 = vmatprep.subr.mxu0 0.0
        %7856 = vmatpush1.msra.mxu0 0.0
        %7857 = vmatprep.subr.mxu0 0.0
        %7858 = vmatpush1.msra.mxu0 0.0
        %7859 = vmatprep.subr.mxu0 0.0
        %7860 = vmatpush1.msra.mxu0 0.0
        %7861 = vmatprep.subr.mxu0 0.0
        %7862 = vmatpush1.msra.mxu0 0.0
        %7863 = vmatprep.subr.mxu0 0.0
        %7864 = vmatpush1.msra.mxu0 0.0
        %7865 = vmatprep.subr.mxu0 0.0
        %7866 = vmatpush1.msra.mxu0 0.0
        %7867 = vmatprep.subr.mxu0 0.0
        %7868 = vmatpush1.msra.mxu0 0.0
        %7869 = vmatprep.subr.mxu0 0.0
        %7870 = vmatpush1.msra.mxu0 0.0
        %7871 = vmatprep.subr.mxu0 0.0
        %7872 = vmatpush1.msra.mxu0 0.0
        %7873 = vmatprep.subr.mxu0 0.0
        %7874 = vmatpush1.msra.mxu0 0.0
        %7875 = vmatprep.subr.mxu0 0.0
        %7876 = vmatpush1.msra.mxu0 0.0
        %7877 = vmatprep.mubr.f32.mxu0 0.0
        %7878 = vmatmul.mubr.f32.gmra.mrb[0].mxu0 %v7718
        %v7879 = vpop.f32.mrb[0].mxu0
        %v7880 = vadd.f32 0.0, %v7879
        %v7881 = vpop.f32.mrb[0].mxu0
        %7882 = vmatprep.mubr.f32.mxu0 0.0
        %7883 = vmatmul.mubr.f32.gmra.mrb[0].mxu0 %v7721
        %v7884 = vpop.f32.mrb[0].mxu0
        %v7885 = vadd.f32 0.0, %v7884
        %v7886 = vpop.f32.mrb[0].mxu0
        %7887 = vmatprep.mubr.f32.mxu0 0.0
        %7888 = vmatmul.mubr.f32.gmra.mrb[0].mxu0 %v7724
        %v7889 = vpop.f32.mrb[0].mxu0
        %v7890 = vadd.f32 0.0, %v7889
        %v7891 = vpop.f32.mrb[0].mxu0
        %7892 = vmatprep.mubr.f32.mxu0 0.0
        %7893 = vmatmul.mubr.f32.gmra.mrb[0].mxu0 %v7727
        %v7894 = vpop.f32.mrb[0].mxu0
        %v7895 = vadd.f32 0.0, %v7894
        %v7896 = vpop.f32.mrb[0].mxu0
        %7897 = vmatprep.mubr.f32.mxu0 0.0
        %7898 = vmatmul.mubr.f32.gmra.mrb[0].mxu0 %v7730
        %v7899 = vpop.f32.mrb[0].mxu0
        %v7900 = vadd.f32 0.0, %v7899
        %v7901 = vpop.f32.mrb[0].mxu0
        %7902 = vmatprep.mubr.f32.mxu0 0.0
        %7903 = vmatmul.mubr.f32.gmra.mrb[0].mxu0 %v7733
        %v7904 = vpop.f32.mrb[0].mxu0
        %v7905 = vadd.f32 0.0, %v7904
        %v7906 = vpop.f32.mrb[0].mxu0
        %7907 = vmatprep.mubr.f32.mxu0 0.0
        %7908 = vmatmul.mubr.f32.gmra.mrb[0].mxu0 %v7736
        %v7909 = vpop.f32.mrb[0].mxu0
        %v7910 = vadd.f32 0.0, %v7909
        %v7911 = vpop.f32.mrb[0].mxu0
        %7912 = vmatprep.mubr.f32.mxu0 0.0
        %7913 = vmatmul.mubr.f32.gmra.mrb[0].mxu0 %v7739
        %v7914 = vpop.f32.mrb[0].mxu0
        %v7915 = vadd.f32 0.0, %v7914
        %v7916 = vpop.f32.mrb[0].mxu0
        %7917 = vmatprep.mubr.f32.mxu0 0.0
        %7918 = vmatmul.mubr.f32.gmra.mrb[0].mxu0 %v7742
        %v7919 = vpop.f32.mrb[0].mxu0
        %v7920 = vadd.f32 0.0, %v7919
        %v7921 = vpop.f32.mrb[0].mxu0
        %7922 = vmatprep.mubr.f32.mxu0 0.0
        %7923 = vmatmul.mubr.f32.gmra.mrb[0].mxu0 %v7745
        %v7924 = vpop.f32.mrb[0].mxu0
        %v7925 = vadd.f32 0.0, %v7924
        %v7926 = vpop.f32.mrb[0].mxu0
        %7927 = vmatprep.mubr.f32.mxu0 0.0
        %7928 = vmatmul.mubr.f32.gmra.mrb[0].mxu0 %v7748
        %v7929 = vpop.f32.mrb[0].mxu0
        %v7930 = vadd.f32 0.0, %v7929
        %v7931 = vpop.f32.mrb[0].mxu0
        %7932 = vmatprep.mubr.f32.mxu0 0.0
        %7933 = vmatmul.mubr.f32.gmra.mrb[0].mxu0 %v7751
        %v7934 = vpop.f32.mrb[0].mxu0
        %v7935 = vadd.f32 0.0, %v7934
        %v7936 = vpop.f32.mrb[0].mxu0
        %7937 = vmatprep.mubr.f32.mxu0 0.0
        %7938 = vmatmul.mubr.f32.gmra.mrb[0].mxu0 %v7754
        %v7939 = vpop.f32.mrb[0].mxu0
        %v7940 = vadd.f32 0.0, %v7939
        %v7941 = vpop.f32.mrb[0].mxu0
        %7942 = vmatprep.mubr.f32.mxu0 0.0
        %7943 = vmatmul.mubr.f32.gmra.mrb[0].mxu0 %v7757
        %v7944 = vpop.f32.mrb[0].mxu0
        %v7945 = vadd.f32 0.0, %v7944
        %v7946 = vpop.f32.mrb[0].mxu0
        %7947 = vmatprep.mubr.f32.mxu0 0.0
        %7948 = vmatmul.mubr.f32.gmra.mrb[0].mxu0 %v7760
        %v7949 = vpop.f32.mrb[0].mxu0
        %v7950 = vadd.f32 0.0, %v7949
        %v7951 = vpop.f32.mrb[0].mxu0
        %7952 = vmatprep.mubr.f32.mxu0 0.0
        %7953 = vmatmul.mubr.f32.gmra.mrb[0].mxu0 %v7763
        %v7954 = vpop.f32.mrb[0].mxu0
        %v7955 = vadd.f32 0.0, %v7954
        %v7956 = vpop.f32.mrb[0].mxu0
        %7957 = vmatprep.mubr.f32.mxu0 0.0
        %7958 = vmatmul.mubr.f32.gmra.mrb[0].mxu0 %v7766
        %v7959 = vpop.f32.mrb[0].mxu0
        %v7960 = vadd.f32 0.0, %v7959
        %v7961 = vpop.f32.mrb[0].mxu0
        %7962 = vmatprep.mubr.f32.mxu0 0.0
        %7963 = vmatmul.mubr.f32.gmra.mrb[0].mxu0 %v7769
        %v7964 = vpop.f32.mrb[0].mxu0
        %v7965 = vadd.f32 0.0, %v7964
        %v7966 = vpop.f32.mrb[0].mxu0
        %7967 = vmatprep.mubr.f32.mxu0 0.0
        %7968 = vmatmul.mubr.f32.gmra.mrb[0].mxu0 %v7772
        %v7969 = vpop.f32.mrb[0].mxu0
        %v7970 = vadd.f32 0.0, %v7969
        %v7971 = vpop.f32.mrb[0].mxu0
        %7972 = vmatprep.mubr.f32.mxu0 0.0
        %7973 = vmatmul.mubr.f32.gmra.mrb[0].mxu0 %v7775
        %v7974 = vpop.f32.mrb[0].mxu0
        %v7975 = vadd.f32 0.0, %v7974
        %v7976 = vpop.f32.mrb[0].mxu0
        %7977 = vmatprep.mubr.f32.mxu0 0.0
        %7978 = vmatmul.mubr.f32.gmra.mrb[0].mxu0 %v7778
        %v7979 = vpop.f32.mrb[0].mxu0
        %v7980 = vadd.f32 0.0, %v7979
        %v7981 = vpop.f32.mrb[0].mxu0
        %7982 = vmatprep.mubr.f32.mxu0 0.0
        %7983 = vmatmul.mubr.f32.gmra.mrb[0].mxu0 %v7781
        %v7984 = vpop.f32.mrb[0].mxu0
        %v7985 = vadd.f32 0.0, %v7984
        %v7986 = vpop.f32.mrb[0].mxu0
        %7987 = vmatprep.mubr.f32.mxu0 0.0
        %7988 = vmatmul.mubr.f32.gmra.mrb[0].mxu0 %v7784
        %v7989 = vpop.f32.mrb[0].mxu0
        %v7990 = vadd.f32 0.0, %v7989
        %v7991 = vpop.f32.mrb[0].mxu0
        %7992 = vmatprep.mubr.f32.mxu0 0.0
        %7993 = vmatmul.mubr.f32.gmra.mrb[0].mxu0 %v7787
        %v7994 = vpop.f32.mrb[0].mxu0
        %v7995 = vadd.f32 0.0, %v7994
        %v7996 = vpop.f32.mrb[0].mxu0
        %7997 = vmatprep.mubr.f32.mxu0 0.0
        %7998 = vmatmul.mubr.f32.gmra.mrb[0].mxu0 %v7790
        %v7999 = vpop.f32.mrb[0].mxu0
        %v8000 = vadd.f32 0.0, %v7999
        %v8001 = vpop.f32.mrb[0].mxu0
        %8002 = vmatprep.mubr.f32.mxu0 0.0
        %8003 = vmatmul.mubr.f32.gmra.mrb[0].mxu0 %v7793
        %v8004 = vpop.f32.mrb[0].mxu0
        %v8005 = vadd.f32 0.0, %v8004
        %v8006 = vpop.f32.mrb[0].mxu0
        %8007 = vmatprep.mubr.f32.mxu0 0.0
        %8008 = vmatmul.mubr.f32.gmra.mrb[0].mxu0 %v7796
        %v8009 = vpop.f32.mrb[0].mxu0
        %v8010 = vadd.f32 0.0, %v8009
        %v8011 = vpop.f32.mrb[0].mxu0
        %8012 = vmatprep.mubr.f32.mxu0 0.0
        %8013 = vmatmul.mubr.f32.gmra.mrb[0].mxu0 %v7799
        %v8014 = vpop.f32.mrb[0].mxu0
        %v8015 = vadd.f32 0.0, %v8014
        %v8016 = vpop.f32.mrb[0].mxu0
        %8017 = vmatprep.mubr.f32.mxu0 0.0
        %8018 = vmatmul.mubr.f32.gmra.mrb[0].mxu0 %v7802
        %v8019 = vpop.f32.mrb[0].mxu0
        %v8020 = vadd.f32 0.0, %v8019
        %v8021 = vpop.f32.mrb[0].mxu0
        %8022 = vmatprep.mubr.f32.mxu0 0.0
        %8023 = vmatmul.mubr.f32.gmra.mrb[0].mxu0 %v7805
        %v8024 = vpop.f32.mrb[0].mxu0
        %v8025 = vadd.f32 0.0, %v8024
        %v8026 = vpop.f32.mrb[0].mxu0
        %8027 = vmatprep.mubr.f32.mxu0 0.0
        %8028 = vmatmul.mubr.f32.gmra.mrb[0].mxu0 %v7808
        %v8029 = vpop.f32.mrb[0].mxu0
        %v8030 = vadd.f32 0.0, %v8029
        %v8031 = vpop.f32.mrb[0].mxu0
        %8032 = vmatprep.mubr.f32.mxu0 0.0
        %8033 = vmatmul.mubr.f32.gmra.mrb[0].mxu0 %v7811
        %v8034 = vpop.f32.mrb[0].mxu0
        %v8035 = vadd.f32 0.0, %v8034
        %v8036 = vpop.f32.mrb[0].mxu0
        %8037 = vdwg.mxu0
        %v8038 = vadd.f32 %v7649, %v7880
        %v8039 = vadd.f32 %v7650, %v7885
        %v8040 = vadd.f32 %v7651, %v7890
        %v8041 = vadd.f32 %v7652, %v7895
        %v8042 = vadd.f32 %v7653, %v7900
        %v8043 = vadd.f32 %v7654, %v7905
        %v8044 = vadd.f32 %v7655, %v7910
        %v8045 = vadd.f32 %v7656, %v7915
        %v8046 = vadd.f32 %v7657, %v7920
        %v8047 = vadd.f32 %v7658, %v7925
        %v8048 = vadd.f32 %v7659, %v7930
        %v8049 = vadd.f32 %v7660, %v7935
        %v8050 = vadd.f32 %v7661, %v7940
        %v8051 = vadd.f32 %v7662, %v7945
        %v8052 = vadd.f32 %v7663, %v7950
        %v8053 = vadd.f32 %v7664, %v7955
        %v8054 = vadd.f32 %v7665, %v7960
        %v8055 = vadd.f32 %v7666, %v7965
        %v8056 = vadd.f32 %v7667, %v7970
        %v8057 = vadd.f32 %v7668, %v7975
        %v8058 = vadd.f32 %v7669, %v7980
        %v8059 = vadd.f32 %v7670, %v7985
        %v8060 = vadd.f32 %v7671, %v7990
        %v8061 = vadd.f32 %v7672, %v7995
        %v8062 = vadd.f32 %v7673, %v8000
        %v8063 = vadd.f32 %v7674, %v8005
        %v8064 = vadd.f32 %v7675, %v8010
        %v8065 = vadd.f32 %v7676, %v8015
        %v8066 = vadd.f32 %v7677, %v8020
        %v8067 = vadd.f32 %v7678, %v8025
        %v8068 = vadd.f32 %v7679, %v8030
        %v8069 = vadd.f32 %v7680, %v8035
        %v8070 = vld [vmem:[%s6384 + $0x8] sm:$0xff]
        %v8071 = vld [vmem:[%s6384 + $0x10] sm:$0xff]
        %v8072 = vld [vmem:[%s6384 + $0x28] sm:$0xff]
        %v8073 = vld [vmem:[%s6384 + $0x30] sm:$0xff]
        %v8074 = vld [vmem:[%s6384 + $0x48] sm:$0xff]
        %v8075 = vld [vmem:[%s6384 + $0x50] sm:$0xff]
        %v8076 = vld [vmem:[%s6384 + $0x68] sm:$0xff]
        %v8077 = vld [vmem:[%s6384 + $0x70] sm:$0xff]
        %v8078 = vld [vmem:[%s6384 + $0x88] sm:$0xff]
        %v8079 = vld [vmem:[%s6384 + $0x90] sm:$0xff]
        %v8080 = vld [vmem:[%s6384 + $0xa8] sm:$0xff]
        %v8081 = vld [vmem:[%s6384 + $0xb0] sm:$0xff]
        %v8082 = vld [vmem:[%s6384 + $0xc8] sm:$0xff]
        %v8083 = vld [vmem:[%s6384 + $0xd0] sm:$0xff]
        %v8084 = vld [vmem:[%s6384 + $0xe8] sm:$0xff]
        %v8085 = vld [vmem:[%s6384 + $0xf0] sm:$0xff]
        %v8086 = vld [vmem:[%s6384 + $0x108] sm:$0xff]
        %v8087 = vld [vmem:[%s6384 + $0x110] sm:$0xff]
        %v8088 = vld [vmem:[%s6384 + $0x128] sm:$0xff]
        %v8089 = vld [vmem:[%s6384 + $0x130] sm:$0xff]
        %v8090 = vld [vmem:[%s6384 + $0x148] sm:$0xff]
        %v8091 = vld [vmem:[%s6384 + $0x150] sm:$0xff]
        %v8092 = vld [vmem:[%s6384 + $0x168] sm:$0xff]
        %v8093 = vld [vmem:[%s6384 + $0x170] sm:$0xff]
        %v8094 = vld [vmem:[%s6384 + $0x188] sm:$0xff]
        %v8095 = vld [vmem:[%s6384 + $0x190] sm:$0xff]
        %v8096 = vld [vmem:[%s6384 + $0x1a8] sm:$0xff]
        %v8097 = vld [vmem:[%s6384 + $0x1b0] sm:$0xff]
        %v8098 = vld [vmem:[%s6384 + $0x1c8] sm:$0xff]
        %v8099 = vld [vmem:[%s6384 + $0x1d0] sm:$0xff]
        %v8100 = vld [vmem:[%s6384 + $0x1e8] sm:$0xff]
        %v8101 = vld [vmem:[%s6384 + $0x1f0] sm:$0xff]
        %s8102 = scalar_lea.vmem [#allocation6], 96
        %v8103 = vld [vmem:[%s8102] sm:$0xff]
        %v8104 = vld [vmem:[%s8102 + $0x8] sm:$0xff]
        %v8105 = vld [vmem:[%s8102 + $0x10] sm:$0xff]
        %v8107 = vsel %vm6310, %v8070, 0
        %v8110 = vsel %vm6310, %v8071, 0
        %v8113 = vsel %vm6310, %v8072, 0
        %v8116 = vsel %vm6310, %v8073, 0
        %v8119 = vsel %vm6310, %v8074, 0
        %v8122 = vsel %vm6310, %v8075, 0
        %v8125 = vsel %vm6310, %v8076, 0
        %v8128 = vsel %vm6310, %v8077, 0
        %v8131 = vsel %vm6310, %v8078, 0
        %v8134 = vsel %vm6310, %v8079, 0
        %v8137 = vsel %vm6310, %v8080, 0
        %v8140 = vsel %vm6310, %v8081, 0
        %v8143 = vsel %vm6310, %v8082, 0
        %v8146 = vsel %vm6310, %v8083, 0
        %v8149 = vsel %vm6310, %v8084, 0
        %v8152 = vsel %vm6310, %v8085, 0
        %v8155 = vsel %vm6310, %v8086, 0
        %v8158 = vsel %vm6310, %v8087, 0
        %v8161 = vsel %vm6310, %v8088, 0
        %v8164 = vsel %vm6310, %v8089, 0
        %v8167 = vsel %vm6310, %v8090, 0
        %v8170 = vsel %vm6310, %v8091, 0
        %v8173 = vsel %vm6310, %v8092, 0
        %v8176 = vsel %vm6310, %v8093, 0
        %v8179 = vsel %vm6310, %v8094, 0
        %v8182 = vsel %vm6310, %v8095, 0
        %v8185 = vsel %vm6310, %v8096, 0
        %v8188 = vsel %vm6310, %v8097, 0
        %v8191 = vsel %vm6310, %v8098, 0
        %v8194 = vsel %vm6310, %v8099, 0
        %v8197 = vsel %vm6310, %v8100, 0
        %v8200 = vsel %vm6310, %v8101, 0
        %8202 = vmatprep.subr.mxu0 0.0
        %8203 = vmatpush1.msra.mxu0 %v8103
        %8204 = vmatprep.subr.mxu0 0.0
        %8205 = vmatpush1.msra.mxu0 %v8104
        %8206 = vmatprep.subr.mxu0 0.0
        %8207 = vmatpush1.msra.mxu0 %v8105
        %8208 = vmatprep.subr.mxu0 0.0
        %8209 = vmatpush1.msra.mxu0 0.0
        %8210 = vmatprep.subr.mxu0 0.0
        %8211 = vmatpush1.msra.mxu0 0.0
        %8212 = vmatprep.subr.mxu0 0.0
        %8213 = vmatpush1.msra.mxu0 0.0
        %8214 = vmatprep.subr.mxu0 0.0
        %8215 = vmatpush1.msra.mxu0 0.0
        %8216 = vmatprep.subr.mxu0 0.0
        %8217 = vmatpush1.msra.mxu0 0.0
        %8218 = vmatprep.subr.mxu0 0.0
        %8219 = vmatpush1.msra.mxu0 0.0
        %8220 = vmatprep.subr.mxu0 0.0
        %8221 = vmatpush1.msra.mxu0 0.0
        %8222 = vmatprep.subr.mxu0 0.0
        %8223 = vmatpush1.msra.mxu0 0.0
        %8224 = vmatprep.subr.mxu0 0.0
        %8225 = vmatpush1.msra.mxu0 0.0
        %8226 = vmatprep.subr.mxu0 0.0
        %8227 = vmatpush1.msra.mxu0 0.0
        %8228 = vmatprep.subr.mxu0 0.0
        %8229 = vmatpush1.msra.mxu0 0.0
        %8230 = vmatprep.subr.mxu0 0.0
        %8231 = vmatpush1.msra.mxu0 0.0
        %8232 = vmatprep.subr.mxu0 0.0
        %8233 = vmatpush1.msra.mxu0 0.0
        %8234 = vmatprep.subr.mxu0 0.0
        %8235 = vmatpush1.msra.mxu0 0.0
        %8236 = vmatprep.subr.mxu0 0.0
        %8237 = vmatpush1.msra.mxu0 0.0
        %8238 = vmatprep.subr.mxu0 0.0
        %8239 = vmatpush1.msra.mxu0 0.0
        %8240 = vmatprep.subr.mxu0 0.0
        %8241 = vmatpush1.msra.mxu0 0.0
        %8242 = vmatprep.subr.mxu0 0.0
        %8243 = vmatpush1.msra.mxu0 0.0
        %8244 = vmatprep.subr.mxu0 0.0
        %8245 = vmatpush1.msra.mxu0 0.0
        %8246 = vmatprep.subr.mxu0 0.0
        %8247 = vmatpush1.msra.mxu0 0.0
        %8248 = vmatprep.subr.mxu0 0.0
        %8249 = vmatpush1.msra.mxu0 0.0
        %8250 = vmatprep.subr.mxu0 0.0
        %8251 = vmatpush1.msra.mxu0 0.0
        %8252 = vmatprep.subr.mxu0 0.0
        %8253 = vmatpush1.msra.mxu0 0.0
        %8254 = vmatprep.subr.mxu0 0.0
        %8255 = vmatpush1.msra.mxu0 0.0
        %8256 = vmatprep.subr.mxu0 0.0
        %8257 = vmatpush1.msra.mxu0 0.0
        %8258 = vmatprep.subr.mxu0 0.0
        %8259 = vmatpush1.msra.mxu0 0.0
        %8260 = vmatprep.subr.mxu0 0.0
        %8261 = vmatpush1.msra.mxu0 0.0
        %8262 = vmatprep.subr.mxu0 0.0
        %8263 = vmatpush1.msra.mxu0 0.0
        %8264 = vmatprep.subr.mxu0 0.0
        %8265 = vmatpush1.msra.mxu0 0.0
        %8266 = vmatprep.mubr.f32.mxu0 0.0
        %8267 = vmatmul.mubr.f32.gmra.mrb[0].mxu0 %v8107
        %v8268 = vpop.f32.mrb[0].mxu0
        %v8269 = vadd.f32 0.0, %v8268
        %v8270 = vpop.f32.mrb[0].mxu0
        %8271 = vmatprep.mubr.f32.mxu0 0.0
        %8272 = vmatmul.mubr.f32.gmra.mrb[0].mxu0 %v8110
        %v8273 = vpop.f32.mrb[0].mxu0
        %v8274 = vadd.f32 0.0, %v8273
        %v8275 = vpop.f32.mrb[0].mxu0
        %8276 = vmatprep.mubr.f32.mxu0 0.0
        %8277 = vmatmul.mubr.f32.gmra.mrb[0].mxu0 %v8113
        %v8278 = vpop.f32.mrb[0].mxu0
        %v8279 = vadd.f32 0.0, %v8278
        %v8280 = vpop.f32.mrb[0].mxu0
        %8281 = vmatprep.mubr.f32.mxu0 0.0
        %8282 = vmatmul.mubr.f32.gmra.mrb[0].mxu0 %v8116
        %v8283 = vpop.f32.mrb[0].mxu0
        %v8284 = vadd.f32 0.0, %v8283
        %v8285 = vpop.f32.mrb[0].mxu0
        %8286 = vmatprep.mubr.f32.mxu0 0.0
        %8287 = vmatmul.mubr.f32.gmra.mrb[0].mxu0 %v8119
        %v8288 = vpop.f32.mrb[0].mxu0
        %v8289 = vadd.f32 0.0, %v8288
        %v8290 = vpop.f32.mrb[0].mxu0
        %8291 = vmatprep.mubr.f32.mxu0 0.0
        %8292 = vmatmul.mubr.f32.gmra.mrb[0].mxu0 %v8122
        %v8293 = vpop.f32.mrb[0].mxu0
        %v8294 = vadd.f32 0.0, %v8293
        %v8295 = vpop.f32.mrb[0].mxu0
        %8296 = vmatprep.mubr.f32.mxu0 0.0
        %8297 = vmatmul.mubr.f32.gmra.mrb[0].mxu0 %v8125
        %v8298 = vpop.f32.mrb[0].mxu0
        %v8299 = vadd.f32 0.0, %v8298
        %v8300 = vpop.f32.mrb[0].mxu0
        %8301 = vmatprep.mubr.f32.mxu0 0.0
        %8302 = vmatmul.mubr.f32.gmra.mrb[0].mxu0 %v8128
        %v8303 = vpop.f32.mrb[0].mxu0
        %v8304 = vadd.f32 0.0, %v8303
        %v8305 = vpop.f32.mrb[0].mxu0
        %8306 = vmatprep.mubr.f32.mxu0 0.0
        %8307 = vmatmul.mubr.f32.gmra.mrb[0].mxu0 %v8131
        %v8308 = vpop.f32.mrb[0].mxu0
        %v8309 = vadd.f32 0.0, %v8308
        %v8310 = vpop.f32.mrb[0].mxu0
        %8311 = vmatprep.mubr.f32.mxu0 0.0
        %8312 = vmatmul.mubr.f32.gmra.mrb[0].mxu0 %v8134
        %v8313 = vpop.f32.mrb[0].mxu0
        %v8314 = vadd.f32 0.0, %v8313
        %v8315 = vpop.f32.mrb[0].mxu0
        %8316 = vmatprep.mubr.f32.mxu0 0.0
        %8317 = vmatmul.mubr.f32.gmra.mrb[0].mxu0 %v8137
        %v8318 = vpop.f32.mrb[0].mxu0
        %v8319 = vadd.f32 0.0, %v8318
        %v8320 = vpop.f32.mrb[0].mxu0
        %8321 = vmatprep.mubr.f32.mxu0 0.0
        %8322 = vmatmul.mubr.f32.gmra.mrb[0].mxu0 %v8140
        %v8323 = vpop.f32.mrb[0].mxu0
        %v8324 = vadd.f32 0.0, %v8323
        %v8325 = vpop.f32.mrb[0].mxu0
        %8326 = vmatprep.mubr.f32.mxu0 0.0
        %8327 = vmatmul.mubr.f32.gmra.mrb[0].mxu0 %v8143
        %v8328 = vpop.f32.mrb[0].mxu0
        %v8329 = vadd.f32 0.0, %v8328
        %v8330 = vpop.f32.mrb[0].mxu0
        %8331 = vmatprep.mubr.f32.mxu0 0.0
        %8332 = vmatmul.mubr.f32.gmra.mrb[0].mxu0 %v8146
        %v8333 = vpop.f32.mrb[0].mxu0
        %v8334 = vadd.f32 0.0, %v8333
        %v8335 = vpop.f32.mrb[0].mxu0
        %8336 = vmatprep.mubr.f32.mxu0 0.0
        %8337 = vmatmul.mubr.f32.gmra.mrb[0].mxu0 %v8149
        %v8338 = vpop.f32.mrb[0].mxu0
        %v8339 = vadd.f32 0.0, %v8338
        %v8340 = vpop.f32.mrb[0].mxu0
        %8341 = vmatprep.mubr.f32.mxu0 0.0
        %8342 = vmatmul.mubr.f32.gmra.mrb[0].mxu0 %v8152
        %v8343 = vpop.f32.mrb[0].mxu0
        %v8344 = vadd.f32 0.0, %v8343
        %v8345 = vpop.f32.mrb[0].mxu0
        %8346 = vmatprep.mubr.f32.mxu0 0.0
        %8347 = vmatmul.mubr.f32.gmra.mrb[0].mxu0 %v8155
        %v8348 = vpop.f32.mrb[0].mxu0
        %v8349 = vadd.f32 0.0, %v8348
        %v8350 = vpop.f32.mrb[0].mxu0
        %8351 = vmatprep.mubr.f32.mxu0 0.0
        %8352 = vmatmul.mubr.f32.gmra.mrb[0].mxu0 %v8158
        %v8353 = vpop.f32.mrb[0].mxu0
        %v8354 = vadd.f32 0.0, %v8353
        %v8355 = vpop.f32.mrb[0].mxu0
        %8356 = vmatprep.mubr.f32.mxu0 0.0
        %8357 = vmatmul.mubr.f32.gmra.mrb[0].mxu0 %v8161
        %v8358 = vpop.f32.mrb[0].mxu0
        %v8359 = vadd.f32 0.0, %v8358
        %v8360 = vpop.f32.mrb[0].mxu0
        %8361 = vmatprep.mubr.f32.mxu0 0.0
        %8362 = vmatmul.mubr.f32.gmra.mrb[0].mxu0 %v8164
        %v8363 = vpop.f32.mrb[0].mxu0
        %v8364 = vadd.f32 0.0, %v8363
        %v8365 = vpop.f32.mrb[0].mxu0
        %8366 = vmatprep.mubr.f32.mxu0 0.0
        %8367 = vmatmul.mubr.f32.gmra.mrb[0].mxu0 %v8167
        %v8368 = vpop.f32.mrb[0].mxu0
        %v8369 = vadd.f32 0.0, %v8368
        %v8370 = vpop.f32.mrb[0].mxu0
        %8371 = vmatprep.mubr.f32.mxu0 0.0
        %8372 = vmatmul.mubr.f32.gmra.mrb[0].mxu0 %v8170
        %v8373 = vpop.f32.mrb[0].mxu0
        %v8374 = vadd.f32 0.0, %v8373
        %v8375 = vpop.f32.mrb[0].mxu0
        %8376 = vmatprep.mubr.f32.mxu0 0.0
        %8377 = vmatmul.mubr.f32.gmra.mrb[0].mxu0 %v8173
        %v8378 = vpop.f32.mrb[0].mxu0
        %v8379 = vadd.f32 0.0, %v8378
        %v8380 = vpop.f32.mrb[0].mxu0
        %8381 = vmatprep.mubr.f32.mxu0 0.0
        %8382 = vmatmul.mubr.f32.gmra.mrb[0].mxu0 %v8176
        %v8383 = vpop.f32.mrb[0].mxu0
        %v8384 = vadd.f32 0.0, %v8383
        %v8385 = vpop.f32.mrb[0].mxu0
        %8386 = vmatprep.mubr.f32.mxu0 0.0
        %8387 = vmatmul.mubr.f32.gmra.mrb[0].mxu0 %v8179
        %v8388 = vpop.f32.mrb[0].mxu0
        %v8389 = vadd.f32 0.0, %v8388
        %v8390 = vpop.f32.mrb[0].mxu0
        %8391 = vmatprep.mubr.f32.mxu0 0.0
        %8392 = vmatmul.mubr.f32.gmra.mrb[0].mxu0 %v8182
        %v8393 = vpop.f32.mrb[0].mxu0
        %v8394 = vadd.f32 0.0, %v8393
        %v8395 = vpop.f32.mrb[0].mxu0
        %8396 = vmatprep.mubr.f32.mxu0 0.0
        %8397 = vmatmul.mubr.f32.gmra.mrb[0].mxu0 %v8185
        %v8398 = vpop.f32.mrb[0].mxu0
        %v8399 = vadd.f32 0.0, %v8398
        %v8400 = vpop.f32.mrb[0].mxu0
        %8401 = vmatprep.mubr.f32.mxu0 0.0
        %8402 = vmatmul.mubr.f32.gmra.mrb[0].mxu0 %v8188
        %v8403 = vpop.f32.mrb[0].mxu0
        %v8404 = vadd.f32 0.0, %v8403
        %v8405 = vpop.f32.mrb[0].mxu0
        %8406 = vmatprep.mubr.f32.mxu0 0.0
        %8407 = vmatmul.mubr.f32.gmra.mrb[0].mxu0 %v8191
        %v8408 = vpop.f32.mrb[0].mxu0
        %v8409 = vadd.f32 0.0, %v8408
        %v8410 = vpop.f32.mrb[0].mxu0
        %8411 = vmatprep.mubr.f32.mxu0 0.0
        %8412 = vmatmul.mubr.f32.gmra.mrb[0].mxu0 %v8194
        %v8413 = vpop.f32.mrb[0].mxu0
        %v8414 = vadd.f32 0.0, %v8413
        %v8415 = vpop.f32.mrb[0].mxu0
        %8416 = vmatprep.mubr.f32.mxu0 0.0
        %8417 = vmatmul.mubr.f32.gmra.mrb[0].mxu0 %v8197
        %v8418 = vpop.f32.mrb[0].mxu0
        %v8419 = vadd.f32 0.0, %v8418
        %v8420 = vpop.f32.mrb[0].mxu0
        %8421 = vmatprep.mubr.f32.mxu0 0.0
        %8422 = vmatmul.mubr.f32.gmra.mrb[0].mxu0 %v8200
        %v8423 = vpop.f32.mrb[0].mxu0
        %v8424 = vadd.f32 0.0, %v8423
        %v8425 = vpop.f32.mrb[0].mxu0
        %8426 = vdwg.mxu0
        %v8427 = vadd.f32 %v8038, %v8269
        %v8428 = vadd.f32 %v8039, %v8274
        %v8429 = vadd.f32 %v8040, %v8279
        %v8430 = vadd.f32 %v8041, %v8284
        %v8431 = vadd.f32 %v8042, %v8289
        %v8432 = vadd.f32 %v8043, %v8294
        %v8433 = vadd.f32 %v8044, %v8299
        %v8434 = vadd.f32 %v8045, %v8304
        %v8435 = vadd.f32 %v8046, %v8309
        %v8436 = vadd.f32 %v8047, %v8314
        %v8437 = vadd.f32 %v8048, %v8319
        %v8438 = vadd.f32 %v8049, %v8324
        %v8439 = vadd.f32 %v8050, %v8329
        %v8440 = vadd.f32 %v8051, %v8334
        %v8441 = vadd.f32 %v8052, %v8339
        %v8442 = vadd.f32 %v8053, %v8344
        %v8443 = vadd.f32 %v8054, %v8349
        %v8444 = vadd.f32 %v8055, %v8354
        %v8445 = vadd.f32 %v8056, %v8359
        %v8446 = vadd.f32 %v8057, %v8364
        %v8447 = vadd.f32 %v8058, %v8369
        %v8448 = vadd.f32 %v8059, %v8374
        %v8449 = vadd.f32 %v8060, %v8379
        %v8450 = vadd.f32 %v8061, %v8384
        %v8451 = vadd.f32 %v8062, %v8389
        %v8452 = vadd.f32 %v8063, %v8394
        %v8453 = vadd.f32 %v8064, %v8399
        %v8454 = vadd.f32 %v8065, %v8404
        %v8455 = vadd.f32 %v8066, %v8409
        %v8456 = vadd.f32 %v8067, %v8414
        %v8457 = vadd.f32 %v8068, %v8419
        %v8458 = vadd.f32 %v8069, %v8424
        %v8459 = vld [vmem:[%s6384 + $0x9] sm:$0xff]
        %v8460 = vld [vmem:[%s6384 + $0x11] sm:$0xff]
        %v8461 = vld [vmem:[%s6384 + $0x29] sm:$0xff]
        %v8462 = vld [vmem:[%s6384 + $0x31] sm:$0xff]
        %v8463 = vld [vmem:[%s6384 + $0x49] sm:$0xff]
        %v8464 = vld [vmem:[%s6384 + $0x51] sm:$0xff]
        %v8465 = vld [vmem:[%s6384 + $0x69] sm:$0xff]
        %v8466 = vld [vmem:[%s6384 + $0x71] sm:$0xff]
        %v8467 = vld [vmem:[%s6384 + $0x89] sm:$0xff]
        %v8468 = vld [vmem:[%s6384 + $0x91] sm:$0xff]
        %v8469 = vld [vmem:[%s6384 + $0xa9] sm:$0xff]
        %v8470 = vld [vmem:[%s6384 + $0xb1] sm:$0xff]
        %v8471 = vld [vmem:[%s6384 + $0xc9] sm:$0xff]
        %v8472 = vld [vmem:[%s6384 + $0xd1] sm:$0xff]
        %v8473 = vld [vmem:[%s6384 + $0xe9] sm:$0xff]
        %v8474 = vld [vmem:[%s6384 + $0xf1] sm:$0xff]
        %v8475 = vld [vmem:[%s6384 + $0x109] sm:$0xff]
        %v8476 = vld [vmem:[%s6384 + $0x111] sm:$0xff]
        %v8477 = vld [vmem:[%s6384 + $0x129] sm:$0xff]
        %v8478 = vld [vmem:[%s6384 + $0x131] sm:$0xff]
        %v8479 = vld [vmem:[%s6384 + $0x149] sm:$0xff]
        %v8480 = vld [vmem:[%s6384 + $0x151] sm:$0xff]
        %v8481 = vld [vmem:[%s6384 + $0x169] sm:$0xff]
        %v8482 = vld [vmem:[%s6384 + $0x171] sm:$0xff]
        %v8483 = vld [vmem:[%s6384 + $0x189] sm:$0xff]
        %v8484 = vld [vmem:[%s6384 + $0x191] sm:$0xff]
        %v8485 = vld [vmem:[%s6384 + $0x1a9] sm:$0xff]
        %v8486 = vld [vmem:[%s6384 + $0x1b1] sm:$0xff]
        %v8487 = vld [vmem:[%s6384 + $0x1c9] sm:$0xff]
        %v8488 = vld [vmem:[%s6384 + $0x1d1] sm:$0xff]
        %v8489 = vld [vmem:[%s6384 + $0x1e9] sm:$0xff]
        %v8490 = vld [vmem:[%s6384 + $0x1f1] sm:$0xff]
        %s8491 = scalar_lea.vmem [#allocation6], 120
        %v8492 = vld [vmem:[%s8491] sm:$0xff]
        %v8493 = vld [vmem:[%s8491 + $0x8] sm:$0xff]
        %v8494 = vld [vmem:[%s8491 + $0x10] sm:$0xff]
        %v8496 = vsel %vm6310, %v8459, 0
        %v8499 = vsel %vm6310, %v8460, 0
        %v8502 = vsel %vm6310, %v8461, 0
        %v8505 = vsel %vm6310, %v8462, 0
        %v8508 = vsel %vm6310, %v8463, 0
        %v8511 = vsel %vm6310, %v8464, 0
        %v8514 = vsel %vm6310, %v8465, 0
        %v8517 = vsel %vm6310, %v8466, 0
        %v8520 = vsel %vm6310, %v8467, 0
        %v8523 = vsel %vm6310, %v8468, 0
        %v8526 = vsel %vm6310, %v8469, 0
        %v8529 = vsel %vm6310, %v8470, 0
        %v8532 = vsel %vm6310, %v8471, 0
        %v8535 = vsel %vm6310, %v8472, 0
        %v8538 = vsel %vm6310, %v8473, 0
        %v8541 = vsel %vm6310, %v8474, 0
        %v8544 = vsel %vm6310, %v8475, 0
        %v8547 = vsel %vm6310, %v8476, 0
        %v8550 = vsel %vm6310, %v8477, 0
        %v8553 = vsel %vm6310, %v8478, 0
        %v8556 = vsel %vm6310, %v8479, 0
        %v8559 = vsel %vm6310, %v8480, 0
        %v8562 = vsel %vm6310, %v8481, 0
        %v8565 = vsel %vm6310, %v8482, 0
        %v8568 = vsel %vm6310, %v8483, 0
        %v8571 = vsel %vm6310, %v8484, 0
        %v8574 = vsel %vm6310, %v8485, 0
        %v8577 = vsel %vm6310, %v8486, 0
        %v8580 = vsel %vm6310, %v8487, 0
        %v8583 = vsel %vm6310, %v8488, 0
        %v8586 = vsel %vm6310, %v8489, 0
        %v8589 = vsel %vm6310, %v8490, 0
        %8591 = vmatprep.subr.mxu0 0.0
        %8592 = vmatpush1.msra.mxu0 %v8492
        %8593 = vmatprep.subr.mxu0 0.0
        %8594 = vmatpush1.msra.mxu0 %v8493
        %8595 = vmatprep.subr.mxu0 0.0
        %8596 = vmatpush1.msra.mxu0 %v8494
        %8597 = vmatprep.subr.mxu0 0.0
        %8598 = vmatpush1.msra.mxu0 0.0
        %8599 = vmatprep.subr.mxu0 0.0
        %8600 = vmatpush1.msra.mxu0 0.0
        %8601 = vmatprep.subr.mxu0 0.0
        %8602 = vmatpush1.msra.mxu0 0.0
        %8603 = vmatprep.subr.mxu0 0.0
        %8604 = vmatpush1.msra.mxu0 0.0
        %8605 = vmatprep.subr.mxu0 0.0
        %8606 = vmatpush1.msra.mxu0 0.0
        %8607 = vmatprep.subr.mxu0 0.0
        %8608 = vmatpush1.msra.mxu0 0.0
        %8609 = vmatprep.subr.mxu0 0.0
        %8610 = vmatpush1.msra.mxu0 0.0
        %8611 = vmatprep.subr.mxu0 0.0
        %8612 = vmatpush1.msra.mxu0 0.0
        %8613 = vmatprep.subr.mxu0 0.0
        %8614 = vmatpush1.msra.mxu0 0.0
        %8615 = vmatprep.subr.mxu0 0.0
        %8616 = vmatpush1.msra.mxu0 0.0
        %8617 = vmatprep.subr.mxu0 0.0
        %8618 = vmatpush1.msra.mxu0 0.0
        %8619 = vmatprep.subr.mxu0 0.0
        %8620 = vmatpush1.msra.mxu0 0.0
        %8621 = vmatprep.subr.mxu0 0.0
        %8622 = vmatpush1.msra.mxu0 0.0
        %8623 = vmatprep.subr.mxu0 0.0
        %8624 = vmatpush1.msra.mxu0 0.0
        %8625 = vmatprep.subr.mxu0 0.0
        %8626 = vmatpush1.msra.mxu0 0.0
        %8627 = vmatprep.subr.mxu0 0.0
        %8628 = vmatpush1.msra.mxu0 0.0
        %8629 = vmatprep.subr.mxu0 0.0
        %8630 = vmatpush1.msra.mxu0 0.0
        %8631 = vmatprep.subr.mxu0 0.0
        %8632 = vmatpush1.msra.mxu0 0.0
        %8633 = vmatprep.subr.mxu0 0.0
        %8634 = vmatpush1.msra.mxu0 0.0
        %8635 = vmatprep.subr.mxu0 0.0
        %8636 = vmatpush1.msra.mxu0 0.0
        %8637 = vmatprep.subr.mxu0 0.0
        %8638 = vmatpush1.msra.mxu0 0.0
        %8639 = vmatprep.subr.mxu0 0.0
        %8640 = vmatpush1.msra.mxu0 0.0
        %8641 = vmatprep.subr.mxu0 0.0
        %8642 = vmatpush1.msra.mxu0 0.0
        %8643 = vmatprep.subr.mxu0 0.0
        %8644 = vmatpush1.msra.mxu0 0.0
        %8645 = vmatprep.subr.mxu0 0.0
        %8646 = vmatpush1.msra.mxu0 0.0
        %8647 = vmatprep.subr.mxu0 0.0
        %8648 = vmatpush1.msra.mxu0 0.0
        %8649 = vmatprep.subr.mxu0 0.0
        %8650 = vmatpush1.msra.mxu0 0.0
        %8651 = vmatprep.subr.mxu0 0.0
        %8652 = vmatpush1.msra.mxu0 0.0
        %8653 = vmatprep.subr.mxu0 0.0
        %8654 = vmatpush1.msra.mxu0 0.0
        %8655 = vmatprep.mubr.f32.mxu0 0.0
        %8656 = vmatmul.mubr.f32.gmra.mrb[0].mxu0 %v8496
        %v8657 = vpop.f32.mrb[0].mxu0
        %v8658 = vadd.f32 0.0, %v8657
        %v8659 = vpop.f32.mrb[0].mxu0
        %8660 = vmatprep.mubr.f32.mxu0 0.0
        %8661 = vmatmul.mubr.f32.gmra.mrb[0].mxu0 %v8499
        %v8662 = vpop.f32.mrb[0].mxu0
        %v8663 = vadd.f32 0.0, %v8662
        %v8664 = vpop.f32.mrb[0].mxu0
        %8665 = vmatprep.mubr.f32.mxu0 0.0
        %8666 = vmatmul.mubr.f32.gmra.mrb[0].mxu0 %v8502
        %v8667 = vpop.f32.mrb[0].mxu0
        %v8668 = vadd.f32 0.0, %v8667
        %v8669 = vpop.f32.mrb[0].mxu0
        %8670 = vmatprep.mubr.f32.mxu0 0.0
        %8671 = vmatmul.mubr.f32.gmra.mrb[0].mxu0 %v8505
        %v8672 = vpop.f32.mrb[0].mxu0
        %v8673 = vadd.f32 0.0, %v8672
        %v8674 = vpop.f32.mrb[0].mxu0
        %8675 = vmatprep.mubr.f32.mxu0 0.0
        %8676 = vmatmul.mubr.f32.gmra.mrb[0].mxu0 %v8508
        %v8677 = vpop.f32.mrb[0].mxu0
        %v8678 = vadd.f32 0.0, %v8677
        %v8679 = vpop.f32.mrb[0].mxu0
        %8680 = vmatprep.mubr.f32.mxu0 0.0
        %8681 = vmatmul.mubr.f32.gmra.mrb[0].mxu0 %v8511
        %v8682 = vpop.f32.mrb[0].mxu0
        %v8683 = vadd.f32 0.0, %v8682
        %v8684 = vpop.f32.mrb[0].mxu0
        %8685 = vmatprep.mubr.f32.mxu0 0.0
        %8686 = vmatmul.mubr.f32.gmra.mrb[0].mxu0 %v8514
        %v8687 = vpop.f32.mrb[0].mxu0
        %v8688 = vadd.f32 0.0, %v8687
        %v8689 = vpop.f32.mrb[0].mxu0
        %8690 = vmatprep.mubr.f32.mxu0 0.0
        %8691 = vmatmul.mubr.f32.gmra.mrb[0].mxu0 %v8517
        %v8692 = vpop.f32.mrb[0].mxu0
        %v8693 = vadd.f32 0.0, %v8692
        %v8694 = vpop.f32.mrb[0].mxu0
        %8695 = vmatprep.mubr.f32.mxu0 0.0
        %8696 = vmatmul.mubr.f32.gmra.mrb[0].mxu0 %v8520
        %v8697 = vpop.f32.mrb[0].mxu0
        %v8698 = vadd.f32 0.0, %v8697
        %v8699 = vpop.f32.mrb[0].mxu0
        %8700 = vmatprep.mubr.f32.mxu0 0.0
        %8701 = vmatmul.mubr.f32.gmra.mrb[0].mxu0 %v8523
        %v8702 = vpop.f32.mrb[0].mxu0
        %v8703 = vadd.f32 0.0, %v8702
        %v8704 = vpop.f32.mrb[0].mxu0
        %8705 = vmatprep.mubr.f32.mxu0 0.0
        %8706 = vmatmul.mubr.f32.gmra.mrb[0].mxu0 %v8526
        %v8707 = vpop.f32.mrb[0].mxu0
        %v8708 = vadd.f32 0.0, %v8707
        %v8709 = vpop.f32.mrb[0].mxu0
        %8710 = vmatprep.mubr.f32.mxu0 0.0
        %8711 = vmatmul.mubr.f32.gmra.mrb[0].mxu0 %v8529
        %v8712 = vpop.f32.mrb[0].mxu0
        %v8713 = vadd.f32 0.0, %v8712
        %v8714 = vpop.f32.mrb[0].mxu0
        %8715 = vmatprep.mubr.f32.mxu0 0.0
        %8716 = vmatmul.mubr.f32.gmra.mrb[0].mxu0 %v8532
        %v8717 = vpop.f32.mrb[0].mxu0
        %v8718 = vadd.f32 0.0, %v8717
        %v8719 = vpop.f32.mrb[0].mxu0
        %8720 = vmatprep.mubr.f32.mxu0 0.0
        %8721 = vmatmul.mubr.f32.gmra.mrb[0].mxu0 %v8535
        %v8722 = vpop.f32.mrb[0].mxu0
        %v8723 = vadd.f32 0.0, %v8722
        %v8724 = vpop.f32.mrb[0].mxu0
        %8725 = vmatprep.mubr.f32.mxu0 0.0
        %8726 = vmatmul.mubr.f32.gmra.mrb[0].mxu0 %v8538
        %v8727 = vpop.f32.mrb[0].mxu0
        %v8728 = vadd.f32 0.0, %v8727
        %v8729 = vpop.f32.mrb[0].mxu0
        %8730 = vmatprep.mubr.f32.mxu0 0.0
        %8731 = vmatmul.mubr.f32.gmra.mrb[0].mxu0 %v8541
        %v8732 = vpop.f32.mrb[0].mxu0
        %v8733 = vadd.f32 0.0, %v8732
        %v8734 = vpop.f32.mrb[0].mxu0
        %8735 = vmatprep.mubr.f32.mxu0 0.0
        %8736 = vmatmul.mubr.f32.gmra.mrb[0].mxu0 %v8544
        %v8737 = vpop.f32.mrb[0].mxu0
        %v8738 = vadd.f32 0.0, %v8737
        %v8739 = vpop.f32.mrb[0].mxu0
        %8740 = vmatprep.mubr.f32.mxu0 0.0
        %8741 = vmatmul.mubr.f32.gmra.mrb[0].mxu0 %v8547
        %v8742 = vpop.f32.mrb[0].mxu0
        %v8743 = vadd.f32 0.0, %v8742
        %v8744 = vpop.f32.mrb[0].mxu0
        %8745 = vmatprep.mubr.f32.mxu0 0.0
        %8746 = vmatmul.mubr.f32.gmra.mrb[0].mxu0 %v8550
        %v8747 = vpop.f32.mrb[0].mxu0
        %v8748 = vadd.f32 0.0, %v8747
        %v8749 = vpop.f32.mrb[0].mxu0
        %8750 = vmatprep.mubr.f32.mxu0 0.0
        %8751 = vmatmul.mubr.f32.gmra.mrb[0].mxu0 %v8553
        %v8752 = vpop.f32.mrb[0].mxu0
        %v8753 = vadd.f32 0.0, %v8752
        %v8754 = vpop.f32.mrb[0].mxu0
        %8755 = vmatprep.mubr.f32.mxu0 0.0
        %8756 = vmatmul.mubr.f32.gmra.mrb[0].mxu0 %v8556
        %v8757 = vpop.f32.mrb[0].mxu0
        %v8758 = vadd.f32 0.0, %v8757
        %v8759 = vpop.f32.mrb[0].mxu0
        %8760 = vmatprep.mubr.f32.mxu0 0.0
        %8761 = vmatmul.mubr.f32.gmra.mrb[0].mxu0 %v8559
        %v8762 = vpop.f32.mrb[0].mxu0
        %v8763 = vadd.f32 0.0, %v8762
        %v8764 = vpop.f32.mrb[0].mxu0
        %8765 = vmatprep.mubr.f32.mxu0 0.0
        %8766 = vmatmul.mubr.f32.gmra.mrb[0].mxu0 %v8562
        %v8767 = vpop.f32.mrb[0].mxu0
        %v8768 = vadd.f32 0.0, %v8767
        %v8769 = vpop.f32.mrb[0].mxu0
        %8770 = vmatprep.mubr.f32.mxu0 0.0
        %8771 = vmatmul.mubr.f32.gmra.mrb[0].mxu0 %v8565
        %v8772 = vpop.f32.mrb[0].mxu0
        %v8773 = vadd.f32 0.0, %v8772
        %v8774 = vpop.f32.mrb[0].mxu0
        %8775 = vmatprep.mubr.f32.mxu0 0.0
        %8776 = vmatmul.mubr.f32.gmra.mrb[0].mxu0 %v8568
        %v8777 = vpop.f32.mrb[0].mxu0
        %v8778 = vadd.f32 0.0, %v8777
        %v8779 = vpop.f32.mrb[0].mxu0
        %8780 = vmatprep.mubr.f32.mxu0 0.0
        %8781 = vmatmul.mubr.f32.gmra.mrb[0].mxu0 %v8571
        %v8782 = vpop.f32.mrb[0].mxu0
        %v8783 = vadd.f32 0.0, %v8782
        %v8784 = vpop.f32.mrb[0].mxu0
        %8785 = vmatprep.mubr.f32.mxu0 0.0
        %8786 = vmatmul.mubr.f32.gmra.mrb[0].mxu0 %v8574
        %v8787 = vpop.f32.mrb[0].mxu0
        %v8788 = vadd.f32 0.0, %v8787
        %v8789 = vpop.f32.mrb[0].mxu0
        %8790 = vmatprep.mubr.f32.mxu0 0.0
        %8791 = vmatmul.mubr.f32.gmra.mrb[0].mxu0 %v8577
        %v8792 = vpop.f32.mrb[0].mxu0
        %v8793 = vadd.f32 0.0, %v8792
        %v8794 = vpop.f32.mrb[0].mxu0
        %8795 = vmatprep.mubr.f32.mxu0 0.0
        %8796 = vmatmul.mubr.f32.gmra.mrb[0].mxu0 %v8580
        %v8797 = vpop.f32.mrb[0].mxu0
        %v8798 = vadd.f32 0.0, %v8797
        %v8799 = vpop.f32.mrb[0].mxu0
        %8800 = vmatprep.mubr.f32.mxu0 0.0
        %8801 = vmatmul.mubr.f32.gmra.mrb[0].mxu0 %v8583
        %v8802 = vpop.f32.mrb[0].mxu0
        %v8803 = vadd.f32 0.0, %v8802
        %v8804 = vpop.f32.mrb[0].mxu0
        %8805 = vmatprep.mubr.f32.mxu0 0.0
        %8806 = vmatmul.mubr.f32.gmra.mrb[0].mxu0 %v8586
        %v8807 = vpop.f32.mrb[0].mxu0
        %v8808 = vadd.f32 0.0, %v8807
        %v8809 = vpop.f32.mrb[0].mxu0
        %8810 = vmatprep.mubr.f32.mxu0 0.0
        %8811 = vmatmul.mubr.f32.gmra.mrb[0].mxu0 %v8589
        %v8812 = vpop.f32.mrb[0].mxu0
        %v8813 = vadd.f32 0.0, %v8812
        %v8814 = vpop.f32.mrb[0].mxu0
        %8815 = vdwg.mxu0
        %v8816 = vadd.f32 %v8427, %v8658
        %v8817 = vadd.f32 %v8428, %v8663
        %v8818 = vadd.f32 %v8429, %v8668
        %v8819 = vadd.f32 %v8430, %v8673
        %v8820 = vadd.f32 %v8431, %v8678
        %v8821 = vadd.f32 %v8432, %v8683
        %v8822 = vadd.f32 %v8433, %v8688
        %v8823 = vadd.f32 %v8434, %v8693
        %v8824 = vadd.f32 %v8435, %v8698
        %v8825 = vadd.f32 %v8436, %v8703
        %v8826 = vadd.f32 %v8437, %v8708
        %v8827 = vadd.f32 %v8438, %v8713
        %v8828 = vadd.f32 %v8439, %v8718
        %v8829 = vadd.f32 %v8440, %v8723
        %v8830 = vadd.f32 %v8441, %v8728
        %v8831 = vadd.f32 %v8442, %v8733
        %v8832 = vadd.f32 %v8443, %v8738
        %v8833 = vadd.f32 %v8444, %v8743
        %v8834 = vadd.f32 %v8445, %v8748
        %v8835 = vadd.f32 %v8446, %v8753
        %v8836 = vadd.f32 %v8447, %v8758
        %v8837 = vadd.f32 %v8448, %v8763
        %v8838 = vadd.f32 %v8449, %v8768
        %v8839 = vadd.f32 %v8450, %v8773
        %v8840 = vadd.f32 %v8451, %v8778
        %v8841 = vadd.f32 %v8452, %v8783
        %v8842 = vadd.f32 %v8453, %v8788
        %v8843 = vadd.f32 %v8454, %v8793
        %v8844 = vadd.f32 %v8455, %v8798
        %v8845 = vadd.f32 %v8456, %v8803
        %v8846 = vadd.f32 %v8457, %v8808
        %v8847 = vadd.f32 %v8458, %v8813
        %s8848 = scalar_lea.vmem [#allocation4], 64
        %v8849 = vld [vmem:[%s8848 + $0x7] sm:$0xff]
        %v8850 = vld [vmem:[%s8848 + $0xf] sm:$0xff]
        %v8851 = vld [vmem:[%s8848 + $0x27] sm:$0xff]
        %v8852 = vld [vmem:[%s8848 + $0x2f] sm:$0xff]
        %v8853 = vld [vmem:[%s8848 + $0x47] sm:$0xff]
        %v8854 = vld [vmem:[%s8848 + $0x4f] sm:$0xff]
        %v8855 = vld [vmem:[%s8848 + $0x67] sm:$0xff]
        %v8856 = vld [vmem:[%s8848 + $0x6f] sm:$0xff]
        %v8857 = vld [vmem:[%s8848 + $0x87] sm:$0xff]
        %v8858 = vld [vmem:[%s8848 + $0x8f] sm:$0xff]
        %v8859 = vld [vmem:[%s8848 + $0xa7] sm:$0xff]
        %v8860 = vld [vmem:[%s8848 + $0xaf] sm:$0xff]
        %v8861 = vld [vmem:[%s8848 + $0xc7] sm:$0xff]
        %v8862 = vld [vmem:[%s8848 + $0xcf] sm:$0xff]
        %v8863 = vld [vmem:[%s8848 + $0xe7] sm:$0xff]
        %v8864 = vld [vmem:[%s8848 + $0xef] sm:$0xff]
        %v8865 = vld [vmem:[%s8848 + $0x107] sm:$0xff]
        %v8866 = vld [vmem:[%s8848 + $0x10f] sm:$0xff]
        %v8867 = vld [vmem:[%s8848 + $0x127] sm:$0xff]
        %v8868 = vld [vmem:[%s8848 + $0x12f] sm:$0xff]
        %v8869 = vld [vmem:[%s8848 + $0x147] sm:$0xff]
        %v8870 = vld [vmem:[%s8848 + $0x14f] sm:$0xff]
        %v8871 = vld [vmem:[%s8848 + $0x167] sm:$0xff]
        %v8872 = vld [vmem:[%s8848 + $0x16f] sm:$0xff]
        %v8873 = vld [vmem:[%s8848 + $0x187] sm:$0xff]
        %v8874 = vld [vmem:[%s8848 + $0x18f] sm:$0xff]
        %v8875 = vld [vmem:[%s8848 + $0x1a7] sm:$0xff]
        %v8876 = vld [vmem:[%s8848 + $0x1af] sm:$0xff]
        %v8877 = vld [vmem:[%s8848 + $0x1c7] sm:$0xff]
        %v8878 = vld [vmem:[%s8848 + $0x1cf] sm:$0xff]
        %v8879 = vld [vmem:[%s8848 + $0x1e7] sm:$0xff]
        %v8880 = vld [vmem:[%s8848 + $0x1ef] sm:$0xff]
        %s8881 = scalar_lea.vmem [#allocation6], 144
        %v8882 = vld [vmem:[%s8881] sm:$0xff]
        %v8883 = vld [vmem:[%s8881 + $0x8] sm:$0xff]
        %v8884 = vld [vmem:[%s8881 + $0x10] sm:$0xff]
        %v8886 = vsel %vm6310, %v8849, 0
        %v8889 = vsel %vm6310, %v8850, 0
        %v8892 = vsel %vm6310, %v8851, 0
        %v8895 = vsel %vm6310, %v8852, 0
        %v8898 = vsel %vm6310, %v8853, 0
        %v8901 = vsel %vm6310, %v8854, 0
        %v8904 = vsel %vm6310, %v8855, 0
        %v8907 = vsel %vm6310, %v8856, 0
        %v8910 = vsel %vm6310, %v8857, 0
        %v8913 = vsel %vm6310, %v8858, 0
        %v8916 = vsel %vm6310, %v8859, 0
        %v8919 = vsel %vm6310, %v8860, 0
        %v8922 = vsel %vm6310, %v8861, 0
        %v8925 = vsel %vm6310, %v8862, 0
        %v8928 = vsel %vm6310, %v8863, 0
        %v8931 = vsel %vm6310, %v8864, 0
        %v8934 = vsel %vm6310, %v8865, 0
        %v8937 = vsel %vm6310, %v8866, 0
        %v8940 = vsel %vm6310, %v8867, 0
        %v8943 = vsel %vm6310, %v8868, 0
        %v8946 = vsel %vm6310, %v8869, 0
        %v8949 = vsel %vm6310, %v8870, 0
        %v8952 = vsel %vm6310, %v8871, 0
        %v8955 = vsel %vm6310, %v8872, 0
        %v8958 = vsel %vm6310, %v8873, 0
        %v8961 = vsel %vm6310, %v8874, 0
        %v8964 = vsel %vm6310, %v8875, 0
        %v8967 = vsel %vm6310, %v8876, 0
        %v8970 = vsel %vm6310, %v8877, 0
        %v8973 = vsel %vm6310, %v8878, 0
        %v8976 = vsel %vm6310, %v8879, 0
        %v8979 = vsel %vm6310, %v8880, 0
        %8981 = vmatprep.subr.mxu0 0.0
        %8982 = vmatpush1.msra.mxu0 %v8882
        %8983 = vmatprep.subr.mxu0 0.0
        %8984 = vmatpush1.msra.mxu0 %v8883
        %8985 = vmatprep.subr.mxu0 0.0
        %8986 = vmatpush1.msra.mxu0 %v8884
        %8987 = vmatprep.subr.mxu0 0.0
        %8988 = vmatpush1.msra.mxu0 0.0
        %8989 = vmatprep.subr.mxu0 0.0
        %8990 = vmatpush1.msra.mxu0 0.0
        %8991 = vmatprep.subr.mxu0 0.0
        %8992 = vmatpush1.msra.mxu0 0.0
        %8993 = vmatprep.subr.mxu0 0.0
        %8994 = vmatpush1.msra.mxu0 0.0
        %8995 = vmatprep.subr.mxu0 0.0
        %8996 = vmatpush1.msra.mxu0 0.0
        %8997 = vmatprep.subr.mxu0 0.0
        %8998 = vmatpush1.msra.mxu0 0.0
        %8999 = vmatprep.subr.mxu0 0.0
        %9000 = vmatpush1.msra.mxu0 0.0
        %9001 = vmatprep.subr.mxu0 0.0
        %9002 = vmatpush1.msra.mxu0 0.0
        %9003 = vmatprep.subr.mxu0 0.0
        %9004 = vmatpush1.msra.mxu0 0.0
        %9005 = vmatprep.subr.mxu0 0.0
        %9006 = vmatpush1.msra.mxu0 0.0
        %9007 = vmatprep.subr.mxu0 0.0
        %9008 = vmatpush1.msra.mxu0 0.0
        %9009 = vmatprep.subr.mxu0 0.0
        %9010 = vmatpush1.msra.mxu0 0.0
        %9011 = vmatprep.subr.mxu0 0.0
        %9012 = vmatpush1.msra.mxu0 0.0
        %9013 = vmatprep.subr.mxu0 0.0
        %9014 = vmatpush1.msra.mxu0 0.0
        %9015 = vmatprep.subr.mxu0 0.0
        %9016 = vmatpush1.msra.mxu0 0.0
        %9017 = vmatprep.subr.mxu0 0.0
        %9018 = vmatpush1.msra.mxu0 0.0
        %9019 = vmatprep.subr.mxu0 0.0
        %9020 = vmatpush1.msra.mxu0 0.0
        %9021 = vmatprep.subr.mxu0 0.0
        %9022 = vmatpush1.msra.mxu0 0.0
        %9023 = vmatprep.subr.mxu0 0.0
        %9024 = vmatpush1.msra.mxu0 0.0
        %9025 = vmatprep.subr.mxu0 0.0
        %9026 = vmatpush1.msra.mxu0 0.0
        %9027 = vmatprep.subr.mxu0 0.0
        %9028 = vmatpush1.msra.mxu0 0.0
        %9029 = vmatprep.subr.mxu0 0.0
        %9030 = vmatpush1.msra.mxu0 0.0
        %9031 = vmatprep.subr.mxu0 0.0
        %9032 = vmatpush1.msra.mxu0 0.0
        %9033 = vmatprep.subr.mxu0 0.0
        %9034 = vmatpush1.msra.mxu0 0.0
        %9035 = vmatprep.subr.mxu0 0.0
        %9036 = vmatpush1.msra.mxu0 0.0
        %9037 = vmatprep.subr.mxu0 0.0
        %9038 = vmatpush1.msra.mxu0 0.0
        %9039 = vmatprep.subr.mxu0 0.0
        %9040 = vmatpush1.msra.mxu0 0.0
        %9041 = vmatprep.subr.mxu0 0.0
        %9042 = vmatpush1.msra.mxu0 0.0
        %9043 = vmatprep.subr.mxu0 0.0
        %9044 = vmatpush1.msra.mxu0 0.0
        %9045 = vmatprep.mubr.f32.mxu0 0.0
        %9046 = vmatmul.mubr.f32.gmra.mrb[0].mxu0 %v8886
        %v9047 = vpop.f32.mrb[0].mxu0
        %v9048 = vadd.f32 0.0, %v9047
        %v9049 = vpop.f32.mrb[0].mxu0
        %9050 = vmatprep.mubr.f32.mxu0 0.0
        %9051 = vmatmul.mubr.f32.gmra.mrb[0].mxu0 %v8889
        %v9052 = vpop.f32.mrb[0].mxu0
        %v9053 = vadd.f32 0.0, %v9052
        %v9054 = vpop.f32.mrb[0].mxu0
        %9055 = vmatprep.mubr.f32.mxu0 0.0
        %9056 = vmatmul.mubr.f32.gmra.mrb[0].mxu0 %v8892
        %v9057 = vpop.f32.mrb[0].mxu0
        %v9058 = vadd.f32 0.0, %v9057
        %v9059 = vpop.f32.mrb[0].mxu0
        %9060 = vmatprep.mubr.f32.mxu0 0.0
        %9061 = vmatmul.mubr.f32.gmra.mrb[0].mxu0 %v8895
        %v9062 = vpop.f32.mrb[0].mxu0
        %v9063 = vadd.f32 0.0, %v9062
        %v9064 = vpop.f32.mrb[0].mxu0
        %9065 = vmatprep.mubr.f32.mxu0 0.0
        %9066 = vmatmul.mubr.f32.gmra.mrb[0].mxu0 %v8898
        %v9067 = vpop.f32.mrb[0].mxu0
        %v9068 = vadd.f32 0.0, %v9067
        %v9069 = vpop.f32.mrb[0].mxu0
        %9070 = vmatprep.mubr.f32.mxu0 0.0
        %9071 = vmatmul.mubr.f32.gmra.mrb[0].mxu0 %v8901
        %v9072 = vpop.f32.mrb[0].mxu0
        %v9073 = vadd.f32 0.0, %v9072
        %v9074 = vpop.f32.mrb[0].mxu0
        %9075 = vmatprep.mubr.f32.mxu0 0.0
        %9076 = vmatmul.mubr.f32.gmra.mrb[0].mxu0 %v8904
        %v9077 = vpop.f32.mrb[0].mxu0
        %v9078 = vadd.f32 0.0, %v9077
        %v9079 = vpop.f32.mrb[0].mxu0
        %9080 = vmatprep.mubr.f32.mxu0 0.0
        %9081 = vmatmul.mubr.f32.gmra.mrb[0].mxu0 %v8907
        %v9082 = vpop.f32.mrb[0].mxu0
        %v9083 = vadd.f32 0.0, %v9082
        %v9084 = vpop.f32.mrb[0].mxu0
        %9085 = vmatprep.mubr.f32.mxu0 0.0
        %9086 = vmatmul.mubr.f32.gmra.mrb[0].mxu0 %v8910
        %v9087 = vpop.f32.mrb[0].mxu0
        %v9088 = vadd.f32 0.0, %v9087
        %v9089 = vpop.f32.mrb[0].mxu0
        %9090 = vmatprep.mubr.f32.mxu0 0.0
        %9091 = vmatmul.mubr.f32.gmra.mrb[0].mxu0 %v8913
        %v9092 = vpop.f32.mrb[0].mxu0
        %v9093 = vadd.f32 0.0, %v9092
        %v9094 = vpop.f32.mrb[0].mxu0
        %9095 = vmatprep.mubr.f32.mxu0 0.0
        %9096 = vmatmul.mubr.f32.gmra.mrb[0].mxu0 %v8916
        %v9097 = vpop.f32.mrb[0].mxu0
        %v9098 = vadd.f32 0.0, %v9097
        %v9099 = vpop.f32.mrb[0].mxu0
        %9100 = vmatprep.mubr.f32.mxu0 0.0
        %9101 = vmatmul.mubr.f32.gmra.mrb[0].mxu0 %v8919
        %v9102 = vpop.f32.mrb[0].mxu0
        %v9103 = vadd.f32 0.0, %v9102
        %v9104 = vpop.f32.mrb[0].mxu0
        %9105 = vmatprep.mubr.f32.mxu0 0.0
        %9106 = vmatmul.mubr.f32.gmra.mrb[0].mxu0 %v8922
        %v9107 = vpop.f32.mrb[0].mxu0
        %v9108 = vadd.f32 0.0, %v9107
        %v9109 = vpop.f32.mrb[0].mxu0
        %9110 = vmatprep.mubr.f32.mxu0 0.0
        %9111 = vmatmul.mubr.f32.gmra.mrb[0].mxu0 %v8925
        %v9112 = vpop.f32.mrb[0].mxu0
        %v9113 = vadd.f32 0.0, %v9112
        %v9114 = vpop.f32.mrb[0].mxu0
        %9115 = vmatprep.mubr.f32.mxu0 0.0
        %9116 = vmatmul.mubr.f32.gmra.mrb[0].mxu0 %v8928
        %v9117 = vpop.f32.mrb[0].mxu0
        %v9118 = vadd.f32 0.0, %v9117
        %v9119 = vpop.f32.mrb[0].mxu0
        %9120 = vmatprep.mubr.f32.mxu0 0.0
        %9121 = vmatmul.mubr.f32.gmra.mrb[0].mxu0 %v8931
        %v9122 = vpop.f32.mrb[0].mxu0
        %v9123 = vadd.f32 0.0, %v9122
        %v9124 = vpop.f32.mrb[0].mxu0
        %9125 = vmatprep.mubr.f32.mxu0 0.0
        %9126 = vmatmul.mubr.f32.gmra.mrb[0].mxu0 %v8934
        %v9127 = vpop.f32.mrb[0].mxu0
        %v9128 = vadd.f32 0.0, %v9127
        %v9129 = vpop.f32.mrb[0].mxu0
        %9130 = vmatprep.mubr.f32.mxu0 0.0
        %9131 = vmatmul.mubr.f32.gmra.mrb[0].mxu0 %v8937
        %v9132 = vpop.f32.mrb[0].mxu0
        %v9133 = vadd.f32 0.0, %v9132
        %v9134 = vpop.f32.mrb[0].mxu0
        %9135 = vmatprep.mubr.f32.mxu0 0.0
        %9136 = vmatmul.mubr.f32.gmra.mrb[0].mxu0 %v8940
        %v9137 = vpop.f32.mrb[0].mxu0
        %v9138 = vadd.f32 0.0, %v9137
        %v9139 = vpop.f32.mrb[0].mxu0
        %9140 = vmatprep.mubr.f32.mxu0 0.0
        %9141 = vmatmul.mubr.f32.gmra.mrb[0].mxu0 %v8943
        %v9142 = vpop.f32.mrb[0].mxu0
        %v9143 = vadd.f32 0.0, %v9142
        %v9144 = vpop.f32.mrb[0].mxu0
        %9145 = vmatprep.mubr.f32.mxu0 0.0
        %9146 = vmatmul.mubr.f32.gmra.mrb[0].mxu0 %v8946
        %v9147 = vpop.f32.mrb[0].mxu0
        %v9148 = vadd.f32 0.0, %v9147
        %v9149 = vpop.f32.mrb[0].mxu0
        %9150 = vmatprep.mubr.f32.mxu0 0.0
        %9151 = vmatmul.mubr.f32.gmra.mrb[0].mxu0 %v8949
        %v9152 = vpop.f32.mrb[0].mxu0
        %v9153 = vadd.f32 0.0, %v9152
        %v9154 = vpop.f32.mrb[0].mxu0
        %9155 = vmatprep.mubr.f32.mxu0 0.0
        %9156 = vmatmul.mubr.f32.gmra.mrb[0].mxu0 %v8952
        %v9157 = vpop.f32.mrb[0].mxu0
        %v9158 = vadd.f32 0.0, %v9157
        %v9159 = vpop.f32.mrb[0].mxu0
        %9160 = vmatprep.mubr.f32.mxu0 0.0
        %9161 = vmatmul.mubr.f32.gmra.mrb[0].mxu0 %v8955
        %v9162 = vpop.f32.mrb[0].mxu0
        %v9163 = vadd.f32 0.0, %v9162
        %v9164 = vpop.f32.mrb[0].mxu0
        %9165 = vmatprep.mubr.f32.mxu0 0.0
        %9166 = vmatmul.mubr.f32.gmra.mrb[0].mxu0 %v8958
        %v9167 = vpop.f32.mrb[0].mxu0
        %v9168 = vadd.f32 0.0, %v9167
        %v9169 = vpop.f32.mrb[0].mxu0
        %9170 = vmatprep.mubr.f32.mxu0 0.0
        %9171 = vmatmul.mubr.f32.gmra.mrb[0].mxu0 %v8961
        %v9172 = vpop.f32.mrb[0].mxu0
        %v9173 = vadd.f32 0.0, %v9172
        %v9174 = vpop.f32.mrb[0].mxu0
        %9175 = vmatprep.mubr.f32.mxu0 0.0
        %9176 = vmatmul.mubr.f32.gmra.mrb[0].mxu0 %v8964
        %v9177 = vpop.f32.mrb[0].mxu0
        %v9178 = vadd.f32 0.0, %v9177
        %v9179 = vpop.f32.mrb[0].mxu0
        %9180 = vmatprep.mubr.f32.mxu0 0.0
        %9181 = vmatmul.mubr.f32.gmra.mrb[0].mxu0 %v8967
        %v9182 = vpop.f32.mrb[0].mxu0
        %v9183 = vadd.f32 0.0, %v9182
        %v9184 = vpop.f32.mrb[0].mxu0
        %9185 = vmatprep.mubr.f32.mxu0 0.0
        %9186 = vmatmul.mubr.f32.gmra.mrb[0].mxu0 %v8970
        %v9187 = vpop.f32.mrb[0].mxu0
        %v9188 = vadd.f32 0.0, %v9187
        %v9189 = vpop.f32.mrb[0].mxu0
        %9190 = vmatprep.mubr.f32.mxu0 0.0
        %9191 = vmatmul.mubr.f32.gmra.mrb[0].mxu0 %v8973
        %v9192 = vpop.f32.mrb[0].mxu0
        %v9193 = vadd.f32 0.0, %v9192
        %v9194 = vpop.f32.mrb[0].mxu0
        %9195 = vmatprep.mubr.f32.mxu0 0.0
        %9196 = vmatmul.mubr.f32.gmra.mrb[0].mxu0 %v8976
        %v9197 = vpop.f32.mrb[0].mxu0
        %v9198 = vadd.f32 0.0, %v9197
        %v9199 = vpop.f32.mrb[0].mxu0
        %9200 = vmatprep.mubr.f32.mxu0 0.0
        %9201 = vmatmul.mubr.f32.gmra.mrb[0].mxu0 %v8979
        %v9202 = vpop.f32.mrb[0].mxu0
        %v9203 = vadd.f32 0.0, %v9202
        %v9204 = vpop.f32.mrb[0].mxu0
        %9205 = vdwg.mxu0
        %v9206 = vadd.f32 %v8816, %v9048
        %v9207 = vadd.f32 %v8817, %v9053
        %v9208 = vadd.f32 %v8818, %v9058
        %v9209 = vadd.f32 %v8819, %v9063
        %v9210 = vadd.f32 %v8820, %v9068
        %v9211 = vadd.f32 %v8821, %v9073
        %v9212 = vadd.f32 %v8822, %v9078
        %v9213 = vadd.f32 %v8823, %v9083
        %v9214 = vadd.f32 %v8824, %v9088
        %v9215 = vadd.f32 %v8825, %v9093
        %v9216 = vadd.f32 %v8826, %v9098
        %v9217 = vadd.f32 %v8827, %v9103
        %v9218 = vadd.f32 %v8828, %v9108
        %v9219 = vadd.f32 %v8829, %v9113
        %v9220 = vadd.f32 %v8830, %v9118
        %v9221 = vadd.f32 %v8831, %v9123
        %v9222 = vadd.f32 %v8832, %v9128
        %v9223 = vadd.f32 %v8833, %v9133
        %v9224 = vadd.f32 %v8834, %v9138
        %v9225 = vadd.f32 %v8835, %v9143
        %v9226 = vadd.f32 %v8836, %v9148
        %v9227 = vadd.f32 %v8837, %v9153
        %v9228 = vadd.f32 %v8838, %v9158
        %v9229 = vadd.f32 %v8839, %v9163
        %v9230 = vadd.f32 %v8840, %v9168
        %v9231 = vadd.f32 %v8841, %v9173
        %v9232 = vadd.f32 %v8842, %v9178
        %v9233 = vadd.f32 %v8843, %v9183
        %v9234 = vadd.f32 %v8844, %v9188
        %v9235 = vadd.f32 %v8845, %v9193
        %v9236 = vadd.f32 %v8846, %v9198
        %v9237 = vadd.f32 %v8847, %v9203
        %v9238 = vld [vmem:[%s8848 + $0x8] sm:$0xff]
        %v9239 = vld [vmem:[%s8848 + $0x10] sm:$0xff]
        %v9240 = vld [vmem:[%s8848 + $0x28] sm:$0xff]
        %v9241 = vld [vmem:[%s8848 + $0x30] sm:$0xff]
        %v9242 = vld [vmem:[%s8848 + $0x48] sm:$0xff]
        %v9243 = vld [vmem:[%s8848 + $0x50] sm:$0xff]
        %v9244 = vld [vmem:[%s8848 + $0x68] sm:$0xff]
        %v9245 = vld [vmem:[%s8848 + $0x70] sm:$0xff]
        %v9246 = vld [vmem:[%s8848 + $0x88] sm:$0xff]
        %v9247 = vld [vmem:[%s8848 + $0x90] sm:$0xff]
        %v9248 = vld [vmem:[%s8848 + $0xa8] sm:$0xff]
        %v9249 = vld [vmem:[%s8848 + $0xb0] sm:$0xff]
        %v9250 = vld [vmem:[%s8848 + $0xc8] sm:$0xff]
        %v9251 = vld [vmem:[%s8848 + $0xd0] sm:$0xff]
        %v9252 = vld [vmem:[%s8848 + $0xe8] sm:$0xff]
        %v9253 = vld [vmem:[%s8848 + $0xf0] sm:$0xff]
        %v9254 = vld [vmem:[%s8848 + $0x108] sm:$0xff]
        %v9255 = vld [vmem:[%s8848 + $0x110] sm:$0xff]
        %v9256 = vld [vmem:[%s8848 + $0x128] sm:$0xff]
        %v9257 = vld [vmem:[%s8848 + $0x130] sm:$0xff]
        %v9258 = vld [vmem:[%s8848 + $0x148] sm:$0xff]
        %v9259 = vld [vmem:[%s8848 + $0x150] sm:$0xff]
        %v9260 = vld [vmem:[%s8848 + $0x168] sm:$0xff]
        %v9261 = vld [vmem:[%s8848 + $0x170] sm:$0xff]
        %v9262 = vld [vmem:[%s8848 + $0x188] sm:$0xff]
        %v9263 = vld [vmem:[%s8848 + $0x190] sm:$0xff]
        %v9264 = vld [vmem:[%s8848 + $0x1a8] sm:$0xff]
        %v9265 = vld [vmem:[%s8848 + $0x1b0] sm:$0xff]
        %v9266 = vld [vmem:[%s8848 + $0x1c8] sm:$0xff]
        %v9267 = vld [vmem:[%s8848 + $0x1d0] sm:$0xff]
        %v9268 = vld [vmem:[%s8848 + $0x1e8] sm:$0xff]
        %v9269 = vld [vmem:[%s8848 + $0x1f0] sm:$0xff]
        %s9270 = scalar_lea.vmem [#allocation6], 168
        %v9271 = vld [vmem:[%s9270] sm:$0xff]
        %v9272 = vld [vmem:[%s9270 + $0x8] sm:$0xff]
        %v9273 = vld [vmem:[%s9270 + $0x10] sm:$0xff]
        %v9275 = vsel %vm6310, %v9238, 0
        %v9278 = vsel %vm6310, %v9239, 0
        %v9281 = vsel %vm6310, %v9240, 0
        %v9284 = vsel %vm6310, %v9241, 0
        %v9287 = vsel %vm6310, %v9242, 0
        %v9290 = vsel %vm6310, %v9243, 0
        %v9293 = vsel %vm6310, %v9244, 0
        %v9296 = vsel %vm6310, %v9245, 0
        %v9299 = vsel %vm6310, %v9246, 0
        %v9302 = vsel %vm6310, %v9247, 0
        %v9305 = vsel %vm6310, %v9248, 0
        %v9308 = vsel %vm6310, %v9249, 0
        %v9311 = vsel %vm6310, %v9250, 0
        %v9314 = vsel %vm6310, %v9251, 0
        %v9317 = vsel %vm6310, %v9252, 0
        %v9320 = vsel %vm6310, %v9253, 0
        %v9323 = vsel %vm6310, %v9254, 0
        %v9326 = vsel %vm6310, %v9255, 0
        %v9329 = vsel %vm6310, %v9256, 0
        %v9332 = vsel %vm6310, %v9257, 0
        %v9335 = vsel %vm6310, %v9258, 0
        %v9338 = vsel %vm6310, %v9259, 0
        %v9341 = vsel %vm6310, %v9260, 0
        %v9344 = vsel %vm6310, %v9261, 0
        %v9347 = vsel %vm6310, %v9262, 0
        %v9350 = vsel %vm6310, %v9263, 0
        %v9353 = vsel %vm6310, %v9264, 0
        %v9356 = vsel %vm6310, %v9265, 0
        %v9359 = vsel %vm6310, %v9266, 0
        %v9362 = vsel %vm6310, %v9267, 0
        %v9365 = vsel %vm6310, %v9268, 0
        %v9368 = vsel %vm6310, %v9269, 0
        %9370 = vmatprep.subr.mxu0 0.0
        %9371 = vmatpush1.msra.mxu0 %v9271
        %9372 = vmatprep.subr.mxu0 0.0
        %9373 = vmatpush1.msra.mxu0 %v9272
        %9374 = vmatprep.subr.mxu0 0.0
        %9375 = vmatpush1.msra.mxu0 %v9273
        %9376 = vmatprep.subr.mxu0 0.0
        %9377 = vmatpush1.msra.mxu0 0.0
        %9378 = vmatprep.subr.mxu0 0.0
        %9379 = vmatpush1.msra.mxu0 0.0
        %9380 = vmatprep.subr.mxu0 0.0
        %9381 = vmatpush1.msra.mxu0 0.0
        %9382 = vmatprep.subr.mxu0 0.0
        %9383 = vmatpush1.msra.mxu0 0.0
        %9384 = vmatprep.subr.mxu0 0.0
        %9385 = vmatpush1.msra.mxu0 0.0
        %9386 = vmatprep.subr.mxu0 0.0
        %9387 = vmatpush1.msra.mxu0 0.0
        %9388 = vmatprep.subr.mxu0 0.0
        %9389 = vmatpush1.msra.mxu0 0.0
        %9390 = vmatprep.subr.mxu0 0.0
        %9391 = vmatpush1.msra.mxu0 0.0
        %9392 = vmatprep.subr.mxu0 0.0
        %9393 = vmatpush1.msra.mxu0 0.0
        %9394 = vmatprep.subr.mxu0 0.0
        %9395 = vmatpush1.msra.mxu0 0.0
        %9396 = vmatprep.subr.mxu0 0.0
        %9397 = vmatpush1.msra.mxu0 0.0
        %9398 = vmatprep.subr.mxu0 0.0
        %9399 = vmatpush1.msra.mxu0 0.0
        %9400 = vmatprep.subr.mxu0 0.0
        %9401 = vmatpush1.msra.mxu0 0.0
        %9402 = vmatprep.subr.mxu0 0.0
        %9403 = vmatpush1.msra.mxu0 0.0
        %9404 = vmatprep.subr.mxu0 0.0
        %9405 = vmatpush1.msra.mxu0 0.0
        %9406 = vmatprep.subr.mxu0 0.0
        %9407 = vmatpush1.msra.mxu0 0.0
        %9408 = vmatprep.subr.mxu0 0.0
        %9409 = vmatpush1.msra.mxu0 0.0
        %9410 = vmatprep.subr.mxu0 0.0
        %9411 = vmatpush1.msra.mxu0 0.0
        %9412 = vmatprep.subr.mxu0 0.0
        %9413 = vmatpush1.msra.mxu0 0.0
        %9414 = vmatprep.subr.mxu0 0.0
        %9415 = vmatpush1.msra.mxu0 0.0
        %9416 = vmatprep.subr.mxu0 0.0
        %9417 = vmatpush1.msra.mxu0 0.0
        %9418 = vmatprep.subr.mxu0 0.0
        %9419 = vmatpush1.msra.mxu0 0.0
        %9420 = vmatprep.subr.mxu0 0.0
        %9421 = vmatpush1.msra.mxu0 0.0
        %9422 = vmatprep.subr.mxu0 0.0
        %9423 = vmatpush1.msra.mxu0 0.0
        %9424 = vmatprep.subr.mxu0 0.0
        %9425 = vmatpush1.msra.mxu0 0.0
        %9426 = vmatprep.subr.mxu0 0.0
        %9427 = vmatpush1.msra.mxu0 0.0
        %9428 = vmatprep.subr.mxu0 0.0
        %9429 = vmatpush1.msra.mxu0 0.0
        %9430 = vmatprep.subr.mxu0 0.0
        %9431 = vmatpush1.msra.mxu0 0.0
        %9432 = vmatprep.subr.mxu0 0.0
        %9433 = vmatpush1.msra.mxu0 0.0
        %9434 = vmatprep.mubr.f32.mxu0 0.0
        %9435 = vmatmul.mubr.f32.gmra.mrb[0].mxu0 %v9275
        %v9436 = vpop.f32.mrb[0].mxu0
        %v9437 = vadd.f32 0.0, %v9436
        %v9438 = vpop.f32.mrb[0].mxu0
        %9439 = vmatprep.mubr.f32.mxu0 0.0
        %9440 = vmatmul.mubr.f32.gmra.mrb[0].mxu0 %v9278
        %v9441 = vpop.f32.mrb[0].mxu0
        %v9442 = vadd.f32 0.0, %v9441
        %v9443 = vpop.f32.mrb[0].mxu0
        %9444 = vmatprep.mubr.f32.mxu0 0.0
        %9445 = vmatmul.mubr.f32.gmra.mrb[0].mxu0 %v9281
        %v9446 = vpop.f32.mrb[0].mxu0
        %v9447 = vadd.f32 0.0, %v9446
        %v9448 = vpop.f32.mrb[0].mxu0
        %9449 = vmatprep.mubr.f32.mxu0 0.0
        %9450 = vmatmul.mubr.f32.gmra.mrb[0].mxu0 %v9284
        %v9451 = vpop.f32.mrb[0].mxu0
        %v9452 = vadd.f32 0.0, %v9451
        %v9453 = vpop.f32.mrb[0].mxu0
        %9454 = vmatprep.mubr.f32.mxu0 0.0
        %9455 = vmatmul.mubr.f32.gmra.mrb[0].mxu0 %v9287
        %v9456 = vpop.f32.mrb[0].mxu0
        %v9457 = vadd.f32 0.0, %v9456
        %v9458 = vpop.f32.mrb[0].mxu0
        %9459 = vmatprep.mubr.f32.mxu0 0.0
        %9460 = vmatmul.mubr.f32.gmra.mrb[0].mxu0 %v9290
        %v9461 = vpop.f32.mrb[0].mxu0
        %v9462 = vadd.f32 0.0, %v9461
        %v9463 = vpop.f32.mrb[0].mxu0
        %9464 = vmatprep.mubr.f32.mxu0 0.0
        %9465 = vmatmul.mubr.f32.gmra.mrb[0].mxu0 %v9293
        %v9466 = vpop.f32.mrb[0].mxu0
        %v9467 = vadd.f32 0.0, %v9466
        %v9468 = vpop.f32.mrb[0].mxu0
        %9469 = vmatprep.mubr.f32.mxu0 0.0
        %9470 = vmatmul.mubr.f32.gmra.mrb[0].mxu0 %v9296
        %v9471 = vpop.f32.mrb[0].mxu0
        %v9472 = vadd.f32 0.0, %v9471
        %v9473 = vpop.f32.mrb[0].mxu0
        %9474 = vmatprep.mubr.f32.mxu0 0.0
        %9475 = vmatmul.mubr.f32.gmra.mrb[0].mxu0 %v9299
        %v9476 = vpop.f32.mrb[0].mxu0
        %v9477 = vadd.f32 0.0, %v9476
        %v9478 = vpop.f32.mrb[0].mxu0
        %9479 = vmatprep.mubr.f32.mxu0 0.0
        %9480 = vmatmul.mubr.f32.gmra.mrb[0].mxu0 %v9302
        %v9481 = vpop.f32.mrb[0].mxu0
        %v9482 = vadd.f32 0.0, %v9481
        %v9483 = vpop.f32.mrb[0].mxu0
        %9484 = vmatprep.mubr.f32.mxu0 0.0
        %9485 = vmatmul.mubr.f32.gmra.mrb[0].mxu0 %v9305
        %v9486 = vpop.f32.mrb[0].mxu0
        %v9487 = vadd.f32 0.0, %v9486
        %v9488 = vpop.f32.mrb[0].mxu0
        %9489 = vmatprep.mubr.f32.mxu0 0.0
        %9490 = vmatmul.mubr.f32.gmra.mrb[0].mxu0 %v9308
        %v9491 = vpop.f32.mrb[0].mxu0
        %v9492 = vadd.f32 0.0, %v9491
        %v9493 = vpop.f32.mrb[0].mxu0
        %9494 = vmatprep.mubr.f32.mxu0 0.0
        %9495 = vmatmul.mubr.f32.gmra.mrb[0].mxu0 %v9311
        %v9496 = vpop.f32.mrb[0].mxu0
        %v9497 = vadd.f32 0.0, %v9496
        %v9498 = vpop.f32.mrb[0].mxu0
        %9499 = vmatprep.mubr.f32.mxu0 0.0
        %9500 = vmatmul.mubr.f32.gmra.mrb[0].mxu0 %v9314
        %v9501 = vpop.f32.mrb[0].mxu0
        %v9502 = vadd.f32 0.0, %v9501
        %v9503 = vpop.f32.mrb[0].mxu0
        %9504 = vmatprep.mubr.f32.mxu0 0.0
        %9505 = vmatmul.mubr.f32.gmra.mrb[0].mxu0 %v9317
        %v9506 = vpop.f32.mrb[0].mxu0
        %v9507 = vadd.f32 0.0, %v9506
        %v9508 = vpop.f32.mrb[0].mxu0
        %9509 = vmatprep.mubr.f32.mxu0 0.0
        %9510 = vmatmul.mubr.f32.gmra.mrb[0].mxu0 %v9320
        %v9511 = vpop.f32.mrb[0].mxu0
        %v9512 = vadd.f32 0.0, %v9511
        %v9513 = vpop.f32.mrb[0].mxu0
        %9514 = vmatprep.mubr.f32.mxu0 0.0
        %9515 = vmatmul.mubr.f32.gmra.mrb[0].mxu0 %v9323
        %v9516 = vpop.f32.mrb[0].mxu0
        %v9517 = vadd.f32 0.0, %v9516
        %v9518 = vpop.f32.mrb[0].mxu0
        %9519 = vmatprep.mubr.f32.mxu0 0.0
        %9520 = vmatmul.mubr.f32.gmra.mrb[0].mxu0 %v9326
        %v9521 = vpop.f32.mrb[0].mxu0
        %v9522 = vadd.f32 0.0, %v9521
        %v9523 = vpop.f32.mrb[0].mxu0
        %9524 = vmatprep.mubr.f32.mxu0 0.0
        %9525 = vmatmul.mubr.f32.gmra.mrb[0].mxu0 %v9329
        %v9526 = vpop.f32.mrb[0].mxu0
        %v9527 = vadd.f32 0.0, %v9526
        %v9528 = vpop.f32.mrb[0].mxu0
        %9529 = vmatprep.mubr.f32.mxu0 0.0
        %9530 = vmatmul.mubr.f32.gmra.mrb[0].mxu0 %v9332
        %v9531 = vpop.f32.mrb[0].mxu0
        %v9532 = vadd.f32 0.0, %v9531
        %v9533 = vpop.f32.mrb[0].mxu0
        %9534 = vmatprep.mubr.f32.mxu0 0.0
        %9535 = vmatmul.mubr.f32.gmra.mrb[0].mxu0 %v9335
        %v9536 = vpop.f32.mrb[0].mxu0
        %v9537 = vadd.f32 0.0, %v9536
        %v9538 = vpop.f32.mrb[0].mxu0
        %9539 = vmatprep.mubr.f32.mxu0 0.0
        %9540 = vmatmul.mubr.f32.gmra.mrb[0].mxu0 %v9338
        %v9541 = vpop.f32.mrb[0].mxu0
        %v9542 = vadd.f32 0.0, %v9541
        %v9543 = vpop.f32.mrb[0].mxu0
        %9544 = vmatprep.mubr.f32.mxu0 0.0
        %9545 = vmatmul.mubr.f32.gmra.mrb[0].mxu0 %v9341
        %v9546 = vpop.f32.mrb[0].mxu0
        %v9547 = vadd.f32 0.0, %v9546
        %v9548 = vpop.f32.mrb[0].mxu0
        %9549 = vmatprep.mubr.f32.mxu0 0.0
        %9550 = vmatmul.mubr.f32.gmra.mrb[0].mxu0 %v9344
        %v9551 = vpop.f32.mrb[0].mxu0
        %v9552 = vadd.f32 0.0, %v9551
        %v9553 = vpop.f32.mrb[0].mxu0
        %9554 = vmatprep.mubr.f32.mxu0 0.0
        %9555 = vmatmul.mubr.f32.gmra.mrb[0].mxu0 %v9347
        %v9556 = vpop.f32.mrb[0].mxu0
        %v9557 = vadd.f32 0.0, %v9556
        %v9558 = vpop.f32.mrb[0].mxu0
        %9559 = vmatprep.mubr.f32.mxu0 0.0
        %9560 = vmatmul.mubr.f32.gmra.mrb[0].mxu0 %v9350
        %v9561 = vpop.f32.mrb[0].mxu0
        %v9562 = vadd.f32 0.0, %v9561
        %v9563 = vpop.f32.mrb[0].mxu0
        %9564 = vmatprep.mubr.f32.mxu0 0.0
        %9565 = vmatmul.mubr.f32.gmra.mrb[0].mxu0 %v9353
        %v9566 = vpop.f32.mrb[0].mxu0
        %v9567 = vadd.f32 0.0, %v9566
        %v9568 = vpop.f32.mrb[0].mxu0
        %9569 = vmatprep.mubr.f32.mxu0 0.0
        %9570 = vmatmul.mubr.f32.gmra.mrb[0].mxu0 %v9356
        %v9571 = vpop.f32.mrb[0].mxu0
        %v9572 = vadd.f32 0.0, %v9571
        %v9573 = vpop.f32.mrb[0].mxu0
        %9574 = vmatprep.mubr.f32.mxu0 0.0
        %9575 = vmatmul.mubr.f32.gmra.mrb[0].mxu0 %v9359
        %v9576 = vpop.f32.mrb[0].mxu0
        %v9577 = vadd.f32 0.0, %v9576
        %v9578 = vpop.f32.mrb[0].mxu0
        %9579 = vmatprep.mubr.f32.mxu0 0.0
        %9580 = vmatmul.mubr.f32.gmra.mrb[0].mxu0 %v9362
        %v9581 = vpop.f32.mrb[0].mxu0
        %v9582 = vadd.f32 0.0, %v9581
        %v9583 = vpop.f32.mrb[0].mxu0
        %9584 = vmatprep.mubr.f32.mxu0 0.0
        %9585 = vmatmul.mubr.f32.gmra.mrb[0].mxu0 %v9365
        %v9586 = vpop.f32.mrb[0].mxu0
        %v9587 = vadd.f32 0.0, %v9586
        %v9588 = vpop.f32.mrb[0].mxu0
        %9589 = vmatprep.mubr.f32.mxu0 0.0
        %9590 = vmatmul.mubr.f32.gmra.mrb[0].mxu0 %v9368
        %v9591 = vpop.f32.mrb[0].mxu0
        %v9592 = vadd.f32 0.0, %v9591
        %v9593 = vpop.f32.mrb[0].mxu0
        %9594 = vdwg.mxu0
        %v9595 = vadd.f32 %v9206, %v9437
        %v9596 = vadd.f32 %v9207, %v9442
        %v9597 = vadd.f32 %v9208, %v9447
        %v9598 = vadd.f32 %v9209, %v9452
        %v9599 = vadd.f32 %v9210, %v9457
        %v9600 = vadd.f32 %v9211, %v9462
        %v9601 = vadd.f32 %v9212, %v9467
        %v9602 = vadd.f32 %v9213, %v9472
        %v9603 = vadd.f32 %v9214, %v9477
        %v9604 = vadd.f32 %v9215, %v9482
        %v9605 = vadd.f32 %v9216, %v9487
        %v9606 = vadd.f32 %v9217, %v9492
        %v9607 = vadd.f32 %v9218, %v9497
        %v9608 = vadd.f32 %v9219, %v9502
        %v9609 = vadd.f32 %v9220, %v9507
        %v9610 = vadd.f32 %v9221, %v9512
        %v9611 = vadd.f32 %v9222, %v9517
        %v9612 = vadd.f32 %v9223, %v9522
        %v9613 = vadd.f32 %v9224, %v9527
        %v9614 = vadd.f32 %v9225, %v9532
        %v9615 = vadd.f32 %v9226, %v9537
        %v9616 = vadd.f32 %v9227, %v9542
        %v9617 = vadd.f32 %v9228, %v9547
        %v9618 = vadd.f32 %v9229, %v9552
        %v9619 = vadd.f32 %v9230, %v9557
        %v9620 = vadd.f32 %v9231, %v9562
        %v9621 = vadd.f32 %v9232, %v9567
        %v9622 = vadd.f32 %v9233, %v9572
        %v9623 = vadd.f32 %v9234, %v9577
        %v9624 = vadd.f32 %v9235, %v9582
        %v9625 = vadd.f32 %v9236, %v9587
        %v9626 = vadd.f32 %v9237, %v9592
        %v9627 = vld [vmem:[%s8848 + $0x9] sm:$0xff]
        %v9628 = vld [vmem:[%s8848 + $0x11] sm:$0xff]
        %v9629 = vld [vmem:[%s8848 + $0x29] sm:$0xff]
        %v9630 = vld [vmem:[%s8848 + $0x31] sm:$0xff]
        %v9631 = vld [vmem:[%s8848 + $0x49] sm:$0xff]
        %v9632 = vld [vmem:[%s8848 + $0x51] sm:$0xff]
        %v9633 = vld [vmem:[%s8848 + $0x69] sm:$0xff]
        %v9634 = vld [vmem:[%s8848 + $0x71] sm:$0xff]
        %v9635 = vld [vmem:[%s8848 + $0x89] sm:$0xff]
        %v9636 = vld [vmem:[%s8848 + $0x91] sm:$0xff]
        %v9637 = vld [vmem:[%s8848 + $0xa9] sm:$0xff]
        %v9638 = vld [vmem:[%s8848 + $0xb1] sm:$0xff]
        %v9639 = vld [vmem:[%s8848 + $0xc9] sm:$0xff]
        %v9640 = vld [vmem:[%s8848 + $0xd1] sm:$0xff]
        %v9641 = vld [vmem:[%s8848 + $0xe9] sm:$0xff]
        %v9642 = vld [vmem:[%s8848 + $0xf1] sm:$0xff]
        %v9643 = vld [vmem:[%s8848 + $0x109] sm:$0xff]
        %v9644 = vld [vmem:[%s8848 + $0x111] sm:$0xff]
        %v9645 = vld [vmem:[%s8848 + $0x129] sm:$0xff]
        %v9646 = vld [vmem:[%s8848 + $0x131] sm:$0xff]
        %v9647 = vld [vmem:[%s8848 + $0x149] sm:$0xff]
        %v9648 = vld [vmem:[%s8848 + $0x151] sm:$0xff]
        %v9649 = vld [vmem:[%s8848 + $0x169] sm:$0xff]
        %v9650 = vld [vmem:[%s8848 + $0x171] sm:$0xff]
        %v9651 = vld [vmem:[%s8848 + $0x189] sm:$0xff]
        %v9652 = vld [vmem:[%s8848 + $0x191] sm:$0xff]
        %v9653 = vld [vmem:[%s8848 + $0x1a9] sm:$0xff]
        %v9654 = vld [vmem:[%s8848 + $0x1b1] sm:$0xff]
        %v9655 = vld [vmem:[%s8848 + $0x1c9] sm:$0xff]
        %v9656 = vld [vmem:[%s8848 + $0x1d1] sm:$0xff]
        %v9657 = vld [vmem:[%s8848 + $0x1e9] sm:$0xff]
        %v9658 = vld [vmem:[%s8848 + $0x1f1] sm:$0xff]
        %s9659 = scalar_lea.vmem [#allocation6], 192
        %v9660 = vld [vmem:[%s9659] sm:$0xff]
        %v9661 = vld [vmem:[%s9659 + $0x8] sm:$0xff]
        %v9662 = vld [vmem:[%s9659 + $0x10] sm:$0xff]
        %v9664 = vsel %vm6310, %v9627, 0
        %v9667 = vsel %vm6310, %v9628, 0
        %v9670 = vsel %vm6310, %v9629, 0
        %v9673 = vsel %vm6310, %v9630, 0
        %v9676 = vsel %vm6310, %v9631, 0
        %v9679 = vsel %vm6310, %v9632, 0
        %v9682 = vsel %vm6310, %v9633, 0
        %v9685 = vsel %vm6310, %v9634, 0
        %v9688 = vsel %vm6310, %v9635, 0
        %v9691 = vsel %vm6310, %v9636, 0
        %v9694 = vsel %vm6310, %v9637, 0
        %v9697 = vsel %vm6310, %v9638, 0
        %v9700 = vsel %vm6310, %v9639, 0
        %v9703 = vsel %vm6310, %v9640, 0
        %v9706 = vsel %vm6310, %v9641, 0
        %v9709 = vsel %vm6310, %v9642, 0
        %v9712 = vsel %vm6310, %v9643, 0
        %v9715 = vsel %vm6310, %v9644, 0
        %v9718 = vsel %vm6310, %v9645, 0
        %v9721 = vsel %vm6310, %v9646, 0
        %v9724 = vsel %vm6310, %v9647, 0
        %v9727 = vsel %vm6310, %v9648, 0
        %v9730 = vsel %vm6310, %v9649, 0
        %v9733 = vsel %vm6310, %v9650, 0
        %v9736 = vsel %vm6310, %v9651, 0
        %v9739 = vsel %vm6310, %v9652, 0
        %v9742 = vsel %vm6310, %v9653, 0
        %v9745 = vsel %vm6310, %v9654, 0
        %v9748 = vsel %vm6310, %v9655, 0
        %v9751 = vsel %vm6310, %v9656, 0
        %v9754 = vsel %vm6310, %v9657, 0
        %v9757 = vsel %vm6310, %v9658, 0
        %9759 = vmatprep.subr.mxu0 0.0
        %9760 = vmatpush1.msra.mxu0 %v9660
        %9761 = vmatprep.subr.mxu0 0.0
        %9762 = vmatpush1.msra.mxu0 %v9661
        %9763 = vmatprep.subr.mxu0 0.0
        %9764 = vmatpush1.msra.mxu0 %v9662
        %9765 = vmatprep.subr.mxu0 0.0
        %9766 = vmatpush1.msra.mxu0 0.0
        %9767 = vmatprep.subr.mxu0 0.0
        %9768 = vmatpush1.msra.mxu0 0.0
        %9769 = vmatprep.subr.mxu0 0.0
        %9770 = vmatpush1.msra.mxu0 0.0
        %9771 = vmatprep.subr.mxu0 0.0
        %9772 = vmatpush1.msra.mxu0 0.0
        %9773 = vmatprep.subr.mxu0 0.0
        %9774 = vmatpush1.msra.mxu0 0.0
        %9775 = vmatprep.subr.mxu0 0.0
        %9776 = vmatpush1.msra.mxu0 0.0
        %9777 = vmatprep.subr.mxu0 0.0
        %9778 = vmatpush1.msra.mxu0 0.0
        %9779 = vmatprep.subr.mxu0 0.0
        %9780 = vmatpush1.msra.mxu0 0.0
        %9781 = vmatprep.subr.mxu0 0.0
        %9782 = vmatpush1.msra.mxu0 0.0
        %9783 = vmatprep.subr.mxu0 0.0
        %9784 = vmatpush1.msra.mxu0 0.0
        %9785 = vmatprep.subr.mxu0 0.0
        %9786 = vmatpush1.msra.mxu0 0.0
        %9787 = vmatprep.subr.mxu0 0.0
        %9788 = vmatpush1.msra.mxu0 0.0
        %9789 = vmatprep.subr.mxu0 0.0
        %9790 = vmatpush1.msra.mxu0 0.0
        %9791 = vmatprep.subr.mxu0 0.0
        %9792 = vmatpush1.msra.mxu0 0.0
        %9793 = vmatprep.subr.mxu0 0.0
        %9794 = vmatpush1.msra.mxu0 0.0
        %9795 = vmatprep.subr.mxu0 0.0
        %9796 = vmatpush1.msra.mxu0 0.0
        %9797 = vmatprep.subr.mxu0 0.0
        %9798 = vmatpush1.msra.mxu0 0.0
        %9799 = vmatprep.subr.mxu0 0.0
        %9800 = vmatpush1.msra.mxu0 0.0
        %9801 = vmatprep.subr.mxu0 0.0
        %9802 = vmatpush1.msra.mxu0 0.0
        %9803 = vmatprep.subr.mxu0 0.0
        %9804 = vmatpush1.msra.mxu0 0.0
        %9805 = vmatprep.subr.mxu0 0.0
        %9806 = vmatpush1.msra.mxu0 0.0
        %9807 = vmatprep.subr.mxu0 0.0
        %9808 = vmatpush1.msra.mxu0 0.0
        %9809 = vmatprep.subr.mxu0 0.0
        %9810 = vmatpush1.msra.mxu0 0.0
        %9811 = vmatprep.subr.mxu0 0.0
        %9812 = vmatpush1.msra.mxu0 0.0
        %9813 = vmatprep.subr.mxu0 0.0
        %9814 = vmatpush1.msra.mxu0 0.0
        %9815 = vmatprep.subr.mxu0 0.0
        %9816 = vmatpush1.msra.mxu0 0.0
        %9817 = vmatprep.subr.mxu0 0.0
        %9818 = vmatpush1.msra.mxu0 0.0
        %9819 = vmatprep.subr.mxu0 0.0
        %9820 = vmatpush1.msra.mxu0 0.0
        %9821 = vmatprep.subr.mxu0 0.0
        %9822 = vmatpush1.msra.mxu0 0.0
        %9823 = vmatprep.mubr.f32.mxu0 0.0
        %9824 = vmatmul.mubr.f32.gmra.mrb[0].mxu0 %v9664
        %v9825 = vpop.f32.mrb[0].mxu0
        %v9826 = vadd.f32 0.0, %v9825
        %v9827 = vpop.f32.mrb[0].mxu0
        %9828 = vmatprep.mubr.f32.mxu0 0.0
        %9829 = vmatmul.mubr.f32.gmra.mrb[0].mxu0 %v9667
        %v9830 = vpop.f32.mrb[0].mxu0
        %v9831 = vadd.f32 0.0, %v9830
        %v9832 = vpop.f32.mrb[0].mxu0
        %9833 = vmatprep.mubr.f32.mxu0 0.0
        %9834 = vmatmul.mubr.f32.gmra.mrb[0].mxu0 %v9670
        %v9835 = vpop.f32.mrb[0].mxu0
        %v9836 = vadd.f32 0.0, %v9835
        %v9837 = vpop.f32.mrb[0].mxu0
        %9838 = vmatprep.mubr.f32.mxu0 0.0
        %9839 = vmatmul.mubr.f32.gmra.mrb[0].mxu0 %v9673
        %v9840 = vpop.f32.mrb[0].mxu0
        %v9841 = vadd.f32 0.0, %v9840
        %v9842 = vpop.f32.mrb[0].mxu0
        %9843 = vmatprep.mubr.f32.mxu0 0.0
        %9844 = vmatmul.mubr.f32.gmra.mrb[0].mxu0 %v9676
        %v9845 = vpop.f32.mrb[0].mxu0
        %v9846 = vadd.f32 0.0, %v9845
        %v9847 = vpop.f32.mrb[0].mxu0
        %9848 = vmatprep.mubr.f32.mxu0 0.0
        %9849 = vmatmul.mubr.f32.gmra.mrb[0].mxu0 %v9679
        %v9850 = vpop.f32.mrb[0].mxu0
        %v9851 = vadd.f32 0.0, %v9850
        %v9852 = vpop.f32.mrb[0].mxu0
        %9853 = vmatprep.mubr.f32.mxu0 0.0
        %9854 = vmatmul.mubr.f32.gmra.mrb[0].mxu0 %v9682
        %v9855 = vpop.f32.mrb[0].mxu0
        %v9856 = vadd.f32 0.0, %v9855
        %v9857 = vpop.f32.mrb[0].mxu0
        %9858 = vmatprep.mubr.f32.mxu0 0.0
        %9859 = vmatmul.mubr.f32.gmra.mrb[0].mxu0 %v9685
        %v9860 = vpop.f32.mrb[0].mxu0
        %v9861 = vadd.f32 0.0, %v9860
        %v9862 = vpop.f32.mrb[0].mxu0
        %9863 = vmatprep.mubr.f32.mxu0 0.0
        %9864 = vmatmul.mubr.f32.gmra.mrb[0].mxu0 %v9688
        %v9865 = vpop.f32.mrb[0].mxu0
        %v9866 = vadd.f32 0.0, %v9865
        %v9867 = vpop.f32.mrb[0].mxu0
        %9868 = vmatprep.mubr.f32.mxu0 0.0
        %9869 = vmatmul.mubr.f32.gmra.mrb[0].mxu0 %v9691
        %v9870 = vpop.f32.mrb[0].mxu0
        %v9871 = vadd.f32 0.0, %v9870
        %v9872 = vpop.f32.mrb[0].mxu0
        %9873 = vmatprep.mubr.f32.mxu0 0.0
        %9874 = vmatmul.mubr.f32.gmra.mrb[0].mxu0 %v9694
        %v9875 = vpop.f32.mrb[0].mxu0
        %v9876 = vadd.f32 0.0, %v9875
        %v9877 = vpop.f32.mrb[0].mxu0
        %9878 = vmatprep.mubr.f32.mxu0 0.0
        %9879 = vmatmul.mubr.f32.gmra.mrb[0].mxu0 %v9697
        %v9880 = vpop.f32.mrb[0].mxu0
        %v9881 = vadd.f32 0.0, %v9880
        %v9882 = vpop.f32.mrb[0].mxu0
        %9883 = vmatprep.mubr.f32.mxu0 0.0
        %9884 = vmatmul.mubr.f32.gmra.mrb[0].mxu0 %v9700
        %v9885 = vpop.f32.mrb[0].mxu0
        %v9886 = vadd.f32 0.0, %v9885
        %v9887 = vpop.f32.mrb[0].mxu0
        %9888 = vmatprep.mubr.f32.mxu0 0.0
        %9889 = vmatmul.mubr.f32.gmra.mrb[0].mxu0 %v9703
        %v9890 = vpop.f32.mrb[0].mxu0
        %v9891 = vadd.f32 0.0, %v9890
        %v9892 = vpop.f32.mrb[0].mxu0
        %9893 = vmatprep.mubr.f32.mxu0 0.0
        %9894 = vmatmul.mubr.f32.gmra.mrb[0].mxu0 %v9706
        %v9895 = vpop.f32.mrb[0].mxu0
        %v9896 = vadd.f32 0.0, %v9895
        %v9897 = vpop.f32.mrb[0].mxu0
        %9898 = vmatprep.mubr.f32.mxu0 0.0
        %9899 = vmatmul.mubr.f32.gmra.mrb[0].mxu0 %v9709
        %v9900 = vpop.f32.mrb[0].mxu0
        %v9901 = vadd.f32 0.0, %v9900
        %v9902 = vpop.f32.mrb[0].mxu0
        %9903 = vmatprep.mubr.f32.mxu0 0.0
        %9904 = vmatmul.mubr.f32.gmra.mrb[0].mxu0 %v9712
        %v9905 = vpop.f32.mrb[0].mxu0
        %v9906 = vadd.f32 0.0, %v9905
        %v9907 = vpop.f32.mrb[0].mxu0
        %9908 = vmatprep.mubr.f32.mxu0 0.0
        %9909 = vmatmul.mubr.f32.gmra.mrb[0].mxu0 %v9715
        %v9910 = vpop.f32.mrb[0].mxu0
        %v9911 = vadd.f32 0.0, %v9910
        %v9912 = vpop.f32.mrb[0].mxu0
        %9913 = vmatprep.mubr.f32.mxu0 0.0
        %9914 = vmatmul.mubr.f32.gmra.mrb[0].mxu0 %v9718
        %v9915 = vpop.f32.mrb[0].mxu0
        %v9916 = vadd.f32 0.0, %v9915
        %v9917 = vpop.f32.mrb[0].mxu0
        %9918 = vmatprep.mubr.f32.mxu0 0.0
        %9919 = vmatmul.mubr.f32.gmra.mrb[0].mxu0 %v9721
        %v9920 = vpop.f32.mrb[0].mxu0
        %v9921 = vadd.f32 0.0, %v9920
        %v9922 = vpop.f32.mrb[0].mxu0
        %9923 = vmatprep.mubr.f32.mxu0 0.0
        %9924 = vmatmul.mubr.f32.gmra.mrb[0].mxu0 %v9724
        %v9925 = vpop.f32.mrb[0].mxu0
        %v9926 = vadd.f32 0.0, %v9925
        %v9927 = vpop.f32.mrb[0].mxu0
        %9928 = vmatprep.mubr.f32.mxu0 0.0
        %9929 = vmatmul.mubr.f32.gmra.mrb[0].mxu0 %v9727
        %v9930 = vpop.f32.mrb[0].mxu0
        %v9931 = vadd.f32 0.0, %v9930
        %v9932 = vpop.f32.mrb[0].mxu0
        %9933 = vmatprep.mubr.f32.mxu0 0.0
        %9934 = vmatmul.mubr.f32.gmra.mrb[0].mxu0 %v9730
        %v9935 = vpop.f32.mrb[0].mxu0
        %v9936 = vadd.f32 0.0, %v9935
        %v9937 = vpop.f32.mrb[0].mxu0
        %9938 = vmatprep.mubr.f32.mxu0 0.0
        %9939 = vmatmul.mubr.f32.gmra.mrb[0].mxu0 %v9733
        %v9940 = vpop.f32.mrb[0].mxu0
        %v9941 = vadd.f32 0.0, %v9940
        %v9942 = vpop.f32.mrb[0].mxu0
        %9943 = vmatprep.mubr.f32.mxu0 0.0
        %9944 = vmatmul.mubr.f32.gmra.mrb[0].mxu0 %v9736
        %v9945 = vpop.f32.mrb[0].mxu0
        %v9946 = vadd.f32 0.0, %v9945
        %v9947 = vpop.f32.mrb[0].mxu0
        %9948 = vmatprep.mubr.f32.mxu0 0.0
        %9949 = vmatmul.mubr.f32.gmra.mrb[0].mxu0 %v9739
        %v9950 = vpop.f32.mrb[0].mxu0
        %v9951 = vadd.f32 0.0, %v9950
        %v9952 = vpop.f32.mrb[0].mxu0
        %9953 = vmatprep.mubr.f32.mxu0 0.0
        %9954 = vmatmul.mubr.f32.gmra.mrb[0].mxu0 %v9742
        %v9955 = vpop.f32.mrb[0].mxu0
        %v9956 = vadd.f32 0.0, %v9955
        %v9957 = vpop.f32.mrb[0].mxu0
        %9958 = vmatprep.mubr.f32.mxu0 0.0
        %9959 = vmatmul.mubr.f32.gmra.mrb[0].mxu0 %v9745
        %v9960 = vpop.f32.mrb[0].mxu0
        %v9961 = vadd.f32 0.0, %v9960
        %v9962 = vpop.f32.mrb[0].mxu0
        %9963 = vmatprep.mubr.f32.mxu0 0.0
        %9964 = vmatmul.mubr.f32.gmra.mrb[0].mxu0 %v9748
        %v9965 = vpop.f32.mrb[0].mxu0
        %v9966 = vadd.f32 0.0, %v9965
        %v9967 = vpop.f32.mrb[0].mxu0
        %9968 = vmatprep.mubr.f32.mxu0 0.0
        %9969 = vmatmul.mubr.f32.gmra.mrb[0].mxu0 %v9751
        %v9970 = vpop.f32.mrb[0].mxu0
        %v9971 = vadd.f32 0.0, %v9970
        %v9972 = vpop.f32.mrb[0].mxu0
        %9973 = vmatprep.mubr.f32.mxu0 0.0
        %9974 = vmatmul.mubr.f32.gmra.mrb[0].mxu0 %v9754
        %v9975 = vpop.f32.mrb[0].mxu0
        %v9976 = vadd.f32 0.0, %v9975
        %v9977 = vpop.f32.mrb[0].mxu0
        %9978 = vmatprep.mubr.f32.mxu0 0.0
        %9979 = vmatmul.mubr.f32.gmra.mrb[0].mxu0 %v9757
        %v9980 = vpop.f32.mrb[0].mxu0
        %v9981 = vadd.f32 0.0, %v9980
        %v9982 = vpop.f32.mrb[0].mxu0
        %9983 = vdwg.mxu0
        %v9984 = vadd.f32 %v9595, %v9826
        %v9985 = vadd.f32 %v9596, %v9831
        %v9986 = vadd.f32 %v9597, %v9836
        %v9987 = vadd.f32 %v9598, %v9841
        %v9988 = vadd.f32 %v9599, %v9846
        %v9989 = vadd.f32 %v9600, %v9851
        %v9990 = vadd.f32 %v9601, %v9856
        %v9991 = vadd.f32 %v9602, %v9861
        %v9992 = vadd.f32 %v9603, %v9866
        %v9993 = vadd.f32 %v9604, %v9871
        %v9994 = vadd.f32 %v9605, %v9876
        %v9995 = vadd.f32 %v9606, %v9881
        %v9996 = vadd.f32 %v9607, %v9886
        %v9997 = vadd.f32 %v9608, %v9891
        %v9998 = vadd.f32 %v9609, %v9896
        %v9999 = vadd.f32 %v9610, %v9901
        %v10000 = vadd.f32 %v9611, %v9906
        %v10001 = vadd.f32 %v9612, %v9911
        %v10002 = vadd.f32 %v9613, %v9916
        %v10003 = vadd.f32 %v9614, %v9921
        %v10004 = vadd.f32 %v9615, %v9926
        %v10005 = vadd.f32 %v9616, %v9931
        %v10006 = vadd.f32 %v9617, %v9936
        %v10007 = vadd.f32 %v9618, %v9941
        %v10008 = vadd.f32 %v9619, %v9946
        %v10009 = vadd.f32 %v9620, %v9951
        %v10010 = vadd.f32 %v9621, %v9956
        %v10011 = vadd.f32 %v9622, %v9961
        %v10012 = vadd.f32 %v9623, %v9966
        %v10013 = vadd.f32 %v9624, %v9971
        %v10014 = vadd.f32 %v9625, %v9976
        %v10015 = vadd.f32 %v9626, %v9981
        %v10016 = vld [vmem:[%s6] sm:$0x1]
        %v10018 = vlaneseq
        %v10019 = vshrl.u32 %v10018, 7
        %v10020 = vsub.s32 0, %v10019
        %v10021 = vrot.slane %v10016, %v10020
        %v10023 = vadd.f32 %v9984, %v10021
        %v10024 = vadd.f32 %v9985, %v10021
        %v10025 = vadd.f32 %v9986, %v10021
        %v10026 = vadd.f32 %v9987, %v10021
        %v10027 = vadd.f32 %v9988, %v10021
        %v10028 = vadd.f32 %v9989, %v10021
        %v10029 = vadd.f32 %v9990, %v10021
        %v10030 = vadd.f32 %v9991, %v10021
        %v10031 = vadd.f32 %v9992, %v10021
        %v10032 = vadd.f32 %v9993, %v10021
        %v10033 = vadd.f32 %v9994, %v10021
        %v10034 = vadd.f32 %v9995, %v10021
        %v10035 = vadd.f32 %v9996, %v10021
        %v10036 = vadd.f32 %v9997, %v10021
        %v10037 = vadd.f32 %v9998, %v10021
        %v10038 = vadd.f32 %v9999, %v10021
        %v10039 = vadd.f32 %v10000, %v10021
        %v10040 = vadd.f32 %v10001, %v10021
        %v10041 = vadd.f32 %v10002, %v10021
        %v10042 = vadd.f32 %v10003, %v10021
        %v10043 = vadd.f32 %v10004, %v10021
        %v10044 = vadd.f32 %v10005, %v10021
        %v10045 = vadd.f32 %v10006, %v10021
        %v10046 = vadd.f32 %v10007, %v10021
        %v10047 = vadd.f32 %v10008, %v10021
        %v10048 = vadd.f32 %v10009, %v10021
        %v10049 = vadd.f32 %v10010, %v10021
        %v10050 = vadd.f32 %v10011, %v10021
        %v10051 = vadd.f32 %v10012, %v10021
        %v10052 = vadd.f32 %v10013, %v10021
        %v10053 = vadd.f32 %v10014, %v10021
        %v10054 = vadd.f32 %v10015, %v10021
        %v10055 = vmax.f32 %v10023, 0.0
        %v10056 = vmax.f32 %v10024, 0.0
        %v10057 = vmax.f32 %v10025, 0.0
        %v10058 = vmax.f32 %v10026, 0.0
        %v10059 = vmax.f32 %v10027, 0.0
        %v10060 = vmax.f32 %v10028, 0.0
        %v10061 = vmax.f32 %v10029, 0.0
        %v10062 = vmax.f32 %v10030, 0.0
        %v10063 = vmax.f32 %v10031, 0.0
        %v10064 = vmax.f32 %v10032, 0.0
        %v10065 = vmax.f32 %v10033, 0.0
        %v10066 = vmax.f32 %v10034, 0.0
        %v10067 = vmax.f32 %v10035, 0.0
        %v10068 = vmax.f32 %v10036, 0.0
        %v10069 = vmax.f32 %v10037, 0.0
        %v10070 = vmax.f32 %v10038, 0.0
        %v10071 = vmax.f32 %v10039, 0.0
        %v10072 = vmax.f32 %v10040, 0.0
        %v10073 = vmax.f32 %v10041, 0.0
        %v10074 = vmax.f32 %v10042, 0.0
        %v10075 = vmax.f32 %v10043, 0.0
        %v10076 = vmax.f32 %v10044, 0.0
        %v10077 = vmax.f32 %v10045, 0.0
        %v10078 = vmax.f32 %v10046, 0.0
        %v10079 = vmax.f32 %v10047, 0.0
        %v10080 = vmax.f32 %v10048, 0.0
        %v10081 = vmax.f32 %v10049, 0.0
        %v10082 = vmax.f32 %v10050, 0.0
        %v10083 = vmax.f32 %v10051, 0.0
        %v10084 = vmax.f32 %v10052, 0.0
        %v10085 = vmax.f32 %v10053, 0.0
        %v10086 = vmax.f32 %v10054, 0.0
        %v10087 = vld [vmem:[%s7] sm:$0x1]
        %v10088 = vld [vmem:[#allocation5] sm:$0x1]
        %10090 = vset.pattern.permute.xlu0 0
        %10091 = vperm.xlu0 %10090, %v10088
        %v10092 = vpop.permute.xlu0 %10091
        %v10094 = vlaneseq
        %v10095 = vshrl.u32 %v10094, 7
        %v10096 = vsub.s32 0, %v10095
        %v10097 = vrot.slane %v10092, %v10096
        %v10099 = vsel %vm4585, %v10087, 0
        %v10102 = vsel %vm4585, %v10055, 0
        %v10105 = vsel %vm4585, %v10056, 0
        %v10108 = vsel %vm4585, %v10057, 0
        %v10111 = vsel %vm4585, %v10058, 0
        %v10114 = vsel %vm4585, %v10059, 0
        %v10117 = vsel %vm4585, %v10060, 0
        %v10120 = vsel %vm4585, %v10061, 0
        %v10123 = vsel %vm4585, %v10062, 0
        %v10126 = vsel %vm4585, %v10063, 0
        %v10129 = vsel %vm4585, %v10064, 0
        %v10132 = vsel %vm4585, %v10065, 0
        %v10135 = vsel %vm4585, %v10066, 0
        %v10138 = vsel %vm4585, %v10067, 0
        %v10141 = vsel %vm4585, %v10068, 0
        %v10144 = vsel %vm4585, %v10069, 0
        %v10147 = vsel %vm4585, %v10070, 0
        %v10150 = vsel %vm4585, %v10071, 0
        %v10153 = vsel %vm4585, %v10072, 0
        %v10156 = vsel %vm4585, %v10073, 0
        %v10159 = vsel %vm4585, %v10074, 0
        %v10162 = vsel %vm4585, %v10075, 0
        %v10165 = vsel %vm4585, %v10076, 0
        %v10168 = vsel %vm4585, %v10077, 0
        %v10171 = vsel %vm4585, %v10078, 0
        %v10174 = vsel %vm4585, %v10079, 0
        %v10177 = vsel %vm4585, %v10080, 0
        %v10180 = vsel %vm4585, %v10081, 0
        %v10183 = vsel %vm4585, %v10082, 0
        %v10186 = vsel %vm4585, %v10083, 0
        %v10189 = vsel %vm4585, %v10084, 0
        %v10192 = vsel %vm4585, %v10085, 0
        %v10195 = vsel %vm4585, %v10086, 0
        %10197 = vmatprep.subr.mxu0 0.0
        %10198 = vmatpush1.xpose.msra.mxu0 %v10102
        %10199 = vmatprep.subr.mxu0 0.0
        %10200 = vmatpush1.xpose.msra.mxu0 %v10105
        %10201 = vmatprep.subr.mxu0 0.0
        %10202 = vmatpush1.xpose.msra.mxu0 %v10108
        %10203 = vmatprep.subr.mxu0 0.0
        %10204 = vmatpush1.xpose.msra.mxu0 %v10111
        %10205 = vmatprep.subr.mxu0 0.0
        %10206 = vmatpush1.xpose.msra.mxu0 %v10114
        %10207 = vmatprep.subr.mxu0 0.0
        %10208 = vmatpush1.xpose.msra.mxu0 %v10117
        %10209 = vmatprep.subr.mxu0 0.0
        %10210 = vmatpush1.xpose.msra.mxu0 %v10120
        %10211 = vmatprep.subr.mxu0 0.0
        %10212 = vmatpush1.xpose.msra.mxu0 %v10123
        %10213 = vmatprep.subr.mxu0 0.0
        %10214 = vmatpush1.xpose.msra.mxu0 %v10126
        %10215 = vmatprep.subr.mxu0 0.0
        %10216 = vmatpush1.xpose.msra.mxu0 %v10129
        %10217 = vmatprep.subr.mxu0 0.0
        %10218 = vmatpush1.xpose.msra.mxu0 %v10132
        %10219 = vmatprep.subr.mxu0 0.0
        %10220 = vmatpush1.xpose.msra.mxu0 %v10135
        %10221 = vmatprep.subr.mxu0 0.0
        %10222 = vmatpush1.xpose.msra.mxu0 %v10138
        %10223 = vmatprep.subr.mxu0 0.0
        %10224 = vmatpush1.xpose.msra.mxu0 %v10141
        %10225 = vmatprep.subr.mxu0 0.0
        %10226 = vmatpush1.xpose.msra.mxu0 %v10144
        %10227 = vmatprep.subr.mxu0 0.0
        %10228 = vmatpush1.xpose.msra.mxu0 %v10147
        %10229 = vmatprep.subr.mxu0 0.0
        %10230 = vmatpush1.xpose.msra.mxu0 %v10150
        %10231 = vmatprep.subr.mxu0 0.0
        %10232 = vmatpush1.xpose.msra.mxu0 %v10153
        %10233 = vmatprep.subr.mxu0 0.0
        %10234 = vmatpush1.xpose.msra.mxu0 %v10156
        %10235 = vmatprep.subr.mxu0 0.0
        %10236 = vmatpush1.xpose.msra.mxu0 %v10159
        %10237 = vmatprep.subr.mxu0 0.0
        %10238 = vmatpush1.xpose.msra.mxu0 %v10162
        %10239 = vmatprep.subr.mxu0 0.0
        %10240 = vmatpush1.xpose.msra.mxu0 %v10165
        %10241 = vmatprep.subr.mxu0 0.0
        %10242 = vmatpush1.xpose.msra.mxu0 %v10168
        %10243 = vmatprep.subr.mxu0 0.0
        %10244 = vmatpush1.xpose.msra.mxu0 %v10171
        %10245 = vmatprep.subr.mxu0 0.0
        %10246 = vmatpush1.xpose.msra.mxu0 %v10174
        %10247 = vmatprep.subr.mxu0 0.0
        %10248 = vmatpush1.xpose.msra.mxu0 %v10177
        %10249 = vmatprep.subr.mxu0 0.0
        %10250 = vmatpush1.xpose.msra.mxu0 %v10180
        %10251 = vmatprep.subr.mxu0 0.0
        %10252 = vmatpush1.xpose.msra.mxu0 %v10183
        %10253 = vmatprep.subr.mxu0 0.0
        %10254 = vmatpush1.xpose.msra.mxu0 %v10186
        %10255 = vmatprep.subr.mxu0 0.0
        %10256 = vmatpush1.xpose.msra.mxu0 %v10189
        %10257 = vmatprep.subr.mxu0 0.0
        %10258 = vmatpush1.xpose.msra.mxu0 %v10192
        %10259 = vmatprep.subr.mxu0 0.0
        %10260 = vmatpush1.xpose.msra.mxu0 %v10195
        %10261 = vmatprep.mubr.f32.mxu0 0.0
        %10262 = vmatmul.mubr.f32.gmra.mrb[0].mxu0 %v10099
        %v10263 = vpop.f32.mrb[0].mxu0
        %v10264 = vadd.f32 %v10097, %v10263
        %v10265 = vpop.f32.mrb[0].mxu0
        %v10266 = vadd.f32 %v10097, %v10265
        %10267 = vdwg.mxu0
        %v10268 = vsub.f32 0.0, %v10264
        %v10269 = vsub.f32 0.0, %v10266
        %v10270 = vmul.f32 %v10268, 1.442695
        %v10271 = vpow.pop %v10270
        %v10272 = vmul.f32 %v10269, 1.442695
        %v10273 = vpow.pop %v10272
        %v10274 = vadd.f32 %v10271, 1.0
        %v10275 = vadd.f32 %v10273, 1.0
        %v10276 = vrcp.pop %v10274
        %v10277 = vmul.f32 1.0, %v10276
        %v10278 = vrcp.pop %v10275
        %v10279 = vmul.f32 1.0, %v10278
        %v10282 = vcombine.low %v10277, %v10279
        %v10284 = vunpack.c.l.s4 1966171168
        %v10285 = vunpack.c.0.s8 %v10284
        %v10286 = vlaneseq
        %v10287 = vshrl.u32 %v10286, 7
        %v10288 = vsub.s32 %v10285, %v10287
        %v10289 = vrot.slane %v10282, %v10288
        %v10291 = vunpack.c.l.s4 1966171168
        %v10292 = vunpack.c.0.s8 %v10291
        %v10293 = vlaneseq
        %v10294 = vshrl.u32 %v10293, 7
        %v10295 = vsub.s32 %v10292, %v10294
        %v10296 = vrot.slane %v10289, %v10295
        %v10298 = vlaneseq
        %vm10299 = vcmp.ge.s32.totalorder %v10298, 0
        %vm10300 = vcmp.lt.s32.totalorder %v10298, 256
        %vm10301 = vmand %vm10299, %vm10300
        %10302 = vst.msk [vmem:[%s416] sm:$0x3] %vm10301, %v10296
        %p10303 = scmp.lt.s32.totalorder %s26, 1
        %s10304 = scalar_select %p10303, %s26, 1
        %s10305 = smul.addr %s10304, 2
        %s10306 = scalar_lea.vmem %s11, %s10305
        // Predicated region
        $region73: #{unet_segmenter_forward.1} parent=63 // pred_check
          %p10307 = pneg %p280
        $region74: #{unet_segmenter_forward.1} parent=63 // pred_check_branch
          %10309 = sbr.rel (%p10307) target = $region76
        $region75: #{unet_segmenter_forward.1} parent=63 // pred_region
          _
        $region76: #{unet_segmenter_forward.1} parent=63 // pred_fallthru
          _
      $region64: #{unet_segmenter_forward.1} parent=5 // pred_fallthru
        _
      %p10310 = scmp.le.s32.totalorder 2, %s21
      // Predicated region
      $region77: #{unet_segmenter_forward.1} parent=5 // pred_check
        %p10311 = pneg %p10310
      $region78: #{unet_segmenter_forward.1} parent=5 // pred_check_branch
        %10313 = sbr.rel (%p10311) target = $region80
      $region79: #{unet_segmenter_forward.1} parent=5 // pred_region
        %s10314 = ssub.s32 %s21, 2
        // Predicated region
        $region81: #{unet_segmenter_forward.1} parent=79 // pred_check
          %p10315 = pneg %p286
        $region82: #{unet_segmenter_forward.1} parent=79 // pred_check_branch
          %10317 = sbr.rel (%p10315) target = $region84
        $region83: #{unet_segmenter_forward.1} parent=79 // pred_region
          %p10318 = scmp.lt.s32.totalorder %s27, 1
          %s10319 = scalar_select %p10318, %s27, 1
          %s10320 = smul.addr %s10319, 2
          %s10321 = scalar_lea.vmem %s11, %s10320
        $region84: #{unet_segmenter_forward.1} parent=79 // pred_fallthru
          _
      $region80: #{unet_segmenter_forward.1} parent=5 // pred_fallthru
        _
    $region6: #{unet_segmenter_forward.1} parent=1 // loop_footer
      %s25 = sadd.s32 1, %s21
    $region7: #{unet_segmenter_forward.1} parent=1 // loop_footer_branch
      %20 = sbr.rel target = $region3
    $region8: #{unet_segmenter_forward.1} parent=1 // loop_exit
      _
    %10322 = vsyncpa [#allocation7], 1
    %s10323 = scalar_lea.sflag [#allocation7], 1
    %10324 = vsyncpa %s10323, 1
    %10325 = vsyncpa [#allocation9], 1

</llo_original>
